<compile_context>
chip_gen: v7x
topology: tpu7x:2x2x1
jax: 0.10.0
libtpu: 0.0.40
codegen_flags: <defaults>
</compile_context>

<pallas_src>
import jax
import jax.numpy as jnp
import numpy as np
from jax.experimental import pallas as pl
from jax.experimental.pallas import tpu as pltpu


# --------------------------- tap tables (host-side constants) ----------------

def _tap_tables(D, H, W):
    """27 (kd,kh,kw) taps in PyTorch weight order, their lane-roll shifts and
    boundary masks on the flattened spatial axis s = d*H*W + h*W + w."""
    S = D * H * W
    s = np.arange(S)
    d, h, w = s // (H * W), (s // W) % H, s % W
    shifts, masks = [], []
    for kd in (-1, 0, 1):
        for kh in (-1, 0, 1):
            for kw in (-1, 0, 1):
                off = kd * H * W + kh * W + kw
                # rolled[s] = x[(s + off) % S]  (jnp.roll convention: shift=-off)
                shifts.append(int((-off) % S))
                valid = ((d + kd >= 0) & (d + kd < D) &
                         (h + kh >= 0) & (h + kh < H) &
                         (w + kw >= 0) & (w + kw < W))
                masks.append(valid.astype(np.float32))
    return shifts, np.stack(masks, axis=0)          # (27, S) float32


# --------------------------- fused kernel ------------------------------------

def _make_kernel(C_in, C_out, S, t, shifts, use_skip_conv):
    ntap = len(shifts)                               # 27

    def conv_block(h, masks_ref, w_ref, b_ref, cols_ref):
        # h: (C_out, S) f32.  Conv3d(k=3, pad=1) + bias via in-VMEM im2col.
        for tap in range(ntap):
            sh = h if shifts[tap] == 0 else pltpu.roll(h, shifts[tap], 1)
            m = masks_ref[pl.ds(tap, 1), :]          # (1, S): zero-pad / kill wrap
            cols_ref[pl.ds(tap * C_out, C_out), :] = sh * m
        y = jnp.dot(w_ref[...], cols_ref[...],       # (C_out, 27*C_out)@(27*C_out, S)
                    preferred_element_type=jnp.float32)
        y = y + b_ref[...]                           # bias (C_out, 1) broadcast
        # TODO(synk): Dropout3d(p=0.5) treated as eval-mode identity.
        mean = jnp.mean(y, axis=1, keepdims=True)    # InstanceNorm3d, biased var
        yc = y - mean
        var = jnp.mean(yc * yc, axis=1, keepdims=True)
        yn = yc * jax.lax.rsqrt(var + 1e-5)
        return jnp.where(yn >= 0.0, yn, 0.01 * yn)   # LeakyReLU(0.01)

    def rec_block(h, masks_ref, w_ref, b_ref, cols_ref):
        out = conv_block(h, masks_ref, w_ref, b_ref, cols_ref)
        for _ in range(t):
            out = conv_block(out + h, masks_ref, w_ref, b_ref, cols_ref)
        return out

    def run(skip, masks_ref, w1_ref, b1_ref, w2_ref, b2_ref, o_ref, cols_ref):
        h = rec_block(skip, masks_ref, w1_ref, b1_ref, cols_ref)
        h = rec_block(h, masks_ref, w2_ref, b2_ref, cols_ref)
        o_ref[...] = (h + skip).astype(o_ref.dtype)  # residual add

    if use_skip_conv:
        def kernel(x_ref, masks_ref, sw_ref, sb_ref,
                   w1_ref, b1_ref, w2_ref, b2_ref, o_ref, cols_ref):
            skip = jnp.dot(sw_ref[...], x_ref[...],  # 1x1 conv: (C_out,C_in)@(C_in,S)
                           preferred_element_type=jnp.float32) + sb_ref[...]
            run(skip, masks_ref, w1_ref, b1_ref, w2_ref, b2_ref, o_ref, cols_ref)
    else:
        def kernel(x_ref, masks_ref,
                   w1_ref, b1_ref, w2_ref, b2_ref, o_ref, cols_ref):
            run(x_ref[...].astype(jnp.float32), masks_ref,
                w1_ref, b1_ref, w2_ref, b2_ref, o_ref, cols_ref)

    return kernel


# --------------------------- forward wrapper ----------------------------------

def res_rec_block_forward(params, x, t=2):
    """x: (N, C_in, D, H, W) float32 (PyTorch NCDHW). Returns (N, C_out, D, H, W)."""
    N, C_in, D, H, W = x.shape
    C_out = params["rec1_w"].shape[0]
    S = D * H * W
    use_skip_conv = (C_in != C_out)                  # mirrors ResRecBlock.forward

    shifts, masks_np = _tap_tables(D, H, W)
    masks = jnp.asarray(masks_np)                    # (27, S)

    def wmat(w):                                     # (Co, Ci, 3,3,3) -> (Co, 27*Ci)
        co, ci = w.shape[0], w.shape[1]
        return jnp.transpose(w, (0, 2, 3, 4, 1)).reshape(co, 27 * ci).astype(jnp.float32)

    x2 = x.reshape(N, C_in, S).astype(jnp.float32)
    w1 = wmat(params["rec1_w"]); b1 = params["rec1_b"].reshape(C_out, 1).astype(jnp.float32)
    w2 = wmat(params["rec2_w"]); b2 = params["rec2_b"].reshape(C_out, 1).astype(jnp.float32)

    inputs = [x2, masks]
    in_specs = [
        pl.BlockSpec((None, C_in, S), lambda n: (n, 0, 0)),   # per-sample block
        pl.BlockSpec((27, S), lambda n: (0, 0)),              # masks (resident)
    ]
    if use_skip_conv:
        sw = params["skip_w"].reshape(C_out, C_in).astype(jnp.float32)
        sb = params["skip_b"].reshape(C_out, 1).astype(jnp.float32)
        inputs += [sw, sb]
        in_specs += [pl.BlockSpec((C_out, C_in), lambda n: (0, 0)),
                     pl.BlockSpec((C_out, 1), lambda n: (0, 0))]
    inputs += [w1, b1, w2, b2]
    in_specs += [pl.BlockSpec((C_out, 27 * C_out), lambda n: (0, 0)),
                 pl.BlockSpec((C_out, 1), lambda n: (0, 0)),
                 pl.BlockSpec((C_out, 27 * C_out), lambda n: (0, 0)),
                 pl.BlockSpec((C_out, 1), lambda n: (0, 0))]

    n_convs = 2 * (t + 1)                            # 2 RecBlocks x (t+1) ConvBlocks
    flops = N * S * (n_convs * 2 * C_out * 27 * C_out
                     + (2 * C_out * C_in if use_skip_conv else 0)
                     + n_convs * 6 * C_out)
    bytes_accessed = 4 * (x2.size + masks.size + w1.size + b1.size + w2.size + b2.size
                          + N * C_out * S
                          + (C_out * C_in + C_out if use_skip_conv else 0))

    kernel = _make_kernel(C_in, C_out, S, t, shifts, use_skip_conv)
    y = pl.pallas_call(
        kernel,
        out_shape=jax.ShapeDtypeStruct((N, C_out, S), jnp.float32),
        grid=(N,),
        in_specs=in_specs,
        out_specs=pl.BlockSpec((None, C_out, S), lambda n: (n, 0, 0)),
        scratch_shapes=[pltpu.VMEM((27 * C_out, S), jnp.float32)],   # im2col cols
        compiler_params=pltpu.CompilerParams(
            dimension_semantics=("parallel",)),                      # v7x megacore
        cost_estimate=pl.CostEstimate(
            flops=flops,
            transcendentals=N * n_convs * C_out,
            bytes_accessed=bytes_accessed),
    )(*inputs)
    return y.reshape(N, C_out, D, H, W)


# --------------------------- params & demo ------------------------------------

def init_params(key, in_channels, out_channels):
    ks = jax.random.split(key, 6)
    nrm = jax.random.normal
    return {
        # nn.Conv3d(in, out, kernel_size=1) weight/bias (used when in != out)
        "skip_w": 0.1 * nrm(ks[0], (out_channels, in_channels, 1, 1, 1), jnp.float32),
        "skip_b": 0.05 * nrm(ks[1], (out_channels,), jnp.float32),
        # RecBlock 1 / RecBlock 2 shared ConvBlock weights (Conv3d k=3, pad=1)
        "rec1_w": 0.1 * nrm(ks[2], (out_channels, out_channels, 3, 3, 3), jnp.float32),
        "rec1_b": 0.05 * nrm(ks[3], (out_channels,), jnp.float32),
        "rec2_w": 0.1 * nrm(ks[4], (out_channels, out_channels, 3, 3, 3), jnp.float32),
        "rec2_b": 0.05 * nrm(ks[5], (out_channels,), jnp.float32),
    }


if __name__ == "__main__":
    key = jax.random.PRNGKey(0)
    kx, kp = jax.random.split(key)

    N, C_in, C_out, D, H, W = 2, 4, 8, 8, 8, 8       # ResRecBlock(4 -> 8, t=2)
    x = jax.random.normal(kx, (N, C_in, D, H, W), jnp.float32)   # NCDHW input
    params = init_params(kp, C_in, C_out)

    fwd = jax.jit(res_rec_block_forward)
    y = jax.block_until_ready(fwd(params, x))

    assert y.shape == (N, C_out, D, H, W), y.shape
    assert bool(jnp.all(jnp.isfinite(y)))
    print("KERNEL_OK")
</pallas_src>

<mosaic_0001>
module attributes {stable_mosaic.version = 11 : i64} {
  func.func @kernel(%arg0: i32, %arg1: memref<1x4x512xf32, #tpu.memory_space<vmem>>, %arg2: memref<27x512xf32, #tpu.memory_space<vmem>>, %arg3: memref<8x4xf32, #tpu.memory_space<vmem>>, %arg4: memref<8x1xf32, #tpu.memory_space<vmem>>, %arg5: memref<8x216xf32, #tpu.memory_space<vmem>>, %arg6: memref<8x1xf32, #tpu.memory_space<vmem>>, %arg7: memref<8x216xf32, #tpu.memory_space<vmem>>, %arg8: memref<8x1xf32, #tpu.memory_space<vmem>>, %arg9: memref<1x8x512xf32, #tpu.memory_space<vmem>>, %arg10: memref<216x512xf32, #tpu.memory_space<vmem>>) attributes {dimension_semantics = [#tpu.dimension_semantics<parallel>], iteration_bounds = array<i64: 2>, scalar_prefetch = 0 : i64, scratch_operands = 1 : i64, tpu.core_type = #tpu.core_type<tc>, window_params = [{transform_indices = @transform_0, window_bounds = array<i64: 1, 4, 512>}, {pipeline_mode = #tpu.pipeline_mode<synchronous>, transform_indices = @transform_1, window_bounds = array<i64: 27, 512>}, {pipeline_mode = #tpu.pipeline_mode<synchronous>, transform_indices = @transform_2, window_bounds = array<i64: 8, 4>}, {pipeline_mode = #tpu.pipeline_mode<synchronous>, transform_indices = @transform_3, window_bounds = array<i64: 8, 1>}, {pipeline_mode = #tpu.pipeline_mode<synchronous>, transform_indices = @transform_4, window_bounds = array<i64: 8, 216>}, {pipeline_mode = #tpu.pipeline_mode<synchronous>, transform_indices = @transform_5, window_bounds = array<i64: 8, 1>}, {pipeline_mode = #tpu.pipeline_mode<synchronous>, transform_indices = @transform_6, window_bounds = array<i64: 8, 216>}, {pipeline_mode = #tpu.pipeline_mode<synchronous>, transform_indices = @transform_7, window_bounds = array<i64: 8, 1>}, {transform_indices = @transform_8, window_bounds = array<i64: 1, 8, 512>}]} {
    %c0 = arith.constant 0 : index
    %c0_0 = arith.constant 0 : index
    %0 = vector.load %arg3[%c0, %c0_0] : memref<8x4xf32, #tpu.memory_space<vmem>>, vector<8x4xf32>
    %c0_1 = arith.constant 0 : index
    %c0_2 = arith.constant 0 : index
    %c0_3 = arith.constant 0 : index
    %1 = vector.load %arg1[%c0_1, %c0_2, %c0_3] : memref<1x4x512xf32, #tpu.memory_space<vmem>>, vector<1x4x512xf32>
    %2 = vector.shape_cast %1 : vector<1x4x512xf32> to vector<4x512xf32>
    %cst = arith.constant dense<0.000000e+00> : vector<8x512xf32>
    %3 = tpu.matmul %0, %2, %cst {dimension_numbers = #tpu.dot_dimension_numbers<[1], [0], [0], [1], [0, 0, 1, 1], [], []>} : vector<8x4xf32>, vector<4x512xf32>, vector<8x512xf32> -> vector<8x512xf32>
    %c0_4 = arith.constant 0 : index
    %c0_5 = arith.constant 0 : index
    %4 = vector.load %arg4[%c0_4, %c0_5] : memref<8x1xf32, #tpu.memory_space<vmem>>, vector<8x1xf32>
    %5 = vector.broadcast %4 : vector<8x1xf32> to vector<8x512xf32>
    %6 = arith.addf %3, %5 : vector<8x512xf32>
    %c73_i32 = arith.constant 73 : i32
    %7 = tpu.dynamic_rotate %6 by %c73_i32 dim 1 : vector<8x512xf32>, i32 -> vector<8x512xf32>
    %c0_6 = arith.constant 0 : index
    %c0_7 = arith.constant 0 : index
    %8 = vector.load %arg2[%c0_6, %c0_7] : memref<27x512xf32, #tpu.memory_space<vmem>>, vector<1x512xf32>
    %9 = vector.broadcast %8 : vector<1x512xf32> to vector<8x512xf32>
    %10 = arith.mulf %7, %9 : vector<8x512xf32>
    %c0_8 = arith.constant 0 : index
    %c0_9 = arith.constant 0 : index
    %11 = vector.load %arg10[%c0_8, %c0_9] : memref<216x512xf32, #tpu.memory_space<vmem>>, vector<8x512xf32>
    tpu.vector_store %arg10[%c0_8, %c0_9], %10 {strides = array<i32>} : memref<216x512xf32, #tpu.memory_space<vmem>>, vector<8x512xf32>,
    %c72_i32 = arith.constant 72 : i32
    %12 = tpu.dynamic_rotate %6 by %c72_i32 dim 1 : vector<8x512xf32>, i32 -> vector<8x512xf32>
    %c1 = arith.constant 1 : index
    %c0_10 = arith.constant 0 : index
    %13 = vector.load %arg2[%c1, %c0_10] : memref<27x512xf32, #tpu.memory_space<vmem>>, vector<1x512xf32>
    %14 = vector.broadcast %13 : vector<1x512xf32> to vector<8x512xf32>
    %15 = arith.mulf %12, %14 : vector<8x512xf32>
    %c8 = arith.constant 8 : index
    %c0_11 = arith.constant 0 : index
    %16 = vector.load %arg10[%c8, %c0_11] : memref<216x512xf32, #tpu.memory_space<vmem>>, vector<8x512xf32>
    tpu.vector_store %arg10[%c8, %c0_11], %15 {strides = array<i32>} : memref<216x512xf32, #tpu.memory_space<vmem>>, vector<8x512xf32>,
    %c71_i32 = arith.constant 71 : i32
    %17 = tpu.dynamic_rotate %6 by %c71_i32 dim 1 : vector<8x512xf32>, i32 -> vector<8x512xf32>
    %c2 = arith.constant 2 : index
    %c0_12 = arith.constant 0 : index
    %18 = vector.load %arg2[%c2, %c0_12] : memref<27x512xf32, #tpu.memory_space<vmem>>, vector<1x512xf32>
    %19 = vector.broadcast %18 : vector<1x512xf32> to vector<8x512xf32>
    %20 = arith.mulf %17, %19 : vector<8x512xf32>
    %c16 = arith.constant 16 : index
    %c0_13 = arith.constant 0 : index
    %21 = vector.load %arg10[%c16, %c0_13] : memref<216x512xf32, #tpu.memory_space<vmem>>, vector<8x512xf32>
    tpu.vector_store %arg10[%c16, %c0_13], %20 {strides = array<i32>} : memref<216x512xf32, #tpu.memory_space<vmem>>, vector<8x512xf32>,
    %c65_i32 = arith.constant 65 : i32
    %22 = tpu.dynamic_rotate %6 by %c65_i32 dim 1 : vector<8x512xf32>, i32 -> vector<8x512xf32>
    %c3 = arith.constant 3 : index
    %c0_14 = arith.constant 0 : index
    %23 = vector.load %arg2[%c3, %c0_14] : memref<27x512xf32, #tpu.memory_space<vmem>>, vector<1x512xf32>
    %24 = vector.broadcast %23 : vector<1x512xf32> to vector<8x512xf32>
    %25 = arith.mulf %22, %24 : vector<8x512xf32>
    %c24 = arith.constant 24 : index
    %c0_15 = arith.constant 0 : index
    %26 = vector.load %arg10[%c24, %c0_15] : memref<216x512xf32, #tpu.memory_space<vmem>>, vector<8x512xf32>
    tpu.vector_store %arg10[%c24, %c0_15], %25 {strides = array<i32>} : memref<216x512xf32, #tpu.memory_space<vmem>>, vector<8x512xf32>,
    %c64_i32 = arith.constant 64 : i32
    %27 = tpu.dynamic_rotate %6 by %c64_i32 dim 1 : vector<8x512xf32>, i32 -> vector<8x512xf32>
    %c4 = arith.constant 4 : index
    %c0_16 = arith.constant 0 : index
    %28 = vector.load %arg2[%c4, %c0_16] : memref<27x512xf32, #tpu.memory_space<vmem>>, vector<1x512xf32>
    %29 = vector.broadcast %28 : vector<1x512xf32> to vector<8x512xf32>
    %30 = arith.mulf %27, %29 : vector<8x512xf32>
    %c32 = arith.constant 32 : index
    %c0_17 = arith.constant 0 : index
    %31 = vector.load %arg10[%c32, %c0_17] : memref<216x512xf32, #tpu.memory_space<vmem>>, vector<8x512xf32>
    tpu.vector_store %arg10[%c32, %c0_17], %30 {strides = array<i32>} : memref<216x512xf32, #tpu.memory_space<vmem>>, vector<8x512xf32>,
    %c63_i32 = arith.constant 63 : i32
    %32 = tpu.dynamic_rotate %6 by %c63_i32 dim 1 : vector<8x512xf32>, i32 -> vector<8x512xf32>
    %c5 = arith.constant 5 : index
    %c0_18 = arith.constant 0 : index
    %33 = vector.load %arg2[%c5, %c0_18] : memref<27x512xf32, #tpu.memory_space<vmem>>, vector<1x512xf32>
    %34 = vector.broadcast %33 : vector<1x512xf32> to vector<8x512xf32>
    %35 = arith.mulf %32, %34 : vector<8x512xf32>
    %c40 = arith.constant 40 : index
    %c0_19 = arith.constant 0 : index
    %36 = vector.load %arg10[%c40, %c0_19] : memref<216x512xf32, #tpu.memory_space<vmem>>, vector<8x512xf32>
    tpu.vector_store %arg10[%c40, %c0_19], %35 {strides = array<i32>} : memref<216x512xf32, #tpu.memory_space<vmem>>, vector<8x512xf32>,
    %c57_i32 = arith.constant 57 : i32
    %37 = tpu.dynamic_rotate %6 by %c57_i32 dim 1 : vector<8x512xf32>, i32 -> vector<8x512xf32>
    %c6 = arith.constant 6 : index
    %c0_20 = arith.constant 0 : index
    %38 = vector.load %arg2[%c6, %c0_20] : memref<27x512xf32, #tpu.memory_space<vmem>>, vector<1x512xf32>
    %39 = vector.broadcast %38 : vector<1x512xf32> to vector<8x512xf32>
    %40 = arith.mulf %37, %39 : vector<8x512xf32>
    %c48 = arith.constant 48 : index
    %c0_21 = arith.constant 0 : index
    %41 = vector.load %arg10[%c48, %c0_21] : memref<216x512xf32, #tpu.memory_space<vmem>>, vector<8x512xf32>
    tpu.vector_store %arg10[%c48, %c0_21], %40 {strides = array<i32>} : memref<216x512xf32, #tpu.memory_space<vmem>>, vector<8x512xf32>,
    %c56_i32 = arith.constant 56 : i32
    %42 = tpu.dynamic_rotate %6 by %c56_i32 dim 1 : vector<8x512xf32>, i32 -> vector<8x512xf32>
    %c7 = arith.constant 7 : index
    %c0_22 = arith.constant 0 : index
    %43 = vector.load %arg2[%c7, %c0_22] : memref<27x512xf32, #tpu.memory_space<vmem>>, vector<1x512xf32>
    %44 = vector.broadcast %43 : vector<1x512xf32> to vector<8x512xf32>
    %45 = arith.mulf %42, %44 : vector<8x512xf32>
    %c56 = arith.constant 56 : index
    %c0_23 = arith.constant 0 : index
    %46 = vector.load %arg10[%c56, %c0_23] : memref<216x512xf32, #tpu.memory_space<vmem>>, vector<8x512xf32>
    tpu.vector_store %arg10[%c56, %c0_23], %45 {strides = array<i32>} : memref<216x512xf32, #tpu.memory_space<vmem>>, vector<8x512xf32>,
    %c55_i32 = arith.constant 55 : i32
    %47 = tpu.dynamic_rotate %6 by %c55_i32 dim 1 : vector<8x512xf32>, i32 -> vector<8x512xf32>
    %c8_24 = arith.constant 8 : index
    %c0_25 = arith.constant 0 : index
    %48 = vector.load %arg2[%c8_24, %c0_25] : memref<27x512xf32, #tpu.memory_space<vmem>>, vector<1x512xf32>
    %49 = vector.broadcast %48 : vector<1x512xf32> to vector<8x512xf32>
    %50 = arith.mulf %47, %49 : vector<8x512xf32>
    %c64 = arith.constant 64 : index
    %c0_26 = arith.constant 0 : index
    %51 = vector.load %arg10[%c64, %c0_26] : memref<216x512xf32, #tpu.memory_space<vmem>>, vector<8x512xf32>
    tpu.vector_store %arg10[%c64, %c0_26], %50 {strides = array<i32>} : memref<216x512xf32, #tpu.memory_space<vmem>>, vector<8x512xf32>,
    %c9_i32 = arith.constant 9 : i32
    %52 = tpu.dynamic_rotate %6 by %c9_i32 dim 1 : vector<8x512xf32>, i32 -> vector<8x512xf32>
    %c9 = arith.constant 9 : index
    %c0_27 = arith.constant 0 : index
    %53 = vector.load %arg2[%c9, %c0_27] : memref<27x512xf32, #tpu.memory_space<vmem>>, vector<1x512xf32>
    %54 = vector.broadcast %53 : vector<1x512xf32> to vector<8x512xf32>
    %55 = arith.mulf %52, %54 : vector<8x512xf32>
    %c72 = arith.constant 72 : index
    %c0_28 = arith.constant 0 : index
    %56 = vector.load %arg10[%c72, %c0_28] : memref<216x512xf32, #tpu.memory_space<vmem>>, vector<8x512xf32>
    tpu.vector_store %arg10[%c72, %c0_28], %55 {strides = array<i32>} : memref<216x512xf32, #tpu.memory_space<vmem>>, vector<8x512xf32>,
    %c8_i32 = arith.constant 8 : i32
    %57 = tpu.dynamic_rotate %6 by %c8_i32 dim 1 : vector<8x512xf32>, i32 -> vector<8x512xf32>
    %c10 = arith.constant 10 : index
    %c0_29 = arith.constant 0 : index
    %58 = vector.load %arg2[%c10, %c0_29] : memref<27x512xf32, #tpu.memory_space<vmem>>, vector<1x512xf32>
    %59 = vector.broadcast %58 : vector<1x512xf32> to vector<8x512xf32>
    %60 = arith.mulf %57, %59 : vector<8x512xf32>
    %c80 = arith.constant 80 : index
    %c0_30 = arith.constant 0 : index
    %61 = vector.load %arg10[%c80, %c0_30] : memref<216x512xf32, #tpu.memory_space<vmem>>, vector<8x512xf32>
    tpu.vector_store %arg10[%c80, %c0_30], %60 {strides = array<i32>} : memref<216x512xf32, #tpu.memory_space<vmem>>, vector<8x512xf32>,
    %c7_i32 = arith.constant 7 : i32
    %62 = tpu.dynamic_rotate %6 by %c7_i32 dim 1 : vector<8x512xf32>, i32 -> vector<8x512xf32>
    %c11 = arith.constant 11 : index
    %c0_31 = arith.constant 0 : index
    %63 = vector.load %arg2[%c11, %c0_31] : memref<27x512xf32, #tpu.memory_space<vmem>>, vector<1x512xf32>
    %64 = vector.broadcast %63 : vector<1x512xf32> to vector<8x512xf32>
    %65 = arith.mulf %62, %64 : vector<8x512xf32>
    %c88 = arith.constant 88 : index
    %c0_32 = arith.constant 0 : index
    %66 = vector.load %arg10[%c88, %c0_32] : memref<216x512xf32, #tpu.memory_space<vmem>>, vector<8x512xf32>
    tpu.vector_store %arg10[%c88, %c0_32], %65 {strides = array<i32>} : memref<216x512xf32, #tpu.memory_space<vmem>>, vector<8x512xf32>,
    %c1_i32 = arith.constant 1 : i32
    %67 = tpu.dynamic_rotate %6 by %c1_i32 dim 1 : vector<8x512xf32>, i32 -> vector<8x512xf32>
    %c12 = arith.constant 12 : index
    %c0_33 = arith.constant 0 : index
    %68 = vector.load %arg2[%c12, %c0_33] : memref<27x512xf32, #tpu.memory_space<vmem>>, vector<1x512xf32>
    %69 = vector.broadcast %68 : vector<1x512xf32> to vector<8x512xf32>
    %70 = arith.mulf %67, %69 : vector<8x512xf32>
    %c96 = arith.constant 96 : index
    %c0_34 = arith.constant 0 : index
    %71 = vector.load %arg10[%c96, %c0_34] : memref<216x512xf32, #tpu.memory_space<vmem>>, vector<8x512xf32>
    tpu.vector_store %arg10[%c96, %c0_34], %70 {strides = array<i32>} : memref<216x512xf32, #tpu.memory_space<vmem>>, vector<8x512xf32>,
    %c13 = arith.constant 13 : index
    %c0_35 = arith.constant 0 : index
    %72 = vector.load %arg2[%c13, %c0_35] : memref<27x512xf32, #tpu.memory_space<vmem>>, vector<1x512xf32>
    %73 = vector.broadcast %72 : vector<1x512xf32> to vector<8x512xf32>
    %74 = arith.mulf %6, %73 : vector<8x512xf32>
    %c104 = arith.constant 104 : index
    %c0_36 = arith.constant 0 : index
    %75 = vector.load %arg10[%c104, %c0_36] : memref<216x512xf32, #tpu.memory_space<vmem>>, vector<8x512xf32>
    tpu.vector_store %arg10[%c104, %c0_36], %74 {strides = array<i32>} : memref<216x512xf32, #tpu.memory_space<vmem>>, vector<8x512xf32>,
    %c511_i32 = arith.constant 511 : i32
    %76 = tpu.dynamic_rotate %6 by %c511_i32 dim 1 : vector<8x512xf32>, i32 -> vector<8x512xf32>
    %c14 = arith.constant 14 : index
    %c0_37 = arith.constant 0 : index
    %77 = vector.load %arg2[%c14, %c0_37] : memref<27x512xf32, #tpu.memory_space<vmem>>, vector<1x512xf32>
    %78 = vector.broadcast %77 : vector<1x512xf32> to vector<8x512xf32>
    %79 = arith.mulf %76, %78 : vector<8x512xf32>
    %c112 = arith.constant 112 : index
    %c0_38 = arith.constant 0 : index
    %80 = vector.load %arg10[%c112, %c0_38] : memref<216x512xf32, #tpu.memory_space<vmem>>, vector<8x512xf32>
    tpu.vector_store %arg10[%c112, %c0_38], %79 {strides = array<i32>} : memref<216x512xf32, #tpu.memory_space<vmem>>, vector<8x512xf32>,
    %c505_i32 = arith.constant 505 : i32
    %81 = tpu.dynamic_rotate %6 by %c505_i32 dim 1 : vector<8x512xf32>, i32 -> vector<8x512xf32>
    %c15 = arith.constant 15 : index
    %c0_39 = arith.constant 0 : index
    %82 = vector.load %arg2[%c15, %c0_39] : memref<27x512xf32, #tpu.memory_space<vmem>>, vector<1x512xf32>
    %83 = vector.broadcast %82 : vector<1x512xf32> to vector<8x512xf32>
    %84 = arith.mulf %81, %83 : vector<8x512xf32>
    %c120 = arith.constant 120 : index
    %c0_40 = arith.constant 0 : index
    %85 = vector.load %arg10[%c120, %c0_40] : memref<216x512xf32, #tpu.memory_space<vmem>>, vector<8x512xf32>
    tpu.vector_store %arg10[%c120, %c0_40], %84 {strides = array<i32>} : memref<216x512xf32, #tpu.memory_space<vmem>>, vector<8x512xf32>,
    %c504_i32 = arith.constant 504 : i32
    %86 = tpu.dynamic_rotate %6 by %c504_i32 dim 1 : vector<8x512xf32>, i32 -> vector<8x512xf32>
    %c16_41 = arith.constant 16 : index
    %c0_42 = arith.constant 0 : index
    %87 = vector.load %arg2[%c16_41, %c0_42] : memref<27x512xf32, #tpu.memory_space<vmem>>, vector<1x512xf32>
    %88 = vector.broadcast %87 : vector<1x512xf32> to vector<8x512xf32>
    %89 = arith.mulf %86, %88 : vector<8x512xf32>
    %c128 = arith.constant 128 : index
    %c0_43 = arith.constant 0 : index
    %90 = vector.load %arg10[%c128, %c0_43] : memref<216x512xf32, #tpu.memory_space<vmem>>, vector<8x512xf32>
    tpu.vector_store %arg10[%c128, %c0_43], %89 {strides = array<i32>} : memref<216x512xf32, #tpu.memory_space<vmem>>, vector<8x512xf32>,
    %c503_i32 = arith.constant 503 : i32
    %91 = tpu.dynamic_rotate %6 by %c503_i32 dim 1 : vector<8x512xf32>, i32 -> vector<8x512xf32>
    %c17 = arith.constant 17 : index
    %c0_44 = arith.constant 0 : index
    %92 = vector.load %arg2[%c17, %c0_44] : memref<27x512xf32, #tpu.memory_space<vmem>>, vector<1x512xf32>
    %93 = vector.broadcast %92 : vector<1x512xf32> to vector<8x512xf32>
    %94 = arith.mulf %91, %93 : vector<8x512xf32>
    %c136 = arith.constant 136 : index
    %c0_45 = arith.constant 0 : index
    %95 = vector.load %arg10[%c136, %c0_45] : memref<216x512xf32, #tpu.memory_space<vmem>>, vector<8x512xf32>
    tpu.vector_store %arg10[%c136, %c0_45], %94 {strides = array<i32>} : memref<216x512xf32, #tpu.memory_space<vmem>>, vector<8x512xf32>,
    %c457_i32 = arith.constant 457 : i32
    %96 = tpu.dynamic_rotate %6 by %c457_i32 dim 1 : vector<8x512xf32>, i32 -> vector<8x512xf32>
    %c18 = arith.constant 18 : index
    %c0_46 = arith.constant 0 : index
    %97 = vector.load %arg2[%c18, %c0_46] : memref<27x512xf32, #tpu.memory_space<vmem>>, vector<1x512xf32>
    %98 = vector.broadcast %97 : vector<1x512xf32> to vector<8x512xf32>
    %99 = arith.mulf %96, %98 : vector<8x512xf32>
    %c144 = arith.constant 144 : index
    %c0_47 = arith.constant 0 : index
    %100 = vector.load %arg10[%c144, %c0_47] : memref<216x512xf32, #tpu.memory_space<vmem>>, vector<8x512xf32>
    tpu.vector_store %arg10[%c144, %c0_47], %99 {strides = array<i32>} : memref<216x512xf32, #tpu.memory_space<vmem>>, vector<8x512xf32>,
    %c456_i32 = arith.constant 456 : i32
    %101 = tpu.dynamic_rotate %6 by %c456_i32 dim 1 : vector<8x512xf32>, i32 -> vector<8x512xf32>
    %c19 = arith.constant 19 : index
    %c0_48 = arith.constant 0 : index
    %102 = vector.load %arg2[%c19, %c0_48] : memref<27x512xf32, #tpu.memory_space<vmem>>, vector<1x512xf32>
    %103 = vector.broadcast %102 : vector<1x512xf32> to vector<8x512xf32>
    %104 = arith.mulf %101, %103 : vector<8x512xf32>
    %c152 = arith.constant 152 : index
    %c0_49 = arith.constant 0 : index
    %105 = vector.load %arg10[%c152, %c0_49] : memref<216x512xf32, #tpu.memory_space<vmem>>, vector<8x512xf32>
    tpu.vector_store %arg10[%c152, %c0_49], %104 {strides = array<i32>} : memref<216x512xf32, #tpu.memory_space<vmem>>, vector<8x512xf32>,
    %c455_i32 = arith.constant 455 : i32
    %106 = tpu.dynamic_rotate %6 by %c455_i32 dim 1 : vector<8x512xf32>, i32 -> vector<8x512xf32>
    %c20 = arith.constant 20 : index
    %c0_50 = arith.constant 0 : index
    %107 = vector.load %arg2[%c20, %c0_50] : memref<27x512xf32, #tpu.memory_space<vmem>>, vector<1x512xf32>
    %108 = vector.broadcast %107 : vector<1x512xf32> to vector<8x512xf32>
    %109 = arith.mulf %106, %108 : vector<8x512xf32>
    %c160 = arith.constant 160 : index
    %c0_51 = arith.constant 0 : index
    %110 = vector.load %arg10[%c160, %c0_51] : memref<216x512xf32, #tpu.memory_space<vmem>>, vector<8x512xf32>
    tpu.vector_store %arg10[%c160, %c0_51], %109 {strides = array<i32>} : memref<216x512xf32, #tpu.memory_space<vmem>>, vector<8x512xf32>,
    %c449_i32 = arith.constant 449 : i32
    %111 = tpu.dynamic_rotate %6 by %c449_i32 dim 1 : vector<8x512xf32>, i32 -> vector<8x512xf32>
    %c21 = arith.constant 21 : index
    %c0_52 = arith.constant 0 : index
    %112 = vector.load %arg2[%c21, %c0_52] : memref<27x512xf32, #tpu.memory_space<vmem>>, vector<1x512xf32>
    %113 = vector.broadcast %112 : vector<1x512xf32> to vector<8x512xf32>
    %114 = arith.mulf %111, %113 : vector<8x512xf32>
    %c168 = arith.constant 168 : index
    %c0_53 = arith.constant 0 : index
    %115 = vector.load %arg10[%c168, %c0_53] : memref<216x512xf32, #tpu.memory_space<vmem>>, vector<8x512xf32>
    tpu.vector_store %arg10[%c168, %c0_53], %114 {strides = array<i32>} : memref<216x512xf32, #tpu.memory_space<vmem>>, vector<8x512xf32>,
    %c448_i32 = arith.constant 448 : i32
    %116 = tpu.dynamic_rotate %6 by %c448_i32 dim 1 : vector<8x512xf32>, i32 -> vector<8x512xf32>
    %c22 = arith.constant 22 : index
    %c0_54 = arith.constant 0 : index
    %117 = vector.load %arg2[%c22, %c0_54] : memref<27x512xf32, #tpu.memory_space<vmem>>, vector<1x512xf32>
    %118 = vector.broadcast %117 : vector<1x512xf32> to vector<8x512xf32>
    %119 = arith.mulf %116, %118 : vector<8x512xf32>
    %c176 = arith.constant 176 : index
    %c0_55 = arith.constant 0 : index
    %120 = vector.load %arg10[%c176, %c0_55] : memref<216x512xf32, #tpu.memory_space<vmem>>, vector<8x512xf32>
    tpu.vector_store %arg10[%c176, %c0_55], %119 {strides = array<i32>} : memref<216x512xf32, #tpu.memory_space<vmem>>, vector<8x512xf32>,
    %c447_i32 = arith.constant 447 : i32
    %121 = tpu.dynamic_rotate %6 by %c447_i32 dim 1 : vector<8x512xf32>, i32 -> vector<8x512xf32>
    %c23 = arith.constant 23 : index
    %c0_56 = arith.constant 0 : index
    %122 = vector.load %arg2[%c23, %c0_56] : memref<27x512xf32, #tpu.memory_space<vmem>>, vector<1x512xf32>
    %123 = vector.broadcast %122 : vector<1x512xf32> to vector<8x512xf32>
    %124 = arith.mulf %121, %123 : vector<8x512xf32>
    %c184 = arith.constant 184 : index
    %c0_57 = arith.constant 0 : index
    %125 = vector.load %arg10[%c184, %c0_57] : memref<216x512xf32, #tpu.memory_space<vmem>>, vector<8x512xf32>
    tpu.vector_store %arg10[%c184, %c0_57], %124 {strides = array<i32>} : memref<216x512xf32, #tpu.memory_space<vmem>>, vector<8x512xf32>,
    %c441_i32 = arith.constant 441 : i32
    %126 = tpu.dynamic_rotate %6 by %c441_i32 dim 1 : vector<8x512xf32>, i32 -> vector<8x512xf32>
    %c24_58 = arith.constant 24 : index
    %c0_59 = arith.constant 0 : index
    %127 = vector.load %arg2[%c24_58, %c0_59] : memref<27x512xf32, #tpu.memory_space<vmem>>, vector<1x512xf32>
    %128 = vector.broadcast %127 : vector<1x512xf32> to vector<8x512xf32>
    %129 = arith.mulf %126, %128 : vector<8x512xf32>
    %c192 = arith.constant 192 : index
    %c0_60 = arith.constant 0 : index
    %130 = vector.load %arg10[%c192, %c0_60] : memref<216x512xf32, #tpu.memory_space<vmem>>, vector<8x512xf32>
    tpu.vector_store %arg10[%c192, %c0_60], %129 {strides = array<i32>} : memref<216x512xf32, #tpu.memory_space<vmem>>, vector<8x512xf32>,
    %c440_i32 = arith.constant 440 : i32
    %131 = tpu.dynamic_rotate %6 by %c440_i32 dim 1 : vector<8x512xf32>, i32 -> vector<8x512xf32>
    %c25 = arith.constant 25 : index
    %c0_61 = arith.constant 0 : index
    %132 = vector.load %arg2[%c25, %c0_61] : memref<27x512xf32, #tpu.memory_space<vmem>>, vector<1x512xf32>
    %133 = vector.broadcast %132 : vector<1x512xf32> to vector<8x512xf32>
    %134 = arith.mulf %131, %133 : vector<8x512xf32>
    %c200 = arith.constant 200 : index
    %c0_62 = arith.constant 0 : index
    %135 = vector.load %arg10[%c200, %c0_62] : memref<216x512xf32, #tpu.memory_space<vmem>>, vector<8x512xf32>
    tpu.vector_store %arg10[%c200, %c0_62], %134 {strides = array<i32>} : memref<216x512xf32, #tpu.memory_space<vmem>>, vector<8x512xf32>,
    %c439_i32 = arith.constant 439 : i32
    %136 = tpu.dynamic_rotate %6 by %c439_i32 dim 1 : vector<8x512xf32>, i32 -> vector<8x512xf32>
    %c26 = arith.constant 26 : index
    %c0_63 = arith.constant 0 : index
    %137 = vector.load %arg2[%c26, %c0_63] : memref<27x512xf32, #tpu.memory_space<vmem>>, vector<1x512xf32>
    %138 = vector.broadcast %137 : vector<1x512xf32> to vector<8x512xf32>
    %139 = arith.mulf %136, %138 : vector<8x512xf32>
    %c208 = arith.constant 208 : index
    %c0_64 = arith.constant 0 : index
    %140 = vector.load %arg10[%c208, %c0_64] : memref<216x512xf32, #tpu.memory_space<vmem>>, vector<8x512xf32>
    tpu.vector_store %arg10[%c208, %c0_64], %139 {strides = array<i32>} : memref<216x512xf32, #tpu.memory_space<vmem>>, vector<8x512xf32>,
    %c0_65 = arith.constant 0 : index
    %c0_66 = arith.constant 0 : index
    %141 = vector.load %arg5[%c0_65, %c0_66] : memref<8x216xf32, #tpu.memory_space<vmem>>, vector<8x216xf32>
    %c0_67 = arith.constant 0 : index
    %c0_68 = arith.constant 0 : index
    %142 = vector.load %arg10[%c0_67, %c0_68] : memref<216x512xf32, #tpu.memory_space<vmem>>, vector<216x512xf32>
    %cst_69 = arith.constant dense<0.000000e+00> : vector<8x512xf32>
    %143 = tpu.matmul %141, %142, %cst_69 {dimension_numbers = #tpu.dot_dimension_numbers<[1], [0], [0], [1], [0, 0, 1, 1], [], []>} : vector<8x216xf32>, vector<216x512xf32>, vector<8x512xf32> -> vector<8x512xf32>
    %c0_70 = arith.constant 0 : index
    %c0_71 = arith.constant 0 : index
    %144 = vector.load %arg6[%c0_70, %c0_71] : memref<8x1xf32, #tpu.memory_space<vmem>>, vector<8x1xf32>
    %145 = vector.broadcast %144 : vector<8x1xf32> to vector<8x512xf32>
    %146 = arith.addf %143, %145 : vector<8x512xf32>
    %cst_72 = arith.constant dense<0.000000e+00> : vector<8xf32>
    %147 = vector.multi_reduction <add>, %146, %cst_72 [1] : vector<8x512xf32> to vector<8xf32>
    %148 = vector.shape_cast %147 : vector<8xf32> to vector<8x1xf32>
    %cst_73 = arith.constant 5.120000e+02 : f32
    %149 = vector.broadcast %cst_73 : f32 to vector<8x1xf32>
    %150 = arith.divf %148, %149 : vector<8x1xf32>
    %151 = vector.broadcast %150 : vector<8x1xf32> to vector<8x512xf32>
    %152 = arith.subf %146, %151 : vector<8x512xf32>
    %153 = arith.mulf %152, %152 : vector<8x512xf32>
    %cst_74 = arith.constant dense<0.000000e+00> : vector<8xf32>
    %154 = vector.multi_reduction <add>, %153, %cst_74 [1] : vector<8x512xf32> to vector<8xf32>
    %155 = vector.shape_cast %154 : vector<8xf32> to vector<8x1xf32>
    %cst_75 = arith.constant 5.120000e+02 : f32
    %156 = vector.broadcast %cst_75 : f32 to vector<8x1xf32>
    %157 = arith.divf %155, %156 : vector<8x1xf32>
    %cst_76 = arith.constant 9.99999974E-6 : f32
    %158 = vector.broadcast %cst_76 : f32 to vector<8x1xf32>
    %159 = arith.addf %157, %158 : vector<8x1xf32>
    %160 = math.rsqrt %159 : vector<8x1xf32>
    %161 = vector.broadcast %160 : vector<8x1xf32> to vector<8x512xf32>
    %162 = arith.mulf %152, %161 : vector<8x512xf32>
    %cst_77 = arith.constant 0.000000e+00 : f32
    %163 = vector.broadcast %cst_77 : f32 to vector<8x512xf32>
    %164 = arith.cmpf oge, %162, %163 : vector<8x512xf32>
    %cst_78 = arith.constant 0.00999999977 : f32
    %165 = vector.broadcast %cst_78 : f32 to vector<8x512xf32>
    %166 = arith.mulf %165, %162 : vector<8x512xf32>
    %167 = arith.select %164, %162, %166 : vector<8x512xi1>, vector<8x512xf32>
    %168 = arith.addf %167, %6 : vector<8x512xf32>
    %c73_i32_79 = arith.constant 73 : i32
    %169 = tpu.dynamic_rotate %168 by %c73_i32_79 dim 1 : vector<8x512xf32>, i32 -> vector<8x512xf32>
    %c0_80 = arith.constant 0 : index
    %c0_81 = arith.constant 0 : index
    %170 = vector.load %arg2[%c0_80, %c0_81] : memref<27x512xf32, #tpu.memory_space<vmem>>, vector<1x512xf32>
    %171 = vector.broadcast %170 : vector<1x512xf32> to vector<8x512xf32>
    %172 = arith.mulf %169, %171 : vector<8x512xf32>
    %c0_82 = arith.constant 0 : index
    %c0_83 = arith.constant 0 : index
    %173 = vector.load %arg10[%c0_82, %c0_83] : memref<216x512xf32, #tpu.memory_space<vmem>>, vector<8x512xf32>
    tpu.vector_store %arg10[%c0_82, %c0_83], %172 {strides = array<i32>} : memref<216x512xf32, #tpu.memory_space<vmem>>, vector<8x512xf32>,
    %c72_i32_84 = arith.constant 72 : i32
    %174 = tpu.dynamic_rotate %168 by %c72_i32_84 dim 1 : vector<8x512xf32>, i32 -> vector<8x512xf32>
    %c1_85 = arith.constant 1 : index
    %c0_86 = arith.constant 0 : index
    %175 = vector.load %arg2[%c1_85, %c0_86] : memref<27x512xf32, #tpu.memory_space<vmem>>, vector<1x512xf32>
    %176 = vector.broadcast %175 : vector<1x512xf32> to vector<8x512xf32>
    %177 = arith.mulf %174, %176 : vector<8x512xf32>
    %c8_87 = arith.constant 8 : index
    %c0_88 = arith.constant 0 : index
    %178 = vector.load %arg10[%c8_87, %c0_88] : memref<216x512xf32, #tpu.memory_space<vmem>>, vector<8x512xf32>
    tpu.vector_store %arg10[%c8_87, %c0_88], %177 {strides = array<i32>} : memref<216x512xf32, #tpu.memory_space<vmem>>, vector<8x512xf32>,
    %c71_i32_89 = arith.constant 71 : i32
    %179 = tpu.dynamic_rotate %168 by %c71_i32_89 dim 1 : vector<8x512xf32>, i32 -> vector<8x512xf32>
    %c2_90 = arith.constant 2 : index
    %c0_91 = arith.constant 0 : index
    %180 = vector.load %arg2[%c2_90, %c0_91] : memref<27x512xf32, #tpu.memory_space<vmem>>, vector<1x512xf32>
    %181 = vector.broadcast %180 : vector<1x512xf32> to vector<8x512xf32>
    %182 = arith.mulf %179, %181 : vector<8x512xf32>
    %c16_92 = arith.constant 16 : index
    %c0_93 = arith.constant 0 : index
    %183 = vector.load %arg10[%c16_92, %c0_93] : memref<216x512xf32, #tpu.memory_space<vmem>>, vector<8x512xf32>
    tpu.vector_store %arg10[%c16_92, %c0_93], %182 {strides = array<i32>} : memref<216x512xf32, #tpu.memory_space<vmem>>, vector<8x512xf32>,
    %c65_i32_94 = arith.constant 65 : i32
    %184 = tpu.dynamic_rotate %168 by %c65_i32_94 dim 1 : vector<8x512xf32>, i32 -> vector<8x512xf32>
    %c3_95 = arith.constant 3 : index
    %c0_96 = arith.constant 0 : index
    %185 = vector.load %arg2[%c3_95, %c0_96] : memref<27x512xf32, #tpu.memory_space<vmem>>, vector<1x512xf32>
    %186 = vector.broadcast %185 : vector<1x512xf32> to vector<8x512xf32>
    %187 = arith.mulf %184, %186 : vector<8x512xf32>
    %c24_97 = arith.constant 24 : index
    %c0_98 = arith.constant 0 : index
    %188 = vector.load %arg10[%c24_97, %c0_98] : memref<216x512xf32, #tpu.memory_space<vmem>>, vector<8x512xf32>
    tpu.vector_store %arg10[%c24_97, %c0_98], %187 {strides = array<i32>} : memref<216x512xf32, #tpu.memory_space<vmem>>, vector<8x512xf32>,
    %c64_i32_99 = arith.constant 64 : i32
    %189 = tpu.dynamic_rotate %168 by %c64_i32_99 dim 1 : vector<8x512xf32>, i32 -> vector<8x512xf32>
    %c4_100 = arith.constant 4 : index
    %c0_101 = arith.constant 0 : index
    %190 = vector.load %arg2[%c4_100, %c0_101] : memref<27x512xf32, #tpu.memory_space<vmem>>, vector<1x512xf32>
    %191 = vector.broadcast %190 : vector<1x512xf32> to vector<8x512xf32>
    %192 = arith.mulf %189, %191 : vector<8x512xf32>
    %c32_102 = arith.constant 32 : index
    %c0_103 = arith.constant 0 : index
    %193 = vector.load %arg10[%c32_102, %c0_103] : memref<216x512xf32, #tpu.memory_space<vmem>>, vector<8x512xf32>
    tpu.vector_store %arg10[%c32_102, %c0_103], %192 {strides = array<i32>} : memref<216x512xf32, #tpu.memory_space<vmem>>, vector<8x512xf32>,
    %c63_i32_104 = arith.constant 63 : i32
    %194 = tpu.dynamic_rotate %168 by %c63_i32_104 dim 1 : vector<8x512xf32>, i32 -> vector<8x512xf32>
    %c5_105 = arith.constant 5 : index
    %c0_106 = arith.constant 0 : index
    %195 = vector.load %arg2[%c5_105, %c0_106] : memref<27x512xf32, #tpu.memory_space<vmem>>, vector<1x512xf32>
    %196 = vector.broadcast %195 : vector<1x512xf32> to vector<8x512xf32>
    %197 = arith.mulf %194, %196 : vector<8x512xf32>
    %c40_107 = arith.constant 40 : index
    %c0_108 = arith.constant 0 : index
    %198 = vector.load %arg10[%c40_107, %c0_108] : memref<216x512xf32, #tpu.memory_space<vmem>>, vector<8x512xf32>
    tpu.vector_store %arg10[%c40_107, %c0_108], %197 {strides = array<i32>} : memref<216x512xf32, #tpu.memory_space<vmem>>, vector<8x512xf32>,
    %c57_i32_109 = arith.constant 57 : i32
    %199 = tpu.dynamic_rotate %168 by %c57_i32_109 dim 1 : vector<8x512xf32>, i32 -> vector<8x512xf32>
    %c6_110 = arith.constant 6 : index
    %c0_111 = arith.constant 0 : index
    %200 = vector.load %arg2[%c6_110, %c0_111] : memref<27x512xf32, #tpu.memory_space<vmem>>, vector<1x512xf32>
    %201 = vector.broadcast %200 : vector<1x512xf32> to vector<8x512xf32>
    %202 = arith.mulf %199, %201 : vector<8x512xf32>
    %c48_112 = arith.constant 48 : index
    %c0_113 = arith.constant 0 : index
    %203 = vector.load %arg10[%c48_112, %c0_113] : memref<216x512xf32, #tpu.memory_space<vmem>>, vector<8x512xf32>
    tpu.vector_store %arg10[%c48_112, %c0_113], %202 {strides = array<i32>} : memref<216x512xf32, #tpu.memory_space<vmem>>, vector<8x512xf32>,
    %c56_i32_114 = arith.constant 56 : i32
    %204 = tpu.dynamic_rotate %168 by %c56_i32_114 dim 1 : vector<8x512xf32>, i32 -> vector<8x512xf32>
    %c7_115 = arith.constant 7 : index
    %c0_116 = arith.constant 0 : index
    %205 = vector.load %arg2[%c7_115, %c0_116] : memref<27x512xf32, #tpu.memory_space<vmem>>, vector<1x512xf32>
    %206 = vector.broadcast %205 : vector<1x512xf32> to vector<8x512xf32>
    %207 = arith.mulf %204, %206 : vector<8x512xf32>
    %c56_117 = arith.constant 56 : index
    %c0_118 = arith.constant 0 : index
    %208 = vector.load %arg10[%c56_117, %c0_118] : memref<216x512xf32, #tpu.memory_space<vmem>>, vector<8x512xf32>
    tpu.vector_store %arg10[%c56_117, %c0_118], %207 {strides = array<i32>} : memref<216x512xf32, #tpu.memory_space<vmem>>, vector<8x512xf32>,
    %c55_i32_119 = arith.constant 55 : i32
    %209 = tpu.dynamic_rotate %168 by %c55_i32_119 dim 1 : vector<8x512xf32>, i32 -> vector<8x512xf32>
    %c8_120 = arith.constant 8 : index
    %c0_121 = arith.constant 0 : index
    %210 = vector.load %arg2[%c8_120, %c0_121] : memref<27x512xf32, #tpu.memory_space<vmem>>, vector<1x512xf32>
    %211 = vector.broadcast %210 : vector<1x512xf32> to vector<8x512xf32>
    %212 = arith.mulf %209, %211 : vector<8x512xf32>
    %c64_122 = arith.constant 64 : index
    %c0_123 = arith.constant 0 : index
    %213 = vector.load %arg10[%c64_122, %c0_123] : memref<216x512xf32, #tpu.memory_space<vmem>>, vector<8x512xf32>
    tpu.vector_store %arg10[%c64_122, %c0_123], %212 {strides = array<i32>} : memref<216x512xf32, #tpu.memory_space<vmem>>, vector<8x512xf32>,
    %c9_i32_124 = arith.constant 9 : i32
    %214 = tpu.dynamic_rotate %168 by %c9_i32_124 dim 1 : vector<8x512xf32>, i32 -> vector<8x512xf32>
    %c9_125 = arith.constant 9 : index
    %c0_126 = arith.constant 0 : index
    %215 = vector.load %arg2[%c9_125, %c0_126] : memref<27x512xf32, #tpu.memory_space<vmem>>, vector<1x512xf32>
    %216 = vector.broadcast %215 : vector<1x512xf32> to vector<8x512xf32>
    %217 = arith.mulf %214, %216 : vector<8x512xf32>
    %c72_127 = arith.constant 72 : index
    %c0_128 = arith.constant 0 : index
    %218 = vector.load %arg10[%c72_127, %c0_128] : memref<216x512xf32, #tpu.memory_space<vmem>>, vector<8x512xf32>
    tpu.vector_store %arg10[%c72_127, %c0_128], %217 {strides = array<i32>} : memref<216x512xf32, #tpu.memory_space<vmem>>, vector<8x512xf32>,
    %c8_i32_129 = arith.constant 8 : i32
    %219 = tpu.dynamic_rotate %168 by %c8_i32_129 dim 1 : vector<8x512xf32>, i32 -> vector<8x512xf32>
    %c10_130 = arith.constant 10 : index
    %c0_131 = arith.constant 0 : index
    %220 = vector.load %arg2[%c10_130, %c0_131] : memref<27x512xf32, #tpu.memory_space<vmem>>, vector<1x512xf32>
    %221 = vector.broadcast %220 : vector<1x512xf32> to vector<8x512xf32>
    %222 = arith.mulf %219, %221 : vector<8x512xf32>
    %c80_132 = arith.constant 80 : index
    %c0_133 = arith.constant 0 : index
    %223 = vector.load %arg10[%c80_132, %c0_133] : memref<216x512xf32, #tpu.memory_space<vmem>>, vector<8x512xf32>
    tpu.vector_store %arg10[%c80_132, %c0_133], %222 {strides = array<i32>} : memref<216x512xf32, #tpu.memory_space<vmem>>, vector<8x512xf32>,
    %c7_i32_134 = arith.constant 7 : i32
    %224 = tpu.dynamic_rotate %168 by %c7_i32_134 dim 1 : vector<8x512xf32>, i32 -> vector<8x512xf32>
    %c11_135 = arith.constant 11 : index
    %c0_136 = arith.constant 0 : index
    %225 = vector.load %arg2[%c11_135, %c0_136] : memref<27x512xf32, #tpu.memory_space<vmem>>, vector<1x512xf32>
    %226 = vector.broadcast %225 : vector<1x512xf32> to vector<8x512xf32>
    %227 = arith.mulf %224, %226 : vector<8x512xf32>
    %c88_137 = arith.constant 88 : index
    %c0_138 = arith.constant 0 : index
    %228 = vector.load %arg10[%c88_137, %c0_138] : memref<216x512xf32, #tpu.memory_space<vmem>>, vector<8x512xf32>
    tpu.vector_store %arg10[%c88_137, %c0_138], %227 {strides = array<i32>} : memref<216x512xf32, #tpu.memory_space<vmem>>, vector<8x512xf32>,
    %c1_i32_139 = arith.constant 1 : i32
    %229 = tpu.dynamic_rotate %168 by %c1_i32_139 dim 1 : vector<8x512xf32>, i32 -> vector<8x512xf32>
    %c12_140 = arith.constant 12 : index
    %c0_141 = arith.constant 0 : index
    %230 = vector.load %arg2[%c12_140, %c0_141] : memref<27x512xf32, #tpu.memory_space<vmem>>, vector<1x512xf32>
    %231 = vector.broadcast %230 : vector<1x512xf32> to vector<8x512xf32>
    %232 = arith.mulf %229, %231 : vector<8x512xf32>
    %c96_142 = arith.constant 96 : index
    %c0_143 = arith.constant 0 : index
    %233 = vector.load %arg10[%c96_142, %c0_143] : memref<216x512xf32, #tpu.memory_space<vmem>>, vector<8x512xf32>
    tpu.vector_store %arg10[%c96_142, %c0_143], %232 {strides = array<i32>} : memref<216x512xf32, #tpu.memory_space<vmem>>, vector<8x512xf32>,
    %c13_144 = arith.constant 13 : index
    %c0_145 = arith.constant 0 : index
    %234 = vector.load %arg2[%c13_144, %c0_145] : memref<27x512xf32, #tpu.memory_space<vmem>>, vector<1x512xf32>
    %235 = vector.broadcast %234 : vector<1x512xf32> to vector<8x512xf32>
    %236 = arith.mulf %168, %235 : vector<8x512xf32>
    %c104_146 = arith.constant 104 : index
    %c0_147 = arith.constant 0 : index
    %237 = vector.load %arg10[%c104_146, %c0_147] : memref<216x512xf32, #tpu.memory_space<vmem>>, vector<8x512xf32>
    tpu.vector_store %arg10[%c104_146, %c0_147], %236 {strides = array<i32>} : memref<216x512xf32, #tpu.memory_space<vmem>>, vector<8x512xf32>,
    %c511_i32_148 = arith.constant 511 : i32
    %238 = tpu.dynamic_rotate %168 by %c511_i32_148 dim 1 : vector<8x512xf32>, i32 -> vector<8x512xf32>
    %c14_149 = arith.constant 14 : index
    %c0_150 = arith.constant 0 : index
    %239 = vector.load %arg2[%c14_149, %c0_150] : memref<27x512xf32, #tpu.memory_space<vmem>>, vector<1x512xf32>
    %240 = vector.broadcast %239 : vector<1x512xf32> to vector<8x512xf32>
    %241 = arith.mulf %238, %240 : vector<8x512xf32>
    %c112_151 = arith.constant 112 : index
    %c0_152 = arith.constant 0 : index
    %242 = vector.load %arg10[%c112_151, %c0_152] : memref<216x512xf32, #tpu.memory_space<vmem>>, vector<8x512xf32>
    tpu.vector_store %arg10[%c112_151, %c0_152], %241 {strides = array<i32>} : memref<216x512xf32, #tpu.memory_space<vmem>>, vector<8x512xf32>,
    %c505_i32_153 = arith.constant 505 : i32
    %243 = tpu.dynamic_rotate %168 by %c505_i32_153 dim 1 : vector<8x512xf32>, i32 -> vector<8x512xf32>
    %c15_154 = arith.constant 15 : index
    %c0_155 = arith.constant 0 : index
    %244 = vector.load %arg2[%c15_154, %c0_155] : memref<27x512xf32, #tpu.memory_space<vmem>>, vector<1x512xf32>
    %245 = vector.broadcast %244 : vector<1x512xf32> to vector<8x512xf32>
    %246 = arith.mulf %243, %245 : vector<8x512xf32>
    %c120_156 = arith.constant 120 : index
    %c0_157 = arith.constant 0 : index
    %247 = vector.load %arg10[%c120_156, %c0_157] : memref<216x512xf32, #tpu.memory_space<vmem>>, vector<8x512xf32>
    tpu.vector_store %arg10[%c120_156, %c0_157], %246 {strides = array<i32>} : memref<216x512xf32, #tpu.memory_space<vmem>>, vector<8x512xf32>,
    %c504_i32_158 = arith.constant 504 : i32
    %248 = tpu.dynamic_rotate %168 by %c504_i32_158 dim 1 : vector<8x512xf32>, i32 -> vector<8x512xf32>
    %c16_159 = arith.constant 16 : index
    %c0_160 = arith.constant 0 : index
    %249 = vector.load %arg2[%c16_159, %c0_160] : memref<27x512xf32, #tpu.memory_space<vmem>>, vector<1x512xf32>
    %250 = vector.broadcast %249 : vector<1x512xf32> to vector<8x512xf32>
    %251 = arith.mulf %248, %250 : vector<8x512xf32>
    %c128_161 = arith.constant 128 : index
    %c0_162 = arith.constant 0 : index
    %252 = vector.load %arg10[%c128_161, %c0_162] : memref<216x512xf32, #tpu.memory_space<vmem>>, vector<8x512xf32>
    tpu.vector_store %arg10[%c128_161, %c0_162], %251 {strides = array<i32>} : memref<216x512xf32, #tpu.memory_space<vmem>>, vector<8x512xf32>,
    %c503_i32_163 = arith.constant 503 : i32
    %253 = tpu.dynamic_rotate %168 by %c503_i32_163 dim 1 : vector<8x512xf32>, i32 -> vector<8x512xf32>
    %c17_164 = arith.constant 17 : index
    %c0_165 = arith.constant 0 : index
    %254 = vector.load %arg2[%c17_164, %c0_165] : memref<27x512xf32, #tpu.memory_space<vmem>>, vector<1x512xf32>
    %255 = vector.broadcast %254 : vector<1x512xf32> to vector<8x512xf32>
    %256 = arith.mulf %253, %255 : vector<8x512xf32>
    %c136_166 = arith.constant 136 : index
    %c0_167 = arith.constant 0 : index
    %257 = vector.load %arg10[%c136_166, %c0_167] : memref<216x512xf32, #tpu.memory_space<vmem>>, vector<8x512xf32>
    tpu.vector_store %arg10[%c136_166, %c0_167], %256 {strides = array<i32>} : memref<216x512xf32, #tpu.memory_space<vmem>>, vector<8x512xf32>,
    %c457_i32_168 = arith.constant 457 : i32
    %258 = tpu.dynamic_rotate %168 by %c457_i32_168 dim 1 : vector<8x512xf32>, i32 -> vector<8x512xf32>
    %c18_169 = arith.constant 18 : index
    %c0_170 = arith.constant 0 : index
    %259 = vector.load %arg2[%c18_169, %c0_170] : memref<27x512xf32, #tpu.memory_space<vmem>>, vector<1x512xf32>
    %260 = vector.broadcast %259 : vector<1x512xf32> to vector<8x512xf32>
    %261 = arith.mulf %258, %260 : vector<8x512xf32>
    %c144_171 = arith.constant 144 : index
    %c0_172 = arith.constant 0 : index
    %262 = vector.load %arg10[%c144_171, %c0_172] : memref<216x512xf32, #tpu.memory_space<vmem>>, vector<8x512xf32>
    tpu.vector_store %arg10[%c144_171, %c0_172], %261 {strides = array<i32>} : memref<216x512xf32, #tpu.memory_space<vmem>>, vector<8x512xf32>,
    %c456_i32_173 = arith.constant 456 : i32
    %263 = tpu.dynamic_rotate %168 by %c456_i32_173 dim 1 : vector<8x512xf32>, i32 -> vector<8x512xf32>
    %c19_174 = arith.constant 19 : index
    %c0_175 = arith.constant 0 : index
    %264 = vector.load %arg2[%c19_174, %c0_175] : memref<27x512xf32, #tpu.memory_space<vmem>>, vector<1x512xf32>
    %265 = vector.broadcast %264 : vector<1x512xf32> to vector<8x512xf32>
    %266 = arith.mulf %263, %265 : vector<8x512xf32>
    %c152_176 = arith.constant 152 : index
    %c0_177 = arith.constant 0 : index
    %267 = vector.load %arg10[%c152_176, %c0_177] : memref<216x512xf32, #tpu.memory_space<vmem>>, vector<8x512xf32>
    tpu.vector_store %arg10[%c152_176, %c0_177], %266 {strides = array<i32>} : memref<216x512xf32, #tpu.memory_space<vmem>>, vector<8x512xf32>,
    %c455_i32_178 = arith.constant 455 : i32
    %268 = tpu.dynamic_rotate %168 by %c455_i32_178 dim 1 : vector<8x512xf32>, i32 -> vector<8x512xf32>
    %c20_179 = arith.constant 20 : index
    %c0_180 = arith.constant 0 : index
    %269 = vector.load %arg2[%c20_179, %c0_180] : memref<27x512xf32, #tpu.memory_space<vmem>>, vector<1x512xf32>
    %270 = vector.broadcast %269 : vector<1x512xf32> to vector<8x512xf32>
    %271 = arith.mulf %268, %270 : vector<8x512xf32>
    %c160_181 = arith.constant 160 : index
    %c0_182 = arith.constant 0 : index
    %272 = vector.load %arg10[%c160_181, %c0_182] : memref<216x512xf32, #tpu.memory_space<vmem>>, vector<8x512xf32>
    tpu.vector_store %arg10[%c160_181, %c0_182], %271 {strides = array<i32>} : memref<216x512xf32, #tpu.memory_space<vmem>>, vector<8x512xf32>,
    %c449_i32_183 = arith.constant 449 : i32
    %273 = tpu.dynamic_rotate %168 by %c449_i32_183 dim 1 : vector<8x512xf32>, i32 -> vector<8x512xf32>
    %c21_184 = arith.constant 21 : index
    %c0_185 = arith.constant 0 : index
    %274 = vector.load %arg2[%c21_184, %c0_185] : memref<27x512xf32, #tpu.memory_space<vmem>>, vector<1x512xf32>
    %275 = vector.broadcast %274 : vector<1x512xf32> to vector<8x512xf32>
    %276 = arith.mulf %273, %275 : vector<8x512xf32>
    %c168_186 = arith.constant 168 : index
    %c0_187 = arith.constant 0 : index
    %277 = vector.load %arg10[%c168_186, %c0_187] : memref<216x512xf32, #tpu.memory_space<vmem>>, vector<8x512xf32>
    tpu.vector_store %arg10[%c168_186, %c0_187], %276 {strides = array<i32>} : memref<216x512xf32, #tpu.memory_space<vmem>>, vector<8x512xf32>,
    %c448_i32_188 = arith.constant 448 : i32
    %278 = tpu.dynamic_rotate %168 by %c448_i32_188 dim 1 : vector<8x512xf32>, i32 -> vector<8x512xf32>
    %c22_189 = arith.constant 22 : index
    %c0_190 = arith.constant 0 : index
    %279 = vector.load %arg2[%c22_189, %c0_190] : memref<27x512xf32, #tpu.memory_space<vmem>>, vector<1x512xf32>
    %280 = vector.broadcast %279 : vector<1x512xf32> to vector<8x512xf32>
    %281 = arith.mulf %278, %280 : vector<8x512xf32>
    %c176_191 = arith.constant 176 : index
    %c0_192 = arith.constant 0 : index
    %282 = vector.load %arg10[%c176_191, %c0_192] : memref<216x512xf32, #tpu.memory_space<vmem>>, vector<8x512xf32>
    tpu.vector_store %arg10[%c176_191, %c0_192], %281 {strides = array<i32>} : memref<216x512xf32, #tpu.memory_space<vmem>>, vector<8x512xf32>,
    %c447_i32_193 = arith.constant 447 : i32
    %283 = tpu.dynamic_rotate %168 by %c447_i32_193 dim 1 : vector<8x512xf32>, i32 -> vector<8x512xf32>
    %c23_194 = arith.constant 23 : index
    %c0_195 = arith.constant 0 : index
    %284 = vector.load %arg2[%c23_194, %c0_195] : memref<27x512xf32, #tpu.memory_space<vmem>>, vector<1x512xf32>
    %285 = vector.broadcast %284 : vector<1x512xf32> to vector<8x512xf32>
    %286 = arith.mulf %283, %285 : vector<8x512xf32>
    %c184_196 = arith.constant 184 : index
    %c0_197 = arith.constant 0 : index
    %287 = vector.load %arg10[%c184_196, %c0_197] : memref<216x512xf32, #tpu.memory_space<vmem>>, vector<8x512xf32>
    tpu.vector_store %arg10[%c184_196, %c0_197], %286 {strides = array<i32>} : memref<216x512xf32, #tpu.memory_space<vmem>>, vector<8x512xf32>,
    %c441_i32_198 = arith.constant 441 : i32
    %288 = tpu.dynamic_rotate %168 by %c441_i32_198 dim 1 : vector<8x512xf32>, i32 -> vector<8x512xf32>
    %c24_199 = arith.constant 24 : index
    %c0_200 = arith.constant 0 : index
    %289 = vector.load %arg2[%c24_199, %c0_200] : memref<27x512xf32, #tpu.memory_space<vmem>>, vector<1x512xf32>
    %290 = vector.broadcast %289 : vector<1x512xf32> to vector<8x512xf32>
    %291 = arith.mulf %288, %290 : vector<8x512xf32>
    %c192_201 = arith.constant 192 : index
    %c0_202 = arith.constant 0 : index
    %292 = vector.load %arg10[%c192_201, %c0_202] : memref<216x512xf32, #tpu.memory_space<vmem>>, vector<8x512xf32>
    tpu.vector_store %arg10[%c192_201, %c0_202], %291 {strides = array<i32>} : memref<216x512xf32, #tpu.memory_space<vmem>>, vector<8x512xf32>,
    %c440_i32_203 = arith.constant 440 : i32
    %293 = tpu.dynamic_rotate %168 by %c440_i32_203 dim 1 : vector<8x512xf32>, i32 -> vector<8x512xf32>
    %c25_204 = arith.constant 25 : index
    %c0_205 = arith.constant 0 : index
    %294 = vector.load %arg2[%c25_204, %c0_205] : memref<27x512xf32, #tpu.memory_space<vmem>>, vector<1x512xf32>
    %295 = vector.broadcast %294 : vector<1x512xf32> to vector<8x512xf32>
    %296 = arith.mulf %293, %295 : vector<8x512xf32>
    %c200_206 = arith.constant 200 : index
    %c0_207 = arith.constant 0 : index
    %297 = vector.load %arg10[%c200_206, %c0_207] : memref<216x512xf32, #tpu.memory_space<vmem>>, vector<8x512xf32>
    tpu.vector_store %arg10[%c200_206, %c0_207], %296 {strides = array<i32>} : memref<216x512xf32, #tpu.memory_space<vmem>>, vector<8x512xf32>,
    %c439_i32_208 = arith.constant 439 : i32
    %298 = tpu.dynamic_rotate %168 by %c439_i32_208 dim 1 : vector<8x512xf32>, i32 -> vector<8x512xf32>
    %c26_209 = arith.constant 26 : index
    %c0_210 = arith.constant 0 : index
    %299 = vector.load %arg2[%c26_209, %c0_210] : memref<27x512xf32, #tpu.memory_space<vmem>>, vector<1x512xf32>
    %300 = vector.broadcast %299 : vector<1x512xf32> to vector<8x512xf32>
    %301 = arith.mulf %298, %300 : vector<8x512xf32>
    %c208_211 = arith.constant 208 : index
    %c0_212 = arith.constant 0 : index
    %302 = vector.load %arg10[%c208_211, %c0_212] : memref<216x512xf32, #tpu.memory_space<vmem>>, vector<8x512xf32>
    tpu.vector_store %arg10[%c208_211, %c0_212], %301 {strides = array<i32>} : memref<216x512xf32, #tpu.memory_space<vmem>>, vector<8x512xf32>,
    %c0_213 = arith.constant 0 : index
    %c0_214 = arith.constant 0 : index
    %303 = vector.load %arg5[%c0_213, %c0_214] : memref<8x216xf32, #tpu.memory_space<vmem>>, vector<8x216xf32>
    %c0_215 = arith.constant 0 : index
    %c0_216 = arith.constant 0 : index
    %304 = vector.load %arg10[%c0_215, %c0_216] : memref<216x512xf32, #tpu.memory_space<vmem>>, vector<216x512xf32>
    %cst_217 = arith.constant dense<0.000000e+00> : vector<8x512xf32>
    %305 = tpu.matmul %303, %304, %cst_217 {dimension_numbers = #tpu.dot_dimension_numbers<[1], [0], [0], [1], [0, 0, 1, 1], [], []>} : vector<8x216xf32>, vector<216x512xf32>, vector<8x512xf32> -> vector<8x512xf32>
    %c0_218 = arith.constant 0 : index
    %c0_219 = arith.constant 0 : index
    %306 = vector.load %arg6[%c0_218, %c0_219] : memref<8x1xf32, #tpu.memory_space<vmem>>, vector<8x1xf32>
    %307 = vector.broadcast %306 : vector<8x1xf32> to vector<8x512xf32>
    %308 = arith.addf %305, %307 : vector<8x512xf32>
    %cst_220 = arith.constant dense<0.000000e+00> : vector<8xf32>
    %309 = vector.multi_reduction <add>, %308, %cst_220 [1] : vector<8x512xf32> to vector<8xf32>
    %310 = vector.shape_cast %309 : vector<8xf32> to vector<8x1xf32>
    %cst_221 = arith.constant 5.120000e+02 : f32
    %311 = vector.broadcast %cst_221 : f32 to vector<8x1xf32>
    %312 = arith.divf %310, %311 : vector<8x1xf32>
    %313 = vector.broadcast %312 : vector<8x1xf32> to vector<8x512xf32>
    %314 = arith.subf %308, %313 : vector<8x512xf32>
    %315 = arith.mulf %314, %314 : vector<8x512xf32>
    %cst_222 = arith.constant dense<0.000000e+00> : vector<8xf32>
    %316 = vector.multi_reduction <add>, %315, %cst_222 [1] : vector<8x512xf32> to vector<8xf32>
    %317 = vector.shape_cast %316 : vector<8xf32> to vector<8x1xf32>
    %cst_223 = arith.constant 5.120000e+02 : f32
    %318 = vector.broadcast %cst_223 : f32 to vector<8x1xf32>
    %319 = arith.divf %317, %318 : vector<8x1xf32>
    %cst_224 = arith.constant 9.99999974E-6 : f32
    %320 = vector.broadcast %cst_224 : f32 to vector<8x1xf32>
    %321 = arith.addf %319, %320 : vector<8x1xf32>
    %322 = math.rsqrt %321 : vector<8x1xf32>
    %323 = vector.broadcast %322 : vector<8x1xf32> to vector<8x512xf32>
    %324 = arith.mulf %314, %323 : vector<8x512xf32>
    %cst_225 = arith.constant 0.000000e+00 : f32
    %325 = vector.broadcast %cst_225 : f32 to vector<8x512xf32>
    %326 = arith.cmpf oge, %324, %325 : vector<8x512xf32>
    %cst_226 = arith.constant 0.00999999977 : f32
    %327 = vector.broadcast %cst_226 : f32 to vector<8x512xf32>
    %328 = arith.mulf %327, %324 : vector<8x512xf32>
    %329 = arith.select %326, %324, %328 : vector<8x512xi1>, vector<8x512xf32>
    %330 = arith.addf %329, %6 : vector<8x512xf32>
    %c73_i32_227 = arith.constant 73 : i32
    %331 = tpu.dynamic_rotate %330 by %c73_i32_227 dim 1 : vector<8x512xf32>, i32 -> vector<8x512xf32>
    %c0_228 = arith.constant 0 : index
    %c0_229 = arith.constant 0 : index
    %332 = vector.load %arg2[%c0_228, %c0_229] : memref<27x512xf32, #tpu.memory_space<vmem>>, vector<1x512xf32>
    %333 = vector.broadcast %332 : vector<1x512xf32> to vector<8x512xf32>
    %334 = arith.mulf %331, %333 : vector<8x512xf32>
    %c0_230 = arith.constant 0 : index
    %c0_231 = arith.constant 0 : index
    %335 = vector.load %arg10[%c0_230, %c0_231] : memref<216x512xf32, #tpu.memory_space<vmem>>, vector<8x512xf32>
    tpu.vector_store %arg10[%c0_230, %c0_231], %334 {strides = array<i32>} : memref<216x512xf32, #tpu.memory_space<vmem>>, vector<8x512xf32>,
    %c72_i32_232 = arith.constant 72 : i32
    %336 = tpu.dynamic_rotate %330 by %c72_i32_232 dim 1 : vector<8x512xf32>, i32 -> vector<8x512xf32>
    %c1_233 = arith.constant 1 : index
    %c0_234 = arith.constant 0 : index
    %337 = vector.load %arg2[%c1_233, %c0_234] : memref<27x512xf32, #tpu.memory_space<vmem>>, vector<1x512xf32>
    %338 = vector.broadcast %337 : vector<1x512xf32> to vector<8x512xf32>
    %339 = arith.mulf %336, %338 : vector<8x512xf32>
    %c8_235 = arith.constant 8 : index
    %c0_236 = arith.constant 0 : index
    %340 = vector.load %arg10[%c8_235, %c0_236] : memref<216x512xf32, #tpu.memory_space<vmem>>, vector<8x512xf32>
    tpu.vector_store %arg10[%c8_235, %c0_236], %339 {strides = array<i32>} : memref<216x512xf32, #tpu.memory_space<vmem>>, vector<8x512xf32>,
    %c71_i32_237 = arith.constant 71 : i32
    %341 = tpu.dynamic_rotate %330 by %c71_i32_237 dim 1 : vector<8x512xf32>, i32 -> vector<8x512xf32>
    %c2_238 = arith.constant 2 : index
    %c0_239 = arith.constant 0 : index
    %342 = vector.load %arg2[%c2_238, %c0_239] : memref<27x512xf32, #tpu.memory_space<vmem>>, vector<1x512xf32>
    %343 = vector.broadcast %342 : vector<1x512xf32> to vector<8x512xf32>
    %344 = arith.mulf %341, %343 : vector<8x512xf32>
    %c16_240 = arith.constant 16 : index
    %c0_241 = arith.constant 0 : index
    %345 = vector.load %arg10[%c16_240, %c0_241] : memref<216x512xf32, #tpu.memory_space<vmem>>, vector<8x512xf32>
    tpu.vector_store %arg10[%c16_240, %c0_241], %344 {strides = array<i32>} : memref<216x512xf32, #tpu.memory_space<vmem>>, vector<8x512xf32>,
    %c65_i32_242 = arith.constant 65 : i32
    %346 = tpu.dynamic_rotate %330 by %c65_i32_242 dim 1 : vector<8x512xf32>, i32 -> vector<8x512xf32>
    %c3_243 = arith.constant 3 : index
    %c0_244 = arith.constant 0 : index
    %347 = vector.load %arg2[%c3_243, %c0_244] : memref<27x512xf32, #tpu.memory_space<vmem>>, vector<1x512xf32>
    %348 = vector.broadcast %347 : vector<1x512xf32> to vector<8x512xf32>
    %349 = arith.mulf %346, %348 : vector<8x512xf32>
    %c24_245 = arith.constant 24 : index
    %c0_246 = arith.constant 0 : index
    %350 = vector.load %arg10[%c24_245, %c0_246] : memref<216x512xf32, #tpu.memory_space<vmem>>, vector<8x512xf32>
    tpu.vector_store %arg10[%c24_245, %c0_246], %349 {strides = array<i32>} : memref<216x512xf32, #tpu.memory_space<vmem>>, vector<8x512xf32>,
    %c64_i32_247 = arith.constant 64 : i32
    %351 = tpu.dynamic_rotate %330 by %c64_i32_247 dim 1 : vector<8x512xf32>, i32 -> vector<8x512xf32>
    %c4_248 = arith.constant 4 : index
    %c0_249 = arith.constant 0 : index
    %352 = vector.load %arg2[%c4_248, %c0_249] : memref<27x512xf32, #tpu.memory_space<vmem>>, vector<1x512xf32>
    %353 = vector.broadcast %352 : vector<1x512xf32> to vector<8x512xf32>
    %354 = arith.mulf %351, %353 : vector<8x512xf32>
    %c32_250 = arith.constant 32 : index
    %c0_251 = arith.constant 0 : index
    %355 = vector.load %arg10[%c32_250, %c0_251] : memref<216x512xf32, #tpu.memory_space<vmem>>, vector<8x512xf32>
    tpu.vector_store %arg10[%c32_250, %c0_251], %354 {strides = array<i32>} : memref<216x512xf32, #tpu.memory_space<vmem>>, vector<8x512xf32>,
    %c63_i32_252 = arith.constant 63 : i32
    %356 = tpu.dynamic_rotate %330 by %c63_i32_252 dim 1 : vector<8x512xf32>, i32 -> vector<8x512xf32>
    %c5_253 = arith.constant 5 : index
    %c0_254 = arith.constant 0 : index
    %357 = vector.load %arg2[%c5_253, %c0_254] : memref<27x512xf32, #tpu.memory_space<vmem>>, vector<1x512xf32>
    %358 = vector.broadcast %357 : vector<1x512xf32> to vector<8x512xf32>
    %359 = arith.mulf %356, %358 : vector<8x512xf32>
    %c40_255 = arith.constant 40 : index
    %c0_256 = arith.constant 0 : index
    %360 = vector.load %arg10[%c40_255, %c0_256] : memref<216x512xf32, #tpu.memory_space<vmem>>, vector<8x512xf32>
    tpu.vector_store %arg10[%c40_255, %c0_256], %359 {strides = array<i32>} : memref<216x512xf32, #tpu.memory_space<vmem>>, vector<8x512xf32>,
    %c57_i32_257 = arith.constant 57 : i32
    %361 = tpu.dynamic_rotate %330 by %c57_i32_257 dim 1 : vector<8x512xf32>, i32 -> vector<8x512xf32>
    %c6_258 = arith.constant 6 : index
    %c0_259 = arith.constant 0 : index
    %362 = vector.load %arg2[%c6_258, %c0_259] : memref<27x512xf32, #tpu.memory_space<vmem>>, vector<1x512xf32>
    %363 = vector.broadcast %362 : vector<1x512xf32> to vector<8x512xf32>
    %364 = arith.mulf %361, %363 : vector<8x512xf32>
    %c48_260 = arith.constant 48 : index
    %c0_261 = arith.constant 0 : index
    %365 = vector.load %arg10[%c48_260, %c0_261] : memref<216x512xf32, #tpu.memory_space<vmem>>, vector<8x512xf32>
    tpu.vector_store %arg10[%c48_260, %c0_261], %364 {strides = array<i32>} : memref<216x512xf32, #tpu.memory_space<vmem>>, vector<8x512xf32>,
    %c56_i32_262 = arith.constant 56 : i32
    %366 = tpu.dynamic_rotate %330 by %c56_i32_262 dim 1 : vector<8x512xf32>, i32 -> vector<8x512xf32>
    %c7_263 = arith.constant 7 : index
    %c0_264 = arith.constant 0 : index
    %367 = vector.load %arg2[%c7_263, %c0_264] : memref<27x512xf32, #tpu.memory_space<vmem>>, vector<1x512xf32>
    %368 = vector.broadcast %367 : vector<1x512xf32> to vector<8x512xf32>
    %369 = arith.mulf %366, %368 : vector<8x512xf32>
    %c56_265 = arith.constant 56 : index
    %c0_266 = arith.constant 0 : index
    %370 = vector.load %arg10[%c56_265, %c0_266] : memref<216x512xf32, #tpu.memory_space<vmem>>, vector<8x512xf32>
    tpu.vector_store %arg10[%c56_265, %c0_266], %369 {strides = array<i32>} : memref<216x512xf32, #tpu.memory_space<vmem>>, vector<8x512xf32>,
    %c55_i32_267 = arith.constant 55 : i32
    %371 = tpu.dynamic_rotate %330 by %c55_i32_267 dim 1 : vector<8x512xf32>, i32 -> vector<8x512xf32>
    %c8_268 = arith.constant 8 : index
    %c0_269 = arith.constant 0 : index
    %372 = vector.load %arg2[%c8_268, %c0_269] : memref<27x512xf32, #tpu.memory_space<vmem>>, vector<1x512xf32>
    %373 = vector.broadcast %372 : vector<1x512xf32> to vector<8x512xf32>
    %374 = arith.mulf %371, %373 : vector<8x512xf32>
    %c64_270 = arith.constant 64 : index
    %c0_271 = arith.constant 0 : index
    %375 = vector.load %arg10[%c64_270, %c0_271] : memref<216x512xf32, #tpu.memory_space<vmem>>, vector<8x512xf32>
    tpu.vector_store %arg10[%c64_270, %c0_271], %374 {strides = array<i32>} : memref<216x512xf32, #tpu.memory_space<vmem>>, vector<8x512xf32>,
    %c9_i32_272 = arith.constant 9 : i32
    %376 = tpu.dynamic_rotate %330 by %c9_i32_272 dim 1 : vector<8x512xf32>, i32 -> vector<8x512xf32>
    %c9_273 = arith.constant 9 : index
    %c0_274 = arith.constant 0 : index
    %377 = vector.load %arg2[%c9_273, %c0_274] : memref<27x512xf32, #tpu.memory_space<vmem>>, vector<1x512xf32>
    %378 = vector.broadcast %377 : vector<1x512xf32> to vector<8x512xf32>
    %379 = arith.mulf %376, %378 : vector<8x512xf32>
    %c72_275 = arith.constant 72 : index
    %c0_276 = arith.constant 0 : index
    %380 = vector.load %arg10[%c72_275, %c0_276] : memref<216x512xf32, #tpu.memory_space<vmem>>, vector<8x512xf32>
    tpu.vector_store %arg10[%c72_275, %c0_276], %379 {strides = array<i32>} : memref<216x512xf32, #tpu.memory_space<vmem>>, vector<8x512xf32>,
    %c8_i32_277 = arith.constant 8 : i32
    %381 = tpu.dynamic_rotate %330 by %c8_i32_277 dim 1 : vector<8x512xf32>, i32 -> vector<8x512xf32>
    %c10_278 = arith.constant 10 : index
    %c0_279 = arith.constant 0 : index
    %382 = vector.load %arg2[%c10_278, %c0_279] : memref<27x512xf32, #tpu.memory_space<vmem>>, vector<1x512xf32>
    %383 = vector.broadcast %382 : vector<1x512xf32> to vector<8x512xf32>
    %384 = arith.mulf %381, %383 : vector<8x512xf32>
    %c80_280 = arith.constant 80 : index
    %c0_281 = arith.constant 0 : index
    %385 = vector.load %arg10[%c80_280, %c0_281] : memref<216x512xf32, #tpu.memory_space<vmem>>, vector<8x512xf32>
    tpu.vector_store %arg10[%c80_280, %c0_281], %384 {strides = array<i32>} : memref<216x512xf32, #tpu.memory_space<vmem>>, vector<8x512xf32>,
    %c7_i32_282 = arith.constant 7 : i32
    %386 = tpu.dynamic_rotate %330 by %c7_i32_282 dim 1 : vector<8x512xf32>, i32 -> vector<8x512xf32>
    %c11_283 = arith.constant 11 : index
    %c0_284 = arith.constant 0 : index
    %387 = vector.load %arg2[%c11_283, %c0_284] : memref<27x512xf32, #tpu.memory_space<vmem>>, vector<1x512xf32>
    %388 = vector.broadcast %387 : vector<1x512xf32> to vector<8x512xf32>
    %389 = arith.mulf %386, %388 : vector<8x512xf32>
    %c88_285 = arith.constant 88 : index
    %c0_286 = arith.constant 0 : index
    %390 = vector.load %arg10[%c88_285, %c0_286] : memref<216x512xf32, #tpu.memory_space<vmem>>, vector<8x512xf32>
    tpu.vector_store %arg10[%c88_285, %c0_286], %389 {strides = array<i32>} : memref<216x512xf32, #tpu.memory_space<vmem>>, vector<8x512xf32>,
    %c1_i32_287 = arith.constant 1 : i32
    %391 = tpu.dynamic_rotate %330 by %c1_i32_287 dim 1 : vector<8x512xf32>, i32 -> vector<8x512xf32>
    %c12_288 = arith.constant 12 : index
    %c0_289 = arith.constant 0 : index
    %392 = vector.load %arg2[%c12_288, %c0_289] : memref<27x512xf32, #tpu.memory_space<vmem>>, vector<1x512xf32>
    %393 = vector.broadcast %392 : vector<1x512xf32> to vector<8x512xf32>
    %394 = arith.mulf %391, %393 : vector<8x512xf32>
    %c96_290 = arith.constant 96 : index
    %c0_291 = arith.constant 0 : index
    %395 = vector.load %arg10[%c96_290, %c0_291] : memref<216x512xf32, #tpu.memory_space<vmem>>, vector<8x512xf32>
    tpu.vector_store %arg10[%c96_290, %c0_291], %394 {strides = array<i32>} : memref<216x512xf32, #tpu.memory_space<vmem>>, vector<8x512xf32>,
    %c13_292 = arith.constant 13 : index
    %c0_293 = arith.constant 0 : index
    %396 = vector.load %arg2[%c13_292, %c0_293] : memref<27x512xf32, #tpu.memory_space<vmem>>, vector<1x512xf32>
    %397 = vector.broadcast %396 : vector<1x512xf32> to vector<8x512xf32>
    %398 = arith.mulf %330, %397 : vector<8x512xf32>
    %c104_294 = arith.constant 104 : index
    %c0_295 = arith.constant 0 : index
    %399 = vector.load %arg10[%c104_294, %c0_295] : memref<216x512xf32, #tpu.memory_space<vmem>>, vector<8x512xf32>
    tpu.vector_store %arg10[%c104_294, %c0_295], %398 {strides = array<i32>} : memref<216x512xf32, #tpu.memory_space<vmem>>, vector<8x512xf32>,
    %c511_i32_296 = arith.constant 511 : i32
    %400 = tpu.dynamic_rotate %330 by %c511_i32_296 dim 1 : vector<8x512xf32>, i32 -> vector<8x512xf32>
    %c14_297 = arith.constant 14 : index
    %c0_298 = arith.constant 0 : index
    %401 = vector.load %arg2[%c14_297, %c0_298] : memref<27x512xf32, #tpu.memory_space<vmem>>, vector<1x512xf32>
    %402 = vector.broadcast %401 : vector<1x512xf32> to vector<8x512xf32>
    %403 = arith.mulf %400, %402 : vector<8x512xf32>
    %c112_299 = arith.constant 112 : index
    %c0_300 = arith.constant 0 : index
    %404 = vector.load %arg10[%c112_299, %c0_300] : memref<216x512xf32, #tpu.memory_space<vmem>>, vector<8x512xf32>
    tpu.vector_store %arg10[%c112_299, %c0_300], %403 {strides = array<i32>} : memref<216x512xf32, #tpu.memory_space<vmem>>, vector<8x512xf32>,
    %c505_i32_301 = arith.constant 505 : i32
    %405 = tpu.dynamic_rotate %330 by %c505_i32_301 dim 1 : vector<8x512xf32>, i32 -> vector<8x512xf32>
    %c15_302 = arith.constant 15 : index
    %c0_303 = arith.constant 0 : index
    %406 = vector.load %arg2[%c15_302, %c0_303] : memref<27x512xf32, #tpu.memory_space<vmem>>, vector<1x512xf32>
    %407 = vector.broadcast %406 : vector<1x512xf32> to vector<8x512xf32>
    %408 = arith.mulf %405, %407 : vector<8x512xf32>
    %c120_304 = arith.constant 120 : index
    %c0_305 = arith.constant 0 : index
    %409 = vector.load %arg10[%c120_304, %c0_305] : memref<216x512xf32, #tpu.memory_space<vmem>>, vector<8x512xf32>
    tpu.vector_store %arg10[%c120_304, %c0_305], %408 {strides = array<i32>} : memref<216x512xf32, #tpu.memory_space<vmem>>, vector<8x512xf32>,
    %c504_i32_306 = arith.constant 504 : i32
    %410 = tpu.dynamic_rotate %330 by %c504_i32_306 dim 1 : vector<8x512xf32>, i32 -> vector<8x512xf32>
    %c16_307 = arith.constant 16 : index
    %c0_308 = arith.constant 0 : index
    %411 = vector.load %arg2[%c16_307, %c0_308] : memref<27x512xf32, #tpu.memory_space<vmem>>, vector<1x512xf32>
    %412 = vector.broadcast %411 : vector<1x512xf32> to vector<8x512xf32>
    %413 = arith.mulf %410, %412 : vector<8x512xf32>
    %c128_309 = arith.constant 128 : index
    %c0_310 = arith.constant 0 : index
    %414 = vector.load %arg10[%c128_309, %c0_310] : memref<216x512xf32, #tpu.memory_space<vmem>>, vector<8x512xf32>
    tpu.vector_store %arg10[%c128_309, %c0_310], %413 {strides = array<i32>} : memref<216x512xf32, #tpu.memory_space<vmem>>, vector<8x512xf32>,
    %c503_i32_311 = arith.constant 503 : i32
    %415 = tpu.dynamic_rotate %330 by %c503_i32_311 dim 1 : vector<8x512xf32>, i32 -> vector<8x512xf32>
    %c17_312 = arith.constant 17 : index
    %c0_313 = arith.constant 0 : index
    %416 = vector.load %arg2[%c17_312, %c0_313] : memref<27x512xf32, #tpu.memory_space<vmem>>, vector<1x512xf32>
    %417 = vector.broadcast %416 : vector<1x512xf32> to vector<8x512xf32>
    %418 = arith.mulf %415, %417 : vector<8x512xf32>
    %c136_314 = arith.constant 136 : index
    %c0_315 = arith.constant 0 : index
    %419 = vector.load %arg10[%c136_314, %c0_315] : memref<216x512xf32, #tpu.memory_space<vmem>>, vector<8x512xf32>
    tpu.vector_store %arg10[%c136_314, %c0_315], %418 {strides = array<i32>} : memref<216x512xf32, #tpu.memory_space<vmem>>, vector<8x512xf32>,
    %c457_i32_316 = arith.constant 457 : i32
    %420 = tpu.dynamic_rotate %330 by %c457_i32_316 dim 1 : vector<8x512xf32>, i32 -> vector<8x512xf32>
    %c18_317 = arith.constant 18 : index
    %c0_318 = arith.constant 0 : index
    %421 = vector.load %arg2[%c18_317, %c0_318] : memref<27x512xf32, #tpu.memory_space<vmem>>, vector<1x512xf32>
    %422 = vector.broadcast %421 : vector<1x512xf32> to vector<8x512xf32>
    %423 = arith.mulf %420, %422 : vector<8x512xf32>
    %c144_319 = arith.constant 144 : index
    %c0_320 = arith.constant 0 : index
    %424 = vector.load %arg10[%c144_319, %c0_320] : memref<216x512xf32, #tpu.memory_space<vmem>>, vector<8x512xf32>
    tpu.vector_store %arg10[%c144_319, %c0_320], %423 {strides = array<i32>} : memref<216x512xf32, #tpu.memory_space<vmem>>, vector<8x512xf32>,
    %c456_i32_321 = arith.constant 456 : i32
    %425 = tpu.dynamic_rotate %330 by %c456_i32_321 dim 1 : vector<8x512xf32>, i32 -> vector<8x512xf32>
    %c19_322 = arith.constant 19 : index
    %c0_323 = arith.constant 0 : index
    %426 = vector.load %arg2[%c19_322, %c0_323] : memref<27x512xf32, #tpu.memory_space<vmem>>, vector<1x512xf32>
    %427 = vector.broadcast %426 : vector<1x512xf32> to vector<8x512xf32>
    %428 = arith.mulf %425, %427 : vector<8x512xf32>
    %c152_324 = arith.constant 152 : index
    %c0_325 = arith.constant 0 : index
    %429 = vector.load %arg10[%c152_324, %c0_325] : memref<216x512xf32, #tpu.memory_space<vmem>>, vector<8x512xf32>
    tpu.vector_store %arg10[%c152_324, %c0_325], %428 {strides = array<i32>} : memref<216x512xf32, #tpu.memory_space<vmem>>, vector<8x512xf32>,
    %c455_i32_326 = arith.constant 455 : i32
    %430 = tpu.dynamic_rotate %330 by %c455_i32_326 dim 1 : vector<8x512xf32>, i32 -> vector<8x512xf32>
    %c20_327 = arith.constant 20 : index
    %c0_328 = arith.constant 0 : index
    %431 = vector.load %arg2[%c20_327, %c0_328] : memref<27x512xf32, #tpu.memory_space<vmem>>, vector<1x512xf32>
    %432 = vector.broadcast %431 : vector<1x512xf32> to vector<8x512xf32>
    %433 = arith.mulf %430, %432 : vector<8x512xf32>
    %c160_329 = arith.constant 160 : index
    %c0_330 = arith.constant 0 : index
    %434 = vector.load %arg10[%c160_329, %c0_330] : memref<216x512xf32, #tpu.memory_space<vmem>>, vector<8x512xf32>
    tpu.vector_store %arg10[%c160_329, %c0_330], %433 {strides = array<i32>} : memref<216x512xf32, #tpu.memory_space<vmem>>, vector<8x512xf32>,
    %c449_i32_331 = arith.constant 449 : i32
    %435 = tpu.dynamic_rotate %330 by %c449_i32_331 dim 1 : vector<8x512xf32>, i32 -> vector<8x512xf32>
    %c21_332 = arith.constant 21 : index
    %c0_333 = arith.constant 0 : index
    %436 = vector.load %arg2[%c21_332, %c0_333] : memref<27x512xf32, #tpu.memory_space<vmem>>, vector<1x512xf32>
    %437 = vector.broadcast %436 : vector<1x512xf32> to vector<8x512xf32>
    %438 = arith.mulf %435, %437 : vector<8x512xf32>
    %c168_334 = arith.constant 168 : index
    %c0_335 = arith.constant 0 : index
    %439 = vector.load %arg10[%c168_334, %c0_335] : memref<216x512xf32, #tpu.memory_space<vmem>>, vector<8x512xf32>
    tpu.vector_store %arg10[%c168_334, %c0_335], %438 {strides = array<i32>} : memref<216x512xf32, #tpu.memory_space<vmem>>, vector<8x512xf32>,
    %c448_i32_336 = arith.constant 448 : i32
    %440 = tpu.dynamic_rotate %330 by %c448_i32_336 dim 1 : vector<8x512xf32>, i32 -> vector<8x512xf32>
    %c22_337 = arith.constant 22 : index
    %c0_338 = arith.constant 0 : index
    %441 = vector.load %arg2[%c22_337, %c0_338] : memref<27x512xf32, #tpu.memory_space<vmem>>, vector<1x512xf32>
    %442 = vector.broadcast %441 : vector<1x512xf32> to vector<8x512xf32>
    %443 = arith.mulf %440, %442 : vector<8x512xf32>
    %c176_339 = arith.constant 176 : index
    %c0_340 = arith.constant 0 : index
    %444 = vector.load %arg10[%c176_339, %c0_340] : memref<216x512xf32, #tpu.memory_space<vmem>>, vector<8x512xf32>
    tpu.vector_store %arg10[%c176_339, %c0_340], %443 {strides = array<i32>} : memref<216x512xf32, #tpu.memory_space<vmem>>, vector<8x512xf32>,
    %c447_i32_341 = arith.constant 447 : i32
    %445 = tpu.dynamic_rotate %330 by %c447_i32_341 dim 1 : vector<8x512xf32>, i32 -> vector<8x512xf32>
    %c23_342 = arith.constant 23 : index
    %c0_343 = arith.constant 0 : index
    %446 = vector.load %arg2[%c23_342, %c0_343] : memref<27x512xf32, #tpu.memory_space<vmem>>, vector<1x512xf32>
    %447 = vector.broadcast %446 : vector<1x512xf32> to vector<8x512xf32>
    %448 = arith.mulf %445, %447 : vector<8x512xf32>
    %c184_344 = arith.constant 184 : index
    %c0_345 = arith.constant 0 : index
    %449 = vector.load %arg10[%c184_344, %c0_345] : memref<216x512xf32, #tpu.memory_space<vmem>>, vector<8x512xf32>
    tpu.vector_store %arg10[%c184_344, %c0_345], %448 {strides = array<i32>} : memref<216x512xf32, #tpu.memory_space<vmem>>, vector<8x512xf32>,
    %c441_i32_346 = arith.constant 441 : i32
    %450 = tpu.dynamic_rotate %330 by %c441_i32_346 dim 1 : vector<8x512xf32>, i32 -> vector<8x512xf32>
    %c24_347 = arith.constant 24 : index
    %c0_348 = arith.constant 0 : index
    %451 = vector.load %arg2[%c24_347, %c0_348] : memref<27x512xf32, #tpu.memory_space<vmem>>, vector<1x512xf32>
    %452 = vector.broadcast %451 : vector<1x512xf32> to vector<8x512xf32>
    %453 = arith.mulf %450, %452 : vector<8x512xf32>
    %c192_349 = arith.constant 192 : index
    %c0_350 = arith.constant 0 : index
    %454 = vector.load %arg10[%c192_349, %c0_350] : memref<216x512xf32, #tpu.memory_space<vmem>>, vector<8x512xf32>
    tpu.vector_store %arg10[%c192_349, %c0_350], %453 {strides = array<i32>} : memref<216x512xf32, #tpu.memory_space<vmem>>, vector<8x512xf32>,
    %c440_i32_351 = arith.constant 440 : i32
    %455 = tpu.dynamic_rotate %330 by %c440_i32_351 dim 1 : vector<8x512xf32>, i32 -> vector<8x512xf32>
    %c25_352 = arith.constant 25 : index
    %c0_353 = arith.constant 0 : index
    %456 = vector.load %arg2[%c25_352, %c0_353] : memref<27x512xf32, #tpu.memory_space<vmem>>, vector<1x512xf32>
    %457 = vector.broadcast %456 : vector<1x512xf32> to vector<8x512xf32>
    %458 = arith.mulf %455, %457 : vector<8x512xf32>
    %c200_354 = arith.constant 200 : index
    %c0_355 = arith.constant 0 : index
    %459 = vector.load %arg10[%c200_354, %c0_355] : memref<216x512xf32, #tpu.memory_space<vmem>>, vector<8x512xf32>
    tpu.vector_store %arg10[%c200_354, %c0_355], %458 {strides = array<i32>} : memref<216x512xf32, #tpu.memory_space<vmem>>, vector<8x512xf32>,
    %c439_i32_356 = arith.constant 439 : i32
    %460 = tpu.dynamic_rotate %330 by %c439_i32_356 dim 1 : vector<8x512xf32>, i32 -> vector<8x512xf32>
    %c26_357 = arith.constant 26 : index
    %c0_358 = arith.constant 0 : index
    %461 = vector.load %arg2[%c26_357, %c0_358] : memref<27x512xf32, #tpu.memory_space<vmem>>, vector<1x512xf32>
    %462 = vector.broadcast %461 : vector<1x512xf32> to vector<8x512xf32>
    %463 = arith.mulf %460, %462 : vector<8x512xf32>
    %c208_359 = arith.constant 208 : index
    %c0_360 = arith.constant 0 : index
    %464 = vector.load %arg10[%c208_359, %c0_360] : memref<216x512xf32, #tpu.memory_space<vmem>>, vector<8x512xf32>
    tpu.vector_store %arg10[%c208_359, %c0_360], %463 {strides = array<i32>} : memref<216x512xf32, #tpu.memory_space<vmem>>, vector<8x512xf32>,
    %c0_361 = arith.constant 0 : index
    %c0_362 = arith.constant 0 : index
    %465 = vector.load %arg5[%c0_361, %c0_362] : memref<8x216xf32, #tpu.memory_space<vmem>>, vector<8x216xf32>
    %c0_363 = arith.constant 0 : index
    %c0_364 = arith.constant 0 : index
    %466 = vector.load %arg10[%c0_363, %c0_364] : memref<216x512xf32, #tpu.memory_space<vmem>>, vector<216x512xf32>
    %cst_365 = arith.constant dense<0.000000e+00> : vector<8x512xf32>
    %467 = tpu.matmul %465, %466, %cst_365 {dimension_numbers = #tpu.dot_dimension_numbers<[1], [0], [0], [1], [0, 0, 1, 1], [], []>} : vector<8x216xf32>, vector<216x512xf32>, vector<8x512xf32> -> vector<8x512xf32>
    %c0_366 = arith.constant 0 : index
    %c0_367 = arith.constant 0 : index
    %468 = vector.load %arg6[%c0_366, %c0_367] : memref<8x1xf32, #tpu.memory_space<vmem>>, vector<8x1xf32>
    %469 = vector.broadcast %468 : vector<8x1xf32> to vector<8x512xf32>
    %470 = arith.addf %467, %469 : vector<8x512xf32>
    %cst_368 = arith.constant dense<0.000000e+00> : vector<8xf32>
    %471 = vector.multi_reduction <add>, %470, %cst_368 [1] : vector<8x512xf32> to vector<8xf32>
    %472 = vector.shape_cast %471 : vector<8xf32> to vector<8x1xf32>
    %cst_369 = arith.constant 5.120000e+02 : f32
    %473 = vector.broadcast %cst_369 : f32 to vector<8x1xf32>
    %474 = arith.divf %472, %473 : vector<8x1xf32>
    %475 = vector.broadcast %474 : vector<8x1xf32> to vector<8x512xf32>
    %476 = arith.subf %470, %475 : vector<8x512xf32>
    %477 = arith.mulf %476, %476 : vector<8x512xf32>
    %cst_370 = arith.constant dense<0.000000e+00> : vector<8xf32>
    %478 = vector.multi_reduction <add>, %477, %cst_370 [1] : vector<8x512xf32> to vector<8xf32>
    %479 = vector.shape_cast %478 : vector<8xf32> to vector<8x1xf32>
    %cst_371 = arith.constant 5.120000e+02 : f32
    %480 = vector.broadcast %cst_371 : f32 to vector<8x1xf32>
    %481 = arith.divf %479, %480 : vector<8x1xf32>
    %cst_372 = arith.constant 9.99999974E-6 : f32
    %482 = vector.broadcast %cst_372 : f32 to vector<8x1xf32>
    %483 = arith.addf %481, %482 : vector<8x1xf32>
    %484 = math.rsqrt %483 : vector<8x1xf32>
    %485 = vector.broadcast %484 : vector<8x1xf32> to vector<8x512xf32>
    %486 = arith.mulf %476, %485 : vector<8x512xf32>
    %cst_373 = arith.constant 0.000000e+00 : f32
    %487 = vector.broadcast %cst_373 : f32 to vector<8x512xf32>
    %488 = arith.cmpf oge, %486, %487 : vector<8x512xf32>
    %cst_374 = arith.constant 0.00999999977 : f32
    %489 = vector.broadcast %cst_374 : f32 to vector<8x512xf32>
    %490 = arith.mulf %489, %486 : vector<8x512xf32>
    %491 = arith.select %488, %486, %490 : vector<8x512xi1>, vector<8x512xf32>
    %c73_i32_375 = arith.constant 73 : i32
    %492 = tpu.dynamic_rotate %491 by %c73_i32_375 dim 1 : vector<8x512xf32>, i32 -> vector<8x512xf32>
    %c0_376 = arith.constant 0 : index
    %c0_377 = arith.constant 0 : index
    %493 = vector.load %arg2[%c0_376, %c0_377] : memref<27x512xf32, #tpu.memory_space<vmem>>, vector<1x512xf32>
    %494 = vector.broadcast %493 : vector<1x512xf32> to vector<8x512xf32>
    %495 = arith.mulf %492, %494 : vector<8x512xf32>
    %c0_378 = arith.constant 0 : index
    %c0_379 = arith.constant 0 : index
    %496 = vector.load %arg10[%c0_378, %c0_379] : memref<216x512xf32, #tpu.memory_space<vmem>>, vector<8x512xf32>
    tpu.vector_store %arg10[%c0_378, %c0_379], %495 {strides = array<i32>} : memref<216x512xf32, #tpu.memory_space<vmem>>, vector<8x512xf32>,
    %c72_i32_380 = arith.constant 72 : i32
    %497 = tpu.dynamic_rotate %491 by %c72_i32_380 dim 1 : vector<8x512xf32>, i32 -> vector<8x512xf32>
    %c1_381 = arith.constant 1 : index
    %c0_382 = arith.constant 0 : index
    %498 = vector.load %arg2[%c1_381, %c0_382] : memref<27x512xf32, #tpu.memory_space<vmem>>, vector<1x512xf32>
    %499 = vector.broadcast %498 : vector<1x512xf32> to vector<8x512xf32>
    %500 = arith.mulf %497, %499 : vector<8x512xf32>
    %c8_383 = arith.constant 8 : index
    %c0_384 = arith.constant 0 : index
    %501 = vector.load %arg10[%c8_383, %c0_384] : memref<216x512xf32, #tpu.memory_space<vmem>>, vector<8x512xf32>
    tpu.vector_store %arg10[%c8_383, %c0_384], %500 {strides = array<i32>} : memref<216x512xf32, #tpu.memory_space<vmem>>, vector<8x512xf32>,
    %c71_i32_385 = arith.constant 71 : i32
    %502 = tpu.dynamic_rotate %491 by %c71_i32_385 dim 1 : vector<8x512xf32>, i32 -> vector<8x512xf32>
    %c2_386 = arith.constant 2 : index
    %c0_387 = arith.constant 0 : index
    %503 = vector.load %arg2[%c2_386, %c0_387] : memref<27x512xf32, #tpu.memory_space<vmem>>, vector<1x512xf32>
    %504 = vector.broadcast %503 : vector<1x512xf32> to vector<8x512xf32>
    %505 = arith.mulf %502, %504 : vector<8x512xf32>
    %c16_388 = arith.constant 16 : index
    %c0_389 = arith.constant 0 : index
    %506 = vector.load %arg10[%c16_388, %c0_389] : memref<216x512xf32, #tpu.memory_space<vmem>>, vector<8x512xf32>
    tpu.vector_store %arg10[%c16_388, %c0_389], %505 {strides = array<i32>} : memref<216x512xf32, #tpu.memory_space<vmem>>, vector<8x512xf32>,
    %c65_i32_390 = arith.constant 65 : i32
    %507 = tpu.dynamic_rotate %491 by %c65_i32_390 dim 1 : vector<8x512xf32>, i32 -> vector<8x512xf32>
    %c3_391 = arith.constant 3 : index
    %c0_392 = arith.constant 0 : index
    %508 = vector.load %arg2[%c3_391, %c0_392] : memref<27x512xf32, #tpu.memory_space<vmem>>, vector<1x512xf32>
    %509 = vector.broadcast %508 : vector<1x512xf32> to vector<8x512xf32>
    %510 = arith.mulf %507, %509 : vector<8x512xf32>
    %c24_393 = arith.constant 24 : index
    %c0_394 = arith.constant 0 : index
    %511 = vector.load %arg10[%c24_393, %c0_394] : memref<216x512xf32, #tpu.memory_space<vmem>>, vector<8x512xf32>
    tpu.vector_store %arg10[%c24_393, %c0_394], %510 {strides = array<i32>} : memref<216x512xf32, #tpu.memory_space<vmem>>, vector<8x512xf32>,
    %c64_i32_395 = arith.constant 64 : i32
    %512 = tpu.dynamic_rotate %491 by %c64_i32_395 dim 1 : vector<8x512xf32>, i32 -> vector<8x512xf32>
    %c4_396 = arith.constant 4 : index
    %c0_397 = arith.constant 0 : index
    %513 = vector.load %arg2[%c4_396, %c0_397] : memref<27x512xf32, #tpu.memory_space<vmem>>, vector<1x512xf32>
    %514 = vector.broadcast %513 : vector<1x512xf32> to vector<8x512xf32>
    %515 = arith.mulf %512, %514 : vector<8x512xf32>
    %c32_398 = arith.constant 32 : index
    %c0_399 = arith.constant 0 : index
    %516 = vector.load %arg10[%c32_398, %c0_399] : memref<216x512xf32, #tpu.memory_space<vmem>>, vector<8x512xf32>
    tpu.vector_store %arg10[%c32_398, %c0_399], %515 {strides = array<i32>} : memref<216x512xf32, #tpu.memory_space<vmem>>, vector<8x512xf32>,
    %c63_i32_400 = arith.constant 63 : i32
    %517 = tpu.dynamic_rotate %491 by %c63_i32_400 dim 1 : vector<8x512xf32>, i32 -> vector<8x512xf32>
    %c5_401 = arith.constant 5 : index
    %c0_402 = arith.constant 0 : index
    %518 = vector.load %arg2[%c5_401, %c0_402] : memref<27x512xf32, #tpu.memory_space<vmem>>, vector<1x512xf32>
    %519 = vector.broadcast %518 : vector<1x512xf32> to vector<8x512xf32>
    %520 = arith.mulf %517, %519 : vector<8x512xf32>
    %c40_403 = arith.constant 40 : index
    %c0_404 = arith.constant 0 : index
    %521 = vector.load %arg10[%c40_403, %c0_404] : memref<216x512xf32, #tpu.memory_space<vmem>>, vector<8x512xf32>
    tpu.vector_store %arg10[%c40_403, %c0_404], %520 {strides = array<i32>} : memref<216x512xf32, #tpu.memory_space<vmem>>, vector<8x512xf32>,
    %c57_i32_405 = arith.constant 57 : i32
    %522 = tpu.dynamic_rotate %491 by %c57_i32_405 dim 1 : vector<8x512xf32>, i32 -> vector<8x512xf32>
    %c6_406 = arith.constant 6 : index
    %c0_407 = arith.constant 0 : index
    %523 = vector.load %arg2[%c6_406, %c0_407] : memref<27x512xf32, #tpu.memory_space<vmem>>, vector<1x512xf32>
    %524 = vector.broadcast %523 : vector<1x512xf32> to vector<8x512xf32>
    %525 = arith.mulf %522, %524 : vector<8x512xf32>
    %c48_408 = arith.constant 48 : index
    %c0_409 = arith.constant 0 : index
    %526 = vector.load %arg10[%c48_408, %c0_409] : memref<216x512xf32, #tpu.memory_space<vmem>>, vector<8x512xf32>
    tpu.vector_store %arg10[%c48_408, %c0_409], %525 {strides = array<i32>} : memref<216x512xf32, #tpu.memory_space<vmem>>, vector<8x512xf32>,
    %c56_i32_410 = arith.constant 56 : i32
    %527 = tpu.dynamic_rotate %491 by %c56_i32_410 dim 1 : vector<8x512xf32>, i32 -> vector<8x512xf32>
    %c7_411 = arith.constant 7 : index
    %c0_412 = arith.constant 0 : index
    %528 = vector.load %arg2[%c7_411, %c0_412] : memref<27x512xf32, #tpu.memory_space<vmem>>, vector<1x512xf32>
    %529 = vector.broadcast %528 : vector<1x512xf32> to vector<8x512xf32>
    %530 = arith.mulf %527, %529 : vector<8x512xf32>
    %c56_413 = arith.constant 56 : index
    %c0_414 = arith.constant 0 : index
    %531 = vector.load %arg10[%c56_413, %c0_414] : memref<216x512xf32, #tpu.memory_space<vmem>>, vector<8x512xf32>
    tpu.vector_store %arg10[%c56_413, %c0_414], %530 {strides = array<i32>} : memref<216x512xf32, #tpu.memory_space<vmem>>, vector<8x512xf32>,
    %c55_i32_415 = arith.constant 55 : i32
    %532 = tpu.dynamic_rotate %491 by %c55_i32_415 dim 1 : vector<8x512xf32>, i32 -> vector<8x512xf32>
    %c8_416 = arith.constant 8 : index
    %c0_417 = arith.constant 0 : index
    %533 = vector.load %arg2[%c8_416, %c0_417] : memref<27x512xf32, #tpu.memory_space<vmem>>, vector<1x512xf32>
    %534 = vector.broadcast %533 : vector<1x512xf32> to vector<8x512xf32>
    %535 = arith.mulf %532, %534 : vector<8x512xf32>
    %c64_418 = arith.constant 64 : index
    %c0_419 = arith.constant 0 : index
    %536 = vector.load %arg10[%c64_418, %c0_419] : memref<216x512xf32, #tpu.memory_space<vmem>>, vector<8x512xf32>
    tpu.vector_store %arg10[%c64_418, %c0_419], %535 {strides = array<i32>} : memref<216x512xf32, #tpu.memory_space<vmem>>, vector<8x512xf32>,
    %c9_i32_420 = arith.constant 9 : i32
    %537 = tpu.dynamic_rotate %491 by %c9_i32_420 dim 1 : vector<8x512xf32>, i32 -> vector<8x512xf32>
    %c9_421 = arith.constant 9 : index
    %c0_422 = arith.constant 0 : index
    %538 = vector.load %arg2[%c9_421, %c0_422] : memref<27x512xf32, #tpu.memory_space<vmem>>, vector<1x512xf32>
    %539 = vector.broadcast %538 : vector<1x512xf32> to vector<8x512xf32>
    %540 = arith.mulf %537, %539 : vector<8x512xf32>
    %c72_423 = arith.constant 72 : index
    %c0_424 = arith.constant 0 : index
    %541 = vector.load %arg10[%c72_423, %c0_424] : memref<216x512xf32, #tpu.memory_space<vmem>>, vector<8x512xf32>
    tpu.vector_store %arg10[%c72_423, %c0_424], %540 {strides = array<i32>} : memref<216x512xf32, #tpu.memory_space<vmem>>, vector<8x512xf32>,
    %c8_i32_425 = arith.constant 8 : i32
    %542 = tpu.dynamic_rotate %491 by %c8_i32_425 dim 1 : vector<8x512xf32>, i32 -> vector<8x512xf32>
    %c10_426 = arith.constant 10 : index
    %c0_427 = arith.constant 0 : index
    %543 = vector.load %arg2[%c10_426, %c0_427] : memref<27x512xf32, #tpu.memory_space<vmem>>, vector<1x512xf32>
    %544 = vector.broadcast %543 : vector<1x512xf32> to vector<8x512xf32>
    %545 = arith.mulf %542, %544 : vector<8x512xf32>
    %c80_428 = arith.constant 80 : index
    %c0_429 = arith.constant 0 : index
    %546 = vector.load %arg10[%c80_428, %c0_429] : memref<216x512xf32, #tpu.memory_space<vmem>>, vector<8x512xf32>
    tpu.vector_store %arg10[%c80_428, %c0_429], %545 {strides = array<i32>} : memref<216x512xf32, #tpu.memory_space<vmem>>, vector<8x512xf32>,
    %c7_i32_430 = arith.constant 7 : i32
    %547 = tpu.dynamic_rotate %491 by %c7_i32_430 dim 1 : vector<8x512xf32>, i32 -> vector<8x512xf32>
    %c11_431 = arith.constant 11 : index
    %c0_432 = arith.constant 0 : index
    %548 = vector.load %arg2[%c11_431, %c0_432] : memref<27x512xf32, #tpu.memory_space<vmem>>, vector<1x512xf32>
    %549 = vector.broadcast %548 : vector<1x512xf32> to vector<8x512xf32>
    %550 = arith.mulf %547, %549 : vector<8x512xf32>
    %c88_433 = arith.constant 88 : index
    %c0_434 = arith.constant 0 : index
    %551 = vector.load %arg10[%c88_433, %c0_434] : memref<216x512xf32, #tpu.memory_space<vmem>>, vector<8x512xf32>
    tpu.vector_store %arg10[%c88_433, %c0_434], %550 {strides = array<i32>} : memref<216x512xf32, #tpu.memory_space<vmem>>, vector<8x512xf32>,
    %c1_i32_435 = arith.constant 1 : i32
    %552 = tpu.dynamic_rotate %491 by %c1_i32_435 dim 1 : vector<8x512xf32>, i32 -> vector<8x512xf32>
    %c12_436 = arith.constant 12 : index
    %c0_437 = arith.constant 0 : index
    %553 = vector.load %arg2[%c12_436, %c0_437] : memref<27x512xf32, #tpu.memory_space<vmem>>, vector<1x512xf32>
    %554 = vector.broadcast %553 : vector<1x512xf32> to vector<8x512xf32>
    %555 = arith.mulf %552, %554 : vector<8x512xf32>
    %c96_438 = arith.constant 96 : index
    %c0_439 = arith.constant 0 : index
    %556 = vector.load %arg10[%c96_438, %c0_439] : memref<216x512xf32, #tpu.memory_space<vmem>>, vector<8x512xf32>
    tpu.vector_store %arg10[%c96_438, %c0_439], %555 {strides = array<i32>} : memref<216x512xf32, #tpu.memory_space<vmem>>, vector<8x512xf32>,
    %c13_440 = arith.constant 13 : index
    %c0_441 = arith.constant 0 : index
    %557 = vector.load %arg2[%c13_440, %c0_441] : memref<27x512xf32, #tpu.memory_space<vmem>>, vector<1x512xf32>
    %558 = vector.broadcast %557 : vector<1x512xf32> to vector<8x512xf32>
    %559 = arith.mulf %491, %558 : vector<8x512xf32>
    %c104_442 = arith.constant 104 : index
    %c0_443 = arith.constant 0 : index
    %560 = vector.load %arg10[%c104_442, %c0_443] : memref<216x512xf32, #tpu.memory_space<vmem>>, vector<8x512xf32>
    tpu.vector_store %arg10[%c104_442, %c0_443], %559 {strides = array<i32>} : memref<216x512xf32, #tpu.memory_space<vmem>>, vector<8x512xf32>,
    %c511_i32_444 = arith.constant 511 : i32
    %561 = tpu.dynamic_rotate %491 by %c511_i32_444 dim 1 : vector<8x512xf32>, i32 -> vector<8x512xf32>
    %c14_445 = arith.constant 14 : index
    %c0_446 = arith.constant 0 : index
    %562 = vector.load %arg2[%c14_445, %c0_446] : memref<27x512xf32, #tpu.memory_space<vmem>>, vector<1x512xf32>
    %563 = vector.broadcast %562 : vector<1x512xf32> to vector<8x512xf32>
    %564 = arith.mulf %561, %563 : vector<8x512xf32>
    %c112_447 = arith.constant 112 : index
    %c0_448 = arith.constant 0 : index
    %565 = vector.load %arg10[%c112_447, %c0_448] : memref<216x512xf32, #tpu.memory_space<vmem>>, vector<8x512xf32>
    tpu.vector_store %arg10[%c112_447, %c0_448], %564 {strides = array<i32>} : memref<216x512xf32, #tpu.memory_space<vmem>>, vector<8x512xf32>,
    %c505_i32_449 = arith.constant 505 : i32
    %566 = tpu.dynamic_rotate %491 by %c505_i32_449 dim 1 : vector<8x512xf32>, i32 -> vector<8x512xf32>
    %c15_450 = arith.constant 15 : index
    %c0_451 = arith.constant 0 : index
    %567 = vector.load %arg2[%c15_450, %c0_451] : memref<27x512xf32, #tpu.memory_space<vmem>>, vector<1x512xf32>
    %568 = vector.broadcast %567 : vector<1x512xf32> to vector<8x512xf32>
    %569 = arith.mulf %566, %568 : vector<8x512xf32>
    %c120_452 = arith.constant 120 : index
    %c0_453 = arith.constant 0 : index
    %570 = vector.load %arg10[%c120_452, %c0_453] : memref<216x512xf32, #tpu.memory_space<vmem>>, vector<8x512xf32>
    tpu.vector_store %arg10[%c120_452, %c0_453], %569 {strides = array<i32>} : memref<216x512xf32, #tpu.memory_space<vmem>>, vector<8x512xf32>,
    %c504_i32_454 = arith.constant 504 : i32
    %571 = tpu.dynamic_rotate %491 by %c504_i32_454 dim 1 : vector<8x512xf32>, i32 -> vector<8x512xf32>
    %c16_455 = arith.constant 16 : index
    %c0_456 = arith.constant 0 : index
    %572 = vector.load %arg2[%c16_455, %c0_456] : memref<27x512xf32, #tpu.memory_space<vmem>>, vector<1x512xf32>
    %573 = vector.broadcast %572 : vector<1x512xf32> to vector<8x512xf32>
    %574 = arith.mulf %571, %573 : vector<8x512xf32>
    %c128_457 = arith.constant 128 : index
    %c0_458 = arith.constant 0 : index
    %575 = vector.load %arg10[%c128_457, %c0_458] : memref<216x512xf32, #tpu.memory_space<vmem>>, vector<8x512xf32>
    tpu.vector_store %arg10[%c128_457, %c0_458], %574 {strides = array<i32>} : memref<216x512xf32, #tpu.memory_space<vmem>>, vector<8x512xf32>,
    %c503_i32_459 = arith.constant 503 : i32
    %576 = tpu.dynamic_rotate %491 by %c503_i32_459 dim 1 : vector<8x512xf32>, i32 -> vector<8x512xf32>
    %c17_460 = arith.constant 17 : index
    %c0_461 = arith.constant 0 : index
    %577 = vector.load %arg2[%c17_460, %c0_461] : memref<27x512xf32, #tpu.memory_space<vmem>>, vector<1x512xf32>
    %578 = vector.broadcast %577 : vector<1x512xf32> to vector<8x512xf32>
    %579 = arith.mulf %576, %578 : vector<8x512xf32>
    %c136_462 = arith.constant 136 : index
    %c0_463 = arith.constant 0 : index
    %580 = vector.load %arg10[%c136_462, %c0_463] : memref<216x512xf32, #tpu.memory_space<vmem>>, vector<8x512xf32>
    tpu.vector_store %arg10[%c136_462, %c0_463], %579 {strides = array<i32>} : memref<216x512xf32, #tpu.memory_space<vmem>>, vector<8x512xf32>,
    %c457_i32_464 = arith.constant 457 : i32
    %581 = tpu.dynamic_rotate %491 by %c457_i32_464 dim 1 : vector<8x512xf32>, i32 -> vector<8x512xf32>
    %c18_465 = arith.constant 18 : index
    %c0_466 = arith.constant 0 : index
    %582 = vector.load %arg2[%c18_465, %c0_466] : memref<27x512xf32, #tpu.memory_space<vmem>>, vector<1x512xf32>
    %583 = vector.broadcast %582 : vector<1x512xf32> to vector<8x512xf32>
    %584 = arith.mulf %581, %583 : vector<8x512xf32>
    %c144_467 = arith.constant 144 : index
    %c0_468 = arith.constant 0 : index
    %585 = vector.load %arg10[%c144_467, %c0_468] : memref<216x512xf32, #tpu.memory_space<vmem>>, vector<8x512xf32>
    tpu.vector_store %arg10[%c144_467, %c0_468], %584 {strides = array<i32>} : memref<216x512xf32, #tpu.memory_space<vmem>>, vector<8x512xf32>,
    %c456_i32_469 = arith.constant 456 : i32
    %586 = tpu.dynamic_rotate %491 by %c456_i32_469 dim 1 : vector<8x512xf32>, i32 -> vector<8x512xf32>
    %c19_470 = arith.constant 19 : index
    %c0_471 = arith.constant 0 : index
    %587 = vector.load %arg2[%c19_470, %c0_471] : memref<27x512xf32, #tpu.memory_space<vmem>>, vector<1x512xf32>
    %588 = vector.broadcast %587 : vector<1x512xf32> to vector<8x512xf32>
    %589 = arith.mulf %586, %588 : vector<8x512xf32>
    %c152_472 = arith.constant 152 : index
    %c0_473 = arith.constant 0 : index
    %590 = vector.load %arg10[%c152_472, %c0_473] : memref<216x512xf32, #tpu.memory_space<vmem>>, vector<8x512xf32>
    tpu.vector_store %arg10[%c152_472, %c0_473], %589 {strides = array<i32>} : memref<216x512xf32, #tpu.memory_space<vmem>>, vector<8x512xf32>,
    %c455_i32_474 = arith.constant 455 : i32
    %591 = tpu.dynamic_rotate %491 by %c455_i32_474 dim 1 : vector<8x512xf32>, i32 -> vector<8x512xf32>
    %c20_475 = arith.constant 20 : index
    %c0_476 = arith.constant 0 : index
    %592 = vector.load %arg2[%c20_475, %c0_476] : memref<27x512xf32, #tpu.memory_space<vmem>>, vector<1x512xf32>
    %593 = vector.broadcast %592 : vector<1x512xf32> to vector<8x512xf32>
    %594 = arith.mulf %591, %593 : vector<8x512xf32>
    %c160_477 = arith.constant 160 : index
    %c0_478 = arith.constant 0 : index
    %595 = vector.load %arg10[%c160_477, %c0_478] : memref<216x512xf32, #tpu.memory_space<vmem>>, vector<8x512xf32>
    tpu.vector_store %arg10[%c160_477, %c0_478], %594 {strides = array<i32>} : memref<216x512xf32, #tpu.memory_space<vmem>>, vector<8x512xf32>,
    %c449_i32_479 = arith.constant 449 : i32
    %596 = tpu.dynamic_rotate %491 by %c449_i32_479 dim 1 : vector<8x512xf32>, i32 -> vector<8x512xf32>
    %c21_480 = arith.constant 21 : index
    %c0_481 = arith.constant 0 : index
    %597 = vector.load %arg2[%c21_480, %c0_481] : memref<27x512xf32, #tpu.memory_space<vmem>>, vector<1x512xf32>
    %598 = vector.broadcast %597 : vector<1x512xf32> to vector<8x512xf32>
    %599 = arith.mulf %596, %598 : vector<8x512xf32>
    %c168_482 = arith.constant 168 : index
    %c0_483 = arith.constant 0 : index
    %600 = vector.load %arg10[%c168_482, %c0_483] : memref<216x512xf32, #tpu.memory_space<vmem>>, vector<8x512xf32>
    tpu.vector_store %arg10[%c168_482, %c0_483], %599 {strides = array<i32>} : memref<216x512xf32, #tpu.memory_space<vmem>>, vector<8x512xf32>,
    %c448_i32_484 = arith.constant 448 : i32
    %601 = tpu.dynamic_rotate %491 by %c448_i32_484 dim 1 : vector<8x512xf32>, i32 -> vector<8x512xf32>
    %c22_485 = arith.constant 22 : index
    %c0_486 = arith.constant 0 : index
    %602 = vector.load %arg2[%c22_485, %c0_486] : memref<27x512xf32, #tpu.memory_space<vmem>>, vector<1x512xf32>
    %603 = vector.broadcast %602 : vector<1x512xf32> to vector<8x512xf32>
    %604 = arith.mulf %601, %603 : vector<8x512xf32>
    %c176_487 = arith.constant 176 : index
    %c0_488 = arith.constant 0 : index
    %605 = vector.load %arg10[%c176_487, %c0_488] : memref<216x512xf32, #tpu.memory_space<vmem>>, vector<8x512xf32>
    tpu.vector_store %arg10[%c176_487, %c0_488], %604 {strides = array<i32>} : memref<216x512xf32, #tpu.memory_space<vmem>>, vector<8x512xf32>,
    %c447_i32_489 = arith.constant 447 : i32
    %606 = tpu.dynamic_rotate %491 by %c447_i32_489 dim 1 : vector<8x512xf32>, i32 -> vector<8x512xf32>
    %c23_490 = arith.constant 23 : index
    %c0_491 = arith.constant 0 : index
    %607 = vector.load %arg2[%c23_490, %c0_491] : memref<27x512xf32, #tpu.memory_space<vmem>>, vector<1x512xf32>
    %608 = vector.broadcast %607 : vector<1x512xf32> to vector<8x512xf32>
    %609 = arith.mulf %606, %608 : vector<8x512xf32>
    %c184_492 = arith.constant 184 : index
    %c0_493 = arith.constant 0 : index
    %610 = vector.load %arg10[%c184_492, %c0_493] : memref<216x512xf32, #tpu.memory_space<vmem>>, vector<8x512xf32>
    tpu.vector_store %arg10[%c184_492, %c0_493], %609 {strides = array<i32>} : memref<216x512xf32, #tpu.memory_space<vmem>>, vector<8x512xf32>,
    %c441_i32_494 = arith.constant 441 : i32
    %611 = tpu.dynamic_rotate %491 by %c441_i32_494 dim 1 : vector<8x512xf32>, i32 -> vector<8x512xf32>
    %c24_495 = arith.constant 24 : index
    %c0_496 = arith.constant 0 : index
    %612 = vector.load %arg2[%c24_495, %c0_496] : memref<27x512xf32, #tpu.memory_space<vmem>>, vector<1x512xf32>
    %613 = vector.broadcast %612 : vector<1x512xf32> to vector<8x512xf32>
    %614 = arith.mulf %611, %613 : vector<8x512xf32>
    %c192_497 = arith.constant 192 : index
    %c0_498 = arith.constant 0 : index
    %615 = vector.load %arg10[%c192_497, %c0_498] : memref<216x512xf32, #tpu.memory_space<vmem>>, vector<8x512xf32>
    tpu.vector_store %arg10[%c192_497, %c0_498], %614 {strides = array<i32>} : memref<216x512xf32, #tpu.memory_space<vmem>>, vector<8x512xf32>,
    %c440_i32_499 = arith.constant 440 : i32
    %616 = tpu.dynamic_rotate %491 by %c440_i32_499 dim 1 : vector<8x512xf32>, i32 -> vector<8x512xf32>
    %c25_500 = arith.constant 25 : index
    %c0_501 = arith.constant 0 : index
    %617 = vector.load %arg2[%c25_500, %c0_501] : memref<27x512xf32, #tpu.memory_space<vmem>>, vector<1x512xf32>
    %618 = vector.broadcast %617 : vector<1x512xf32> to vector<8x512xf32>
    %619 = arith.mulf %616, %618 : vector<8x512xf32>
    %c200_502 = arith.constant 200 : index
    %c0_503 = arith.constant 0 : index
    %620 = vector.load %arg10[%c200_502, %c0_503] : memref<216x512xf32, #tpu.memory_space<vmem>>, vector<8x512xf32>
    tpu.vector_store %arg10[%c200_502, %c0_503], %619 {strides = array<i32>} : memref<216x512xf32, #tpu.memory_space<vmem>>, vector<8x512xf32>,
    %c439_i32_504 = arith.constant 439 : i32
    %621 = tpu.dynamic_rotate %491 by %c439_i32_504 dim 1 : vector<8x512xf32>, i32 -> vector<8x512xf32>
    %c26_505 = arith.constant 26 : index
    %c0_506 = arith.constant 0 : index
    %622 = vector.load %arg2[%c26_505, %c0_506] : memref<27x512xf32, #tpu.memory_space<vmem>>, vector<1x512xf32>
    %623 = vector.broadcast %622 : vector<1x512xf32> to vector<8x512xf32>
    %624 = arith.mulf %621, %623 : vector<8x512xf32>
    %c208_507 = arith.constant 208 : index
    %c0_508 = arith.constant 0 : index
    %625 = vector.load %arg10[%c208_507, %c0_508] : memref<216x512xf32, #tpu.memory_space<vmem>>, vector<8x512xf32>
    tpu.vector_store %arg10[%c208_507, %c0_508], %624 {strides = array<i32>} : memref<216x512xf32, #tpu.memory_space<vmem>>, vector<8x512xf32>,
    %c0_509 = arith.constant 0 : index
    %c0_510 = arith.constant 0 : index
    %626 = vector.load %arg7[%c0_509, %c0_510] : memref<8x216xf32, #tpu.memory_space<vmem>>, vector<8x216xf32>
    %c0_511 = arith.constant 0 : index
    %c0_512 = arith.constant 0 : index
    %627 = vector.load %arg10[%c0_511, %c0_512] : memref<216x512xf32, #tpu.memory_space<vmem>>, vector<216x512xf32>
    %cst_513 = arith.constant dense<0.000000e+00> : vector<8x512xf32>
    %628 = tpu.matmul %626, %627, %cst_513 {dimension_numbers = #tpu.dot_dimension_numbers<[1], [0], [0], [1], [0, 0, 1, 1], [], []>} : vector<8x216xf32>, vector<216x512xf32>, vector<8x512xf32> -> vector<8x512xf32>
    %c0_514 = arith.constant 0 : index
    %c0_515 = arith.constant 0 : index
    %629 = vector.load %arg8[%c0_514, %c0_515] : memref<8x1xf32, #tpu.memory_space<vmem>>, vector<8x1xf32>
    %630 = vector.broadcast %629 : vector<8x1xf32> to vector<8x512xf32>
    %631 = arith.addf %628, %630 : vector<8x512xf32>
    %cst_516 = arith.constant dense<0.000000e+00> : vector<8xf32>
    %632 = vector.multi_reduction <add>, %631, %cst_516 [1] : vector<8x512xf32> to vector<8xf32>
    %633 = vector.shape_cast %632 : vector<8xf32> to vector<8x1xf32>
    %cst_517 = arith.constant 5.120000e+02 : f32
    %634 = vector.broadcast %cst_517 : f32 to vector<8x1xf32>
    %635 = arith.divf %633, %634 : vector<8x1xf32>
    %636 = vector.broadcast %635 : vector<8x1xf32> to vector<8x512xf32>
    %637 = arith.subf %631, %636 : vector<8x512xf32>
    %638 = arith.mulf %637, %637 : vector<8x512xf32>
    %cst_518 = arith.constant dense<0.000000e+00> : vector<8xf32>
    %639 = vector.multi_reduction <add>, %638, %cst_518 [1] : vector<8x512xf32> to vector<8xf32>
    %640 = vector.shape_cast %639 : vector<8xf32> to vector<8x1xf32>
    %cst_519 = arith.constant 5.120000e+02 : f32
    %641 = vector.broadcast %cst_519 : f32 to vector<8x1xf32>
    %642 = arith.divf %640, %641 : vector<8x1xf32>
    %cst_520 = arith.constant 9.99999974E-6 : f32
    %643 = vector.broadcast %cst_520 : f32 to vector<8x1xf32>
    %644 = arith.addf %642, %643 : vector<8x1xf32>
    %645 = math.rsqrt %644 : vector<8x1xf32>
    %646 = vector.broadcast %645 : vector<8x1xf32> to vector<8x512xf32>
    %647 = arith.mulf %637, %646 : vector<8x512xf32>
    %cst_521 = arith.constant 0.000000e+00 : f32
    %648 = vector.broadcast %cst_521 : f32 to vector<8x512xf32>
    %649 = arith.cmpf oge, %647, %648 : vector<8x512xf32>
    %cst_522 = arith.constant 0.00999999977 : f32
    %650 = vector.broadcast %cst_522 : f32 to vector<8x512xf32>
    %651 = arith.mulf %650, %647 : vector<8x512xf32>
    %652 = arith.select %649, %647, %651 : vector<8x512xi1>, vector<8x512xf32>
    %653 = arith.addf %652, %491 : vector<8x512xf32>
    %c73_i32_523 = arith.constant 73 : i32
    %654 = tpu.dynamic_rotate %653 by %c73_i32_523 dim 1 : vector<8x512xf32>, i32 -> vector<8x512xf32>
    %c0_524 = arith.constant 0 : index
    %c0_525 = arith.constant 0 : index
    %655 = vector.load %arg2[%c0_524, %c0_525] : memref<27x512xf32, #tpu.memory_space<vmem>>, vector<1x512xf32>
    %656 = vector.broadcast %655 : vector<1x512xf32> to vector<8x512xf32>
    %657 = arith.mulf %654, %656 : vector<8x512xf32>
    %c0_526 = arith.constant 0 : index
    %c0_527 = arith.constant 0 : index
    %658 = vector.load %arg10[%c0_526, %c0_527] : memref<216x512xf32, #tpu.memory_space<vmem>>, vector<8x512xf32>
    tpu.vector_store %arg10[%c0_526, %c0_527], %657 {strides = array<i32>} : memref<216x512xf32, #tpu.memory_space<vmem>>, vector<8x512xf32>,
    %c72_i32_528 = arith.constant 72 : i32
    %659 = tpu.dynamic_rotate %653 by %c72_i32_528 dim 1 : vector<8x512xf32>, i32 -> vector<8x512xf32>
    %c1_529 = arith.constant 1 : index
    %c0_530 = arith.constant 0 : index
    %660 = vector.load %arg2[%c1_529, %c0_530] : memref<27x512xf32, #tpu.memory_space<vmem>>, vector<1x512xf32>
    %661 = vector.broadcast %660 : vector<1x512xf32> to vector<8x512xf32>
    %662 = arith.mulf %659, %661 : vector<8x512xf32>
    %c8_531 = arith.constant 8 : index
    %c0_532 = arith.constant 0 : index
    %663 = vector.load %arg10[%c8_531, %c0_532] : memref<216x512xf32, #tpu.memory_space<vmem>>, vector<8x512xf32>
    tpu.vector_store %arg10[%c8_531, %c0_532], %662 {strides = array<i32>} : memref<216x512xf32, #tpu.memory_space<vmem>>, vector<8x512xf32>,
    %c71_i32_533 = arith.constant 71 : i32
    %664 = tpu.dynamic_rotate %653 by %c71_i32_533 dim 1 : vector<8x512xf32>, i32 -> vector<8x512xf32>
    %c2_534 = arith.constant 2 : index
    %c0_535 = arith.constant 0 : index
    %665 = vector.load %arg2[%c2_534, %c0_535] : memref<27x512xf32, #tpu.memory_space<vmem>>, vector<1x512xf32>
    %666 = vector.broadcast %665 : vector<1x512xf32> to vector<8x512xf32>
    %667 = arith.mulf %664, %666 : vector<8x512xf32>
    %c16_536 = arith.constant 16 : index
    %c0_537 = arith.constant 0 : index
    %668 = vector.load %arg10[%c16_536, %c0_537] : memref<216x512xf32, #tpu.memory_space<vmem>>, vector<8x512xf32>
    tpu.vector_store %arg10[%c16_536, %c0_537], %667 {strides = array<i32>} : memref<216x512xf32, #tpu.memory_space<vmem>>, vector<8x512xf32>,
    %c65_i32_538 = arith.constant 65 : i32
    %669 = tpu.dynamic_rotate %653 by %c65_i32_538 dim 1 : vector<8x512xf32>, i32 -> vector<8x512xf32>
    %c3_539 = arith.constant 3 : index
    %c0_540 = arith.constant 0 : index
    %670 = vector.load %arg2[%c3_539, %c0_540] : memref<27x512xf32, #tpu.memory_space<vmem>>, vector<1x512xf32>
    %671 = vector.broadcast %670 : vector<1x512xf32> to vector<8x512xf32>
    %672 = arith.mulf %669, %671 : vector<8x512xf32>
    %c24_541 = arith.constant 24 : index
    %c0_542 = arith.constant 0 : index
    %673 = vector.load %arg10[%c24_541, %c0_542] : memref<216x512xf32, #tpu.memory_space<vmem>>, vector<8x512xf32>
    tpu.vector_store %arg10[%c24_541, %c0_542], %672 {strides = array<i32>} : memref<216x512xf32, #tpu.memory_space<vmem>>, vector<8x512xf32>,
    %c64_i32_543 = arith.constant 64 : i32
    %674 = tpu.dynamic_rotate %653 by %c64_i32_543 dim 1 : vector<8x512xf32>, i32 -> vector<8x512xf32>
    %c4_544 = arith.constant 4 : index
    %c0_545 = arith.constant 0 : index
    %675 = vector.load %arg2[%c4_544, %c0_545] : memref<27x512xf32, #tpu.memory_space<vmem>>, vector<1x512xf32>
    %676 = vector.broadcast %675 : vector<1x512xf32> to vector<8x512xf32>
    %677 = arith.mulf %674, %676 : vector<8x512xf32>
    %c32_546 = arith.constant 32 : index
    %c0_547 = arith.constant 0 : index
    %678 = vector.load %arg10[%c32_546, %c0_547] : memref<216x512xf32, #tpu.memory_space<vmem>>, vector<8x512xf32>
    tpu.vector_store %arg10[%c32_546, %c0_547], %677 {strides = array<i32>} : memref<216x512xf32, #tpu.memory_space<vmem>>, vector<8x512xf32>,
    %c63_i32_548 = arith.constant 63 : i32
    %679 = tpu.dynamic_rotate %653 by %c63_i32_548 dim 1 : vector<8x512xf32>, i32 -> vector<8x512xf32>
    %c5_549 = arith.constant 5 : index
    %c0_550 = arith.constant 0 : index
    %680 = vector.load %arg2[%c5_549, %c0_550] : memref<27x512xf32, #tpu.memory_space<vmem>>, vector<1x512xf32>
    %681 = vector.broadcast %680 : vector<1x512xf32> to vector<8x512xf32>
    %682 = arith.mulf %679, %681 : vector<8x512xf32>
    %c40_551 = arith.constant 40 : index
    %c0_552 = arith.constant 0 : index
    %683 = vector.load %arg10[%c40_551, %c0_552] : memref<216x512xf32, #tpu.memory_space<vmem>>, vector<8x512xf32>
    tpu.vector_store %arg10[%c40_551, %c0_552], %682 {strides = array<i32>} : memref<216x512xf32, #tpu.memory_space<vmem>>, vector<8x512xf32>,
    %c57_i32_553 = arith.constant 57 : i32
    %684 = tpu.dynamic_rotate %653 by %c57_i32_553 dim 1 : vector<8x512xf32>, i32 -> vector<8x512xf32>
    %c6_554 = arith.constant 6 : index
    %c0_555 = arith.constant 0 : index
    %685 = vector.load %arg2[%c6_554, %c0_555] : memref<27x512xf32, #tpu.memory_space<vmem>>, vector<1x512xf32>
    %686 = vector.broadcast %685 : vector<1x512xf32> to vector<8x512xf32>
    %687 = arith.mulf %684, %686 : vector<8x512xf32>
    %c48_556 = arith.constant 48 : index
    %c0_557 = arith.constant 0 : index
    %688 = vector.load %arg10[%c48_556, %c0_557] : memref<216x512xf32, #tpu.memory_space<vmem>>, vector<8x512xf32>
    tpu.vector_store %arg10[%c48_556, %c0_557], %687 {strides = array<i32>} : memref<216x512xf32, #tpu.memory_space<vmem>>, vector<8x512xf32>,
    %c56_i32_558 = arith.constant 56 : i32
    %689 = tpu.dynamic_rotate %653 by %c56_i32_558 dim 1 : vector<8x512xf32>, i32 -> vector<8x512xf32>
    %c7_559 = arith.constant 7 : index
    %c0_560 = arith.constant 0 : index
    %690 = vector.load %arg2[%c7_559, %c0_560] : memref<27x512xf32, #tpu.memory_space<vmem>>, vector<1x512xf32>
    %691 = vector.broadcast %690 : vector<1x512xf32> to vector<8x512xf32>
    %692 = arith.mulf %689, %691 : vector<8x512xf32>
    %c56_561 = arith.constant 56 : index
    %c0_562 = arith.constant 0 : index
    %693 = vector.load %arg10[%c56_561, %c0_562] : memref<216x512xf32, #tpu.memory_space<vmem>>, vector<8x512xf32>
    tpu.vector_store %arg10[%c56_561, %c0_562], %692 {strides = array<i32>} : memref<216x512xf32, #tpu.memory_space<vmem>>, vector<8x512xf32>,
    %c55_i32_563 = arith.constant 55 : i32
    %694 = tpu.dynamic_rotate %653 by %c55_i32_563 dim 1 : vector<8x512xf32>, i32 -> vector<8x512xf32>
    %c8_564 = arith.constant 8 : index
    %c0_565 = arith.constant 0 : index
    %695 = vector.load %arg2[%c8_564, %c0_565] : memref<27x512xf32, #tpu.memory_space<vmem>>, vector<1x512xf32>
    %696 = vector.broadcast %695 : vector<1x512xf32> to vector<8x512xf32>
    %697 = arith.mulf %694, %696 : vector<8x512xf32>
    %c64_566 = arith.constant 64 : index
    %c0_567 = arith.constant 0 : index
    %698 = vector.load %arg10[%c64_566, %c0_567] : memref<216x512xf32, #tpu.memory_space<vmem>>, vector<8x512xf32>
    tpu.vector_store %arg10[%c64_566, %c0_567], %697 {strides = array<i32>} : memref<216x512xf32, #tpu.memory_space<vmem>>, vector<8x512xf32>,
    %c9_i32_568 = arith.constant 9 : i32
    %699 = tpu.dynamic_rotate %653 by %c9_i32_568 dim 1 : vector<8x512xf32>, i32 -> vector<8x512xf32>
    %c9_569 = arith.constant 9 : index
    %c0_570 = arith.constant 0 : index
    %700 = vector.load %arg2[%c9_569, %c0_570] : memref<27x512xf32, #tpu.memory_space<vmem>>, vector<1x512xf32>
    %701 = vector.broadcast %700 : vector<1x512xf32> to vector<8x512xf32>
    %702 = arith.mulf %699, %701 : vector<8x512xf32>
    %c72_571 = arith.constant 72 : index
    %c0_572 = arith.constant 0 : index
    %703 = vector.load %arg10[%c72_571, %c0_572] : memref<216x512xf32, #tpu.memory_space<vmem>>, vector<8x512xf32>
    tpu.vector_store %arg10[%c72_571, %c0_572], %702 {strides = array<i32>} : memref<216x512xf32, #tpu.memory_space<vmem>>, vector<8x512xf32>,
    %c8_i32_573 = arith.constant 8 : i32
    %704 = tpu.dynamic_rotate %653 by %c8_i32_573 dim 1 : vector<8x512xf32>, i32 -> vector<8x512xf32>
    %c10_574 = arith.constant 10 : index
    %c0_575 = arith.constant 0 : index
    %705 = vector.load %arg2[%c10_574, %c0_575] : memref<27x512xf32, #tpu.memory_space<vmem>>, vector<1x512xf32>
    %706 = vector.broadcast %705 : vector<1x512xf32> to vector<8x512xf32>
    %707 = arith.mulf %704, %706 : vector<8x512xf32>
    %c80_576 = arith.constant 80 : index
    %c0_577 = arith.constant 0 : index
    %708 = vector.load %arg10[%c80_576, %c0_577] : memref<216x512xf32, #tpu.memory_space<vmem>>, vector<8x512xf32>
    tpu.vector_store %arg10[%c80_576, %c0_577], %707 {strides = array<i32>} : memref<216x512xf32, #tpu.memory_space<vmem>>, vector<8x512xf32>,
    %c7_i32_578 = arith.constant 7 : i32
    %709 = tpu.dynamic_rotate %653 by %c7_i32_578 dim 1 : vector<8x512xf32>, i32 -> vector<8x512xf32>
    %c11_579 = arith.constant 11 : index
    %c0_580 = arith.constant 0 : index
    %710 = vector.load %arg2[%c11_579, %c0_580] : memref<27x512xf32, #tpu.memory_space<vmem>>, vector<1x512xf32>
    %711 = vector.broadcast %710 : vector<1x512xf32> to vector<8x512xf32>
    %712 = arith.mulf %709, %711 : vector<8x512xf32>
    %c88_581 = arith.constant 88 : index
    %c0_582 = arith.constant 0 : index
    %713 = vector.load %arg10[%c88_581, %c0_582] : memref<216x512xf32, #tpu.memory_space<vmem>>, vector<8x512xf32>
    tpu.vector_store %arg10[%c88_581, %c0_582], %712 {strides = array<i32>} : memref<216x512xf32, #tpu.memory_space<vmem>>, vector<8x512xf32>,
    %c1_i32_583 = arith.constant 1 : i32
    %714 = tpu.dynamic_rotate %653 by %c1_i32_583 dim 1 : vector<8x512xf32>, i32 -> vector<8x512xf32>
    %c12_584 = arith.constant 12 : index
    %c0_585 = arith.constant 0 : index
    %715 = vector.load %arg2[%c12_584, %c0_585] : memref<27x512xf32, #tpu.memory_space<vmem>>, vector<1x512xf32>
    %716 = vector.broadcast %715 : vector<1x512xf32> to vector<8x512xf32>
    %717 = arith.mulf %714, %716 : vector<8x512xf32>
    %c96_586 = arith.constant 96 : index
    %c0_587 = arith.constant 0 : index
    %718 = vector.load %arg10[%c96_586, %c0_587] : memref<216x512xf32, #tpu.memory_space<vmem>>, vector<8x512xf32>
    tpu.vector_store %arg10[%c96_586, %c0_587], %717 {strides = array<i32>} : memref<216x512xf32, #tpu.memory_space<vmem>>, vector<8x512xf32>,
    %c13_588 = arith.constant 13 : index
    %c0_589 = arith.constant 0 : index
    %719 = vector.load %arg2[%c13_588, %c0_589] : memref<27x512xf32, #tpu.memory_space<vmem>>, vector<1x512xf32>
    %720 = vector.broadcast %719 : vector<1x512xf32> to vector<8x512xf32>
    %721 = arith.mulf %653, %720 : vector<8x512xf32>
    %c104_590 = arith.constant 104 : index
    %c0_591 = arith.constant 0 : index
    %722 = vector.load %arg10[%c104_590, %c0_591] : memref<216x512xf32, #tpu.memory_space<vmem>>, vector<8x512xf32>
    tpu.vector_store %arg10[%c104_590, %c0_591], %721 {strides = array<i32>} : memref<216x512xf32, #tpu.memory_space<vmem>>, vector<8x512xf32>,
    %c511_i32_592 = arith.constant 511 : i32
    %723 = tpu.dynamic_rotate %653 by %c511_i32_592 dim 1 : vector<8x512xf32>, i32 -> vector<8x512xf32>
    %c14_593 = arith.constant 14 : index
    %c0_594 = arith.constant 0 : index
    %724 = vector.load %arg2[%c14_593, %c0_594] : memref<27x512xf32, #tpu.memory_space<vmem>>, vector<1x512xf32>
    %725 = vector.broadcast %724 : vector<1x512xf32> to vector<8x512xf32>
    %726 = arith.mulf %723, %725 : vector<8x512xf32>
    %c112_595 = arith.constant 112 : index
    %c0_596 = arith.constant 0 : index
    %727 = vector.load %arg10[%c112_595, %c0_596] : memref<216x512xf32, #tpu.memory_space<vmem>>, vector<8x512xf32>
    tpu.vector_store %arg10[%c112_595, %c0_596], %726 {strides = array<i32>} : memref<216x512xf32, #tpu.memory_space<vmem>>, vector<8x512xf32>,
    %c505_i32_597 = arith.constant 505 : i32
    %728 = tpu.dynamic_rotate %653 by %c505_i32_597 dim 1 : vector<8x512xf32>, i32 -> vector<8x512xf32>
    %c15_598 = arith.constant 15 : index
    %c0_599 = arith.constant 0 : index
    %729 = vector.load %arg2[%c15_598, %c0_599] : memref<27x512xf32, #tpu.memory_space<vmem>>, vector<1x512xf32>
    %730 = vector.broadcast %729 : vector<1x512xf32> to vector<8x512xf32>
    %731 = arith.mulf %728, %730 : vector<8x512xf32>
    %c120_600 = arith.constant 120 : index
    %c0_601 = arith.constant 0 : index
    %732 = vector.load %arg10[%c120_600, %c0_601] : memref<216x512xf32, #tpu.memory_space<vmem>>, vector<8x512xf32>
    tpu.vector_store %arg10[%c120_600, %c0_601], %731 {strides = array<i32>} : memref<216x512xf32, #tpu.memory_space<vmem>>, vector<8x512xf32>,
    %c504_i32_602 = arith.constant 504 : i32
    %733 = tpu.dynamic_rotate %653 by %c504_i32_602 dim 1 : vector<8x512xf32>, i32 -> vector<8x512xf32>
    %c16_603 = arith.constant 16 : index
    %c0_604 = arith.constant 0 : index
    %734 = vector.load %arg2[%c16_603, %c0_604] : memref<27x512xf32, #tpu.memory_space<vmem>>, vector<1x512xf32>
    %735 = vector.broadcast %734 : vector<1x512xf32> to vector<8x512xf32>
    %736 = arith.mulf %733, %735 : vector<8x512xf32>
    %c128_605 = arith.constant 128 : index
    %c0_606 = arith.constant 0 : index
    %737 = vector.load %arg10[%c128_605, %c0_606] : memref<216x512xf32, #tpu.memory_space<vmem>>, vector<8x512xf32>
    tpu.vector_store %arg10[%c128_605, %c0_606], %736 {strides = array<i32>} : memref<216x512xf32, #tpu.memory_space<vmem>>, vector<8x512xf32>,
    %c503_i32_607 = arith.constant 503 : i32
    %738 = tpu.dynamic_rotate %653 by %c503_i32_607 dim 1 : vector<8x512xf32>, i32 -> vector<8x512xf32>
    %c17_608 = arith.constant 17 : index
    %c0_609 = arith.constant 0 : index
    %739 = vector.load %arg2[%c17_608, %c0_609] : memref<27x512xf32, #tpu.memory_space<vmem>>, vector<1x512xf32>
    %740 = vector.broadcast %739 : vector<1x512xf32> to vector<8x512xf32>
    %741 = arith.mulf %738, %740 : vector<8x512xf32>
    %c136_610 = arith.constant 136 : index
    %c0_611 = arith.constant 0 : index
    %742 = vector.load %arg10[%c136_610, %c0_611] : memref<216x512xf32, #tpu.memory_space<vmem>>, vector<8x512xf32>
    tpu.vector_store %arg10[%c136_610, %c0_611], %741 {strides = array<i32>} : memref<216x512xf32, #tpu.memory_space<vmem>>, vector<8x512xf32>,
    %c457_i32_612 = arith.constant 457 : i32
    %743 = tpu.dynamic_rotate %653 by %c457_i32_612 dim 1 : vector<8x512xf32>, i32 -> vector<8x512xf32>
    %c18_613 = arith.constant 18 : index
    %c0_614 = arith.constant 0 : index
    %744 = vector.load %arg2[%c18_613, %c0_614] : memref<27x512xf32, #tpu.memory_space<vmem>>, vector<1x512xf32>
    %745 = vector.broadcast %744 : vector<1x512xf32> to vector<8x512xf32>
    %746 = arith.mulf %743, %745 : vector<8x512xf32>
    %c144_615 = arith.constant 144 : index
    %c0_616 = arith.constant 0 : index
    %747 = vector.load %arg10[%c144_615, %c0_616] : memref<216x512xf32, #tpu.memory_space<vmem>>, vector<8x512xf32>
    tpu.vector_store %arg10[%c144_615, %c0_616], %746 {strides = array<i32>} : memref<216x512xf32, #tpu.memory_space<vmem>>, vector<8x512xf32>,
    %c456_i32_617 = arith.constant 456 : i32
    %748 = tpu.dynamic_rotate %653 by %c456_i32_617 dim 1 : vector<8x512xf32>, i32 -> vector<8x512xf32>
    %c19_618 = arith.constant 19 : index
    %c0_619 = arith.constant 0 : index
    %749 = vector.load %arg2[%c19_618, %c0_619] : memref<27x512xf32, #tpu.memory_space<vmem>>, vector<1x512xf32>
    %750 = vector.broadcast %749 : vector<1x512xf32> to vector<8x512xf32>
    %751 = arith.mulf %748, %750 : vector<8x512xf32>
    %c152_620 = arith.constant 152 : index
    %c0_621 = arith.constant 0 : index
    %752 = vector.load %arg10[%c152_620, %c0_621] : memref<216x512xf32, #tpu.memory_space<vmem>>, vector<8x512xf32>
    tpu.vector_store %arg10[%c152_620, %c0_621], %751 {strides = array<i32>} : memref<216x512xf32, #tpu.memory_space<vmem>>, vector<8x512xf32>,
    %c455_i32_622 = arith.constant 455 : i32
    %753 = tpu.dynamic_rotate %653 by %c455_i32_622 dim 1 : vector<8x512xf32>, i32 -> vector<8x512xf32>
    %c20_623 = arith.constant 20 : index
    %c0_624 = arith.constant 0 : index
    %754 = vector.load %arg2[%c20_623, %c0_624] : memref<27x512xf32, #tpu.memory_space<vmem>>, vector<1x512xf32>
    %755 = vector.broadcast %754 : vector<1x512xf32> to vector<8x512xf32>
    %756 = arith.mulf %753, %755 : vector<8x512xf32>
    %c160_625 = arith.constant 160 : index
    %c0_626 = arith.constant 0 : index
    %757 = vector.load %arg10[%c160_625, %c0_626] : memref<216x512xf32, #tpu.memory_space<vmem>>, vector<8x512xf32>
    tpu.vector_store %arg10[%c160_625, %c0_626], %756 {strides = array<i32>} : memref<216x512xf32, #tpu.memory_space<vmem>>, vector<8x512xf32>,
    %c449_i32_627 = arith.constant 449 : i32
    %758 = tpu.dynamic_rotate %653 by %c449_i32_627 dim 1 : vector<8x512xf32>, i32 -> vector<8x512xf32>
    %c21_628 = arith.constant 21 : index
    %c0_629 = arith.constant 0 : index
    %759 = vector.load %arg2[%c21_628, %c0_629] : memref<27x512xf32, #tpu.memory_space<vmem>>, vector<1x512xf32>
    %760 = vector.broadcast %759 : vector<1x512xf32> to vector<8x512xf32>
    %761 = arith.mulf %758, %760 : vector<8x512xf32>
    %c168_630 = arith.constant 168 : index
    %c0_631 = arith.constant 0 : index
    %762 = vector.load %arg10[%c168_630, %c0_631] : memref<216x512xf32, #tpu.memory_space<vmem>>, vector<8x512xf32>
    tpu.vector_store %arg10[%c168_630, %c0_631], %761 {strides = array<i32>} : memref<216x512xf32, #tpu.memory_space<vmem>>, vector<8x512xf32>,
    %c448_i32_632 = arith.constant 448 : i32
    %763 = tpu.dynamic_rotate %653 by %c448_i32_632 dim 1 : vector<8x512xf32>, i32 -> vector<8x512xf32>
    %c22_633 = arith.constant 22 : index
    %c0_634 = arith.constant 0 : index
    %764 = vector.load %arg2[%c22_633, %c0_634] : memref<27x512xf32, #tpu.memory_space<vmem>>, vector<1x512xf32>
    %765 = vector.broadcast %764 : vector<1x512xf32> to vector<8x512xf32>
    %766 = arith.mulf %763, %765 : vector<8x512xf32>
    %c176_635 = arith.constant 176 : index
    %c0_636 = arith.constant 0 : index
    %767 = vector.load %arg10[%c176_635, %c0_636] : memref<216x512xf32, #tpu.memory_space<vmem>>, vector<8x512xf32>
    tpu.vector_store %arg10[%c176_635, %c0_636], %766 {strides = array<i32>} : memref<216x512xf32, #tpu.memory_space<vmem>>, vector<8x512xf32>,
    %c447_i32_637 = arith.constant 447 : i32
    %768 = tpu.dynamic_rotate %653 by %c447_i32_637 dim 1 : vector<8x512xf32>, i32 -> vector<8x512xf32>
    %c23_638 = arith.constant 23 : index
    %c0_639 = arith.constant 0 : index
    %769 = vector.load %arg2[%c23_638, %c0_639] : memref<27x512xf32, #tpu.memory_space<vmem>>, vector<1x512xf32>
    %770 = vector.broadcast %769 : vector<1x512xf32> to vector<8x512xf32>
    %771 = arith.mulf %768, %770 : vector<8x512xf32>
    %c184_640 = arith.constant 184 : index
    %c0_641 = arith.constant 0 : index
    %772 = vector.load %arg10[%c184_640, %c0_641] : memref<216x512xf32, #tpu.memory_space<vmem>>, vector<8x512xf32>
    tpu.vector_store %arg10[%c184_640, %c0_641], %771 {strides = array<i32>} : memref<216x512xf32, #tpu.memory_space<vmem>>, vector<8x512xf32>,
    %c441_i32_642 = arith.constant 441 : i32
    %773 = tpu.dynamic_rotate %653 by %c441_i32_642 dim 1 : vector<8x512xf32>, i32 -> vector<8x512xf32>
    %c24_643 = arith.constant 24 : index
    %c0_644 = arith.constant 0 : index
    %774 = vector.load %arg2[%c24_643, %c0_644] : memref<27x512xf32, #tpu.memory_space<vmem>>, vector<1x512xf32>
    %775 = vector.broadcast %774 : vector<1x512xf32> to vector<8x512xf32>
    %776 = arith.mulf %773, %775 : vector<8x512xf32>
    %c192_645 = arith.constant 192 : index
    %c0_646 = arith.constant 0 : index
    %777 = vector.load %arg10[%c192_645, %c0_646] : memref<216x512xf32, #tpu.memory_space<vmem>>, vector<8x512xf32>
    tpu.vector_store %arg10[%c192_645, %c0_646], %776 {strides = array<i32>} : memref<216x512xf32, #tpu.memory_space<vmem>>, vector<8x512xf32>,
    %c440_i32_647 = arith.constant 440 : i32
    %778 = tpu.dynamic_rotate %653 by %c440_i32_647 dim 1 : vector<8x512xf32>, i32 -> vector<8x512xf32>
    %c25_648 = arith.constant 25 : index
    %c0_649 = arith.constant 0 : index
    %779 = vector.load %arg2[%c25_648, %c0_649] : memref<27x512xf32, #tpu.memory_space<vmem>>, vector<1x512xf32>
    %780 = vector.broadcast %779 : vector<1x512xf32> to vector<8x512xf32>
    %781 = arith.mulf %778, %780 : vector<8x512xf32>
    %c200_650 = arith.constant 200 : index
    %c0_651 = arith.constant 0 : index
    %782 = vector.load %arg10[%c200_650, %c0_651] : memref<216x512xf32, #tpu.memory_space<vmem>>, vector<8x512xf32>
    tpu.vector_store %arg10[%c200_650, %c0_651], %781 {strides = array<i32>} : memref<216x512xf32, #tpu.memory_space<vmem>>, vector<8x512xf32>,
    %c439_i32_652 = arith.constant 439 : i32
    %783 = tpu.dynamic_rotate %653 by %c439_i32_652 dim 1 : vector<8x512xf32>, i32 -> vector<8x512xf32>
    %c26_653 = arith.constant 26 : index
    %c0_654 = arith.constant 0 : index
    %784 = vector.load %arg2[%c26_653, %c0_654] : memref<27x512xf32, #tpu.memory_space<vmem>>, vector<1x512xf32>
    %785 = vector.broadcast %784 : vector<1x512xf32> to vector<8x512xf32>
    %786 = arith.mulf %783, %785 : vector<8x512xf32>
    %c208_655 = arith.constant 208 : index
    %c0_656 = arith.constant 0 : index
    %787 = vector.load %arg10[%c208_655, %c0_656] : memref<216x512xf32, #tpu.memory_space<vmem>>, vector<8x512xf32>
    tpu.vector_store %arg10[%c208_655, %c0_656], %786 {strides = array<i32>} : memref<216x512xf32, #tpu.memory_space<vmem>>, vector<8x512xf32>,
    %c0_657 = arith.constant 0 : index
    %c0_658 = arith.constant 0 : index
    %788 = vector.load %arg7[%c0_657, %c0_658] : memref<8x216xf32, #tpu.memory_space<vmem>>, vector<8x216xf32>
    %c0_659 = arith.constant 0 : index
    %c0_660 = arith.constant 0 : index
    %789 = vector.load %arg10[%c0_659, %c0_660] : memref<216x512xf32, #tpu.memory_space<vmem>>, vector<216x512xf32>
    %cst_661 = arith.constant dense<0.000000e+00> : vector<8x512xf32>
    %790 = tpu.matmul %788, %789, %cst_661 {dimension_numbers = #tpu.dot_dimension_numbers<[1], [0], [0], [1], [0, 0, 1, 1], [], []>} : vector<8x216xf32>, vector<216x512xf32>, vector<8x512xf32> -> vector<8x512xf32>
    %c0_662 = arith.constant 0 : index
    %c0_663 = arith.constant 0 : index
    %791 = vector.load %arg8[%c0_662, %c0_663] : memref<8x1xf32, #tpu.memory_space<vmem>>, vector<8x1xf32>
    %792 = vector.broadcast %791 : vector<8x1xf32> to vector<8x512xf32>
    %793 = arith.addf %790, %792 : vector<8x512xf32>
    %cst_664 = arith.constant dense<0.000000e+00> : vector<8xf32>
    %794 = vector.multi_reduction <add>, %793, %cst_664 [1] : vector<8x512xf32> to vector<8xf32>
    %795 = vector.shape_cast %794 : vector<8xf32> to vector<8x1xf32>
    %cst_665 = arith.constant 5.120000e+02 : f32
    %796 = vector.broadcast %cst_665 : f32 to vector<8x1xf32>
    %797 = arith.divf %795, %796 : vector<8x1xf32>
    %798 = vector.broadcast %797 : vector<8x1xf32> to vector<8x512xf32>
    %799 = arith.subf %793, %798 : vector<8x512xf32>
    %800 = arith.mulf %799, %799 : vector<8x512xf32>
    %cst_666 = arith.constant dense<0.000000e+00> : vector<8xf32>
    %801 = vector.multi_reduction <add>, %800, %cst_666 [1] : vector<8x512xf32> to vector<8xf32>
    %802 = vector.shape_cast %801 : vector<8xf32> to vector<8x1xf32>
    %cst_667 = arith.constant 5.120000e+02 : f32
    %803 = vector.broadcast %cst_667 : f32 to vector<8x1xf32>
    %804 = arith.divf %802, %803 : vector<8x1xf32>
    %cst_668 = arith.constant 9.99999974E-6 : f32
    %805 = vector.broadcast %cst_668 : f32 to vector<8x1xf32>
    %806 = arith.addf %804, %805 : vector<8x1xf32>
    %807 = math.rsqrt %806 : vector<8x1xf32>
    %808 = vector.broadcast %807 : vector<8x1xf32> to vector<8x512xf32>
    %809 = arith.mulf %799, %808 : vector<8x512xf32>
    %cst_669 = arith.constant 0.000000e+00 : f32
    %810 = vector.broadcast %cst_669 : f32 to vector<8x512xf32>
    %811 = arith.cmpf oge, %809, %810 : vector<8x512xf32>
    %cst_670 = arith.constant 0.00999999977 : f32
    %812 = vector.broadcast %cst_670 : f32 to vector<8x512xf32>
    %813 = arith.mulf %812, %809 : vector<8x512xf32>
    %814 = arith.select %811, %809, %813 : vector<8x512xi1>, vector<8x512xf32>
    %815 = arith.addf %814, %491 : vector<8x512xf32>
    %c73_i32_671 = arith.constant 73 : i32
    %816 = tpu.dynamic_rotate %815 by %c73_i32_671 dim 1 : vector<8x512xf32>, i32 -> vector<8x512xf32>
    %c0_672 = arith.constant 0 : index
    %c0_673 = arith.constant 0 : index
    %817 = vector.load %arg2[%c0_672, %c0_673] : memref<27x512xf32, #tpu.memory_space<vmem>>, vector<1x512xf32>
    %818 = vector.broadcast %817 : vector<1x512xf32> to vector<8x512xf32>
    %819 = arith.mulf %816, %818 : vector<8x512xf32>
    %c0_674 = arith.constant 0 : index
    %c0_675 = arith.constant 0 : index
    %820 = vector.load %arg10[%c0_674, %c0_675] : memref<216x512xf32, #tpu.memory_space<vmem>>, vector<8x512xf32>
    tpu.vector_store %arg10[%c0_674, %c0_675], %819 {strides = array<i32>} : memref<216x512xf32, #tpu.memory_space<vmem>>, vector<8x512xf32>,
    %c72_i32_676 = arith.constant 72 : i32
    %821 = tpu.dynamic_rotate %815 by %c72_i32_676 dim 1 : vector<8x512xf32>, i32 -> vector<8x512xf32>
    %c1_677 = arith.constant 1 : index
    %c0_678 = arith.constant 0 : index
    %822 = vector.load %arg2[%c1_677, %c0_678] : memref<27x512xf32, #tpu.memory_space<vmem>>, vector<1x512xf32>
    %823 = vector.broadcast %822 : vector<1x512xf32> to vector<8x512xf32>
    %824 = arith.mulf %821, %823 : vector<8x512xf32>
    %c8_679 = arith.constant 8 : index
    %c0_680 = arith.constant 0 : index
    %825 = vector.load %arg10[%c8_679, %c0_680] : memref<216x512xf32, #tpu.memory_space<vmem>>, vector<8x512xf32>
    tpu.vector_store %arg10[%c8_679, %c0_680], %824 {strides = array<i32>} : memref<216x512xf32, #tpu.memory_space<vmem>>, vector<8x512xf32>,
    %c71_i32_681 = arith.constant 71 : i32
    %826 = tpu.dynamic_rotate %815 by %c71_i32_681 dim 1 : vector<8x512xf32>, i32 -> vector<8x512xf32>
    %c2_682 = arith.constant 2 : index
    %c0_683 = arith.constant 0 : index
    %827 = vector.load %arg2[%c2_682, %c0_683] : memref<27x512xf32, #tpu.memory_space<vmem>>, vector<1x512xf32>
    %828 = vector.broadcast %827 : vector<1x512xf32> to vector<8x512xf32>
    %829 = arith.mulf %826, %828 : vector<8x512xf32>
    %c16_684 = arith.constant 16 : index
    %c0_685 = arith.constant 0 : index
    %830 = vector.load %arg10[%c16_684, %c0_685] : memref<216x512xf32, #tpu.memory_space<vmem>>, vector<8x512xf32>
    tpu.vector_store %arg10[%c16_684, %c0_685], %829 {strides = array<i32>} : memref<216x512xf32, #tpu.memory_space<vmem>>, vector<8x512xf32>,
    %c65_i32_686 = arith.constant 65 : i32
    %831 = tpu.dynamic_rotate %815 by %c65_i32_686 dim 1 : vector<8x512xf32>, i32 -> vector<8x512xf32>
    %c3_687 = arith.constant 3 : index
    %c0_688 = arith.constant 0 : index
    %832 = vector.load %arg2[%c3_687, %c0_688] : memref<27x512xf32, #tpu.memory_space<vmem>>, vector<1x512xf32>
    %833 = vector.broadcast %832 : vector<1x512xf32> to vector<8x512xf32>
    %834 = arith.mulf %831, %833 : vector<8x512xf32>
    %c24_689 = arith.constant 24 : index
    %c0_690 = arith.constant 0 : index
    %835 = vector.load %arg10[%c24_689, %c0_690] : memref<216x512xf32, #tpu.memory_space<vmem>>, vector<8x512xf32>
    tpu.vector_store %arg10[%c24_689, %c0_690], %834 {strides = array<i32>} : memref<216x512xf32, #tpu.memory_space<vmem>>, vector<8x512xf32>,
    %c64_i32_691 = arith.constant 64 : i32
    %836 = tpu.dynamic_rotate %815 by %c64_i32_691 dim 1 : vector<8x512xf32>, i32 -> vector<8x512xf32>
    %c4_692 = arith.constant 4 : index
    %c0_693 = arith.constant 0 : index
    %837 = vector.load %arg2[%c4_692, %c0_693] : memref<27x512xf32, #tpu.memory_space<vmem>>, vector<1x512xf32>
    %838 = vector.broadcast %837 : vector<1x512xf32> to vector<8x512xf32>
    %839 = arith.mulf %836, %838 : vector<8x512xf32>
    %c32_694 = arith.constant 32 : index
    %c0_695 = arith.constant 0 : index
    %840 = vector.load %arg10[%c32_694, %c0_695] : memref<216x512xf32, #tpu.memory_space<vmem>>, vector<8x512xf32>
    tpu.vector_store %arg10[%c32_694, %c0_695], %839 {strides = array<i32>} : memref<216x512xf32, #tpu.memory_space<vmem>>, vector<8x512xf32>,
    %c63_i32_696 = arith.constant 63 : i32
    %841 = tpu.dynamic_rotate %815 by %c63_i32_696 dim 1 : vector<8x512xf32>, i32 -> vector<8x512xf32>
    %c5_697 = arith.constant 5 : index
    %c0_698 = arith.constant 0 : index
    %842 = vector.load %arg2[%c5_697, %c0_698] : memref<27x512xf32, #tpu.memory_space<vmem>>, vector<1x512xf32>
    %843 = vector.broadcast %842 : vector<1x512xf32> to vector<8x512xf32>
    %844 = arith.mulf %841, %843 : vector<8x512xf32>
    %c40_699 = arith.constant 40 : index
    %c0_700 = arith.constant 0 : index
    %845 = vector.load %arg10[%c40_699, %c0_700] : memref<216x512xf32, #tpu.memory_space<vmem>>, vector<8x512xf32>
    tpu.vector_store %arg10[%c40_699, %c0_700], %844 {strides = array<i32>} : memref<216x512xf32, #tpu.memory_space<vmem>>, vector<8x512xf32>,
    %c57_i32_701 = arith.constant 57 : i32
    %846 = tpu.dynamic_rotate %815 by %c57_i32_701 dim 1 : vector<8x512xf32>, i32 -> vector<8x512xf32>
    %c6_702 = arith.constant 6 : index
    %c0_703 = arith.constant 0 : index
    %847 = vector.load %arg2[%c6_702, %c0_703] : memref<27x512xf32, #tpu.memory_space<vmem>>, vector<1x512xf32>
    %848 = vector.broadcast %847 : vector<1x512xf32> to vector<8x512xf32>
    %849 = arith.mulf %846, %848 : vector<8x512xf32>
    %c48_704 = arith.constant 48 : index
    %c0_705 = arith.constant 0 : index
    %850 = vector.load %arg10[%c48_704, %c0_705] : memref<216x512xf32, #tpu.memory_space<vmem>>, vector<8x512xf32>
    tpu.vector_store %arg10[%c48_704, %c0_705], %849 {strides = array<i32>} : memref<216x512xf32, #tpu.memory_space<vmem>>, vector<8x512xf32>,
    %c56_i32_706 = arith.constant 56 : i32
    %851 = tpu.dynamic_rotate %815 by %c56_i32_706 dim 1 : vector<8x512xf32>, i32 -> vector<8x512xf32>
    %c7_707 = arith.constant 7 : index
    %c0_708 = arith.constant 0 : index
    %852 = vector.load %arg2[%c7_707, %c0_708] : memref<27x512xf32, #tpu.memory_space<vmem>>, vector<1x512xf32>
    %853 = vector.broadcast %852 : vector<1x512xf32> to vector<8x512xf32>
    %854 = arith.mulf %851, %853 : vector<8x512xf32>
    %c56_709 = arith.constant 56 : index
    %c0_710 = arith.constant 0 : index
    %855 = vector.load %arg10[%c56_709, %c0_710] : memref<216x512xf32, #tpu.memory_space<vmem>>, vector<8x512xf32>
    tpu.vector_store %arg10[%c56_709, %c0_710], %854 {strides = array<i32>} : memref<216x512xf32, #tpu.memory_space<vmem>>, vector<8x512xf32>,
    %c55_i32_711 = arith.constant 55 : i32
    %856 = tpu.dynamic_rotate %815 by %c55_i32_711 dim 1 : vector<8x512xf32>, i32 -> vector<8x512xf32>
    %c8_712 = arith.constant 8 : index
    %c0_713 = arith.constant 0 : index
    %857 = vector.load %arg2[%c8_712, %c0_713] : memref<27x512xf32, #tpu.memory_space<vmem>>, vector<1x512xf32>
    %858 = vector.broadcast %857 : vector<1x512xf32> to vector<8x512xf32>
    %859 = arith.mulf %856, %858 : vector<8x512xf32>
    %c64_714 = arith.constant 64 : index
    %c0_715 = arith.constant 0 : index
    %860 = vector.load %arg10[%c64_714, %c0_715] : memref<216x512xf32, #tpu.memory_space<vmem>>, vector<8x512xf32>
    tpu.vector_store %arg10[%c64_714, %c0_715], %859 {strides = array<i32>} : memref<216x512xf32, #tpu.memory_space<vmem>>, vector<8x512xf32>,
    %c9_i32_716 = arith.constant 9 : i32
    %861 = tpu.dynamic_rotate %815 by %c9_i32_716 dim 1 : vector<8x512xf32>, i32 -> vector<8x512xf32>
    %c9_717 = arith.constant 9 : index
    %c0_718 = arith.constant 0 : index
    %862 = vector.load %arg2[%c9_717, %c0_718] : memref<27x512xf32, #tpu.memory_space<vmem>>, vector<1x512xf32>
    %863 = vector.broadcast %862 : vector<1x512xf32> to vector<8x512xf32>
    %864 = arith.mulf %861, %863 : vector<8x512xf32>
    %c72_719 = arith.constant 72 : index
    %c0_720 = arith.constant 0 : index
    %865 = vector.load %arg10[%c72_719, %c0_720] : memref<216x512xf32, #tpu.memory_space<vmem>>, vector<8x512xf32>
    tpu.vector_store %arg10[%c72_719, %c0_720], %864 {strides = array<i32>} : memref<216x512xf32, #tpu.memory_space<vmem>>, vector<8x512xf32>,
    %c8_i32_721 = arith.constant 8 : i32
    %866 = tpu.dynamic_rotate %815 by %c8_i32_721 dim 1 : vector<8x512xf32>, i32 -> vector<8x512xf32>
    %c10_722 = arith.constant 10 : index
    %c0_723 = arith.constant 0 : index
    %867 = vector.load %arg2[%c10_722, %c0_723] : memref<27x512xf32, #tpu.memory_space<vmem>>, vector<1x512xf32>
    %868 = vector.broadcast %867 : vector<1x512xf32> to vector<8x512xf32>
    %869 = arith.mulf %866, %868 : vector<8x512xf32>
    %c80_724 = arith.constant 80 : index
    %c0_725 = arith.constant 0 : index
    %870 = vector.load %arg10[%c80_724, %c0_725] : memref<216x512xf32, #tpu.memory_space<vmem>>, vector<8x512xf32>
    tpu.vector_store %arg10[%c80_724, %c0_725], %869 {strides = array<i32>} : memref<216x512xf32, #tpu.memory_space<vmem>>, vector<8x512xf32>,
    %c7_i32_726 = arith.constant 7 : i32
    %871 = tpu.dynamic_rotate %815 by %c7_i32_726 dim 1 : vector<8x512xf32>, i32 -> vector<8x512xf32>
    %c11_727 = arith.constant 11 : index
    %c0_728 = arith.constant 0 : index
    %872 = vector.load %arg2[%c11_727, %c0_728] : memref<27x512xf32, #tpu.memory_space<vmem>>, vector<1x512xf32>
    %873 = vector.broadcast %872 : vector<1x512xf32> to vector<8x512xf32>
    %874 = arith.mulf %871, %873 : vector<8x512xf32>
    %c88_729 = arith.constant 88 : index
    %c0_730 = arith.constant 0 : index
    %875 = vector.load %arg10[%c88_729, %c0_730] : memref<216x512xf32, #tpu.memory_space<vmem>>, vector<8x512xf32>
    tpu.vector_store %arg10[%c88_729, %c0_730], %874 {strides = array<i32>} : memref<216x512xf32, #tpu.memory_space<vmem>>, vector<8x512xf32>,
    %c1_i32_731 = arith.constant 1 : i32
    %876 = tpu.dynamic_rotate %815 by %c1_i32_731 dim 1 : vector<8x512xf32>, i32 -> vector<8x512xf32>
    %c12_732 = arith.constant 12 : index
    %c0_733 = arith.constant 0 : index
    %877 = vector.load %arg2[%c12_732, %c0_733] : memref<27x512xf32, #tpu.memory_space<vmem>>, vector<1x512xf32>
    %878 = vector.broadcast %877 : vector<1x512xf32> to vector<8x512xf32>
    %879 = arith.mulf %876, %878 : vector<8x512xf32>
    %c96_734 = arith.constant 96 : index
    %c0_735 = arith.constant 0 : index
    %880 = vector.load %arg10[%c96_734, %c0_735] : memref<216x512xf32, #tpu.memory_space<vmem>>, vector<8x512xf32>
    tpu.vector_store %arg10[%c96_734, %c0_735], %879 {strides = array<i32>} : memref<216x512xf32, #tpu.memory_space<vmem>>, vector<8x512xf32>,
    %c13_736 = arith.constant 13 : index
    %c0_737 = arith.constant 0 : index
    %881 = vector.load %arg2[%c13_736, %c0_737] : memref<27x512xf32, #tpu.memory_space<vmem>>, vector<1x512xf32>
    %882 = vector.broadcast %881 : vector<1x512xf32> to vector<8x512xf32>
    %883 = arith.mulf %815, %882 : vector<8x512xf32>
    %c104_738 = arith.constant 104 : index
    %c0_739 = arith.constant 0 : index
    %884 = vector.load %arg10[%c104_738, %c0_739] : memref<216x512xf32, #tpu.memory_space<vmem>>, vector<8x512xf32>
    tpu.vector_store %arg10[%c104_738, %c0_739], %883 {strides = array<i32>} : memref<216x512xf32, #tpu.memory_space<vmem>>, vector<8x512xf32>,
    %c511_i32_740 = arith.constant 511 : i32
    %885 = tpu.dynamic_rotate %815 by %c511_i32_740 dim 1 : vector<8x512xf32>, i32 -> vector<8x512xf32>
    %c14_741 = arith.constant 14 : index
    %c0_742 = arith.constant 0 : index
    %886 = vector.load %arg2[%c14_741, %c0_742] : memref<27x512xf32, #tpu.memory_space<vmem>>, vector<1x512xf32>
    %887 = vector.broadcast %886 : vector<1x512xf32> to vector<8x512xf32>
    %888 = arith.mulf %885, %887 : vector<8x512xf32>
    %c112_743 = arith.constant 112 : index
    %c0_744 = arith.constant 0 : index
    %889 = vector.load %arg10[%c112_743, %c0_744] : memref<216x512xf32, #tpu.memory_space<vmem>>, vector<8x512xf32>
    tpu.vector_store %arg10[%c112_743, %c0_744], %888 {strides = array<i32>} : memref<216x512xf32, #tpu.memory_space<vmem>>, vector<8x512xf32>,
    %c505_i32_745 = arith.constant 505 : i32
    %890 = tpu.dynamic_rotate %815 by %c505_i32_745 dim 1 : vector<8x512xf32>, i32 -> vector<8x512xf32>
    %c15_746 = arith.constant 15 : index
    %c0_747 = arith.constant 0 : index
    %891 = vector.load %arg2[%c15_746, %c0_747] : memref<27x512xf32, #tpu.memory_space<vmem>>, vector<1x512xf32>
    %892 = vector.broadcast %891 : vector<1x512xf32> to vector<8x512xf32>
    %893 = arith.mulf %890, %892 : vector<8x512xf32>
    %c120_748 = arith.constant 120 : index
    %c0_749 = arith.constant 0 : index
    %894 = vector.load %arg10[%c120_748, %c0_749] : memref<216x512xf32, #tpu.memory_space<vmem>>, vector<8x512xf32>
    tpu.vector_store %arg10[%c120_748, %c0_749], %893 {strides = array<i32>} : memref<216x512xf32, #tpu.memory_space<vmem>>, vector<8x512xf32>,
    %c504_i32_750 = arith.constant 504 : i32
    %895 = tpu.dynamic_rotate %815 by %c504_i32_750 dim 1 : vector<8x512xf32>, i32 -> vector<8x512xf32>
    %c16_751 = arith.constant 16 : index
    %c0_752 = arith.constant 0 : index
    %896 = vector.load %arg2[%c16_751, %c0_752] : memref<27x512xf32, #tpu.memory_space<vmem>>, vector<1x512xf32>
    %897 = vector.broadcast %896 : vector<1x512xf32> to vector<8x512xf32>
    %898 = arith.mulf %895, %897 : vector<8x512xf32>
    %c128_753 = arith.constant 128 : index
    %c0_754 = arith.constant 0 : index
    %899 = vector.load %arg10[%c128_753, %c0_754] : memref<216x512xf32, #tpu.memory_space<vmem>>, vector<8x512xf32>
    tpu.vector_store %arg10[%c128_753, %c0_754], %898 {strides = array<i32>} : memref<216x512xf32, #tpu.memory_space<vmem>>, vector<8x512xf32>,
    %c503_i32_755 = arith.constant 503 : i32
    %900 = tpu.dynamic_rotate %815 by %c503_i32_755 dim 1 : vector<8x512xf32>, i32 -> vector<8x512xf32>
    %c17_756 = arith.constant 17 : index
    %c0_757 = arith.constant 0 : index
    %901 = vector.load %arg2[%c17_756, %c0_757] : memref<27x512xf32, #tpu.memory_space<vmem>>, vector<1x512xf32>
    %902 = vector.broadcast %901 : vector<1x512xf32> to vector<8x512xf32>
    %903 = arith.mulf %900, %902 : vector<8x512xf32>
    %c136_758 = arith.constant 136 : index
    %c0_759 = arith.constant 0 : index
    %904 = vector.load %arg10[%c136_758, %c0_759] : memref<216x512xf32, #tpu.memory_space<vmem>>, vector<8x512xf32>
    tpu.vector_store %arg10[%c136_758, %c0_759], %903 {strides = array<i32>} : memref<216x512xf32, #tpu.memory_space<vmem>>, vector<8x512xf32>,
    %c457_i32_760 = arith.constant 457 : i32
    %905 = tpu.dynamic_rotate %815 by %c457_i32_760 dim 1 : vector<8x512xf32>, i32 -> vector<8x512xf32>
    %c18_761 = arith.constant 18 : index
    %c0_762 = arith.constant 0 : index
    %906 = vector.load %arg2[%c18_761, %c0_762] : memref<27x512xf32, #tpu.memory_space<vmem>>, vector<1x512xf32>
    %907 = vector.broadcast %906 : vector<1x512xf32> to vector<8x512xf32>
    %908 = arith.mulf %905, %907 : vector<8x512xf32>
    %c144_763 = arith.constant 144 : index
    %c0_764 = arith.constant 0 : index
    %909 = vector.load %arg10[%c144_763, %c0_764] : memref<216x512xf32, #tpu.memory_space<vmem>>, vector<8x512xf32>
    tpu.vector_store %arg10[%c144_763, %c0_764], %908 {strides = array<i32>} : memref<216x512xf32, #tpu.memory_space<vmem>>, vector<8x512xf32>,
    %c456_i32_765 = arith.constant 456 : i32
    %910 = tpu.dynamic_rotate %815 by %c456_i32_765 dim 1 : vector<8x512xf32>, i32 -> vector<8x512xf32>
    %c19_766 = arith.constant 19 : index
    %c0_767 = arith.constant 0 : index
    %911 = vector.load %arg2[%c19_766, %c0_767] : memref<27x512xf32, #tpu.memory_space<vmem>>, vector<1x512xf32>
    %912 = vector.broadcast %911 : vector<1x512xf32> to vector<8x512xf32>
    %913 = arith.mulf %910, %912 : vector<8x512xf32>
    %c152_768 = arith.constant 152 : index
    %c0_769 = arith.constant 0 : index
    %914 = vector.load %arg10[%c152_768, %c0_769] : memref<216x512xf32, #tpu.memory_space<vmem>>, vector<8x512xf32>
    tpu.vector_store %arg10[%c152_768, %c0_769], %913 {strides = array<i32>} : memref<216x512xf32, #tpu.memory_space<vmem>>, vector<8x512xf32>,
    %c455_i32_770 = arith.constant 455 : i32
    %915 = tpu.dynamic_rotate %815 by %c455_i32_770 dim 1 : vector<8x512xf32>, i32 -> vector<8x512xf32>
    %c20_771 = arith.constant 20 : index
    %c0_772 = arith.constant 0 : index
    %916 = vector.load %arg2[%c20_771, %c0_772] : memref<27x512xf32, #tpu.memory_space<vmem>>, vector<1x512xf32>
    %917 = vector.broadcast %916 : vector<1x512xf32> to vector<8x512xf32>
    %918 = arith.mulf %915, %917 : vector<8x512xf32>
    %c160_773 = arith.constant 160 : index
    %c0_774 = arith.constant 0 : index
    %919 = vector.load %arg10[%c160_773, %c0_774] : memref<216x512xf32, #tpu.memory_space<vmem>>, vector<8x512xf32>
    tpu.vector_store %arg10[%c160_773, %c0_774], %918 {strides = array<i32>} : memref<216x512xf32, #tpu.memory_space<vmem>>, vector<8x512xf32>,
    %c449_i32_775 = arith.constant 449 : i32
    %920 = tpu.dynamic_rotate %815 by %c449_i32_775 dim 1 : vector<8x512xf32>, i32 -> vector<8x512xf32>
    %c21_776 = arith.constant 21 : index
    %c0_777 = arith.constant 0 : index
    %921 = vector.load %arg2[%c21_776, %c0_777] : memref<27x512xf32, #tpu.memory_space<vmem>>, vector<1x512xf32>
    %922 = vector.broadcast %921 : vector<1x512xf32> to vector<8x512xf32>
    %923 = arith.mulf %920, %922 : vector<8x512xf32>
    %c168_778 = arith.constant 168 : index
    %c0_779 = arith.constant 0 : index
    %924 = vector.load %arg10[%c168_778, %c0_779] : memref<216x512xf32, #tpu.memory_space<vmem>>, vector<8x512xf32>
    tpu.vector_store %arg10[%c168_778, %c0_779], %923 {strides = array<i32>} : memref<216x512xf32, #tpu.memory_space<vmem>>, vector<8x512xf32>,
    %c448_i32_780 = arith.constant 448 : i32
    %925 = tpu.dynamic_rotate %815 by %c448_i32_780 dim 1 : vector<8x512xf32>, i32 -> vector<8x512xf32>
    %c22_781 = arith.constant 22 : index
    %c0_782 = arith.constant 0 : index
    %926 = vector.load %arg2[%c22_781, %c0_782] : memref<27x512xf32, #tpu.memory_space<vmem>>, vector<1x512xf32>
    %927 = vector.broadcast %926 : vector<1x512xf32> to vector<8x512xf32>
    %928 = arith.mulf %925, %927 : vector<8x512xf32>
    %c176_783 = arith.constant 176 : index
    %c0_784 = arith.constant 0 : index
    %929 = vector.load %arg10[%c176_783, %c0_784] : memref<216x512xf32, #tpu.memory_space<vmem>>, vector<8x512xf32>
    tpu.vector_store %arg10[%c176_783, %c0_784], %928 {strides = array<i32>} : memref<216x512xf32, #tpu.memory_space<vmem>>, vector<8x512xf32>,
    %c447_i32_785 = arith.constant 447 : i32
    %930 = tpu.dynamic_rotate %815 by %c447_i32_785 dim 1 : vector<8x512xf32>, i32 -> vector<8x512xf32>
    %c23_786 = arith.constant 23 : index
    %c0_787 = arith.constant 0 : index
    %931 = vector.load %arg2[%c23_786, %c0_787] : memref<27x512xf32, #tpu.memory_space<vmem>>, vector<1x512xf32>
    %932 = vector.broadcast %931 : vector<1x512xf32> to vector<8x512xf32>
    %933 = arith.mulf %930, %932 : vector<8x512xf32>
    %c184_788 = arith.constant 184 : index
    %c0_789 = arith.constant 0 : index
    %934 = vector.load %arg10[%c184_788, %c0_789] : memref<216x512xf32, #tpu.memory_space<vmem>>, vector<8x512xf32>
    tpu.vector_store %arg10[%c184_788, %c0_789], %933 {strides = array<i32>} : memref<216x512xf32, #tpu.memory_space<vmem>>, vector<8x512xf32>,
    %c441_i32_790 = arith.constant 441 : i32
    %935 = tpu.dynamic_rotate %815 by %c441_i32_790 dim 1 : vector<8x512xf32>, i32 -> vector<8x512xf32>
    %c24_791 = arith.constant 24 : index
    %c0_792 = arith.constant 0 : index
    %936 = vector.load %arg2[%c24_791, %c0_792] : memref<27x512xf32, #tpu.memory_space<vmem>>, vector<1x512xf32>
    %937 = vector.broadcast %936 : vector<1x512xf32> to vector<8x512xf32>
    %938 = arith.mulf %935, %937 : vector<8x512xf32>
    %c192_793 = arith.constant 192 : index
    %c0_794 = arith.constant 0 : index
    %939 = vector.load %arg10[%c192_793, %c0_794] : memref<216x512xf32, #tpu.memory_space<vmem>>, vector<8x512xf32>
    tpu.vector_store %arg10[%c192_793, %c0_794], %938 {strides = array<i32>} : memref<216x512xf32, #tpu.memory_space<vmem>>, vector<8x512xf32>,
    %c440_i32_795 = arith.constant 440 : i32
    %940 = tpu.dynamic_rotate %815 by %c440_i32_795 dim 1 : vector<8x512xf32>, i32 -> vector<8x512xf32>
    %c25_796 = arith.constant 25 : index
    %c0_797 = arith.constant 0 : index
    %941 = vector.load %arg2[%c25_796, %c0_797] : memref<27x512xf32, #tpu.memory_space<vmem>>, vector<1x512xf32>
    %942 = vector.broadcast %941 : vector<1x512xf32> to vector<8x512xf32>
    %943 = arith.mulf %940, %942 : vector<8x512xf32>
    %c200_798 = arith.constant 200 : index
    %c0_799 = arith.constant 0 : index
    %944 = vector.load %arg10[%c200_798, %c0_799] : memref<216x512xf32, #tpu.memory_space<vmem>>, vector<8x512xf32>
    tpu.vector_store %arg10[%c200_798, %c0_799], %943 {strides = array<i32>} : memref<216x512xf32, #tpu.memory_space<vmem>>, vector<8x512xf32>,
    %c439_i32_800 = arith.constant 439 : i32
    %945 = tpu.dynamic_rotate %815 by %c439_i32_800 dim 1 : vector<8x512xf32>, i32 -> vector<8x512xf32>
    %c26_801 = arith.constant 26 : index
    %c0_802 = arith.constant 0 : index
    %946 = vector.load %arg2[%c26_801, %c0_802] : memref<27x512xf32, #tpu.memory_space<vmem>>, vector<1x512xf32>
    %947 = vector.broadcast %946 : vector<1x512xf32> to vector<8x512xf32>
    %948 = arith.mulf %945, %947 : vector<8x512xf32>
    %c208_803 = arith.constant 208 : index
    %c0_804 = arith.constant 0 : index
    %949 = vector.load %arg10[%c208_803, %c0_804] : memref<216x512xf32, #tpu.memory_space<vmem>>, vector<8x512xf32>
    tpu.vector_store %arg10[%c208_803, %c0_804], %948 {strides = array<i32>} : memref<216x512xf32, #tpu.memory_space<vmem>>, vector<8x512xf32>,
    %c0_805 = arith.constant 0 : index
    %c0_806 = arith.constant 0 : index
    %950 = vector.load %arg7[%c0_805, %c0_806] : memref<8x216xf32, #tpu.memory_space<vmem>>, vector<8x216xf32>
    %c0_807 = arith.constant 0 : index
    %c0_808 = arith.constant 0 : index
    %951 = vector.load %arg10[%c0_807, %c0_808] : memref<216x512xf32, #tpu.memory_space<vmem>>, vector<216x512xf32>
    %cst_809 = arith.constant dense<0.000000e+00> : vector<8x512xf32>
    %952 = tpu.matmul %950, %951, %cst_809 {dimension_numbers = #tpu.dot_dimension_numbers<[1], [0], [0], [1], [0, 0, 1, 1], [], []>} : vector<8x216xf32>, vector<216x512xf32>, vector<8x512xf32> -> vector<8x512xf32>
    %c0_810 = arith.constant 0 : index
    %c0_811 = arith.constant 0 : index
    %953 = vector.load %arg8[%c0_810, %c0_811] : memref<8x1xf32, #tpu.memory_space<vmem>>, vector<8x1xf32>
    %954 = vector.broadcast %953 : vector<8x1xf32> to vector<8x512xf32>
    %955 = arith.addf %952, %954 : vector<8x512xf32>
    %cst_812 = arith.constant dense<0.000000e+00> : vector<8xf32>
    %956 = vector.multi_reduction <add>, %955, %cst_812 [1] : vector<8x512xf32> to vector<8xf32>
    %957 = vector.shape_cast %956 : vector<8xf32> to vector<8x1xf32>
    %cst_813 = arith.constant 5.120000e+02 : f32
    %958 = vector.broadcast %cst_813 : f32 to vector<8x1xf32>
    %959 = arith.divf %957, %958 : vector<8x1xf32>
    %960 = vector.broadcast %959 : vector<8x1xf32> to vector<8x512xf32>
    %961 = arith.subf %955, %960 : vector<8x512xf32>
    %962 = arith.mulf %961, %961 : vector<8x512xf32>
    %cst_814 = arith.constant dense<0.000000e+00> : vector<8xf32>
    %963 = vector.multi_reduction <add>, %962, %cst_814 [1] : vector<8x512xf32> to vector<8xf32>
    %964 = vector.shape_cast %963 : vector<8xf32> to vector<8x1xf32>
    %cst_815 = arith.constant 5.120000e+02 : f32
    %965 = vector.broadcast %cst_815 : f32 to vector<8x1xf32>
    %966 = arith.divf %964, %965 : vector<8x1xf32>
    %cst_816 = arith.constant 9.99999974E-6 : f32
    %967 = vector.broadcast %cst_816 : f32 to vector<8x1xf32>
    %968 = arith.addf %966, %967 : vector<8x1xf32>
    %969 = math.rsqrt %968 : vector<8x1xf32>
    %970 = vector.broadcast %969 : vector<8x1xf32> to vector<8x512xf32>
    %971 = arith.mulf %961, %970 : vector<8x512xf32>
    %cst_817 = arith.constant 0.000000e+00 : f32
    %972 = vector.broadcast %cst_817 : f32 to vector<8x512xf32>
    %973 = arith.cmpf oge, %971, %972 : vector<8x512xf32>
    %cst_818 = arith.constant 0.00999999977 : f32
    %974 = vector.broadcast %cst_818 : f32 to vector<8x512xf32>
    %975 = arith.mulf %974, %971 : vector<8x512xf32>
    %976 = arith.select %973, %971, %975 : vector<8x512xi1>, vector<8x512xf32>
    %977 = arith.addf %976, %6 : vector<8x512xf32>
    %c0_819 = arith.constant 0 : index
    %c0_820 = arith.constant 0 : index
    %c0_821 = arith.constant 0 : index
    %978 = vector.load %arg9[%c0_819, %c0_820, %c0_821] : memref<1x8x512xf32, #tpu.memory_space<vmem>>, vector<1x8x512xf32>
    %979 = vector.shape_cast %978 : vector<1x8x512xf32> to vector<8x512xf32>
    %980 = vector.shape_cast %977 : vector<8x512xf32> to vector<1x8x512xf32>
    tpu.vector_store %arg9[%c0_819, %c0_820, %c0_821], %980 {strides = array<i32>} : memref<1x8x512xf32, #tpu.memory_space<vmem>>, vector<1x8x512xf32>,
    return
  }
  func.func @transform_0(%arg0: i32) -> (i32, i32, i32) {
    %c0_i32 = arith.constant 0 : i32
    %c0_i32_0 = arith.constant 0 : i32
    %c0_i32_1 = arith.constant 0 : i32
    return %arg0, %c0_i32, %c0_i32_0 : i32, i32, i32
  }
  func.func @transform_1(%arg0: i32) -> (i32, i32) {
    %c0_i32 = arith.constant 0 : i32
    %c0_i32_0 = arith.constant 0 : i32
    %c0_i32_1 = arith.constant 0 : i32
    return %c0_i32, %c0_i32_0 : i32, i32
  }
  func.func @transform_2(%arg0: i32) -> (i32, i32) {
    %c0_i32 = arith.constant 0 : i32
    %c0_i32_0 = arith.constant 0 : i32
    %c0_i32_1 = arith.constant 0 : i32
    return %c0_i32, %c0_i32_0 : i32, i32
  }
  func.func @transform_3(%arg0: i32) -> (i32, i32) {
    %c0_i32 = arith.constant 0 : i32
    %c0_i32_0 = arith.constant 0 : i32
    %c0_i32_1 = arith.constant 0 : i32
    return %c0_i32, %c0_i32_0 : i32, i32
  }
  func.func @transform_4(%arg0: i32) -> (i32, i32) {
    %c0_i32 = arith.constant 0 : i32
    %c0_i32_0 = arith.constant 0 : i32
    %c0_i32_1 = arith.constant 0 : i32
    return %c0_i32, %c0_i32_0 : i32, i32
  }
  func.func @transform_5(%arg0: i32) -> (i32, i32) {
    %c0_i32 = arith.constant 0 : i32
    %c0_i32_0 = arith.constant 0 : i32
    %c0_i32_1 = arith.constant 0 : i32
    return %c0_i32, %c0_i32_0 : i32, i32
  }
  func.func @transform_6(%arg0: i32) -> (i32, i32) {
    %c0_i32 = arith.constant 0 : i32
    %c0_i32_0 = arith.constant 0 : i32
    %c0_i32_1 = arith.constant 0 : i32
    return %c0_i32, %c0_i32_0 : i32, i32
  }
  func.func @transform_7(%arg0: i32) -> (i32, i32) {
    %c0_i32 = arith.constant 0 : i32
    %c0_i32_0 = arith.constant 0 : i32
    %c0_i32_1 = arith.constant 0 : i32
    return %c0_i32, %c0_i32_0 : i32, i32
  }
  func.func @transform_8(%arg0: i32) -> (i32, i32, i32) {
    %c0_i32 = arith.constant 0 : i32
    %c0_i32_0 = arith.constant 0 : i32
    %c0_i32_1 = arith.constant 0 : i32
    return %arg0, %c0_i32, %c0_i32_0 : i32, i32, i32
  }
}

</mosaic_0001>

<llo_original>
// kernel: res_rec_block_forward.1
$region0: #{res_rec_block_forward.1}
  #allocation0 [shape = 'u32[]', space=smem, size = 0x4, offset = 0x4, fixed_abs, tag = 'smem constant byte address 0x4 - core index']
  #allocation1 [shape = 'u32[144,128]{1,0:T(1,128)}', space=vmem, size = 0x12000, scoped, tag = 'internal scratch']
  #allocation2 [shape = 'f32[216,512]{1,0:T(8,128)}', space=vmem, size = 0x6c000, scoped, tag = 'scratch operand']
  %s0 = inlined_call_operand.vmem [shape: f32[2,4,512], index: 0, kind: input, shape index: {}]
  %s1 = inlined_call_operand.vmem [shape: f32[27,512], index: 1, kind: input, shape index: {}]
  %s2 = inlined_call_operand.vmem [shape: f32[8,4], index: 2, kind: input, shape index: {}]
  %s3 = inlined_call_operand.vmem [shape: f32[8,1], index: 3, kind: input, shape index: {}]
  %s4 = inlined_call_operand.vmem [shape: f32[8,216], index: 4, kind: input, shape index: {}]
  %s5 = inlined_call_operand.vmem [shape: f32[8,1], index: 5, kind: input, shape index: {}]
  %s6 = inlined_call_operand.vmem [shape: f32[8,216], index: 6, kind: input, shape index: {}]
  %s7 = inlined_call_operand.vmem [shape: f32[8,1], index: 7, kind: input, shape index: {}]
  %s8 = inlined_call_operand.vmem [shape: f32[2,8,512], index: 8, kind: output, shape index: {}]
  %s9 = sld [smem:[#allocation0]]
  $region65: #{res_rec_block_forward.1} parent=0
    _
  %s11 = ssub.s32 1, %s9
  %s12 = scalar_select 0, %s11, %s9
  loop: start=0, step=1, limit=4
  $region2: #{res_rec_block_forward.1} parent=0 // loop_pre_header
    _
  $region3: #{res_rec_block_forward.1} parent=0 // loop_header
    %s14 = sphi 0, %s18
    %p15 = scmp.ge.s32.totalorder %s14, 4
    %s24 = sphi 0, %s26
    %s27 = sphi 0, %s24
    %s28 = sphi 0, %s27
    %s44 = sphi 0, %s28
    %s48 = sphi 0, %s48
    %s50 = sphi 0, %s48
    %s51 = sphi 0, %s50
    %s65 = sphi 0, %s51
    %s69 = sphi 0, %s69
    %s71 = sphi 0, %s69
    %s72 = sphi 0, %s71
    %s86 = sphi 0, %s72
    %s90 = sphi 0, %s90
    %s92 = sphi 0, %s90
    %s93 = sphi 0, %s92
    %s107 = sphi 0, %s93
    %s111 = sphi 0, %s111
    %s113 = sphi 0, %s111
    %s114 = sphi 0, %s113
    %s128 = sphi 0, %s114
    %s132 = sphi 0, %s132
    %s134 = sphi 0, %s132
    %s135 = sphi 0, %s134
    %s149 = sphi 0, %s135
    %s153 = sphi 0, %s153
    %s155 = sphi 0, %s153
    %s156 = sphi 0, %s155
    %s170 = sphi 0, %s156
    %s174 = sphi 0, %s174
    %s176 = sphi 0, %s174
    %s177 = sphi 0, %s176
    %s191 = sphi 0, %s177
    %s197 = sphi 0, %s199
    %s200 = sphi 0, %s197
    %s201 = sphi 0, %s200
    %s217 = sphi 0, %s201
  $region4: #{res_rec_block_forward.1} parent=0 // loop_header_branch
    %17 = sbr.rel (%p15) target = $region8
  $region5: #{res_rec_block_forward.1} parent=0 // loop_body
    %s19 = ssub.s32 %s14, 1
    %s20 = ssub.s32 %s14, 2
    %s21 = sadd.s32 %s14, 1
    %s22 = ssub.s32 %s14, %s21
    %p23 = scmp.eq.s32.totalorder %s22, 0
    %s25 = sadd.s32 %s24, 1
    %s26 = scalar_select %p23, %s24, %s25
    %p29 = pneg %p23
    %p30 = scmp.eq.s32.totalorder %s14, 1
    %p31 = por %p29, %p30
    %p32 = scmp.ne.s32.totalorder %s24, %s27
    %p33 = scmp.eq.s32.totalorder %s14, 0
    %p34 = por %p32, %p33
    %p35 = scmp.ne.s32.totalorder %s24, %s27
    %p36 = scmp.eq.s32.totalorder %s19, 1
    %p37 = por %p35, %p36
    %p38 = scmp.ne.s32.totalorder %s27, %s28
    %p39 = scmp.eq.s32.totalorder %s19, 0
    %p40 = por %p38, %p39
    %p41 = scmp.ne.s32.totalorder %s27, %s28
    %p42 = scmp.eq.s32.totalorder %s20, 1
    %p43 = por %p41, %p42
    %p45 = scmp.ne.s32.totalorder %s28, %s44
    %p46 = scmp.eq.s32.totalorder %s20, 0
    %p47 = por %p45, %p46
    %s49 = sadd.s32 %s48, 1
    %p52 = scmp.eq.s32.totalorder %s14, 1
    %p53 = scmp.ne.s32.totalorder %s48, %s50
    %p54 = scmp.eq.s32.totalorder %s14, 0
    %p55 = por %p53, %p54
    %p56 = scmp.ne.s32.totalorder %s48, %s50
    %p57 = scmp.eq.s32.totalorder %s19, 1
    %p58 = por %p56, %p57
    %p59 = scmp.ne.s32.totalorder %s50, %s51
    %p60 = scmp.eq.s32.totalorder %s19, 0
    %p61 = por %p59, %p60
    %p62 = scmp.ne.s32.totalorder %s50, %s51
    %p63 = scmp.eq.s32.totalorder %s20, 1
    %p64 = por %p62, %p63
    %p66 = scmp.ne.s32.totalorder %s51, %s65
    %p67 = scmp.eq.s32.totalorder %s20, 0
    %p68 = por %p66, %p67
    %s70 = sadd.s32 %s69, 1
    %p73 = scmp.eq.s32.totalorder %s14, 1
    %p74 = scmp.ne.s32.totalorder %s69, %s71
    %p75 = scmp.eq.s32.totalorder %s14, 0
    %p76 = por %p74, %p75
    %p77 = scmp.ne.s32.totalorder %s69, %s71
    %p78 = scmp.eq.s32.totalorder %s19, 1
    %p79 = por %p77, %p78
    %p80 = scmp.ne.s32.totalorder %s71, %s72
    %p81 = scmp.eq.s32.totalorder %s19, 0
    %p82 = por %p80, %p81
    %p83 = scmp.ne.s32.totalorder %s71, %s72
    %p84 = scmp.eq.s32.totalorder %s20, 1
    %p85 = por %p83, %p84
    %p87 = scmp.ne.s32.totalorder %s72, %s86
    %p88 = scmp.eq.s32.totalorder %s20, 0
    %p89 = por %p87, %p88
    %s91 = sadd.s32 %s90, 1
    %p94 = scmp.eq.s32.totalorder %s14, 1
    %p95 = scmp.ne.s32.totalorder %s90, %s92
    %p96 = scmp.eq.s32.totalorder %s14, 0
    %p97 = por %p95, %p96
    %p98 = scmp.ne.s32.totalorder %s90, %s92
    %p99 = scmp.eq.s32.totalorder %s19, 1
    %p100 = por %p98, %p99
    %p101 = scmp.ne.s32.totalorder %s92, %s93
    %p102 = scmp.eq.s32.totalorder %s19, 0
    %p103 = por %p101, %p102
    %p104 = scmp.ne.s32.totalorder %s92, %s93
    %p105 = scmp.eq.s32.totalorder %s20, 1
    %p106 = por %p104, %p105
    %p108 = scmp.ne.s32.totalorder %s93, %s107
    %p109 = scmp.eq.s32.totalorder %s20, 0
    %p110 = por %p108, %p109
    %s112 = sadd.s32 %s111, 1
    %p115 = scmp.eq.s32.totalorder %s14, 1
    %p116 = scmp.ne.s32.totalorder %s111, %s113
    %p117 = scmp.eq.s32.totalorder %s14, 0
    %p118 = por %p116, %p117
    %p119 = scmp.ne.s32.totalorder %s111, %s113
    %p120 = scmp.eq.s32.totalorder %s19, 1
    %p121 = por %p119, %p120
    %p122 = scmp.ne.s32.totalorder %s113, %s114
    %p123 = scmp.eq.s32.totalorder %s19, 0
    %p124 = por %p122, %p123
    %p125 = scmp.ne.s32.totalorder %s113, %s114
    %p126 = scmp.eq.s32.totalorder %s20, 1
    %p127 = por %p125, %p126
    %p129 = scmp.ne.s32.totalorder %s114, %s128
    %p130 = scmp.eq.s32.totalorder %s20, 0
    %p131 = por %p129, %p130
    %s133 = sadd.s32 %s132, 1
    %p136 = scmp.eq.s32.totalorder %s14, 1
    %p137 = scmp.ne.s32.totalorder %s132, %s134
    %p138 = scmp.eq.s32.totalorder %s14, 0
    %p139 = por %p137, %p138
    %p140 = scmp.ne.s32.totalorder %s132, %s134
    %p141 = scmp.eq.s32.totalorder %s19, 1
    %p142 = por %p140, %p141
    %p143 = scmp.ne.s32.totalorder %s134, %s135
    %p144 = scmp.eq.s32.totalorder %s19, 0
    %p145 = por %p143, %p144
    %p146 = scmp.ne.s32.totalorder %s134, %s135
    %p147 = scmp.eq.s32.totalorder %s20, 1
    %p148 = por %p146, %p147
    %p150 = scmp.ne.s32.totalorder %s135, %s149
    %p151 = scmp.eq.s32.totalorder %s20, 0
    %p152 = por %p150, %p151
    %s154 = sadd.s32 %s153, 1
    %p157 = scmp.eq.s32.totalorder %s14, 1
    %p158 = scmp.ne.s32.totalorder %s153, %s155
    %p159 = scmp.eq.s32.totalorder %s14, 0
    %p160 = por %p158, %p159
    %p161 = scmp.ne.s32.totalorder %s153, %s155
    %p162 = scmp.eq.s32.totalorder %s19, 1
    %p163 = por %p161, %p162
    %p164 = scmp.ne.s32.totalorder %s155, %s156
    %p165 = scmp.eq.s32.totalorder %s19, 0
    %p166 = por %p164, %p165
    %p167 = scmp.ne.s32.totalorder %s155, %s156
    %p168 = scmp.eq.s32.totalorder %s20, 1
    %p169 = por %p167, %p168
    %p171 = scmp.ne.s32.totalorder %s156, %s170
    %p172 = scmp.eq.s32.totalorder %s20, 0
    %p173 = por %p171, %p172
    %s175 = sadd.s32 %s174, 1
    %p178 = scmp.eq.s32.totalorder %s14, 1
    %p179 = scmp.ne.s32.totalorder %s174, %s176
    %p180 = scmp.eq.s32.totalorder %s14, 0
    %p181 = por %p179, %p180
    %p182 = scmp.ne.s32.totalorder %s174, %s176
    %p183 = scmp.eq.s32.totalorder %s19, 1
    %p184 = por %p182, %p183
    %p185 = scmp.ne.s32.totalorder %s176, %s177
    %p186 = scmp.eq.s32.totalorder %s19, 0
    %p187 = por %p185, %p186
    %p188 = scmp.ne.s32.totalorder %s176, %s177
    %p189 = scmp.eq.s32.totalorder %s20, 1
    %p190 = por %p188, %p189
    %p192 = scmp.ne.s32.totalorder %s177, %s191
    %p193 = scmp.eq.s32.totalorder %s20, 0
    %p194 = por %p192, %p193
    %s195 = ssub.s32 %s14, %s21
    %p196 = scmp.eq.s32.totalorder %s195, 0
    %s198 = sadd.s32 %s197, 1
    %s199 = scalar_select %p196, %s197, %s198
    %p202 = pneg %p196
    %p203 = scmp.eq.s32.totalorder %s14, 1
    %p204 = por %p202, %p203
    %p205 = scmp.ne.s32.totalorder %s197, %s200
    %p206 = scmp.eq.s32.totalorder %s14, 0
    %p207 = por %p205, %p206
    %p208 = scmp.ne.s32.totalorder %s197, %s200
    %p209 = scmp.eq.s32.totalorder %s19, 1
    %p210 = por %p208, %p209
    %p211 = scmp.ne.s32.totalorder %s200, %s201
    %p212 = scmp.eq.s32.totalorder %s19, 0
    %p213 = por %p211, %p212
    %p214 = scmp.ne.s32.totalorder %s200, %s201
    %p215 = scmp.eq.s32.totalorder %s20, 1
    %p216 = por %p214, %p215
    %p218 = scmp.ne.s32.totalorder %s201, %s217
    %p219 = scmp.eq.s32.totalorder %s20, 0
    %p220 = por %p218, %p219
    %p221 = scmp.le.s32.totalorder 1, %s14
    %p222 = scmp.lt.s32.totalorder %s14, 3
    %p223 = pnand %p221, %p222
    %p224 = pneg %p223
    // Predicated region
    $region9: #{res_rec_block_forward.1} parent=5 // pred_check
      _
    $region10: #{res_rec_block_forward.1} parent=5 // pred_check_branch
      %226 = sbr.rel (%p223) target = $region12
    $region11: #{res_rec_block_forward.1} parent=5 // pred_region
      %s227 = ssub.s32 %s14, 1
      // Predicated region
      $region13: #{res_rec_block_forward.1} parent=11 // pred_check
        %p228 = pneg %p61
      $region14: #{res_rec_block_forward.1} parent=11 // pred_check_branch
        %230 = sbr.rel (%p228) target = $region16
      $region15: #{res_rec_block_forward.1} parent=11 // pred_region
        _
      $region16: #{res_rec_block_forward.1} parent=11 // pred_fallthru
        _
      // Predicated region
      $region17: #{res_rec_block_forward.1} parent=11 // pred_check
        %p231 = pneg %p82
      $region18: #{res_rec_block_forward.1} parent=11 // pred_check_branch
        %233 = sbr.rel (%p231) target = $region20
      $region19: #{res_rec_block_forward.1} parent=11 // pred_region
        _
      $region20: #{res_rec_block_forward.1} parent=11 // pred_fallthru
        _
      // Predicated region
      $region21: #{res_rec_block_forward.1} parent=11 // pred_check
        %p234 = pneg %p103
      $region22: #{res_rec_block_forward.1} parent=11 // pred_check_branch
        %236 = sbr.rel (%p234) target = $region24
      $region23: #{res_rec_block_forward.1} parent=11 // pred_region
        _
      $region24: #{res_rec_block_forward.1} parent=11 // pred_fallthru
        _
      // Predicated region
      $region25: #{res_rec_block_forward.1} parent=11 // pred_check
        %p237 = pneg %p124
      $region26: #{res_rec_block_forward.1} parent=11 // pred_check_branch
        %239 = sbr.rel (%p237) target = $region28
      $region27: #{res_rec_block_forward.1} parent=11 // pred_region
        _
      $region28: #{res_rec_block_forward.1} parent=11 // pred_fallthru
        _
      // Predicated region
      $region29: #{res_rec_block_forward.1} parent=11 // pred_check
        %p240 = pneg %p145
      $region30: #{res_rec_block_forward.1} parent=11 // pred_check_branch
        %242 = sbr.rel (%p240) target = $region32
      $region31: #{res_rec_block_forward.1} parent=11 // pred_region
        _
      $region32: #{res_rec_block_forward.1} parent=11 // pred_fallthru
        _
      // Predicated region
      $region33: #{res_rec_block_forward.1} parent=11 // pred_check
        %p243 = pneg %p166
      $region34: #{res_rec_block_forward.1} parent=11 // pred_check_branch
        %245 = sbr.rel (%p243) target = $region36
      $region35: #{res_rec_block_forward.1} parent=11 // pred_region
        _
      $region36: #{res_rec_block_forward.1} parent=11 // pred_fallthru
        _
      // Predicated region
      $region37: #{res_rec_block_forward.1} parent=11 // pred_check
        %p246 = pneg %p187
      $region38: #{res_rec_block_forward.1} parent=11 // pred_check_branch
        %248 = sbr.rel (%p246) target = $region40
      $region39: #{res_rec_block_forward.1} parent=11 // pred_region
        _
      $region40: #{res_rec_block_forward.1} parent=11 // pred_fallthru
        _
    $region12: #{res_rec_block_forward.1} parent=5 // pred_fallthru
      _
    %p249 = scmp.lt.s32.totalorder %s14, 2
    // Predicated region
    $region41: #{res_rec_block_forward.1} parent=5 // pred_check
      %p250 = pneg %p249
    $region42: #{res_rec_block_forward.1} parent=5 // pred_check_branch
      %252 = sbr.rel (%p250) target = $region44
    $region43: #{res_rec_block_forward.1} parent=5 // pred_region
      // Predicated region
      $region45: #{res_rec_block_forward.1} parent=43 // pred_check
        %p253 = pneg %p34
      $region46: #{res_rec_block_forward.1} parent=43 // pred_check_branch
        %255 = sbr.rel (%p253) target = $region48
      $region47: #{res_rec_block_forward.1} parent=43 // pred_region
        %p256 = scmp.lt.s32.totalorder %s14, 1
        %s257 = scalar_select %p256, %s14, 1
        %s258 = smul.addr %s257, 4
        %s259 = smul.addr %s258, 4
        %s260 = scalar_lea.vmem %s0, %s259
      $region48: #{res_rec_block_forward.1} parent=43 // pred_fallthru
        _
    $region44: #{res_rec_block_forward.1} parent=5 // pred_fallthru
      _
    %p261 = scmp.le.s32.totalorder 1, %s14
    %p262 = scmp.lt.s32.totalorder %s14, 3
    %p263 = pnand %p261, %p262
    %p264 = pneg %p263
    // Predicated region
    $region49: #{res_rec_block_forward.1} parent=5 // pred_check
      _
    $region50: #{res_rec_block_forward.1} parent=5 // pred_check_branch
      %266 = sbr.rel (%p263) target = $region52
    $region51: #{res_rec_block_forward.1} parent=5 // pred_region
      %s267 = ssub.s32 %s14, 1
      %p268 = scmp.lt.s32.totalorder %s19, 1
      %s269 = scalar_select %p268, %s19, 1
      %s270 = smul.addr %s269, 4
      %s271 = smul.addr %s270, 4
      %s272 = scalar_lea.vmem %s0, %s271
      %p273 = pneg %p40
      %p274 = pneg %p37
      %p275 = pneg %p61
      %p276 = pneg %p58
      %p277 = pneg %p82
      %p278 = pneg %p79
      %p279 = pneg %p103
      %p280 = pneg %p100
      %p281 = pneg %p124
      %p282 = pneg %p121
      %p283 = pneg %p145
      %p284 = pneg %p142
      %p285 = pneg %p166
      %p286 = pneg %p163
      %p287 = pneg %p187
      %p288 = pneg %p184
      %p289 = pneg %p213
      %p290 = pneg %p210
      %p291 = scmp.lt.s32.totalorder %s19, 1
      %s292 = scalar_select %p291, %s19, 1
      %s293 = smul.addr %s292, 4
      %s294 = smul.addr %s293, 8
      %s295 = scalar_lea.vmem %s8, %s294
      %p296 = scmp.lt.s32.totalorder %s19, 1
      %s297 = scalar_select %p296, %s19, 1
      %s298 = smul.addr %s297, 4
      %s299 = smul.addr %s298, 4
      %s300 = scalar_lea.vmem %s0, %s299
      %p301 = scmp.lt.s32.totalorder %s19, 1
      %s302 = scalar_select %p301, %s19, 1
      %s303 = smul.addr %s302, 4
      %s304 = smul.addr %s303, 8
      %s305 = scalar_lea.vmem %s8, %s304
      %v306 = vld [vmem:[%s2] sm:$0xff]
      %v307 = vld [vmem:[%s300] sm:$0xff]
      %v308 = vld [vmem:[%s300 + $0x8] sm:$0xff]
      %v309 = vld [vmem:[%s3] sm:$0xff]
      %311 = vset.pattern.permute.xlu0 0
      %312 = vperm.xlu0 %311, %v309
      %v313 = vpop.permute.xlu0 %312
      %v317 = vcombine.high %v307, %v307
      %v318 = vcombine.high %v308, %v308
      %vm319 = vcmask 31744
      %v321 = vsel %vm319, %v306, 0
      %vm323 = vcmask 1043456
      %v324 = vsel %vm323, %v307, 0
      %v326 = vsel %vm323, %v317, 0
      %v328 = vsel %vm323, %v308, 0
      %v330 = vsel %vm323, %v318, 0
      %332 = vmatprep.subr.mxu0 %v326
      %333 = vmatpush1.msra.mxu0 %v324
      %334 = vmatprep.subr.mxu0 0.0
      %335 = vmatpush1.msra.mxu0 0.0
      %336 = vmatprep.subr.mxu0 0.0
      %337 = vmatpush1.msra.mxu0 0.0
      %338 = vmatprep.subr.mxu0 0.0
      %339 = vmatpush1.msra.mxu0 0.0
      %340 = vmatprep.subr.mxu0 0.0
      %341 = vmatpush1.msra.mxu0 0.0
      %342 = vmatprep.subr.mxu0 0.0
      %343 = vmatpush1.msra.mxu0 0.0
      %344 = vmatprep.subr.mxu0 0.0
      %345 = vmatpush1.msra.mxu0 0.0
      %346 = vmatprep.subr.mxu0 0.0
      %347 = vmatpush1.msra.mxu0 0.0
      %348 = vmatprep.subr.mxu0 0.0
      %349 = vmatpush1.msra.mxu0 0.0
      %350 = vmatprep.subr.mxu0 0.0
      %351 = vmatpush1.msra.mxu0 0.0
      %352 = vmatprep.subr.mxu0 0.0
      %353 = vmatpush1.msra.mxu0 0.0
      %354 = vmatprep.subr.mxu0 0.0
      %355 = vmatpush1.msra.mxu0 0.0
      %356 = vmatprep.subr.mxu0 0.0
      %357 = vmatpush1.msra.mxu0 0.0
      %358 = vmatprep.subr.mxu0 0.0
      %359 = vmatpush1.msra.mxu0 0.0
      %360 = vmatprep.subr.mxu0 0.0
      %361 = vmatpush1.msra.mxu0 0.0
      %362 = vmatprep.subr.mxu0 0.0
      %363 = vmatpush1.msra.mxu0 0.0
      %364 = vmatprep.subr.mxu0 0.0
      %365 = vmatpush1.msra.mxu0 0.0
      %366 = vmatprep.subr.mxu0 0.0
      %367 = vmatpush1.msra.mxu0 0.0
      %368 = vmatprep.subr.mxu0 0.0
      %369 = vmatpush1.msra.mxu0 0.0
      %370 = vmatprep.subr.mxu0 0.0
      %371 = vmatpush1.msra.mxu0 0.0
      %372 = vmatprep.subr.mxu0 0.0
      %373 = vmatpush1.msra.mxu0 0.0
      %374 = vmatprep.subr.mxu0 0.0
      %375 = vmatpush1.msra.mxu0 0.0
      %376 = vmatprep.subr.mxu0 0.0
      %377 = vmatpush1.msra.mxu0 0.0
      %378 = vmatprep.subr.mxu0 0.0
      %379 = vmatpush1.msra.mxu0 0.0
      %380 = vmatprep.subr.mxu0 0.0
      %381 = vmatpush1.msra.mxu0 0.0
      %382 = vmatprep.subr.mxu0 0.0
      %383 = vmatpush1.msra.mxu0 0.0
      %384 = vmatprep.subr.mxu0 0.0
      %385 = vmatpush1.msra.mxu0 0.0
      %386 = vmatprep.subr.mxu0 0.0
      %387 = vmatpush1.msra.mxu0 0.0
      %388 = vmatprep.subr.mxu0 0.0
      %389 = vmatpush1.msra.mxu0 0.0
      %390 = vmatprep.subr.mxu0 0.0
      %391 = vmatpush1.msra.mxu0 0.0
      %392 = vmatprep.subr.mxu0 0.0
      %393 = vmatpush1.msra.mxu0 0.0
      %394 = vmatprep.subr.mxu0 0.0
      %395 = vmatpush1.msra.mxu0 0.0
      %396 = vmatprep.mubr.f32.mxu0 0.0
      %397 = vmatmul.mubr.f32.gmra.mrb[0].mxu0 %v321
      %v398 = vpop.f32.mrb[0].mxu0
      %v399 = vadd.f32 %v313, %v398
      %v400 = vpop.f32.mrb[0].mxu0
      %v401 = vadd.f32 %v313, %v400
      %402 = vdwg.mxu0
      %403 = vmatprep.subr.mxu0 %v330
      %404 = vmatpush1.msra.mxu0 %v328
      %405 = vmatprep.subr.mxu0 0.0
      %406 = vmatpush1.msra.mxu0 0.0
      %407 = vmatprep.subr.mxu0 0.0
      %408 = vmatpush1.msra.mxu0 0.0
      %409 = vmatprep.subr.mxu0 0.0
      %410 = vmatpush1.msra.mxu0 0.0
      %411 = vmatprep.subr.mxu0 0.0
      %412 = vmatpush1.msra.mxu0 0.0
      %413 = vmatprep.subr.mxu0 0.0
      %414 = vmatpush1.msra.mxu0 0.0
      %415 = vmatprep.subr.mxu0 0.0
      %416 = vmatpush1.msra.mxu0 0.0
      %417 = vmatprep.subr.mxu0 0.0
      %418 = vmatpush1.msra.mxu0 0.0
      %419 = vmatprep.subr.mxu0 0.0
      %420 = vmatpush1.msra.mxu0 0.0
      %421 = vmatprep.subr.mxu0 0.0
      %422 = vmatpush1.msra.mxu0 0.0
      %423 = vmatprep.subr.mxu0 0.0
      %424 = vmatpush1.msra.mxu0 0.0
      %425 = vmatprep.subr.mxu0 0.0
      %426 = vmatpush1.msra.mxu0 0.0
      %427 = vmatprep.subr.mxu0 0.0
      %428 = vmatpush1.msra.mxu0 0.0
      %429 = vmatprep.subr.mxu0 0.0
      %430 = vmatpush1.msra.mxu0 0.0
      %431 = vmatprep.subr.mxu0 0.0
      %432 = vmatpush1.msra.mxu0 0.0
      %433 = vmatprep.subr.mxu0 0.0
      %434 = vmatpush1.msra.mxu0 0.0
      %435 = vmatprep.subr.mxu0 0.0
      %436 = vmatpush1.msra.mxu0 0.0
      %437 = vmatprep.subr.mxu0 0.0
      %438 = vmatpush1.msra.mxu0 0.0
      %439 = vmatprep.subr.mxu0 0.0
      %440 = vmatpush1.msra.mxu0 0.0
      %441 = vmatprep.subr.mxu0 0.0
      %442 = vmatpush1.msra.mxu0 0.0
      %443 = vmatprep.subr.mxu0 0.0
      %444 = vmatpush1.msra.mxu0 0.0
      %445 = vmatprep.subr.mxu0 0.0
      %446 = vmatpush1.msra.mxu0 0.0
      %447 = vmatprep.subr.mxu0 0.0
      %448 = vmatpush1.msra.mxu0 0.0
      %449 = vmatprep.subr.mxu0 0.0
      %450 = vmatpush1.msra.mxu0 0.0
      %451 = vmatprep.subr.mxu0 0.0
      %452 = vmatpush1.msra.mxu0 0.0
      %453 = vmatprep.subr.mxu0 0.0
      %454 = vmatpush1.msra.mxu0 0.0
      %455 = vmatprep.subr.mxu0 0.0
      %456 = vmatpush1.msra.mxu0 0.0
      %457 = vmatprep.subr.mxu0 0.0
      %458 = vmatpush1.msra.mxu0 0.0
      %459 = vmatprep.subr.mxu0 0.0
      %460 = vmatpush1.msra.mxu0 0.0
      %461 = vmatprep.subr.mxu0 0.0
      %462 = vmatpush1.msra.mxu0 0.0
      %463 = vmatprep.subr.mxu0 0.0
      %464 = vmatpush1.msra.mxu0 0.0
      %465 = vmatprep.subr.mxu0 0.0
      %466 = vmatpush1.msra.mxu0 0.0
      %467 = vmatprep.mubr.f32.mxu0 0.0
      %468 = vmatmul.mubr.f32.gmra.mrb[0].mxu0 %v321
      %v469 = vpop.f32.mrb[0].mxu0
      %v470 = vadd.f32 %v313, %v469
      %v471 = vpop.f32.mrb[0].mxu0
      %v472 = vadd.f32 %v313, %v471
      %473 = vdwg.mxu0
      %474 = vrot.lane.b32.xlu0 %v399, 73
      %v475 = vpop.permute.xlu0 %474
      %476 = vrot.lane.b32.xlu0 %v401, 73
      %v477 = vpop.permute.xlu0 %476
      %478 = vrot.lane.b32.xlu0 %v470, 73
      %v479 = vpop.permute.xlu0 %478
      %480 = vrot.lane.b32.xlu0 %v472, 73
      %v481 = vpop.permute.xlu0 %480
      %v482 = vlaneseq
      %v483 = vand.u32 %v482, 127
      %vm484 = vcmp.lt.s32.totalorder %v483, 73
      %v485 = vsel %vm484, %v479, %v481
      %v486 = vsel %vm484, %v477, %v479
      %v487 = vsel %vm484, %v475, %v477
      %v488 = vsel %vm484, %v481, %v475
      %v489 = vld [vmem:[%s1] ss:$8 sm:$0xf]
      %v491 = vlaneseq
      %v492 = vshrl.u32 %v491, 7
      %v493 = vsub.s32 0, %v492
      %v494 = vrot.slane %v489, %v493
      %v495 = vlaneseq
      %v496 = vshrl.u32 %v495, 7
      %v497 = vsub.s32 1, %v496
      %v498 = vrot.slane %v489, %v497
      %v499 = vlaneseq
      %v500 = vshrl.u32 %v499, 7
      %v501 = vsub.s32 2, %v500
      %v502 = vrot.slane %v489, %v501
      %v503 = vlaneseq
      %v504 = vshrl.u32 %v503, 7
      %v505 = vsub.s32 3, %v504
      %v506 = vrot.slane %v489, %v505
      %v511 = vmul.f32 %v488, %v494
      %v512 = vmul.f32 %v487, %v498
      %v513 = vmul.f32 %v486, %v502
      %v514 = vmul.f32 %v485, %v506
      %515 = vst [vmem:[#allocation2] sm:$0xff] %v511
      %516 = vst [vmem:[#allocation2 + $0x8] sm:$0xff] %v512
      %517 = vst [vmem:[#allocation2 + $0x10] sm:$0xff] %v513
      %518 = vst [vmem:[#allocation2 + $0x18] sm:$0xff] %v514
      %519 = vrot.lane.b32.xlu0 %v399, 72
      %v520 = vpop.permute.xlu0 %519
      %521 = vrot.lane.b32.xlu0 %v401, 72
      %v522 = vpop.permute.xlu0 %521
      %523 = vrot.lane.b32.xlu0 %v470, 72
      %v524 = vpop.permute.xlu0 %523
      %525 = vrot.lane.b32.xlu0 %v472, 72
      %v526 = vpop.permute.xlu0 %525
      %vm527 = vcmp.lt.s32.totalorder %v483, 72
      %v528 = vsel %vm527, %v524, %v526
      %v529 = vsel %vm527, %v522, %v524
      %v530 = vsel %vm527, %v520, %v522
      %v531 = vsel %vm527, %v526, %v520
      %s532 = scalar_lea.vmem %s1, 1
      %v533 = vld [vmem:[%s532] ss:$8 sm:$0xf]
      %v535 = vlaneseq
      %v536 = vshrl.u32 %v535, 7
      %v537 = vsub.s32 0, %v536
      %v538 = vrot.slane %v533, %v537
      %v539 = vlaneseq
      %v540 = vshrl.u32 %v539, 7
      %v541 = vsub.s32 1, %v540
      %v542 = vrot.slane %v533, %v541
      %v543 = vlaneseq
      %v544 = vshrl.u32 %v543, 7
      %v545 = vsub.s32 2, %v544
      %v546 = vrot.slane %v533, %v545
      %v547 = vlaneseq
      %v548 = vshrl.u32 %v547, 7
      %v549 = vsub.s32 3, %v548
      %v550 = vrot.slane %v533, %v549
      %v555 = vmul.f32 %v531, %v538
      %v556 = vmul.f32 %v530, %v542
      %v557 = vmul.f32 %v529, %v546
      %v558 = vmul.f32 %v528, %v550
      %559 = vst [vmem:[#allocation2 + $0x20] sm:$0xff] %v555
      %560 = vst [vmem:[#allocation2 + $0x28] sm:$0xff] %v556
      %561 = vst [vmem:[#allocation2 + $0x30] sm:$0xff] %v557
      %562 = vst [vmem:[#allocation2 + $0x38] sm:$0xff] %v558
      %563 = vrot.lane.b32.xlu0 %v399, 71
      %v564 = vpop.permute.xlu0 %563
      %565 = vrot.lane.b32.xlu0 %v401, 71
      %v566 = vpop.permute.xlu0 %565
      %567 = vrot.lane.b32.xlu0 %v470, 71
      %v568 = vpop.permute.xlu0 %567
      %569 = vrot.lane.b32.xlu0 %v472, 71
      %v570 = vpop.permute.xlu0 %569
      %vm571 = vcmp.lt.s32.totalorder %v483, 71
      %v572 = vsel %vm571, %v568, %v570
      %v573 = vsel %vm571, %v566, %v568
      %v574 = vsel %vm571, %v564, %v566
      %v575 = vsel %vm571, %v570, %v564
      %s576 = scalar_lea.vmem %s1, 2
      %v577 = vld [vmem:[%s576] ss:$8 sm:$0xf]
      %v579 = vlaneseq
      %v580 = vshrl.u32 %v579, 7
      %v581 = vsub.s32 0, %v580
      %v582 = vrot.slane %v577, %v581
      %v583 = vlaneseq
      %v584 = vshrl.u32 %v583, 7
      %v585 = vsub.s32 1, %v584
      %v586 = vrot.slane %v577, %v585
      %v587 = vlaneseq
      %v588 = vshrl.u32 %v587, 7
      %v589 = vsub.s32 2, %v588
      %v590 = vrot.slane %v577, %v589
      %v591 = vlaneseq
      %v592 = vshrl.u32 %v591, 7
      %v593 = vsub.s32 3, %v592
      %v594 = vrot.slane %v577, %v593
      %v599 = vmul.f32 %v575, %v582
      %v600 = vmul.f32 %v574, %v586
      %v601 = vmul.f32 %v573, %v590
      %v602 = vmul.f32 %v572, %v594
      %603 = vst [vmem:[#allocation2 + $0x40] sm:$0xff] %v599
      %604 = vst [vmem:[#allocation2 + $0x48] sm:$0xff] %v600
      %605 = vst [vmem:[#allocation2 + $0x50] sm:$0xff] %v601
      %606 = vst [vmem:[#allocation2 + $0x58] sm:$0xff] %v602
      %607 = vrot.lane.b32.xlu0 %v399, 65
      %v608 = vpop.permute.xlu0 %607
      %609 = vrot.lane.b32.xlu0 %v401, 65
      %v610 = vpop.permute.xlu0 %609
      %611 = vrot.lane.b32.xlu0 %v470, 65
      %v612 = vpop.permute.xlu0 %611
      %613 = vrot.lane.b32.xlu0 %v472, 65
      %v614 = vpop.permute.xlu0 %613
      %vm615 = vcmp.lt.s32.totalorder %v483, 65
      %v616 = vsel %vm615, %v612, %v614
      %v617 = vsel %vm615, %v610, %v612
      %v618 = vsel %vm615, %v608, %v610
      %v619 = vsel %vm615, %v614, %v608
      %s620 = scalar_lea.vmem %s1, 3
      %v621 = vld [vmem:[%s620] ss:$8 sm:$0xf]
      %v623 = vlaneseq
      %v624 = vshrl.u32 %v623, 7
      %v625 = vsub.s32 0, %v624
      %v626 = vrot.slane %v621, %v625
      %v627 = vlaneseq
      %v628 = vshrl.u32 %v627, 7
      %v629 = vsub.s32 1, %v628
      %v630 = vrot.slane %v621, %v629
      %v631 = vlaneseq
      %v632 = vshrl.u32 %v631, 7
      %v633 = vsub.s32 2, %v632
      %v634 = vrot.slane %v621, %v633
      %v635 = vlaneseq
      %v636 = vshrl.u32 %v635, 7
      %v637 = vsub.s32 3, %v636
      %v638 = vrot.slane %v621, %v637
      %v643 = vmul.f32 %v619, %v626
      %v644 = vmul.f32 %v618, %v630
      %v645 = vmul.f32 %v617, %v634
      %v646 = vmul.f32 %v616, %v638
      %647 = vst [vmem:[#allocation2 + $0x60] sm:$0xff] %v643
      %648 = vst [vmem:[#allocation2 + $0x68] sm:$0xff] %v644
      %649 = vst [vmem:[#allocation2 + $0x70] sm:$0xff] %v645
      %650 = vst [vmem:[#allocation2 + $0x78] sm:$0xff] %v646
      %651 = vrot.lane.b32.xlu0 %v399, 64
      %v652 = vpop.permute.xlu0 %651
      %653 = vrot.lane.b32.xlu0 %v401, 64
      %v654 = vpop.permute.xlu0 %653
      %655 = vrot.lane.b32.xlu0 %v470, 64
      %v656 = vpop.permute.xlu0 %655
      %657 = vrot.lane.b32.xlu0 %v472, 64
      %v658 = vpop.permute.xlu0 %657
      %vm659 = vcmp.lt.s32.totalorder %v483, 64
      %v660 = vsel %vm659, %v656, %v658
      %v661 = vsel %vm659, %v654, %v656
      %v662 = vsel %vm659, %v652, %v654
      %v663 = vsel %vm659, %v658, %v652
      %s664 = scalar_lea.vmem %s1, 4
      %v665 = vld [vmem:[%s664] ss:$8 sm:$0xf]
      %v667 = vlaneseq
      %v668 = vshrl.u32 %v667, 7
      %v669 = vsub.s32 0, %v668
      %v670 = vrot.slane %v665, %v669
      %v671 = vlaneseq
      %v672 = vshrl.u32 %v671, 7
      %v673 = vsub.s32 1, %v672
      %v674 = vrot.slane %v665, %v673
      %v675 = vlaneseq
      %v676 = vshrl.u32 %v675, 7
      %v677 = vsub.s32 2, %v676
      %v678 = vrot.slane %v665, %v677
      %v679 = vlaneseq
      %v680 = vshrl.u32 %v679, 7
      %v681 = vsub.s32 3, %v680
      %v682 = vrot.slane %v665, %v681
      %v687 = vmul.f32 %v663, %v670
      %v688 = vmul.f32 %v662, %v674
      %v689 = vmul.f32 %v661, %v678
      %v690 = vmul.f32 %v660, %v682
      %691 = vst [vmem:[#allocation2 + $0x80] sm:$0xff] %v687
      %692 = vst [vmem:[#allocation2 + $0x88] sm:$0xff] %v688
      %693 = vst [vmem:[#allocation2 + $0x90] sm:$0xff] %v689
      %694 = vst [vmem:[#allocation2 + $0x98] sm:$0xff] %v690
      %695 = vrot.lane.b32.xlu0 %v399, 63
      %v696 = vpop.permute.xlu0 %695
      %697 = vrot.lane.b32.xlu0 %v401, 63
      %v698 = vpop.permute.xlu0 %697
      %699 = vrot.lane.b32.xlu0 %v470, 63
      %v700 = vpop.permute.xlu0 %699
      %701 = vrot.lane.b32.xlu0 %v472, 63
      %v702 = vpop.permute.xlu0 %701
      %vm703 = vcmp.lt.s32.totalorder %v483, 63
      %v704 = vsel %vm703, %v700, %v702
      %v705 = vsel %vm703, %v698, %v700
      %v706 = vsel %vm703, %v696, %v698
      %v707 = vsel %vm703, %v702, %v696
      %s708 = scalar_lea.vmem %s1, 5
      %v709 = vld [vmem:[%s708] ss:$8 sm:$0xf]
      %v711 = vlaneseq
      %v712 = vshrl.u32 %v711, 7
      %v713 = vsub.s32 0, %v712
      %v714 = vrot.slane %v709, %v713
      %v715 = vlaneseq
      %v716 = vshrl.u32 %v715, 7
      %v717 = vsub.s32 1, %v716
      %v718 = vrot.slane %v709, %v717
      %v719 = vlaneseq
      %v720 = vshrl.u32 %v719, 7
      %v721 = vsub.s32 2, %v720
      %v722 = vrot.slane %v709, %v721
      %v723 = vlaneseq
      %v724 = vshrl.u32 %v723, 7
      %v725 = vsub.s32 3, %v724
      %v726 = vrot.slane %v709, %v725
      %v731 = vmul.f32 %v707, %v714
      %v732 = vmul.f32 %v706, %v718
      %v733 = vmul.f32 %v705, %v722
      %v734 = vmul.f32 %v704, %v726
      %735 = vst [vmem:[#allocation2 + $0xa0] sm:$0xff] %v731
      %736 = vst [vmem:[#allocation2 + $0xa8] sm:$0xff] %v732
      %737 = vst [vmem:[#allocation2 + $0xb0] sm:$0xff] %v733
      %738 = vst [vmem:[#allocation2 + $0xb8] sm:$0xff] %v734
      %739 = vrot.lane.b32.xlu0 %v399, 57
      %v740 = vpop.permute.xlu0 %739
      %741 = vrot.lane.b32.xlu0 %v401, 57
      %v742 = vpop.permute.xlu0 %741
      %743 = vrot.lane.b32.xlu0 %v470, 57
      %v744 = vpop.permute.xlu0 %743
      %745 = vrot.lane.b32.xlu0 %v472, 57
      %v746 = vpop.permute.xlu0 %745
      %vm747 = vcmp.lt.s32.totalorder %v483, 57
      %v748 = vsel %vm747, %v744, %v746
      %v749 = vsel %vm747, %v742, %v744
      %v750 = vsel %vm747, %v740, %v742
      %v751 = vsel %vm747, %v746, %v740
      %s752 = scalar_lea.vmem %s1, 6
      %v753 = vld [vmem:[%s752] ss:$8 sm:$0xf]
      %v755 = vlaneseq
      %v756 = vshrl.u32 %v755, 7
      %v757 = vsub.s32 0, %v756
      %v758 = vrot.slane %v753, %v757
      %v759 = vlaneseq
      %v760 = vshrl.u32 %v759, 7
      %v761 = vsub.s32 1, %v760
      %v762 = vrot.slane %v753, %v761
      %v763 = vlaneseq
      %v764 = vshrl.u32 %v763, 7
      %v765 = vsub.s32 2, %v764
      %v766 = vrot.slane %v753, %v765
      %v767 = vlaneseq
      %v768 = vshrl.u32 %v767, 7
      %v769 = vsub.s32 3, %v768
      %v770 = vrot.slane %v753, %v769
      %v775 = vmul.f32 %v751, %v758
      %v776 = vmul.f32 %v750, %v762
      %v777 = vmul.f32 %v749, %v766
      %v778 = vmul.f32 %v748, %v770
      %779 = vst [vmem:[#allocation2 + $0xc0] sm:$0xff] %v775
      %780 = vst [vmem:[#allocation2 + $0xc8] sm:$0xff] %v776
      %781 = vst [vmem:[#allocation2 + $0xd0] sm:$0xff] %v777
      %782 = vst [vmem:[#allocation2 + $0xd8] sm:$0xff] %v778
      %783 = vrot.lane.b32.xlu0 %v399, 56
      %v784 = vpop.permute.xlu0 %783
      %785 = vrot.lane.b32.xlu0 %v401, 56
      %v786 = vpop.permute.xlu0 %785
      %787 = vrot.lane.b32.xlu0 %v470, 56
      %v788 = vpop.permute.xlu0 %787
      %789 = vrot.lane.b32.xlu0 %v472, 56
      %v790 = vpop.permute.xlu0 %789
      %vm791 = vcmp.lt.s32.totalorder %v483, 56
      %v792 = vsel %vm791, %v788, %v790
      %v793 = vsel %vm791, %v786, %v788
      %v794 = vsel %vm791, %v784, %v786
      %v795 = vsel %vm791, %v790, %v784
      %s796 = scalar_lea.vmem %s1, 7
      %v797 = vld [vmem:[%s796] ss:$8 sm:$0xf]
      %v799 = vlaneseq
      %v800 = vshrl.u32 %v799, 7
      %v801 = vsub.s32 0, %v800
      %v802 = vrot.slane %v797, %v801
      %v803 = vlaneseq
      %v804 = vshrl.u32 %v803, 7
      %v805 = vsub.s32 1, %v804
      %v806 = vrot.slane %v797, %v805
      %v807 = vlaneseq
      %v808 = vshrl.u32 %v807, 7
      %v809 = vsub.s32 2, %v808
      %v810 = vrot.slane %v797, %v809
      %v811 = vlaneseq
      %v812 = vshrl.u32 %v811, 7
      %v813 = vsub.s32 3, %v812
      %v814 = vrot.slane %v797, %v813
      %v819 = vmul.f32 %v795, %v802
      %v820 = vmul.f32 %v794, %v806
      %v821 = vmul.f32 %v793, %v810
      %v822 = vmul.f32 %v792, %v814
      %823 = vst [vmem:[#allocation2 + $0xe0] sm:$0xff] %v819
      %824 = vst [vmem:[#allocation2 + $0xe8] sm:$0xff] %v820
      %825 = vst [vmem:[#allocation2 + $0xf0] sm:$0xff] %v821
      %826 = vst [vmem:[#allocation2 + $0xf8] sm:$0xff] %v822
      %827 = vrot.lane.b32.xlu0 %v399, 55
      %v828 = vpop.permute.xlu0 %827
      %829 = vrot.lane.b32.xlu0 %v401, 55
      %v830 = vpop.permute.xlu0 %829
      %831 = vrot.lane.b32.xlu0 %v470, 55
      %v832 = vpop.permute.xlu0 %831
      %833 = vrot.lane.b32.xlu0 %v472, 55
      %v834 = vpop.permute.xlu0 %833
      %vm835 = vcmp.lt.s32.totalorder %v483, 55
      %v836 = vsel %vm835, %v832, %v834
      %v837 = vsel %vm835, %v830, %v832
      %v838 = vsel %vm835, %v828, %v830
      %v839 = vsel %vm835, %v834, %v828
      %s840 = scalar_lea.vmem %s1, 32
      %v841 = vld [vmem:[%s840] ss:$8 sm:$0xf]
      %v843 = vlaneseq
      %v844 = vshrl.u32 %v843, 7
      %v845 = vsub.s32 0, %v844
      %v846 = vrot.slane %v841, %v845
      %v847 = vlaneseq
      %v848 = vshrl.u32 %v847, 7
      %v849 = vsub.s32 1, %v848
      %v850 = vrot.slane %v841, %v849
      %v851 = vlaneseq
      %v852 = vshrl.u32 %v851, 7
      %v853 = vsub.s32 2, %v852
      %v854 = vrot.slane %v841, %v853
      %v855 = vlaneseq
      %v856 = vshrl.u32 %v855, 7
      %v857 = vsub.s32 3, %v856
      %v858 = vrot.slane %v841, %v857
      %v863 = vmul.f32 %v839, %v846
      %v864 = vmul.f32 %v838, %v850
      %v865 = vmul.f32 %v837, %v854
      %v866 = vmul.f32 %v836, %v858
      %867 = vst [vmem:[#allocation2 + $0x100] sm:$0xff] %v863
      %868 = vst [vmem:[#allocation2 + $0x108] sm:$0xff] %v864
      %869 = vst [vmem:[#allocation2 + $0x110] sm:$0xff] %v865
      %870 = vst [vmem:[#allocation2 + $0x118] sm:$0xff] %v866
      %871 = vrot.lane.b32.xlu0 %v399, 9
      %v872 = vpop.permute.xlu0 %871
      %873 = vrot.lane.b32.xlu0 %v401, 9
      %v874 = vpop.permute.xlu0 %873
      %875 = vrot.lane.b32.xlu0 %v470, 9
      %v876 = vpop.permute.xlu0 %875
      %877 = vrot.lane.b32.xlu0 %v472, 9
      %v878 = vpop.permute.xlu0 %877
      %vm879 = vcmp.lt.s32.totalorder %v483, 9
      %v880 = vsel %vm879, %v876, %v878
      %v881 = vsel %vm879, %v874, %v876
      %v882 = vsel %vm879, %v872, %v874
      %v883 = vsel %vm879, %v878, %v872
      %s884 = scalar_lea.vmem %s1, 33
      %v885 = vld [vmem:[%s884] ss:$8 sm:$0xf]
      %v887 = vlaneseq
      %v888 = vshrl.u32 %v887, 7
      %v889 = vsub.s32 0, %v888
      %v890 = vrot.slane %v885, %v889
      %v891 = vlaneseq
      %v892 = vshrl.u32 %v891, 7
      %v893 = vsub.s32 1, %v892
      %v894 = vrot.slane %v885, %v893
      %v895 = vlaneseq
      %v896 = vshrl.u32 %v895, 7
      %v897 = vsub.s32 2, %v896
      %v898 = vrot.slane %v885, %v897
      %v899 = vlaneseq
      %v900 = vshrl.u32 %v899, 7
      %v901 = vsub.s32 3, %v900
      %v902 = vrot.slane %v885, %v901
      %v907 = vmul.f32 %v883, %v890
      %v908 = vmul.f32 %v882, %v894
      %v909 = vmul.f32 %v881, %v898
      %v910 = vmul.f32 %v880, %v902
      %911 = vst [vmem:[#allocation2 + $0x120] sm:$0xff] %v907
      %912 = vst [vmem:[#allocation2 + $0x128] sm:$0xff] %v908
      %913 = vst [vmem:[#allocation2 + $0x130] sm:$0xff] %v909
      %914 = vst [vmem:[#allocation2 + $0x138] sm:$0xff] %v910
      %915 = vrot.lane.b32.xlu0 %v399, 8
      %v916 = vpop.permute.xlu0 %915
      %917 = vrot.lane.b32.xlu0 %v401, 8
      %v918 = vpop.permute.xlu0 %917
      %919 = vrot.lane.b32.xlu0 %v470, 8
      %v920 = vpop.permute.xlu0 %919
      %921 = vrot.lane.b32.xlu0 %v472, 8
      %v922 = vpop.permute.xlu0 %921
      %vm923 = vcmp.lt.s32.totalorder %v483, 8
      %v924 = vsel %vm923, %v920, %v922
      %v925 = vsel %vm923, %v918, %v920
      %v926 = vsel %vm923, %v916, %v918
      %v927 = vsel %vm923, %v922, %v916
      %s928 = scalar_lea.vmem %s1, 34
      %v929 = vld [vmem:[%s928] ss:$8 sm:$0xf]
      %v931 = vlaneseq
      %v932 = vshrl.u32 %v931, 7
      %v933 = vsub.s32 0, %v932
      %v934 = vrot.slane %v929, %v933
      %v935 = vlaneseq
      %v936 = vshrl.u32 %v935, 7
      %v937 = vsub.s32 1, %v936
      %v938 = vrot.slane %v929, %v937
      %v939 = vlaneseq
      %v940 = vshrl.u32 %v939, 7
      %v941 = vsub.s32 2, %v940
      %v942 = vrot.slane %v929, %v941
      %v943 = vlaneseq
      %v944 = vshrl.u32 %v943, 7
      %v945 = vsub.s32 3, %v944
      %v946 = vrot.slane %v929, %v945
      %v951 = vmul.f32 %v927, %v934
      %v952 = vmul.f32 %v926, %v938
      %v953 = vmul.f32 %v925, %v942
      %v954 = vmul.f32 %v924, %v946
      %955 = vst [vmem:[#allocation2 + $0x140] sm:$0xff] %v951
      %956 = vst [vmem:[#allocation2 + $0x148] sm:$0xff] %v952
      %957 = vst [vmem:[#allocation2 + $0x150] sm:$0xff] %v953
      %958 = vst [vmem:[#allocation2 + $0x158] sm:$0xff] %v954
      %959 = vrot.lane.b32.xlu0 %v399, 7
      %v960 = vpop.permute.xlu0 %959
      %961 = vrot.lane.b32.xlu0 %v401, 7
      %v962 = vpop.permute.xlu0 %961
      %963 = vrot.lane.b32.xlu0 %v470, 7
      %v964 = vpop.permute.xlu0 %963
      %965 = vrot.lane.b32.xlu0 %v472, 7
      %v966 = vpop.permute.xlu0 %965
      %vm967 = vcmp.lt.s32.totalorder %v483, 7
      %v968 = vsel %vm967, %v964, %v966
      %v969 = vsel %vm967, %v962, %v964
      %v970 = vsel %vm967, %v960, %v962
      %v971 = vsel %vm967, %v966, %v960
      %s972 = scalar_lea.vmem %s1, 35
      %v973 = vld [vmem:[%s972] ss:$8 sm:$0xf]
      %v975 = vlaneseq
      %v976 = vshrl.u32 %v975, 7
      %v977 = vsub.s32 0, %v976
      %v978 = vrot.slane %v973, %v977
      %v979 = vlaneseq
      %v980 = vshrl.u32 %v979, 7
      %v981 = vsub.s32 1, %v980
      %v982 = vrot.slane %v973, %v981
      %v983 = vlaneseq
      %v984 = vshrl.u32 %v983, 7
      %v985 = vsub.s32 2, %v984
      %v986 = vrot.slane %v973, %v985
      %v987 = vlaneseq
      %v988 = vshrl.u32 %v987, 7
      %v989 = vsub.s32 3, %v988
      %v990 = vrot.slane %v973, %v989
      %v995 = vmul.f32 %v971, %v978
      %v996 = vmul.f32 %v970, %v982
      %v997 = vmul.f32 %v969, %v986
      %v998 = vmul.f32 %v968, %v990
      %999 = vst [vmem:[#allocation2 + $0x160] sm:$0xff] %v995
      %1000 = vst [vmem:[#allocation2 + $0x168] sm:$0xff] %v996
      %1001 = vst [vmem:[#allocation2 + $0x170] sm:$0xff] %v997
      %1002 = vst [vmem:[#allocation2 + $0x178] sm:$0xff] %v998
      %1003 = vrot.lane.b32.xlu0 %v399, 1
      %v1004 = vpop.permute.xlu0 %1003
      %1005 = vrot.lane.b32.xlu0 %v401, 1
      %v1006 = vpop.permute.xlu0 %1005
      %1007 = vrot.lane.b32.xlu0 %v470, 1
      %v1008 = vpop.permute.xlu0 %1007
      %1009 = vrot.lane.b32.xlu0 %v472, 1
      %v1010 = vpop.permute.xlu0 %1009
      %vm1011 = vcmp.lt.s32.totalorder %v483, 1
      %v1012 = vsel %vm1011, %v1008, %v1010
      %v1013 = vsel %vm1011, %v1006, %v1008
      %v1014 = vsel %vm1011, %v1004, %v1006
      %v1015 = vsel %vm1011, %v1010, %v1004
      %s1016 = scalar_lea.vmem %s1, 36
      %v1017 = vld [vmem:[%s1016] ss:$8 sm:$0xf]
      %v1019 = vlaneseq
      %v1020 = vshrl.u32 %v1019, 7
      %v1021 = vsub.s32 0, %v1020
      %v1022 = vrot.slane %v1017, %v1021
      %v1023 = vlaneseq
      %v1024 = vshrl.u32 %v1023, 7
      %v1025 = vsub.s32 1, %v1024
      %v1026 = vrot.slane %v1017, %v1025
      %v1027 = vlaneseq
      %v1028 = vshrl.u32 %v1027, 7
      %v1029 = vsub.s32 2, %v1028
      %v1030 = vrot.slane %v1017, %v1029
      %v1031 = vlaneseq
      %v1032 = vshrl.u32 %v1031, 7
      %v1033 = vsub.s32 3, %v1032
      %v1034 = vrot.slane %v1017, %v1033
      %v1039 = vmul.f32 %v1015, %v1022
      %v1040 = vmul.f32 %v1014, %v1026
      %v1041 = vmul.f32 %v1013, %v1030
      %v1042 = vmul.f32 %v1012, %v1034
      %1043 = vst [vmem:[#allocation2 + $0x180] sm:$0xff] %v1039
      %1044 = vst [vmem:[#allocation2 + $0x188] sm:$0xff] %v1040
      %1045 = vst [vmem:[#allocation2 + $0x190] sm:$0xff] %v1041
      %1046 = vst [vmem:[#allocation2 + $0x198] sm:$0xff] %v1042
      %s1047 = scalar_lea.vmem %s1, 37
      %v1048 = vld [vmem:[%s1047] ss:$8 sm:$0xf]
      %v1050 = vlaneseq
      %v1051 = vshrl.u32 %v1050, 7
      %v1052 = vsub.s32 0, %v1051
      %v1053 = vrot.slane %v1048, %v1052
      %v1054 = vlaneseq
      %v1055 = vshrl.u32 %v1054, 7
      %v1056 = vsub.s32 1, %v1055
      %v1057 = vrot.slane %v1048, %v1056
      %v1058 = vlaneseq
      %v1059 = vshrl.u32 %v1058, 7
      %v1060 = vsub.s32 2, %v1059
      %v1061 = vrot.slane %v1048, %v1060
      %v1062 = vlaneseq
      %v1063 = vshrl.u32 %v1062, 7
      %v1064 = vsub.s32 3, %v1063
      %v1065 = vrot.slane %v1048, %v1064
      %v1070 = vmul.f32 %v399, %v1053
      %v1071 = vmul.f32 %v401, %v1057
      %v1072 = vmul.f32 %v470, %v1061
      %v1073 = vmul.f32 %v472, %v1065
      %1074 = vst [vmem:[#allocation2 + $0x1a0] sm:$0xff] %v1070
      %1075 = vst [vmem:[#allocation2 + $0x1a8] sm:$0xff] %v1071
      %1076 = vst [vmem:[#allocation2 + $0x1b0] sm:$0xff] %v1072
      %1077 = vst [vmem:[#allocation2 + $0x1b8] sm:$0xff] %v1073
      %1078 = vrot.lane.b32.xlu0 %v399, 127
      %v1079 = vpop.permute.xlu0 %1078
      %1080 = vrot.lane.b32.xlu0 %v401, 127
      %v1081 = vpop.permute.xlu0 %1080
      %1082 = vrot.lane.b32.xlu0 %v470, 127
      %v1083 = vpop.permute.xlu0 %1082
      %1084 = vrot.lane.b32.xlu0 %v472, 127
      %v1085 = vpop.permute.xlu0 %1084
      %vm1086 = vcmp.lt.s32.totalorder %v483, 127
      %v1087 = vsel %vm1086, %v1083, %v1085
      %v1088 = vsel %vm1086, %v1081, %v1083
      %v1089 = vsel %vm1086, %v1079, %v1081
      %v1090 = vsel %vm1086, %v1085, %v1079
      %s1091 = scalar_lea.vmem %s1, 38
      %v1092 = vld [vmem:[%s1091] ss:$8 sm:$0xf]
      %v1094 = vlaneseq
      %v1095 = vshrl.u32 %v1094, 7
      %v1096 = vsub.s32 0, %v1095
      %v1097 = vrot.slane %v1092, %v1096
      %v1098 = vlaneseq
      %v1099 = vshrl.u32 %v1098, 7
      %v1100 = vsub.s32 1, %v1099
      %v1101 = vrot.slane %v1092, %v1100
      %v1102 = vlaneseq
      %v1103 = vshrl.u32 %v1102, 7
      %v1104 = vsub.s32 2, %v1103
      %v1105 = vrot.slane %v1092, %v1104
      %v1106 = vlaneseq
      %v1107 = vshrl.u32 %v1106, 7
      %v1108 = vsub.s32 3, %v1107
      %v1109 = vrot.slane %v1092, %v1108
      %v1114 = vmul.f32 %v1089, %v1097
      %v1115 = vmul.f32 %v1088, %v1101
      %v1116 = vmul.f32 %v1087, %v1105
      %v1117 = vmul.f32 %v1090, %v1109
      %1118 = vst [vmem:[#allocation2 + $0x1c0] sm:$0xff] %v1114
      %1119 = vst [vmem:[#allocation2 + $0x1c8] sm:$0xff] %v1115
      %1120 = vst [vmem:[#allocation2 + $0x1d0] sm:$0xff] %v1116
      %1121 = vst [vmem:[#allocation2 + $0x1d8] sm:$0xff] %v1117
      %1122 = vrot.lane.b32.xlu0 %v399, 121
      %v1123 = vpop.permute.xlu0 %1122
      %1124 = vrot.lane.b32.xlu0 %v401, 121
      %v1125 = vpop.permute.xlu0 %1124
      %1126 = vrot.lane.b32.xlu0 %v470, 121
      %v1127 = vpop.permute.xlu0 %1126
      %1128 = vrot.lane.b32.xlu0 %v472, 121
      %v1129 = vpop.permute.xlu0 %1128
      %vm1130 = vcmp.lt.s32.totalorder %v483, 121
      %v1131 = vsel %vm1130, %v1127, %v1129
      %v1132 = vsel %vm1130, %v1125, %v1127
      %v1133 = vsel %vm1130, %v1123, %v1125
      %v1134 = vsel %vm1130, %v1129, %v1123
      %s1135 = scalar_lea.vmem %s1, 39
      %v1136 = vld [vmem:[%s1135] ss:$8 sm:$0xf]
      %v1138 = vlaneseq
      %v1139 = vshrl.u32 %v1138, 7
      %v1140 = vsub.s32 0, %v1139
      %v1141 = vrot.slane %v1136, %v1140
      %v1142 = vlaneseq
      %v1143 = vshrl.u32 %v1142, 7
      %v1144 = vsub.s32 1, %v1143
      %v1145 = vrot.slane %v1136, %v1144
      %v1146 = vlaneseq
      %v1147 = vshrl.u32 %v1146, 7
      %v1148 = vsub.s32 2, %v1147
      %v1149 = vrot.slane %v1136, %v1148
      %v1150 = vlaneseq
      %v1151 = vshrl.u32 %v1150, 7
      %v1152 = vsub.s32 3, %v1151
      %v1153 = vrot.slane %v1136, %v1152
      %v1158 = vmul.f32 %v1133, %v1141
      %v1159 = vmul.f32 %v1132, %v1145
      %v1160 = vmul.f32 %v1131, %v1149
      %v1161 = vmul.f32 %v1134, %v1153
      %1162 = vst [vmem:[#allocation2 + $0x1e0] sm:$0xff] %v1158
      %1163 = vst [vmem:[#allocation2 + $0x1e8] sm:$0xff] %v1159
      %1164 = vst [vmem:[#allocation2 + $0x1f0] sm:$0xff] %v1160
      %1165 = vst [vmem:[#allocation2 + $0x1f8] sm:$0xff] %v1161
      %1166 = vrot.lane.b32.xlu0 %v399, 120
      %v1167 = vpop.permute.xlu0 %1166
      %1168 = vrot.lane.b32.xlu0 %v401, 120
      %v1169 = vpop.permute.xlu0 %1168
      %1170 = vrot.lane.b32.xlu0 %v470, 120
      %v1171 = vpop.permute.xlu0 %1170
      %1172 = vrot.lane.b32.xlu0 %v472, 120
      %v1173 = vpop.permute.xlu0 %1172
      %vm1174 = vcmp.lt.s32.totalorder %v483, 120
      %v1175 = vsel %vm1174, %v1171, %v1173
      %v1176 = vsel %vm1174, %v1169, %v1171
      %v1177 = vsel %vm1174, %v1167, %v1169
      %v1178 = vsel %vm1174, %v1173, %v1167
      %s1179 = scalar_lea.vmem %s1, 64
      %v1180 = vld [vmem:[%s1179] ss:$8 sm:$0xf]
      %v1182 = vlaneseq
      %v1183 = vshrl.u32 %v1182, 7
      %v1184 = vsub.s32 0, %v1183
      %v1185 = vrot.slane %v1180, %v1184
      %v1186 = vlaneseq
      %v1187 = vshrl.u32 %v1186, 7
      %v1188 = vsub.s32 1, %v1187
      %v1189 = vrot.slane %v1180, %v1188
      %v1190 = vlaneseq
      %v1191 = vshrl.u32 %v1190, 7
      %v1192 = vsub.s32 2, %v1191
      %v1193 = vrot.slane %v1180, %v1192
      %v1194 = vlaneseq
      %v1195 = vshrl.u32 %v1194, 7
      %v1196 = vsub.s32 3, %v1195
      %v1197 = vrot.slane %v1180, %v1196
      %v1202 = vmul.f32 %v1177, %v1185
      %v1203 = vmul.f32 %v1176, %v1189
      %v1204 = vmul.f32 %v1175, %v1193
      %v1205 = vmul.f32 %v1178, %v1197
      %1206 = vst [vmem:[#allocation2 + $0x200] sm:$0xff] %v1202
      %1207 = vst [vmem:[#allocation2 + $0x208] sm:$0xff] %v1203
      %1208 = vst [vmem:[#allocation2 + $0x210] sm:$0xff] %v1204
      %1209 = vst [vmem:[#allocation2 + $0x218] sm:$0xff] %v1205
      %1210 = vrot.lane.b32.xlu0 %v399, 119
      %v1211 = vpop.permute.xlu0 %1210
      %1212 = vrot.lane.b32.xlu0 %v401, 119
      %v1213 = vpop.permute.xlu0 %1212
      %1214 = vrot.lane.b32.xlu0 %v470, 119
      %v1215 = vpop.permute.xlu0 %1214
      %1216 = vrot.lane.b32.xlu0 %v472, 119
      %v1217 = vpop.permute.xlu0 %1216
      %vm1218 = vcmp.lt.s32.totalorder %v483, 119
      %v1219 = vsel %vm1218, %v1215, %v1217
      %v1220 = vsel %vm1218, %v1213, %v1215
      %v1221 = vsel %vm1218, %v1211, %v1213
      %v1222 = vsel %vm1218, %v1217, %v1211
      %s1223 = scalar_lea.vmem %s1, 65
      %v1224 = vld [vmem:[%s1223] ss:$8 sm:$0xf]
      %v1226 = vlaneseq
      %v1227 = vshrl.u32 %v1226, 7
      %v1228 = vsub.s32 0, %v1227
      %v1229 = vrot.slane %v1224, %v1228
      %v1230 = vlaneseq
      %v1231 = vshrl.u32 %v1230, 7
      %v1232 = vsub.s32 1, %v1231
      %v1233 = vrot.slane %v1224, %v1232
      %v1234 = vlaneseq
      %v1235 = vshrl.u32 %v1234, 7
      %v1236 = vsub.s32 2, %v1235
      %v1237 = vrot.slane %v1224, %v1236
      %v1238 = vlaneseq
      %v1239 = vshrl.u32 %v1238, 7
      %v1240 = vsub.s32 3, %v1239
      %v1241 = vrot.slane %v1224, %v1240
      %v1246 = vmul.f32 %v1221, %v1229
      %v1247 = vmul.f32 %v1220, %v1233
      %v1248 = vmul.f32 %v1219, %v1237
      %v1249 = vmul.f32 %v1222, %v1241
      %1250 = vst [vmem:[#allocation2 + $0x220] sm:$0xff] %v1246
      %1251 = vst [vmem:[#allocation2 + $0x228] sm:$0xff] %v1247
      %1252 = vst [vmem:[#allocation2 + $0x230] sm:$0xff] %v1248
      %1253 = vst [vmem:[#allocation2 + $0x238] sm:$0xff] %v1249
      %s1254 = scalar_lea.vmem %s1, 66
      %v1255 = vld [vmem:[%s1254] ss:$8 sm:$0xf]
      %v1257 = vlaneseq
      %v1258 = vshrl.u32 %v1257, 7
      %v1259 = vsub.s32 0, %v1258
      %v1260 = vrot.slane %v1255, %v1259
      %v1261 = vlaneseq
      %v1262 = vshrl.u32 %v1261, 7
      %v1263 = vsub.s32 1, %v1262
      %v1264 = vrot.slane %v1255, %v1263
      %v1265 = vlaneseq
      %v1266 = vshrl.u32 %v1265, 7
      %v1267 = vsub.s32 2, %v1266
      %v1268 = vrot.slane %v1255, %v1267
      %v1269 = vlaneseq
      %v1270 = vshrl.u32 %v1269, 7
      %v1271 = vsub.s32 3, %v1270
      %v1272 = vrot.slane %v1255, %v1271
      %v1277 = vmul.f32 %v487, %v1260
      %v1278 = vmul.f32 %v486, %v1264
      %v1279 = vmul.f32 %v485, %v1268
      %v1280 = vmul.f32 %v488, %v1272
      %1281 = vst [vmem:[#allocation2 + $0x240] sm:$0xff] %v1277
      %1282 = vst [vmem:[#allocation2 + $0x248] sm:$0xff] %v1278
      %1283 = vst [vmem:[#allocation2 + $0x250] sm:$0xff] %v1279
      %1284 = vst [vmem:[#allocation2 + $0x258] sm:$0xff] %v1280
      %s1285 = scalar_lea.vmem %s1, 67
      %v1286 = vld [vmem:[%s1285] ss:$8 sm:$0xf]
      %v1288 = vlaneseq
      %v1289 = vshrl.u32 %v1288, 7
      %v1290 = vsub.s32 0, %v1289
      %v1291 = vrot.slane %v1286, %v1290
      %v1292 = vlaneseq
      %v1293 = vshrl.u32 %v1292, 7
      %v1294 = vsub.s32 1, %v1293
      %v1295 = vrot.slane %v1286, %v1294
      %v1296 = vlaneseq
      %v1297 = vshrl.u32 %v1296, 7
      %v1298 = vsub.s32 2, %v1297
      %v1299 = vrot.slane %v1286, %v1298
      %v1300 = vlaneseq
      %v1301 = vshrl.u32 %v1300, 7
      %v1302 = vsub.s32 3, %v1301
      %v1303 = vrot.slane %v1286, %v1302
      %v1308 = vmul.f32 %v530, %v1291
      %v1309 = vmul.f32 %v529, %v1295
      %v1310 = vmul.f32 %v528, %v1299
      %v1311 = vmul.f32 %v531, %v1303
      %1312 = vst [vmem:[#allocation2 + $0x260] sm:$0xff] %v1308
      %1313 = vst [vmem:[#allocation2 + $0x268] sm:$0xff] %v1309
      %1314 = vst [vmem:[#allocation2 + $0x270] sm:$0xff] %v1310
      %1315 = vst [vmem:[#allocation2 + $0x278] sm:$0xff] %v1311
      %s1316 = scalar_lea.vmem %s1, 68
      %v1317 = vld [vmem:[%s1316] ss:$8 sm:$0xf]
      %v1319 = vlaneseq
      %v1320 = vshrl.u32 %v1319, 7
      %v1321 = vsub.s32 0, %v1320
      %v1322 = vrot.slane %v1317, %v1321
      %v1323 = vlaneseq
      %v1324 = vshrl.u32 %v1323, 7
      %v1325 = vsub.s32 1, %v1324
      %v1326 = vrot.slane %v1317, %v1325
      %v1327 = vlaneseq
      %v1328 = vshrl.u32 %v1327, 7
      %v1329 = vsub.s32 2, %v1328
      %v1330 = vrot.slane %v1317, %v1329
      %v1331 = vlaneseq
      %v1332 = vshrl.u32 %v1331, 7
      %v1333 = vsub.s32 3, %v1332
      %v1334 = vrot.slane %v1317, %v1333
      %v1339 = vmul.f32 %v574, %v1322
      %v1340 = vmul.f32 %v573, %v1326
      %v1341 = vmul.f32 %v572, %v1330
      %v1342 = vmul.f32 %v575, %v1334
      %1343 = vst [vmem:[#allocation2 + $0x280] sm:$0xff] %v1339
      %1344 = vst [vmem:[#allocation2 + $0x288] sm:$0xff] %v1340
      %1345 = vst [vmem:[#allocation2 + $0x290] sm:$0xff] %v1341
      %1346 = vst [vmem:[#allocation2 + $0x298] sm:$0xff] %v1342
      %s1347 = scalar_lea.vmem %s1, 69
      %v1348 = vld [vmem:[%s1347] ss:$8 sm:$0xf]
      %v1350 = vlaneseq
      %v1351 = vshrl.u32 %v1350, 7
      %v1352 = vsub.s32 0, %v1351
      %v1353 = vrot.slane %v1348, %v1352
      %v1354 = vlaneseq
      %v1355 = vshrl.u32 %v1354, 7
      %v1356 = vsub.s32 1, %v1355
      %v1357 = vrot.slane %v1348, %v1356
      %v1358 = vlaneseq
      %v1359 = vshrl.u32 %v1358, 7
      %v1360 = vsub.s32 2, %v1359
      %v1361 = vrot.slane %v1348, %v1360
      %v1362 = vlaneseq
      %v1363 = vshrl.u32 %v1362, 7
      %v1364 = vsub.s32 3, %v1363
      %v1365 = vrot.slane %v1348, %v1364
      %v1370 = vmul.f32 %v618, %v1353
      %v1371 = vmul.f32 %v617, %v1357
      %v1372 = vmul.f32 %v616, %v1361
      %v1373 = vmul.f32 %v619, %v1365
      %1374 = vst [vmem:[#allocation2 + $0x2a0] sm:$0xff] %v1370
      %1375 = vst [vmem:[#allocation2 + $0x2a8] sm:$0xff] %v1371
      %1376 = vst [vmem:[#allocation2 + $0x2b0] sm:$0xff] %v1372
      %1377 = vst [vmem:[#allocation2 + $0x2b8] sm:$0xff] %v1373
      %s1378 = scalar_lea.vmem %s1, 70
      %v1379 = vld [vmem:[%s1378] ss:$8 sm:$0xf]
      %v1381 = vlaneseq
      %v1382 = vshrl.u32 %v1381, 7
      %v1383 = vsub.s32 0, %v1382
      %v1384 = vrot.slane %v1379, %v1383
      %v1385 = vlaneseq
      %v1386 = vshrl.u32 %v1385, 7
      %v1387 = vsub.s32 1, %v1386
      %v1388 = vrot.slane %v1379, %v1387
      %v1389 = vlaneseq
      %v1390 = vshrl.u32 %v1389, 7
      %v1391 = vsub.s32 2, %v1390
      %v1392 = vrot.slane %v1379, %v1391
      %v1393 = vlaneseq
      %v1394 = vshrl.u32 %v1393, 7
      %v1395 = vsub.s32 3, %v1394
      %v1396 = vrot.slane %v1379, %v1395
      %v1401 = vmul.f32 %v662, %v1384
      %v1402 = vmul.f32 %v661, %v1388
      %v1403 = vmul.f32 %v660, %v1392
      %v1404 = vmul.f32 %v663, %v1396
      %1405 = vst [vmem:[#allocation2 + $0x2c0] sm:$0xff] %v1401
      %1406 = vst [vmem:[#allocation2 + $0x2c8] sm:$0xff] %v1402
      %1407 = vst [vmem:[#allocation2 + $0x2d0] sm:$0xff] %v1403
      %1408 = vst [vmem:[#allocation2 + $0x2d8] sm:$0xff] %v1404
      %s1409 = scalar_lea.vmem %s1, 71
      %v1410 = vld [vmem:[%s1409] ss:$8 sm:$0xf]
      %v1412 = vlaneseq
      %v1413 = vshrl.u32 %v1412, 7
      %v1414 = vsub.s32 0, %v1413
      %v1415 = vrot.slane %v1410, %v1414
      %v1416 = vlaneseq
      %v1417 = vshrl.u32 %v1416, 7
      %v1418 = vsub.s32 1, %v1417
      %v1419 = vrot.slane %v1410, %v1418
      %v1420 = vlaneseq
      %v1421 = vshrl.u32 %v1420, 7
      %v1422 = vsub.s32 2, %v1421
      %v1423 = vrot.slane %v1410, %v1422
      %v1424 = vlaneseq
      %v1425 = vshrl.u32 %v1424, 7
      %v1426 = vsub.s32 3, %v1425
      %v1427 = vrot.slane %v1410, %v1426
      %v1432 = vmul.f32 %v706, %v1415
      %v1433 = vmul.f32 %v705, %v1419
      %v1434 = vmul.f32 %v704, %v1423
      %v1435 = vmul.f32 %v707, %v1427
      %1436 = vst [vmem:[#allocation2 + $0x2e0] sm:$0xff] %v1432
      %1437 = vst [vmem:[#allocation2 + $0x2e8] sm:$0xff] %v1433
      %1438 = vst [vmem:[#allocation2 + $0x2f0] sm:$0xff] %v1434
      %1439 = vst [vmem:[#allocation2 + $0x2f8] sm:$0xff] %v1435
      %s1440 = scalar_lea.vmem %s1, 96
      %v1441 = vld [vmem:[%s1440] ss:$8 sm:$0xf]
      %v1443 = vlaneseq
      %v1444 = vshrl.u32 %v1443, 7
      %v1445 = vsub.s32 0, %v1444
      %v1446 = vrot.slane %v1441, %v1445
      %v1447 = vlaneseq
      %v1448 = vshrl.u32 %v1447, 7
      %v1449 = vsub.s32 1, %v1448
      %v1450 = vrot.slane %v1441, %v1449
      %v1451 = vlaneseq
      %v1452 = vshrl.u32 %v1451, 7
      %v1453 = vsub.s32 2, %v1452
      %v1454 = vrot.slane %v1441, %v1453
      %v1455 = vlaneseq
      %v1456 = vshrl.u32 %v1455, 7
      %v1457 = vsub.s32 3, %v1456
      %v1458 = vrot.slane %v1441, %v1457
      %v1463 = vmul.f32 %v750, %v1446
      %v1464 = vmul.f32 %v749, %v1450
      %v1465 = vmul.f32 %v748, %v1454
      %v1466 = vmul.f32 %v751, %v1458
      %1467 = vst [vmem:[#allocation2 + $0x300] sm:$0xff] %v1463
      %1468 = vst [vmem:[#allocation2 + $0x308] sm:$0xff] %v1464
      %1469 = vst [vmem:[#allocation2 + $0x310] sm:$0xff] %v1465
      %1470 = vst [vmem:[#allocation2 + $0x318] sm:$0xff] %v1466
      %s1471 = scalar_lea.vmem %s1, 97
      %v1472 = vld [vmem:[%s1471] ss:$8 sm:$0xf]
      %v1474 = vlaneseq
      %v1475 = vshrl.u32 %v1474, 7
      %v1476 = vsub.s32 0, %v1475
      %v1477 = vrot.slane %v1472, %v1476
      %v1478 = vlaneseq
      %v1479 = vshrl.u32 %v1478, 7
      %v1480 = vsub.s32 1, %v1479
      %v1481 = vrot.slane %v1472, %v1480
      %v1482 = vlaneseq
      %v1483 = vshrl.u32 %v1482, 7
      %v1484 = vsub.s32 2, %v1483
      %v1485 = vrot.slane %v1472, %v1484
      %v1486 = vlaneseq
      %v1487 = vshrl.u32 %v1486, 7
      %v1488 = vsub.s32 3, %v1487
      %v1489 = vrot.slane %v1472, %v1488
      %v1494 = vmul.f32 %v794, %v1477
      %v1495 = vmul.f32 %v793, %v1481
      %v1496 = vmul.f32 %v792, %v1485
      %v1497 = vmul.f32 %v795, %v1489
      %1498 = vst [vmem:[#allocation2 + $0x320] sm:$0xff] %v1494
      %1499 = vst [vmem:[#allocation2 + $0x328] sm:$0xff] %v1495
      %1500 = vst [vmem:[#allocation2 + $0x330] sm:$0xff] %v1496
      %1501 = vst [vmem:[#allocation2 + $0x338] sm:$0xff] %v1497
      %s1502 = scalar_lea.vmem %s1, 98
      %v1503 = vld [vmem:[%s1502] ss:$8 sm:$0xf]
      %v1505 = vlaneseq
      %v1506 = vshrl.u32 %v1505, 7
      %v1507 = vsub.s32 0, %v1506
      %v1508 = vrot.slane %v1503, %v1507
      %v1509 = vlaneseq
      %v1510 = vshrl.u32 %v1509, 7
      %v1511 = vsub.s32 1, %v1510
      %v1512 = vrot.slane %v1503, %v1511
      %v1513 = vlaneseq
      %v1514 = vshrl.u32 %v1513, 7
      %v1515 = vsub.s32 2, %v1514
      %v1516 = vrot.slane %v1503, %v1515
      %v1517 = vlaneseq
      %v1518 = vshrl.u32 %v1517, 7
      %v1519 = vsub.s32 3, %v1518
      %v1520 = vrot.slane %v1503, %v1519
      %v1525 = vmul.f32 %v838, %v1508
      %v1526 = vmul.f32 %v837, %v1512
      %v1527 = vmul.f32 %v836, %v1516
      %v1528 = vmul.f32 %v839, %v1520
      %1529 = vst [vmem:[#allocation2 + $0x340] sm:$0xff] %v1525
      %1530 = vst [vmem:[#allocation2 + $0x348] sm:$0xff] %v1526
      %1531 = vst [vmem:[#allocation2 + $0x350] sm:$0xff] %v1527
      %1532 = vst [vmem:[#allocation2 + $0x358] sm:$0xff] %v1528
      %v1533 = vld [vmem:[%s4] sm:$0xff]
      %v1534 = vld [vmem:[%s4 + $0x8] sm:$0xff]
      %v1535 = vld [vmem:[#allocation2] sm:$0xff]
      %v1536 = vld [vmem:[#allocation2 + $0x8] sm:$0xff]
      %v1537 = vld [vmem:[#allocation2 + $0x10] sm:$0xff]
      %v1538 = vld [vmem:[#allocation2 + $0x18] sm:$0xff]
      %v1539 = vld [vmem:[#allocation2 + $0x20] sm:$0xff]
      %v1540 = vld [vmem:[#allocation2 + $0x28] sm:$0xff]
      %v1541 = vld [vmem:[#allocation2 + $0x30] sm:$0xff]
      %v1542 = vld [vmem:[#allocation2 + $0x38] sm:$0xff]
      %v1543 = vld [vmem:[#allocation2 + $0x40] sm:$0xff]
      %v1544 = vld [vmem:[#allocation2 + $0x48] sm:$0xff]
      %v1545 = vld [vmem:[#allocation2 + $0x50] sm:$0xff]
      %v1546 = vld [vmem:[#allocation2 + $0x58] sm:$0xff]
      %v1547 = vld [vmem:[#allocation2 + $0x60] sm:$0xff]
      %v1548 = vld [vmem:[#allocation2 + $0x68] sm:$0xff]
      %v1549 = vld [vmem:[#allocation2 + $0x70] sm:$0xff]
      %v1550 = vld [vmem:[#allocation2 + $0x78] sm:$0xff]
      %v1551 = vld [vmem:[#allocation2 + $0x80] sm:$0xff]
      %v1552 = vld [vmem:[#allocation2 + $0x88] sm:$0xff]
      %v1553 = vld [vmem:[#allocation2 + $0x90] sm:$0xff]
      %v1554 = vld [vmem:[#allocation2 + $0x98] sm:$0xff]
      %v1555 = vld [vmem:[#allocation2 + $0xa0] sm:$0xff]
      %v1556 = vld [vmem:[#allocation2 + $0xa8] sm:$0xff]
      %v1557 = vld [vmem:[#allocation2 + $0xb0] sm:$0xff]
      %v1558 = vld [vmem:[#allocation2 + $0xb8] sm:$0xff]
      %v1559 = vld [vmem:[#allocation2 + $0xc0] sm:$0xff]
      %v1560 = vld [vmem:[#allocation2 + $0xc8] sm:$0xff]
      %v1561 = vld [vmem:[#allocation2 + $0xd0] sm:$0xff]
      %v1562 = vld [vmem:[#allocation2 + $0xd8] sm:$0xff]
      %v1563 = vld [vmem:[#allocation2 + $0xe0] sm:$0xff]
      %v1564 = vld [vmem:[#allocation2 + $0xe8] sm:$0xff]
      %v1565 = vld [vmem:[#allocation2 + $0xf0] sm:$0xff]
      %v1566 = vld [vmem:[#allocation2 + $0xf8] sm:$0xff]
      %v1567 = vld [vmem:[#allocation2 + $0x100] sm:$0xff]
      %v1568 = vld [vmem:[#allocation2 + $0x108] sm:$0xff]
      %v1569 = vld [vmem:[#allocation2 + $0x110] sm:$0xff]
      %v1570 = vld [vmem:[#allocation2 + $0x118] sm:$0xff]
      %v1571 = vld [vmem:[#allocation2 + $0x120] sm:$0xff]
      %v1572 = vld [vmem:[#allocation2 + $0x128] sm:$0xff]
      %v1573 = vld [vmem:[#allocation2 + $0x130] sm:$0xff]
      %v1574 = vld [vmem:[#allocation2 + $0x138] sm:$0xff]
      %v1575 = vld [vmem:[#allocation2 + $0x140] sm:$0xff]
      %v1576 = vld [vmem:[#allocation2 + $0x148] sm:$0xff]
      %v1577 = vld [vmem:[#allocation2 + $0x150] sm:$0xff]
      %v1578 = vld [vmem:[#allocation2 + $0x158] sm:$0xff]
      %v1579 = vld [vmem:[#allocation2 + $0x160] sm:$0xff]
      %v1580 = vld [vmem:[#allocation2 + $0x168] sm:$0xff]
      %v1581 = vld [vmem:[#allocation2 + $0x170] sm:$0xff]
      %v1582 = vld [vmem:[#allocation2 + $0x178] sm:$0xff]
      %v1583 = vld [vmem:[#allocation2 + $0x180] sm:$0xff]
      %v1584 = vld [vmem:[#allocation2 + $0x188] sm:$0xff]
      %v1585 = vld [vmem:[#allocation2 + $0x190] sm:$0xff]
      %v1586 = vld [vmem:[#allocation2 + $0x198] sm:$0xff]
      %v1587 = vld [vmem:[#allocation2 + $0x1a0] sm:$0xff]
      %v1588 = vld [vmem:[#allocation2 + $0x1a8] sm:$0xff]
      %v1589 = vld [vmem:[#allocation2 + $0x1b0] sm:$0xff]
      %v1590 = vld [vmem:[#allocation2 + $0x1b8] sm:$0xff]
      %v1591 = vld [vmem:[#allocation2 + $0x1c0] sm:$0xff]
      %v1592 = vld [vmem:[#allocation2 + $0x1c8] sm:$0xff]
      %v1593 = vld [vmem:[#allocation2 + $0x1d0] sm:$0xff]
      %v1594 = vld [vmem:[#allocation2 + $0x1d8] sm:$0xff]
      %v1595 = vld [vmem:[#allocation2 + $0x1e0] sm:$0xff]
      %v1596 = vld [vmem:[#allocation2 + $0x1e8] sm:$0xff]
      %v1597 = vld [vmem:[#allocation2 + $0x1f0] sm:$0xff]
      %v1598 = vld [vmem:[#allocation2 + $0x1f8] sm:$0xff]
      %v1599 = vld [vmem:[#allocation2 + $0x200] sm:$0xff]
      %v1600 = vld [vmem:[#allocation2 + $0x208] sm:$0xff]
      %v1601 = vld [vmem:[#allocation2 + $0x210] sm:$0xff]
      %v1602 = vld [vmem:[#allocation2 + $0x218] sm:$0xff]
      %v1603 = vld [vmem:[#allocation2 + $0x220] sm:$0xff]
      %v1604 = vld [vmem:[#allocation2 + $0x228] sm:$0xff]
      %v1605 = vld [vmem:[#allocation2 + $0x230] sm:$0xff]
      %v1606 = vld [vmem:[#allocation2 + $0x238] sm:$0xff]
      %v1607 = vld [vmem:[#allocation2 + $0x240] sm:$0xff]
      %v1608 = vld [vmem:[#allocation2 + $0x248] sm:$0xff]
      %v1609 = vld [vmem:[#allocation2 + $0x250] sm:$0xff]
      %v1610 = vld [vmem:[#allocation2 + $0x258] sm:$0xff]
      %v1611 = vld [vmem:[#allocation2 + $0x260] sm:$0xff]
      %v1612 = vld [vmem:[#allocation2 + $0x268] sm:$0xff]
      %v1613 = vld [vmem:[#allocation2 + $0x270] sm:$0xff]
      %v1614 = vld [vmem:[#allocation2 + $0x278] sm:$0xff]
      %v1615 = vld [vmem:[#allocation2 + $0x280] sm:$0xff]
      %v1616 = vld [vmem:[#allocation2 + $0x288] sm:$0xff]
      %v1617 = vld [vmem:[#allocation2 + $0x290] sm:$0xff]
      %v1618 = vld [vmem:[#allocation2 + $0x298] sm:$0xff]
      %v1619 = vld [vmem:[#allocation2 + $0x2a0] sm:$0xff]
      %v1620 = vld [vmem:[#allocation2 + $0x2a8] sm:$0xff]
      %v1621 = vld [vmem:[#allocation2 + $0x2b0] sm:$0xff]
      %v1622 = vld [vmem:[#allocation2 + $0x2b8] sm:$0xff]
      %v1623 = vld [vmem:[#allocation2 + $0x2c0] sm:$0xff]
      %v1624 = vld [vmem:[#allocation2 + $0x2c8] sm:$0xff]
      %v1625 = vld [vmem:[#allocation2 + $0x2d0] sm:$0xff]
      %v1626 = vld [vmem:[#allocation2 + $0x2d8] sm:$0xff]
      %v1627 = vld [vmem:[#allocation2 + $0x2e0] sm:$0xff]
      %v1628 = vld [vmem:[#allocation2 + $0x2e8] sm:$0xff]
      %v1629 = vld [vmem:[#allocation2 + $0x2f0] sm:$0xff]
      %v1630 = vld [vmem:[#allocation2 + $0x2f8] sm:$0xff]
      %v1631 = vld [vmem:[#allocation2 + $0x300] sm:$0xff]
      %v1632 = vld [vmem:[#allocation2 + $0x308] sm:$0xff]
      %v1633 = vld [vmem:[#allocation2 + $0x310] sm:$0xff]
      %v1634 = vld [vmem:[#allocation2 + $0x318] sm:$0xff]
      %v1635 = vld [vmem:[#allocation2 + $0x320] sm:$0xff]
      %v1636 = vld [vmem:[#allocation2 + $0x328] sm:$0xff]
      %v1637 = vld [vmem:[#allocation2 + $0x330] sm:$0xff]
      %v1638 = vld [vmem:[#allocation2 + $0x338] sm:$0xff]
      %v1639 = vld [vmem:[#allocation2 + $0x340] sm:$0xff]
      %v1640 = vld [vmem:[#allocation2 + $0x348] sm:$0xff]
      %v1641 = vld [vmem:[#allocation2 + $0x350] sm:$0xff]
      %v1642 = vld [vmem:[#allocation2 + $0x358] sm:$0xff]
      %v1643 = vld [vmem:[%s5] sm:$0xff]
      %1645 = vset.pattern.permute.xlu0 0
      %1646 = vperm.xlu0 %1645, %v1643
      %v1647 = vpop.permute.xlu0 %1646
      %vm1649 = vcmask 719872
      %v1651 = vsel %vm1649, %v1534, 0
      %1653 = vmatprep.subr.mxu0 %v1536
      %1654 = vmatpush1.msra.mxu0 %v1535
      %1655 = vmatprep.subr.mxu0 %v1540
      %1656 = vmatpush1.msra.mxu0 %v1539
      %1657 = vmatprep.subr.mxu0 %v1544
      %1658 = vmatpush1.msra.mxu0 %v1543
      %1659 = vmatprep.subr.mxu0 %v1548
      %1660 = vmatpush1.msra.mxu0 %v1547
      %1661 = vmatprep.subr.mxu0 %v1552
      %1662 = vmatpush1.msra.mxu0 %v1551
      %1663 = vmatprep.subr.mxu0 %v1556
      %1664 = vmatpush1.msra.mxu0 %v1555
      %1665 = vmatprep.subr.mxu0 %v1560
      %1666 = vmatpush1.msra.mxu0 %v1559
      %1667 = vmatprep.subr.mxu0 %v1564
      %1668 = vmatpush1.msra.mxu0 %v1563
      %1669 = vmatprep.subr.mxu0 %v1568
      %1670 = vmatpush1.msra.mxu0 %v1567
      %1671 = vmatprep.subr.mxu0 %v1572
      %1672 = vmatpush1.msra.mxu0 %v1571
      %1673 = vmatprep.subr.mxu0 %v1576
      %1674 = vmatpush1.msra.mxu0 %v1575
      %1675 = vmatprep.subr.mxu0 %v1580
      %1676 = vmatpush1.msra.mxu0 %v1579
      %1677 = vmatprep.subr.mxu0 %v1584
      %1678 = vmatpush1.msra.mxu0 %v1583
      %1679 = vmatprep.subr.mxu0 %v1588
      %1680 = vmatpush1.msra.mxu0 %v1587
      %1681 = vmatprep.subr.mxu0 %v1592
      %1682 = vmatpush1.msra.mxu0 %v1591
      %1683 = vmatprep.subr.mxu0 %v1596
      %1684 = vmatpush1.msra.mxu0 %v1595
      %1685 = vmatprep.subr.mxu0 %v1600
      %1686 = vmatpush1.msra.mxu0 %v1599
      %1687 = vmatprep.subr.mxu0 %v1604
      %1688 = vmatpush1.msra.mxu0 %v1603
      %1689 = vmatprep.subr.mxu0 %v1608
      %1690 = vmatpush1.msra.mxu0 %v1607
      %1691 = vmatprep.subr.mxu0 %v1612
      %1692 = vmatpush1.msra.mxu0 %v1611
      %1693 = vmatprep.subr.mxu0 %v1616
      %1694 = vmatpush1.msra.mxu0 %v1615
      %1695 = vmatprep.subr.mxu0 %v1620
      %1696 = vmatpush1.msra.mxu0 %v1619
      %1697 = vmatprep.subr.mxu0 %v1624
      %1698 = vmatpush1.msra.mxu0 %v1623
      %1699 = vmatprep.subr.mxu0 %v1628
      %1700 = vmatpush1.msra.mxu0 %v1627
      %1701 = vmatprep.subr.mxu0 %v1632
      %1702 = vmatpush1.msra.mxu0 %v1631
      %1703 = vmatprep.subr.mxu0 %v1636
      %1704 = vmatpush1.msra.mxu0 %v1635
      %1705 = vmatprep.subr.mxu0 %v1640
      %1706 = vmatpush1.msra.mxu0 %v1639
      %1707 = vmatprep.subr.mxu0 0.0
      %1708 = vmatpush1.msra.mxu0 0.0
      %1709 = vmatprep.subr.mxu0 0.0
      %1710 = vmatpush1.msra.mxu0 0.0
      %1711 = vmatprep.subr.mxu0 0.0
      %1712 = vmatpush1.msra.mxu0 0.0
      %1713 = vmatprep.subr.mxu0 0.0
      %1714 = vmatpush1.msra.mxu0 0.0
      %1715 = vmatprep.subr.mxu0 0.0
      %1716 = vmatpush1.msra.mxu0 0.0
      %1717 = vmatprep.mubr.f32.mxu0 %v1651
      %1718 = vmatmul.mubr.f32.gmra.mrb[0].mxu0 %v1533
      %v1719 = vpop.f32.mrb[0].mxu0
      %v1720 = vadd.f32 %v1647, %v1719
      %v1721 = vpop.f32.mrb[0].mxu0
      %v1722 = vadd.f32 %v1647, %v1721
      %1723 = vdwg.mxu0
      %1724 = vmatprep.subr.mxu0 %v1538
      %1725 = vmatpush1.msra.mxu0 %v1537
      %1726 = vmatprep.subr.mxu0 %v1542
      %1727 = vmatpush1.msra.mxu0 %v1541
      %1728 = vmatprep.subr.mxu0 %v1546
      %1729 = vmatpush1.msra.mxu0 %v1545
      %1730 = vmatprep.subr.mxu0 %v1550
      %1731 = vmatpush1.msra.mxu0 %v1549
      %1732 = vmatprep.subr.mxu0 %v1554
      %1733 = vmatpush1.msra.mxu0 %v1553
      %1734 = vmatprep.subr.mxu0 %v1558
      %1735 = vmatpush1.msra.mxu0 %v1557
      %1736 = vmatprep.subr.mxu0 %v1562
      %1737 = vmatpush1.msra.mxu0 %v1561
      %1738 = vmatprep.subr.mxu0 %v1566
      %1739 = vmatpush1.msra.mxu0 %v1565
      %1740 = vmatprep.subr.mxu0 %v1570
      %1741 = vmatpush1.msra.mxu0 %v1569
      %1742 = vmatprep.subr.mxu0 %v1574
      %1743 = vmatpush1.msra.mxu0 %v1573
      %1744 = vmatprep.subr.mxu0 %v1578
      %1745 = vmatpush1.msra.mxu0 %v1577
      %1746 = vmatprep.subr.mxu0 %v1582
      %1747 = vmatpush1.msra.mxu0 %v1581
      %1748 = vmatprep.subr.mxu0 %v1586
      %1749 = vmatpush1.msra.mxu0 %v1585
      %1750 = vmatprep.subr.mxu0 %v1590
      %1751 = vmatpush1.msra.mxu0 %v1589
      %1752 = vmatprep.subr.mxu0 %v1594
      %1753 = vmatpush1.msra.mxu0 %v1593
      %1754 = vmatprep.subr.mxu0 %v1598
      %1755 = vmatpush1.msra.mxu0 %v1597
      %1756 = vmatprep.subr.mxu0 %v1602
      %1757 = vmatpush1.msra.mxu0 %v1601
      %1758 = vmatprep.subr.mxu0 %v1606
      %1759 = vmatpush1.msra.mxu0 %v1605
      %1760 = vmatprep.subr.mxu0 %v1610
      %1761 = vmatpush1.msra.mxu0 %v1609
      %1762 = vmatprep.subr.mxu0 %v1614
      %1763 = vmatpush1.msra.mxu0 %v1613
      %1764 = vmatprep.subr.mxu0 %v1618
      %1765 = vmatpush1.msra.mxu0 %v1617
      %1766 = vmatprep.subr.mxu0 %v1622
      %1767 = vmatpush1.msra.mxu0 %v1621
      %1768 = vmatprep.subr.mxu0 %v1626
      %1769 = vmatpush1.msra.mxu0 %v1625
      %1770 = vmatprep.subr.mxu0 %v1630
      %1771 = vmatpush1.msra.mxu0 %v1629
      %1772 = vmatprep.subr.mxu0 %v1634
      %1773 = vmatpush1.msra.mxu0 %v1633
      %1774 = vmatprep.subr.mxu0 %v1638
      %1775 = vmatpush1.msra.mxu0 %v1637
      %1776 = vmatprep.subr.mxu0 %v1642
      %1777 = vmatpush1.msra.mxu0 %v1641
      %1778 = vmatprep.subr.mxu0 0.0
      %1779 = vmatpush1.msra.mxu0 0.0
      %1780 = vmatprep.subr.mxu0 0.0
      %1781 = vmatpush1.msra.mxu0 0.0
      %1782 = vmatprep.subr.mxu0 0.0
      %1783 = vmatpush1.msra.mxu0 0.0
      %1784 = vmatprep.subr.mxu0 0.0
      %1785 = vmatpush1.msra.mxu0 0.0
      %1786 = vmatprep.subr.mxu0 0.0
      %1787 = vmatpush1.msra.mxu0 0.0
      %1788 = vmatprep.mubr.f32.mxu0 %v1651
      %1789 = vmatmul.mubr.f32.gmra.mrb[0].mxu0 %v1533
      %v1790 = vpop.f32.mrb[0].mxu0
      %v1791 = vadd.f32 %v1647, %v1790
      %v1792 = vpop.f32.mrb[0].mxu0
      %v1793 = vadd.f32 %v1647, %v1792
      %1794 = vdwg.mxu0
      %v1795 = vadd.f32 %v1720, %v1722
      %v1796 = vadd.f32 %v1795, %v1791
      %v1797 = vadd.f32 %v1796, %v1793
      %1798 = vadd.xlane.f32.xlu0 %v1797
      %v1799 = vpop.xlane.xlu0 %1798
      %v1800 = vrcp.pop 512.0
      %v1801 = vmul.f32 %v1799, %v1800
      %v1802 = vsub.f32 %v1720, %v1801
      %v1803 = vsub.f32 %v1722, %v1801
      %v1804 = vsub.f32 %v1791, %v1801
      %v1805 = vsub.f32 %v1793, %v1801
      %v1806 = vmul.f32 %v1802, %v1802
      %v1807 = vmul.f32 %v1803, %v1803
      %v1808 = vmul.f32 %v1804, %v1804
      %v1809 = vmul.f32 %v1805, %v1805
      %v1810 = vadd.f32 %v1806, %v1807
      %v1811 = vadd.f32 %v1810, %v1808
      %v1812 = vadd.f32 %v1811, %v1809
      %1813 = vadd.xlane.f32.xlu0 %v1812
      %v1814 = vpop.xlane.xlu0 %1813
      %v1815 = vmul.f32 %v1814, %v1800
      %v1816 = vadd.f32 %v1815, 1e-05
      %v1817 = vrsqrt.pop %v1816
      %v1818 = vmul.f32 %v1802, %v1817
      %v1819 = vmul.f32 %v1803, %v1817
      %v1820 = vmul.f32 %v1804, %v1817
      %v1821 = vmul.f32 %v1805, %v1817
      %vm1822 = vcmp.ge.f32.partialorder %v1818, 0.0
      %vm1823 = vcmp.ge.f32.partialorder %v1819, 0.0
      %vm1824 = vcmp.ge.f32.partialorder %v1820, 0.0
      %vm1825 = vcmp.ge.f32.partialorder %v1821, 0.0
      %v1826 = vmul.f32 %v1818, 0.01
      %v1827 = vmul.f32 %v1819, 0.01
      %v1828 = vmul.f32 %v1820, 0.01
      %v1829 = vmul.f32 %v1821, 0.01
      %v1830 = vsel %vm1822, %v1818, %v1826
      %v1831 = vsel %vm1823, %v1819, %v1827
      %v1832 = vsel %vm1824, %v1820, %v1828
      %v1833 = vsel %vm1825, %v1821, %v1829
      %v1834 = vadd.f32 %v1830, %v399
      %v1835 = vadd.f32 %v1831, %v401
      %v1836 = vadd.f32 %v1832, %v470
      %v1837 = vadd.f32 %v1833, %v472
      %1838 = vrot.lane.b32.xlu0 %v1834, 73
      %v1839 = vpop.permute.xlu0 %1838
      %1840 = vrot.lane.b32.xlu0 %v1835, 73
      %v1841 = vpop.permute.xlu0 %1840
      %1842 = vrot.lane.b32.xlu0 %v1836, 73
      %v1843 = vpop.permute.xlu0 %1842
      %1844 = vrot.lane.b32.xlu0 %v1837, 73
      %v1845 = vpop.permute.xlu0 %1844
      %v1846 = vsel %vm484, %v1843, %v1845
      %v1847 = vsel %vm484, %v1841, %v1843
      %v1848 = vsel %vm484, %v1839, %v1841
      %v1849 = vsel %vm484, %v1845, %v1839
      %v1850 = vld [vmem:[%s1] ss:$8 sm:$0xf]
      %v1852 = vlaneseq
      %v1853 = vshrl.u32 %v1852, 7
      %v1854 = vsub.s32 0, %v1853
      %v1855 = vrot.slane %v1850, %v1854
      %v1856 = vlaneseq
      %v1857 = vshrl.u32 %v1856, 7
      %v1858 = vsub.s32 1, %v1857
      %v1859 = vrot.slane %v1850, %v1858
      %v1860 = vlaneseq
      %v1861 = vshrl.u32 %v1860, 7
      %v1862 = vsub.s32 2, %v1861
      %v1863 = vrot.slane %v1850, %v1862
      %v1864 = vlaneseq
      %v1865 = vshrl.u32 %v1864, 7
      %v1866 = vsub.s32 3, %v1865
      %v1867 = vrot.slane %v1850, %v1866
      %v1872 = vmul.f32 %v1849, %v1855
      %v1873 = vmul.f32 %v1848, %v1859
      %v1874 = vmul.f32 %v1847, %v1863
      %v1875 = vmul.f32 %v1846, %v1867
      %1876 = vst [vmem:[#allocation2] sm:$0xff] %v1872
      %1877 = vst [vmem:[#allocation2 + $0x8] sm:$0xff] %v1873
      %1878 = vst [vmem:[#allocation2 + $0x10] sm:$0xff] %v1874
      %1879 = vst [vmem:[#allocation2 + $0x18] sm:$0xff] %v1875
      %1880 = vrot.lane.b32.xlu0 %v1834, 72
      %v1881 = vpop.permute.xlu0 %1880
      %1882 = vrot.lane.b32.xlu0 %v1835, 72
      %v1883 = vpop.permute.xlu0 %1882
      %1884 = vrot.lane.b32.xlu0 %v1836, 72
      %v1885 = vpop.permute.xlu0 %1884
      %1886 = vrot.lane.b32.xlu0 %v1837, 72
      %v1887 = vpop.permute.xlu0 %1886
      %v1888 = vsel %vm527, %v1885, %v1887
      %v1889 = vsel %vm527, %v1883, %v1885
      %v1890 = vsel %vm527, %v1881, %v1883
      %v1891 = vsel %vm527, %v1887, %v1881
      %v1892 = vld [vmem:[%s532] ss:$8 sm:$0xf]
      %v1894 = vlaneseq
      %v1895 = vshrl.u32 %v1894, 7
      %v1896 = vsub.s32 0, %v1895
      %v1897 = vrot.slane %v1892, %v1896
      %v1898 = vlaneseq
      %v1899 = vshrl.u32 %v1898, 7
      %v1900 = vsub.s32 1, %v1899
      %v1901 = vrot.slane %v1892, %v1900
      %v1902 = vlaneseq
      %v1903 = vshrl.u32 %v1902, 7
      %v1904 = vsub.s32 2, %v1903
      %v1905 = vrot.slane %v1892, %v1904
      %v1906 = vlaneseq
      %v1907 = vshrl.u32 %v1906, 7
      %v1908 = vsub.s32 3, %v1907
      %v1909 = vrot.slane %v1892, %v1908
      %v1914 = vmul.f32 %v1891, %v1897
      %v1915 = vmul.f32 %v1890, %v1901
      %v1916 = vmul.f32 %v1889, %v1905
      %v1917 = vmul.f32 %v1888, %v1909
      %1918 = vst [vmem:[#allocation2 + $0x20] sm:$0xff] %v1914
      %1919 = vst [vmem:[#allocation2 + $0x28] sm:$0xff] %v1915
      %1920 = vst [vmem:[#allocation2 + $0x30] sm:$0xff] %v1916
      %1921 = vst [vmem:[#allocation2 + $0x38] sm:$0xff] %v1917
      %1922 = vrot.lane.b32.xlu0 %v1834, 71
      %v1923 = vpop.permute.xlu0 %1922
      %1924 = vrot.lane.b32.xlu0 %v1835, 71
      %v1925 = vpop.permute.xlu0 %1924
      %1926 = vrot.lane.b32.xlu0 %v1836, 71
      %v1927 = vpop.permute.xlu0 %1926
      %1928 = vrot.lane.b32.xlu0 %v1837, 71
      %v1929 = vpop.permute.xlu0 %1928
      %v1930 = vsel %vm571, %v1927, %v1929
      %v1931 = vsel %vm571, %v1925, %v1927
      %v1932 = vsel %vm571, %v1923, %v1925
      %v1933 = vsel %vm571, %v1929, %v1923
      %v1934 = vld [vmem:[%s576] ss:$8 sm:$0xf]
      %v1936 = vlaneseq
      %v1937 = vshrl.u32 %v1936, 7
      %v1938 = vsub.s32 0, %v1937
      %v1939 = vrot.slane %v1934, %v1938
      %v1940 = vlaneseq
      %v1941 = vshrl.u32 %v1940, 7
      %v1942 = vsub.s32 1, %v1941
      %v1943 = vrot.slane %v1934, %v1942
      %v1944 = vlaneseq
      %v1945 = vshrl.u32 %v1944, 7
      %v1946 = vsub.s32 2, %v1945
      %v1947 = vrot.slane %v1934, %v1946
      %v1948 = vlaneseq
      %v1949 = vshrl.u32 %v1948, 7
      %v1950 = vsub.s32 3, %v1949
      %v1951 = vrot.slane %v1934, %v1950
      %v1956 = vmul.f32 %v1933, %v1939
      %v1957 = vmul.f32 %v1932, %v1943
      %v1958 = vmul.f32 %v1931, %v1947
      %v1959 = vmul.f32 %v1930, %v1951
      %1960 = vst [vmem:[#allocation2 + $0x40] sm:$0xff] %v1956
      %1961 = vst [vmem:[#allocation2 + $0x48] sm:$0xff] %v1957
      %1962 = vst [vmem:[#allocation2 + $0x50] sm:$0xff] %v1958
      %1963 = vst [vmem:[#allocation2 + $0x58] sm:$0xff] %v1959
      %1964 = vrot.lane.b32.xlu0 %v1834, 65
      %v1965 = vpop.permute.xlu0 %1964
      %1966 = vrot.lane.b32.xlu0 %v1835, 65
      %v1967 = vpop.permute.xlu0 %1966
      %1968 = vrot.lane.b32.xlu0 %v1836, 65
      %v1969 = vpop.permute.xlu0 %1968
      %1970 = vrot.lane.b32.xlu0 %v1837, 65
      %v1971 = vpop.permute.xlu0 %1970
      %v1972 = vsel %vm615, %v1969, %v1971
      %v1973 = vsel %vm615, %v1967, %v1969
      %v1974 = vsel %vm615, %v1965, %v1967
      %v1975 = vsel %vm615, %v1971, %v1965
      %v1976 = vld [vmem:[%s620] ss:$8 sm:$0xf]
      %v1978 = vlaneseq
      %v1979 = vshrl.u32 %v1978, 7
      %v1980 = vsub.s32 0, %v1979
      %v1981 = vrot.slane %v1976, %v1980
      %v1982 = vlaneseq
      %v1983 = vshrl.u32 %v1982, 7
      %v1984 = vsub.s32 1, %v1983
      %v1985 = vrot.slane %v1976, %v1984
      %v1986 = vlaneseq
      %v1987 = vshrl.u32 %v1986, 7
      %v1988 = vsub.s32 2, %v1987
      %v1989 = vrot.slane %v1976, %v1988
      %v1990 = vlaneseq
      %v1991 = vshrl.u32 %v1990, 7
      %v1992 = vsub.s32 3, %v1991
      %v1993 = vrot.slane %v1976, %v1992
      %v1998 = vmul.f32 %v1975, %v1981
      %v1999 = vmul.f32 %v1974, %v1985
      %v2000 = vmul.f32 %v1973, %v1989
      %v2001 = vmul.f32 %v1972, %v1993
      %2002 = vst [vmem:[#allocation2 + $0x60] sm:$0xff] %v1998
      %2003 = vst [vmem:[#allocation2 + $0x68] sm:$0xff] %v1999
      %2004 = vst [vmem:[#allocation2 + $0x70] sm:$0xff] %v2000
      %2005 = vst [vmem:[#allocation2 + $0x78] sm:$0xff] %v2001
      %2006 = vrot.lane.b32.xlu0 %v1834, 64
      %v2007 = vpop.permute.xlu0 %2006
      %2008 = vrot.lane.b32.xlu0 %v1835, 64
      %v2009 = vpop.permute.xlu0 %2008
      %2010 = vrot.lane.b32.xlu0 %v1836, 64
      %v2011 = vpop.permute.xlu0 %2010
      %2012 = vrot.lane.b32.xlu0 %v1837, 64
      %v2013 = vpop.permute.xlu0 %2012
      %v2014 = vsel %vm659, %v2011, %v2013
      %v2015 = vsel %vm659, %v2009, %v2011
      %v2016 = vsel %vm659, %v2007, %v2009
      %v2017 = vsel %vm659, %v2013, %v2007
      %v2018 = vld [vmem:[%s664] ss:$8 sm:$0xf]
      %v2020 = vlaneseq
      %v2021 = vshrl.u32 %v2020, 7
      %v2022 = vsub.s32 0, %v2021
      %v2023 = vrot.slane %v2018, %v2022
      %v2024 = vlaneseq
      %v2025 = vshrl.u32 %v2024, 7
      %v2026 = vsub.s32 1, %v2025
      %v2027 = vrot.slane %v2018, %v2026
      %v2028 = vlaneseq
      %v2029 = vshrl.u32 %v2028, 7
      %v2030 = vsub.s32 2, %v2029
      %v2031 = vrot.slane %v2018, %v2030
      %v2032 = vlaneseq
      %v2033 = vshrl.u32 %v2032, 7
      %v2034 = vsub.s32 3, %v2033
      %v2035 = vrot.slane %v2018, %v2034
      %v2040 = vmul.f32 %v2017, %v2023
      %v2041 = vmul.f32 %v2016, %v2027
      %v2042 = vmul.f32 %v2015, %v2031
      %v2043 = vmul.f32 %v2014, %v2035
      %2044 = vst [vmem:[#allocation2 + $0x80] sm:$0xff] %v2040
      %2045 = vst [vmem:[#allocation2 + $0x88] sm:$0xff] %v2041
      %2046 = vst [vmem:[#allocation2 + $0x90] sm:$0xff] %v2042
      %2047 = vst [vmem:[#allocation2 + $0x98] sm:$0xff] %v2043
      %2048 = vrot.lane.b32.xlu0 %v1834, 63
      %v2049 = vpop.permute.xlu0 %2048
      %2050 = vrot.lane.b32.xlu0 %v1835, 63
      %v2051 = vpop.permute.xlu0 %2050
      %2052 = vrot.lane.b32.xlu0 %v1836, 63
      %v2053 = vpop.permute.xlu0 %2052
      %2054 = vrot.lane.b32.xlu0 %v1837, 63
      %v2055 = vpop.permute.xlu0 %2054
      %v2056 = vsel %vm703, %v2053, %v2055
      %v2057 = vsel %vm703, %v2051, %v2053
      %v2058 = vsel %vm703, %v2049, %v2051
      %v2059 = vsel %vm703, %v2055, %v2049
      %v2060 = vld [vmem:[%s708] ss:$8 sm:$0xf]
      %v2062 = vlaneseq
      %v2063 = vshrl.u32 %v2062, 7
      %v2064 = vsub.s32 0, %v2063
      %v2065 = vrot.slane %v2060, %v2064
      %v2066 = vlaneseq
      %v2067 = vshrl.u32 %v2066, 7
      %v2068 = vsub.s32 1, %v2067
      %v2069 = vrot.slane %v2060, %v2068
      %v2070 = vlaneseq
      %v2071 = vshrl.u32 %v2070, 7
      %v2072 = vsub.s32 2, %v2071
      %v2073 = vrot.slane %v2060, %v2072
      %v2074 = vlaneseq
      %v2075 = vshrl.u32 %v2074, 7
      %v2076 = vsub.s32 3, %v2075
      %v2077 = vrot.slane %v2060, %v2076
      %v2082 = vmul.f32 %v2059, %v2065
      %v2083 = vmul.f32 %v2058, %v2069
      %v2084 = vmul.f32 %v2057, %v2073
      %v2085 = vmul.f32 %v2056, %v2077
      %2086 = vst [vmem:[#allocation2 + $0xa0] sm:$0xff] %v2082
      %2087 = vst [vmem:[#allocation2 + $0xa8] sm:$0xff] %v2083
      %2088 = vst [vmem:[#allocation2 + $0xb0] sm:$0xff] %v2084
      %2089 = vst [vmem:[#allocation2 + $0xb8] sm:$0xff] %v2085
      %2090 = vrot.lane.b32.xlu0 %v1834, 57
      %v2091 = vpop.permute.xlu0 %2090
      %2092 = vrot.lane.b32.xlu0 %v1835, 57
      %v2093 = vpop.permute.xlu0 %2092
      %2094 = vrot.lane.b32.xlu0 %v1836, 57
      %v2095 = vpop.permute.xlu0 %2094
      %2096 = vrot.lane.b32.xlu0 %v1837, 57
      %v2097 = vpop.permute.xlu0 %2096
      %v2098 = vsel %vm747, %v2095, %v2097
      %v2099 = vsel %vm747, %v2093, %v2095
      %v2100 = vsel %vm747, %v2091, %v2093
      %v2101 = vsel %vm747, %v2097, %v2091
      %v2102 = vld [vmem:[%s752] ss:$8 sm:$0xf]
      %v2104 = vlaneseq
      %v2105 = vshrl.u32 %v2104, 7
      %v2106 = vsub.s32 0, %v2105
      %v2107 = vrot.slane %v2102, %v2106
      %v2108 = vlaneseq
      %v2109 = vshrl.u32 %v2108, 7
      %v2110 = vsub.s32 1, %v2109
      %v2111 = vrot.slane %v2102, %v2110
      %v2112 = vlaneseq
      %v2113 = vshrl.u32 %v2112, 7
      %v2114 = vsub.s32 2, %v2113
      %v2115 = vrot.slane %v2102, %v2114
      %v2116 = vlaneseq
      %v2117 = vshrl.u32 %v2116, 7
      %v2118 = vsub.s32 3, %v2117
      %v2119 = vrot.slane %v2102, %v2118
      %v2124 = vmul.f32 %v2101, %v2107
      %v2125 = vmul.f32 %v2100, %v2111
      %v2126 = vmul.f32 %v2099, %v2115
      %v2127 = vmul.f32 %v2098, %v2119
      %2128 = vst [vmem:[#allocation2 + $0xc0] sm:$0xff] %v2124
      %2129 = vst [vmem:[#allocation2 + $0xc8] sm:$0xff] %v2125
      %2130 = vst [vmem:[#allocation2 + $0xd0] sm:$0xff] %v2126
      %2131 = vst [vmem:[#allocation2 + $0xd8] sm:$0xff] %v2127
      %2132 = vrot.lane.b32.xlu0 %v1834, 56
      %v2133 = vpop.permute.xlu0 %2132
      %2134 = vrot.lane.b32.xlu0 %v1835, 56
      %v2135 = vpop.permute.xlu0 %2134
      %2136 = vrot.lane.b32.xlu0 %v1836, 56
      %v2137 = vpop.permute.xlu0 %2136
      %2138 = vrot.lane.b32.xlu0 %v1837, 56
      %v2139 = vpop.permute.xlu0 %2138
      %v2140 = vsel %vm791, %v2137, %v2139
      %v2141 = vsel %vm791, %v2135, %v2137
      %v2142 = vsel %vm791, %v2133, %v2135
      %v2143 = vsel %vm791, %v2139, %v2133
      %v2144 = vld [vmem:[%s796] ss:$8 sm:$0xf]
      %v2146 = vlaneseq
      %v2147 = vshrl.u32 %v2146, 7
      %v2148 = vsub.s32 0, %v2147
      %v2149 = vrot.slane %v2144, %v2148
      %v2150 = vlaneseq
      %v2151 = vshrl.u32 %v2150, 7
      %v2152 = vsub.s32 1, %v2151
      %v2153 = vrot.slane %v2144, %v2152
      %v2154 = vlaneseq
      %v2155 = vshrl.u32 %v2154, 7
      %v2156 = vsub.s32 2, %v2155
      %v2157 = vrot.slane %v2144, %v2156
      %v2158 = vlaneseq
      %v2159 = vshrl.u32 %v2158, 7
      %v2160 = vsub.s32 3, %v2159
      %v2161 = vrot.slane %v2144, %v2160
      %v2166 = vmul.f32 %v2143, %v2149
      %v2167 = vmul.f32 %v2142, %v2153
      %v2168 = vmul.f32 %v2141, %v2157
      %v2169 = vmul.f32 %v2140, %v2161
      %2170 = vst [vmem:[#allocation2 + $0xe0] sm:$0xff] %v2166
      %2171 = vst [vmem:[#allocation2 + $0xe8] sm:$0xff] %v2167
      %2172 = vst [vmem:[#allocation2 + $0xf0] sm:$0xff] %v2168
      %2173 = vst [vmem:[#allocation2 + $0xf8] sm:$0xff] %v2169
      %2174 = vrot.lane.b32.xlu0 %v1834, 55
      %v2175 = vpop.permute.xlu0 %2174
      %2176 = vrot.lane.b32.xlu0 %v1835, 55
      %v2177 = vpop.permute.xlu0 %2176
      %2178 = vrot.lane.b32.xlu0 %v1836, 55
      %v2179 = vpop.permute.xlu0 %2178
      %2180 = vrot.lane.b32.xlu0 %v1837, 55
      %v2181 = vpop.permute.xlu0 %2180
      %v2182 = vsel %vm835, %v2179, %v2181
      %v2183 = vsel %vm835, %v2177, %v2179
      %v2184 = vsel %vm835, %v2175, %v2177
      %v2185 = vsel %vm835, %v2181, %v2175
      %v2186 = vld [vmem:[%s840] ss:$8 sm:$0xf]
      %v2188 = vlaneseq
      %v2189 = vshrl.u32 %v2188, 7
      %v2190 = vsub.s32 0, %v2189
      %v2191 = vrot.slane %v2186, %v2190
      %v2192 = vlaneseq
      %v2193 = vshrl.u32 %v2192, 7
      %v2194 = vsub.s32 1, %v2193
      %v2195 = vrot.slane %v2186, %v2194
      %v2196 = vlaneseq
      %v2197 = vshrl.u32 %v2196, 7
      %v2198 = vsub.s32 2, %v2197
      %v2199 = vrot.slane %v2186, %v2198
      %v2200 = vlaneseq
      %v2201 = vshrl.u32 %v2200, 7
      %v2202 = vsub.s32 3, %v2201
      %v2203 = vrot.slane %v2186, %v2202
      %v2208 = vmul.f32 %v2185, %v2191
      %v2209 = vmul.f32 %v2184, %v2195
      %v2210 = vmul.f32 %v2183, %v2199
      %v2211 = vmul.f32 %v2182, %v2203
      %2212 = vst [vmem:[#allocation2 + $0x100] sm:$0xff] %v2208
      %2213 = vst [vmem:[#allocation2 + $0x108] sm:$0xff] %v2209
      %2214 = vst [vmem:[#allocation2 + $0x110] sm:$0xff] %v2210
      %2215 = vst [vmem:[#allocation2 + $0x118] sm:$0xff] %v2211
      %2216 = vrot.lane.b32.xlu0 %v1834, 9
      %v2217 = vpop.permute.xlu0 %2216
      %2218 = vrot.lane.b32.xlu0 %v1835, 9
      %v2219 = vpop.permute.xlu0 %2218
      %2220 = vrot.lane.b32.xlu0 %v1836, 9
      %v2221 = vpop.permute.xlu0 %2220
      %2222 = vrot.lane.b32.xlu0 %v1837, 9
      %v2223 = vpop.permute.xlu0 %2222
      %v2224 = vsel %vm879, %v2221, %v2223
      %v2225 = vsel %vm879, %v2219, %v2221
      %v2226 = vsel %vm879, %v2217, %v2219
      %v2227 = vsel %vm879, %v2223, %v2217
      %v2228 = vld [vmem:[%s884] ss:$8 sm:$0xf]
      %v2230 = vlaneseq
      %v2231 = vshrl.u32 %v2230, 7
      %v2232 = vsub.s32 0, %v2231
      %v2233 = vrot.slane %v2228, %v2232
      %v2234 = vlaneseq
      %v2235 = vshrl.u32 %v2234, 7
      %v2236 = vsub.s32 1, %v2235
      %v2237 = vrot.slane %v2228, %v2236
      %v2238 = vlaneseq
      %v2239 = vshrl.u32 %v2238, 7
      %v2240 = vsub.s32 2, %v2239
      %v2241 = vrot.slane %v2228, %v2240
      %v2242 = vlaneseq
      %v2243 = vshrl.u32 %v2242, 7
      %v2244 = vsub.s32 3, %v2243
      %v2245 = vrot.slane %v2228, %v2244
      %v2250 = vmul.f32 %v2227, %v2233
      %v2251 = vmul.f32 %v2226, %v2237
      %v2252 = vmul.f32 %v2225, %v2241
      %v2253 = vmul.f32 %v2224, %v2245
      %2254 = vst [vmem:[#allocation2 + $0x120] sm:$0xff] %v2250
      %2255 = vst [vmem:[#allocation2 + $0x128] sm:$0xff] %v2251
      %2256 = vst [vmem:[#allocation2 + $0x130] sm:$0xff] %v2252
      %2257 = vst [vmem:[#allocation2 + $0x138] sm:$0xff] %v2253
      %2258 = vrot.lane.b32.xlu0 %v1834, 8
      %v2259 = vpop.permute.xlu0 %2258
      %2260 = vrot.lane.b32.xlu0 %v1835, 8
      %v2261 = vpop.permute.xlu0 %2260
      %2262 = vrot.lane.b32.xlu0 %v1836, 8
      %v2263 = vpop.permute.xlu0 %2262
      %2264 = vrot.lane.b32.xlu0 %v1837, 8
      %v2265 = vpop.permute.xlu0 %2264
      %v2266 = vsel %vm923, %v2263, %v2265
      %v2267 = vsel %vm923, %v2261, %v2263
      %v2268 = vsel %vm923, %v2259, %v2261
      %v2269 = vsel %vm923, %v2265, %v2259
      %v2270 = vld [vmem:[%s928] ss:$8 sm:$0xf]
      %v2272 = vlaneseq
      %v2273 = vshrl.u32 %v2272, 7
      %v2274 = vsub.s32 0, %v2273
      %v2275 = vrot.slane %v2270, %v2274
      %v2276 = vlaneseq
      %v2277 = vshrl.u32 %v2276, 7
      %v2278 = vsub.s32 1, %v2277
      %v2279 = vrot.slane %v2270, %v2278
      %v2280 = vlaneseq
      %v2281 = vshrl.u32 %v2280, 7
      %v2282 = vsub.s32 2, %v2281
      %v2283 = vrot.slane %v2270, %v2282
      %v2284 = vlaneseq
      %v2285 = vshrl.u32 %v2284, 7
      %v2286 = vsub.s32 3, %v2285
      %v2287 = vrot.slane %v2270, %v2286
      %v2292 = vmul.f32 %v2269, %v2275
      %v2293 = vmul.f32 %v2268, %v2279
      %v2294 = vmul.f32 %v2267, %v2283
      %v2295 = vmul.f32 %v2266, %v2287
      %2296 = vst [vmem:[#allocation2 + $0x140] sm:$0xff] %v2292
      %2297 = vst [vmem:[#allocation2 + $0x148] sm:$0xff] %v2293
      %2298 = vst [vmem:[#allocation2 + $0x150] sm:$0xff] %v2294
      %2299 = vst [vmem:[#allocation2 + $0x158] sm:$0xff] %v2295
      %2300 = vrot.lane.b32.xlu0 %v1834, 7
      %v2301 = vpop.permute.xlu0 %2300
      %2302 = vrot.lane.b32.xlu0 %v1835, 7
      %v2303 = vpop.permute.xlu0 %2302
      %2304 = vrot.lane.b32.xlu0 %v1836, 7
      %v2305 = vpop.permute.xlu0 %2304
      %2306 = vrot.lane.b32.xlu0 %v1837, 7
      %v2307 = vpop.permute.xlu0 %2306
      %v2308 = vsel %vm967, %v2305, %v2307
      %v2309 = vsel %vm967, %v2303, %v2305
      %v2310 = vsel %vm967, %v2301, %v2303
      %v2311 = vsel %vm967, %v2307, %v2301
      %v2312 = vld [vmem:[%s972] ss:$8 sm:$0xf]
      %v2314 = vlaneseq
      %v2315 = vshrl.u32 %v2314, 7
      %v2316 = vsub.s32 0, %v2315
      %v2317 = vrot.slane %v2312, %v2316
      %v2318 = vlaneseq
      %v2319 = vshrl.u32 %v2318, 7
      %v2320 = vsub.s32 1, %v2319
      %v2321 = vrot.slane %v2312, %v2320
      %v2322 = vlaneseq
      %v2323 = vshrl.u32 %v2322, 7
      %v2324 = vsub.s32 2, %v2323
      %v2325 = vrot.slane %v2312, %v2324
      %v2326 = vlaneseq
      %v2327 = vshrl.u32 %v2326, 7
      %v2328 = vsub.s32 3, %v2327
      %v2329 = vrot.slane %v2312, %v2328
      %v2334 = vmul.f32 %v2311, %v2317
      %v2335 = vmul.f32 %v2310, %v2321
      %v2336 = vmul.f32 %v2309, %v2325
      %v2337 = vmul.f32 %v2308, %v2329
      %2338 = vst [vmem:[#allocation2 + $0x160] sm:$0xff] %v2334
      %2339 = vst [vmem:[#allocation2 + $0x168] sm:$0xff] %v2335
      %2340 = vst [vmem:[#allocation2 + $0x170] sm:$0xff] %v2336
      %2341 = vst [vmem:[#allocation2 + $0x178] sm:$0xff] %v2337
      %2342 = vrot.lane.b32.xlu0 %v1834, 1
      %v2343 = vpop.permute.xlu0 %2342
      %2344 = vrot.lane.b32.xlu0 %v1835, 1
      %v2345 = vpop.permute.xlu0 %2344
      %2346 = vrot.lane.b32.xlu0 %v1836, 1
      %v2347 = vpop.permute.xlu0 %2346
      %2348 = vrot.lane.b32.xlu0 %v1837, 1
      %v2349 = vpop.permute.xlu0 %2348
      %v2350 = vsel %vm1011, %v2347, %v2349
      %v2351 = vsel %vm1011, %v2345, %v2347
      %v2352 = vsel %vm1011, %v2343, %v2345
      %v2353 = vsel %vm1011, %v2349, %v2343
      %v2354 = vld [vmem:[%s1016] ss:$8 sm:$0xf]
      %v2356 = vlaneseq
      %v2357 = vshrl.u32 %v2356, 7
      %v2358 = vsub.s32 0, %v2357
      %v2359 = vrot.slane %v2354, %v2358
      %v2360 = vlaneseq
      %v2361 = vshrl.u32 %v2360, 7
      %v2362 = vsub.s32 1, %v2361
      %v2363 = vrot.slane %v2354, %v2362
      %v2364 = vlaneseq
      %v2365 = vshrl.u32 %v2364, 7
      %v2366 = vsub.s32 2, %v2365
      %v2367 = vrot.slane %v2354, %v2366
      %v2368 = vlaneseq
      %v2369 = vshrl.u32 %v2368, 7
      %v2370 = vsub.s32 3, %v2369
      %v2371 = vrot.slane %v2354, %v2370
      %v2376 = vmul.f32 %v2353, %v2359
      %v2377 = vmul.f32 %v2352, %v2363
      %v2378 = vmul.f32 %v2351, %v2367
      %v2379 = vmul.f32 %v2350, %v2371
      %2380 = vst [vmem:[#allocation2 + $0x180] sm:$0xff] %v2376
      %2381 = vst [vmem:[#allocation2 + $0x188] sm:$0xff] %v2377
      %2382 = vst [vmem:[#allocation2 + $0x190] sm:$0xff] %v2378
      %2383 = vst [vmem:[#allocation2 + $0x198] sm:$0xff] %v2379
      %v2384 = vld [vmem:[%s1047] ss:$8 sm:$0xf]
      %v2386 = vlaneseq
      %v2387 = vshrl.u32 %v2386, 7
      %v2388 = vsub.s32 0, %v2387
      %v2389 = vrot.slane %v2384, %v2388
      %v2390 = vlaneseq
      %v2391 = vshrl.u32 %v2390, 7
      %v2392 = vsub.s32 1, %v2391
      %v2393 = vrot.slane %v2384, %v2392
      %v2394 = vlaneseq
      %v2395 = vshrl.u32 %v2394, 7
      %v2396 = vsub.s32 2, %v2395
      %v2397 = vrot.slane %v2384, %v2396
      %v2398 = vlaneseq
      %v2399 = vshrl.u32 %v2398, 7
      %v2400 = vsub.s32 3, %v2399
      %v2401 = vrot.slane %v2384, %v2400
      %v2406 = vmul.f32 %v1834, %v2389
      %v2407 = vmul.f32 %v1835, %v2393
      %v2408 = vmul.f32 %v1836, %v2397
      %v2409 = vmul.f32 %v1837, %v2401
      %2410 = vst [vmem:[#allocation2 + $0x1a0] sm:$0xff] %v2406
      %2411 = vst [vmem:[#allocation2 + $0x1a8] sm:$0xff] %v2407
      %2412 = vst [vmem:[#allocation2 + $0x1b0] sm:$0xff] %v2408
      %2413 = vst [vmem:[#allocation2 + $0x1b8] sm:$0xff] %v2409
      %2414 = vrot.lane.b32.xlu0 %v1834, 127
      %v2415 = vpop.permute.xlu0 %2414
      %2416 = vrot.lane.b32.xlu0 %v1835, 127
      %v2417 = vpop.permute.xlu0 %2416
      %2418 = vrot.lane.b32.xlu0 %v1836, 127
      %v2419 = vpop.permute.xlu0 %2418
      %2420 = vrot.lane.b32.xlu0 %v1837, 127
      %v2421 = vpop.permute.xlu0 %2420
      %v2422 = vsel %vm1086, %v2419, %v2421
      %v2423 = vsel %vm1086, %v2417, %v2419
      %v2424 = vsel %vm1086, %v2415, %v2417
      %v2425 = vsel %vm1086, %v2421, %v2415
      %v2426 = vld [vmem:[%s1091] ss:$8 sm:$0xf]
      %v2428 = vlaneseq
      %v2429 = vshrl.u32 %v2428, 7
      %v2430 = vsub.s32 0, %v2429
      %v2431 = vrot.slane %v2426, %v2430
      %v2432 = vlaneseq
      %v2433 = vshrl.u32 %v2432, 7
      %v2434 = vsub.s32 1, %v2433
      %v2435 = vrot.slane %v2426, %v2434
      %v2436 = vlaneseq
      %v2437 = vshrl.u32 %v2436, 7
      %v2438 = vsub.s32 2, %v2437
      %v2439 = vrot.slane %v2426, %v2438
      %v2440 = vlaneseq
      %v2441 = vshrl.u32 %v2440, 7
      %v2442 = vsub.s32 3, %v2441
      %v2443 = vrot.slane %v2426, %v2442
      %v2448 = vmul.f32 %v2424, %v2431
      %v2449 = vmul.f32 %v2423, %v2435
      %v2450 = vmul.f32 %v2422, %v2439
      %v2451 = vmul.f32 %v2425, %v2443
      %2452 = vst [vmem:[#allocation2 + $0x1c0] sm:$0xff] %v2448
      %2453 = vst [vmem:[#allocation2 + $0x1c8] sm:$0xff] %v2449
      %2454 = vst [vmem:[#allocation2 + $0x1d0] sm:$0xff] %v2450
      %2455 = vst [vmem:[#allocation2 + $0x1d8] sm:$0xff] %v2451
      %2456 = vrot.lane.b32.xlu0 %v1834, 121
      %v2457 = vpop.permute.xlu0 %2456
      %2458 = vrot.lane.b32.xlu0 %v1835, 121
      %v2459 = vpop.permute.xlu0 %2458
      %2460 = vrot.lane.b32.xlu0 %v1836, 121
      %v2461 = vpop.permute.xlu0 %2460
      %2462 = vrot.lane.b32.xlu0 %v1837, 121
      %v2463 = vpop.permute.xlu0 %2462
      %v2464 = vsel %vm1130, %v2461, %v2463
      %v2465 = vsel %vm1130, %v2459, %v2461
      %v2466 = vsel %vm1130, %v2457, %v2459
      %v2467 = vsel %vm1130, %v2463, %v2457
      %v2468 = vld [vmem:[%s1135] ss:$8 sm:$0xf]
      %v2470 = vlaneseq
      %v2471 = vshrl.u32 %v2470, 7
      %v2472 = vsub.s32 0, %v2471
      %v2473 = vrot.slane %v2468, %v2472
      %v2474 = vlaneseq
      %v2475 = vshrl.u32 %v2474, 7
      %v2476 = vsub.s32 1, %v2475
      %v2477 = vrot.slane %v2468, %v2476
      %v2478 = vlaneseq
      %v2479 = vshrl.u32 %v2478, 7
      %v2480 = vsub.s32 2, %v2479
      %v2481 = vrot.slane %v2468, %v2480
      %v2482 = vlaneseq
      %v2483 = vshrl.u32 %v2482, 7
      %v2484 = vsub.s32 3, %v2483
      %v2485 = vrot.slane %v2468, %v2484
      %v2490 = vmul.f32 %v2466, %v2473
      %v2491 = vmul.f32 %v2465, %v2477
      %v2492 = vmul.f32 %v2464, %v2481
      %v2493 = vmul.f32 %v2467, %v2485
      %2494 = vst [vmem:[#allocation2 + $0x1e0] sm:$0xff] %v2490
      %2495 = vst [vmem:[#allocation2 + $0x1e8] sm:$0xff] %v2491
      %2496 = vst [vmem:[#allocation2 + $0x1f0] sm:$0xff] %v2492
      %2497 = vst [vmem:[#allocation2 + $0x1f8] sm:$0xff] %v2493
      %2498 = vrot.lane.b32.xlu0 %v1834, 120
      %v2499 = vpop.permute.xlu0 %2498
      %2500 = vrot.lane.b32.xlu0 %v1835, 120
      %v2501 = vpop.permute.xlu0 %2500
      %2502 = vrot.lane.b32.xlu0 %v1836, 120
      %v2503 = vpop.permute.xlu0 %2502
      %2504 = vrot.lane.b32.xlu0 %v1837, 120
      %v2505 = vpop.permute.xlu0 %2504
      %v2506 = vsel %vm1174, %v2503, %v2505
      %v2507 = vsel %vm1174, %v2501, %v2503
      %v2508 = vsel %vm1174, %v2499, %v2501
      %v2509 = vsel %vm1174, %v2505, %v2499
      %v2510 = vld [vmem:[%s1179] ss:$8 sm:$0xf]
      %v2512 = vlaneseq
      %v2513 = vshrl.u32 %v2512, 7
      %v2514 = vsub.s32 0, %v2513
      %v2515 = vrot.slane %v2510, %v2514
      %v2516 = vlaneseq
      %v2517 = vshrl.u32 %v2516, 7
      %v2518 = vsub.s32 1, %v2517
      %v2519 = vrot.slane %v2510, %v2518
      %v2520 = vlaneseq
      %v2521 = vshrl.u32 %v2520, 7
      %v2522 = vsub.s32 2, %v2521
      %v2523 = vrot.slane %v2510, %v2522
      %v2524 = vlaneseq
      %v2525 = vshrl.u32 %v2524, 7
      %v2526 = vsub.s32 3, %v2525
      %v2527 = vrot.slane %v2510, %v2526
      %v2532 = vmul.f32 %v2508, %v2515
      %v2533 = vmul.f32 %v2507, %v2519
      %v2534 = vmul.f32 %v2506, %v2523
      %v2535 = vmul.f32 %v2509, %v2527
      %2536 = vst [vmem:[#allocation2 + $0x200] sm:$0xff] %v2532
      %2537 = vst [vmem:[#allocation2 + $0x208] sm:$0xff] %v2533
      %2538 = vst [vmem:[#allocation2 + $0x210] sm:$0xff] %v2534
      %2539 = vst [vmem:[#allocation2 + $0x218] sm:$0xff] %v2535
      %2540 = vrot.lane.b32.xlu0 %v1834, 119
      %v2541 = vpop.permute.xlu0 %2540
      %2542 = vrot.lane.b32.xlu0 %v1835, 119
      %v2543 = vpop.permute.xlu0 %2542
      %2544 = vrot.lane.b32.xlu0 %v1836, 119
      %v2545 = vpop.permute.xlu0 %2544
      %2546 = vrot.lane.b32.xlu0 %v1837, 119
      %v2547 = vpop.permute.xlu0 %2546
      %v2548 = vsel %vm1218, %v2545, %v2547
      %v2549 = vsel %vm1218, %v2543, %v2545
      %v2550 = vsel %vm1218, %v2541, %v2543
      %v2551 = vsel %vm1218, %v2547, %v2541
      %v2552 = vld [vmem:[%s1223] ss:$8 sm:$0xf]
      %v2554 = vlaneseq
      %v2555 = vshrl.u32 %v2554, 7
      %v2556 = vsub.s32 0, %v2555
      %v2557 = vrot.slane %v2552, %v2556
      %v2558 = vlaneseq
      %v2559 = vshrl.u32 %v2558, 7
      %v2560 = vsub.s32 1, %v2559
      %v2561 = vrot.slane %v2552, %v2560
      %v2562 = vlaneseq
      %v2563 = vshrl.u32 %v2562, 7
      %v2564 = vsub.s32 2, %v2563
      %v2565 = vrot.slane %v2552, %v2564
      %v2566 = vlaneseq
      %v2567 = vshrl.u32 %v2566, 7
      %v2568 = vsub.s32 3, %v2567
      %v2569 = vrot.slane %v2552, %v2568
      %v2574 = vmul.f32 %v2550, %v2557
      %v2575 = vmul.f32 %v2549, %v2561
      %v2576 = vmul.f32 %v2548, %v2565
      %v2577 = vmul.f32 %v2551, %v2569
      %2578 = vst [vmem:[#allocation2 + $0x220] sm:$0xff] %v2574
      %2579 = vst [vmem:[#allocation2 + $0x228] sm:$0xff] %v2575
      %2580 = vst [vmem:[#allocation2 + $0x230] sm:$0xff] %v2576
      %2581 = vst [vmem:[#allocation2 + $0x238] sm:$0xff] %v2577
      %v2582 = vld [vmem:[%s1254] ss:$8 sm:$0xf]
      %v2584 = vlaneseq
      %v2585 = vshrl.u32 %v2584, 7
      %v2586 = vsub.s32 0, %v2585
      %v2587 = vrot.slane %v2582, %v2586
      %v2588 = vlaneseq
      %v2589 = vshrl.u32 %v2588, 7
      %v2590 = vsub.s32 1, %v2589
      %v2591 = vrot.slane %v2582, %v2590
      %v2592 = vlaneseq
      %v2593 = vshrl.u32 %v2592, 7
      %v2594 = vsub.s32 2, %v2593
      %v2595 = vrot.slane %v2582, %v2594
      %v2596 = vlaneseq
      %v2597 = vshrl.u32 %v2596, 7
      %v2598 = vsub.s32 3, %v2597
      %v2599 = vrot.slane %v2582, %v2598
      %v2604 = vmul.f32 %v1848, %v2587
      %v2605 = vmul.f32 %v1847, %v2591
      %v2606 = vmul.f32 %v1846, %v2595
      %v2607 = vmul.f32 %v1849, %v2599
      %2608 = vst [vmem:[#allocation2 + $0x240] sm:$0xff] %v2604
      %2609 = vst [vmem:[#allocation2 + $0x248] sm:$0xff] %v2605
      %2610 = vst [vmem:[#allocation2 + $0x250] sm:$0xff] %v2606
      %2611 = vst [vmem:[#allocation2 + $0x258] sm:$0xff] %v2607
      %v2612 = vld [vmem:[%s1285] ss:$8 sm:$0xf]
      %v2614 = vlaneseq
      %v2615 = vshrl.u32 %v2614, 7
      %v2616 = vsub.s32 0, %v2615
      %v2617 = vrot.slane %v2612, %v2616
      %v2618 = vlaneseq
      %v2619 = vshrl.u32 %v2618, 7
      %v2620 = vsub.s32 1, %v2619
      %v2621 = vrot.slane %v2612, %v2620
      %v2622 = vlaneseq
      %v2623 = vshrl.u32 %v2622, 7
      %v2624 = vsub.s32 2, %v2623
      %v2625 = vrot.slane %v2612, %v2624
      %v2626 = vlaneseq
      %v2627 = vshrl.u32 %v2626, 7
      %v2628 = vsub.s32 3, %v2627
      %v2629 = vrot.slane %v2612, %v2628
      %v2634 = vmul.f32 %v1890, %v2617
      %v2635 = vmul.f32 %v1889, %v2621
      %v2636 = vmul.f32 %v1888, %v2625
      %v2637 = vmul.f32 %v1891, %v2629
      %2638 = vst [vmem:[#allocation2 + $0x260] sm:$0xff] %v2634
      %2639 = vst [vmem:[#allocation2 + $0x268] sm:$0xff] %v2635
      %2640 = vst [vmem:[#allocation2 + $0x270] sm:$0xff] %v2636
      %2641 = vst [vmem:[#allocation2 + $0x278] sm:$0xff] %v2637
      %v2642 = vld [vmem:[%s1316] ss:$8 sm:$0xf]
      %v2644 = vlaneseq
      %v2645 = vshrl.u32 %v2644, 7
      %v2646 = vsub.s32 0, %v2645
      %v2647 = vrot.slane %v2642, %v2646
      %v2648 = vlaneseq
      %v2649 = vshrl.u32 %v2648, 7
      %v2650 = vsub.s32 1, %v2649
      %v2651 = vrot.slane %v2642, %v2650
      %v2652 = vlaneseq
      %v2653 = vshrl.u32 %v2652, 7
      %v2654 = vsub.s32 2, %v2653
      %v2655 = vrot.slane %v2642, %v2654
      %v2656 = vlaneseq
      %v2657 = vshrl.u32 %v2656, 7
      %v2658 = vsub.s32 3, %v2657
      %v2659 = vrot.slane %v2642, %v2658
      %v2664 = vmul.f32 %v1932, %v2647
      %v2665 = vmul.f32 %v1931, %v2651
      %v2666 = vmul.f32 %v1930, %v2655
      %v2667 = vmul.f32 %v1933, %v2659
      %2668 = vst [vmem:[#allocation2 + $0x280] sm:$0xff] %v2664
      %2669 = vst [vmem:[#allocation2 + $0x288] sm:$0xff] %v2665
      %2670 = vst [vmem:[#allocation2 + $0x290] sm:$0xff] %v2666
      %2671 = vst [vmem:[#allocation2 + $0x298] sm:$0xff] %v2667
      %v2672 = vld [vmem:[%s1347] ss:$8 sm:$0xf]
      %v2674 = vlaneseq
      %v2675 = vshrl.u32 %v2674, 7
      %v2676 = vsub.s32 0, %v2675
      %v2677 = vrot.slane %v2672, %v2676
      %v2678 = vlaneseq
      %v2679 = vshrl.u32 %v2678, 7
      %v2680 = vsub.s32 1, %v2679
      %v2681 = vrot.slane %v2672, %v2680
      %v2682 = vlaneseq
      %v2683 = vshrl.u32 %v2682, 7
      %v2684 = vsub.s32 2, %v2683
      %v2685 = vrot.slane %v2672, %v2684
      %v2686 = vlaneseq
      %v2687 = vshrl.u32 %v2686, 7
      %v2688 = vsub.s32 3, %v2687
      %v2689 = vrot.slane %v2672, %v2688
      %v2694 = vmul.f32 %v1974, %v2677
      %v2695 = vmul.f32 %v1973, %v2681
      %v2696 = vmul.f32 %v1972, %v2685
      %v2697 = vmul.f32 %v1975, %v2689
      %2698 = vst [vmem:[#allocation2 + $0x2a0] sm:$0xff] %v2694
      %2699 = vst [vmem:[#allocation2 + $0x2a8] sm:$0xff] %v2695
      %2700 = vst [vmem:[#allocation2 + $0x2b0] sm:$0xff] %v2696
      %2701 = vst [vmem:[#allocation2 + $0x2b8] sm:$0xff] %v2697
      %v2702 = vld [vmem:[%s1378] ss:$8 sm:$0xf]
      %v2704 = vlaneseq
      %v2705 = vshrl.u32 %v2704, 7
      %v2706 = vsub.s32 0, %v2705
      %v2707 = vrot.slane %v2702, %v2706
      %v2708 = vlaneseq
      %v2709 = vshrl.u32 %v2708, 7
      %v2710 = vsub.s32 1, %v2709
      %v2711 = vrot.slane %v2702, %v2710
      %v2712 = vlaneseq
      %v2713 = vshrl.u32 %v2712, 7
      %v2714 = vsub.s32 2, %v2713
      %v2715 = vrot.slane %v2702, %v2714
      %v2716 = vlaneseq
      %v2717 = vshrl.u32 %v2716, 7
      %v2718 = vsub.s32 3, %v2717
      %v2719 = vrot.slane %v2702, %v2718
      %v2724 = vmul.f32 %v2016, %v2707
      %v2725 = vmul.f32 %v2015, %v2711
      %v2726 = vmul.f32 %v2014, %v2715
      %v2727 = vmul.f32 %v2017, %v2719
      %2728 = vst [vmem:[#allocation2 + $0x2c0] sm:$0xff] %v2724
      %2729 = vst [vmem:[#allocation2 + $0x2c8] sm:$0xff] %v2725
      %2730 = vst [vmem:[#allocation2 + $0x2d0] sm:$0xff] %v2726
      %2731 = vst [vmem:[#allocation2 + $0x2d8] sm:$0xff] %v2727
      %v2732 = vld [vmem:[%s1409] ss:$8 sm:$0xf]
      %v2734 = vlaneseq
      %v2735 = vshrl.u32 %v2734, 7
      %v2736 = vsub.s32 0, %v2735
      %v2737 = vrot.slane %v2732, %v2736
      %v2738 = vlaneseq
      %v2739 = vshrl.u32 %v2738, 7
      %v2740 = vsub.s32 1, %v2739
      %v2741 = vrot.slane %v2732, %v2740
      %v2742 = vlaneseq
      %v2743 = vshrl.u32 %v2742, 7
      %v2744 = vsub.s32 2, %v2743
      %v2745 = vrot.slane %v2732, %v2744
      %v2746 = vlaneseq
      %v2747 = vshrl.u32 %v2746, 7
      %v2748 = vsub.s32 3, %v2747
      %v2749 = vrot.slane %v2732, %v2748
      %v2754 = vmul.f32 %v2058, %v2737
      %v2755 = vmul.f32 %v2057, %v2741
      %v2756 = vmul.f32 %v2056, %v2745
      %v2757 = vmul.f32 %v2059, %v2749
      %2758 = vst [vmem:[#allocation2 + $0x2e0] sm:$0xff] %v2754
      %2759 = vst [vmem:[#allocation2 + $0x2e8] sm:$0xff] %v2755
      %2760 = vst [vmem:[#allocation2 + $0x2f0] sm:$0xff] %v2756
      %2761 = vst [vmem:[#allocation2 + $0x2f8] sm:$0xff] %v2757
      %v2762 = vld [vmem:[%s1440] ss:$8 sm:$0xf]
      %v2764 = vlaneseq
      %v2765 = vshrl.u32 %v2764, 7
      %v2766 = vsub.s32 0, %v2765
      %v2767 = vrot.slane %v2762, %v2766
      %v2768 = vlaneseq
      %v2769 = vshrl.u32 %v2768, 7
      %v2770 = vsub.s32 1, %v2769
      %v2771 = vrot.slane %v2762, %v2770
      %v2772 = vlaneseq
      %v2773 = vshrl.u32 %v2772, 7
      %v2774 = vsub.s32 2, %v2773
      %v2775 = vrot.slane %v2762, %v2774
      %v2776 = vlaneseq
      %v2777 = vshrl.u32 %v2776, 7
      %v2778 = vsub.s32 3, %v2777
      %v2779 = vrot.slane %v2762, %v2778
      %v2784 = vmul.f32 %v2100, %v2767
      %v2785 = vmul.f32 %v2099, %v2771
      %v2786 = vmul.f32 %v2098, %v2775
      %v2787 = vmul.f32 %v2101, %v2779
      %2788 = vst [vmem:[#allocation2 + $0x300] sm:$0xff] %v2784
      %2789 = vst [vmem:[#allocation2 + $0x308] sm:$0xff] %v2785
      %2790 = vst [vmem:[#allocation2 + $0x310] sm:$0xff] %v2786
      %2791 = vst [vmem:[#allocation2 + $0x318] sm:$0xff] %v2787
      %v2792 = vld [vmem:[%s1471] ss:$8 sm:$0xf]
      %v2794 = vlaneseq
      %v2795 = vshrl.u32 %v2794, 7
      %v2796 = vsub.s32 0, %v2795
      %v2797 = vrot.slane %v2792, %v2796
      %v2798 = vlaneseq
      %v2799 = vshrl.u32 %v2798, 7
      %v2800 = vsub.s32 1, %v2799
      %v2801 = vrot.slane %v2792, %v2800
      %v2802 = vlaneseq
      %v2803 = vshrl.u32 %v2802, 7
      %v2804 = vsub.s32 2, %v2803
      %v2805 = vrot.slane %v2792, %v2804
      %v2806 = vlaneseq
      %v2807 = vshrl.u32 %v2806, 7
      %v2808 = vsub.s32 3, %v2807
      %v2809 = vrot.slane %v2792, %v2808
      %v2814 = vmul.f32 %v2142, %v2797
      %v2815 = vmul.f32 %v2141, %v2801
      %v2816 = vmul.f32 %v2140, %v2805
      %v2817 = vmul.f32 %v2143, %v2809
      %2818 = vst [vmem:[#allocation2 + $0x320] sm:$0xff] %v2814
      %2819 = vst [vmem:[#allocation2 + $0x328] sm:$0xff] %v2815
      %2820 = vst [vmem:[#allocation2 + $0x330] sm:$0xff] %v2816
      %2821 = vst [vmem:[#allocation2 + $0x338] sm:$0xff] %v2817
      %v2822 = vld [vmem:[%s1502] ss:$8 sm:$0xf]
      %v2824 = vlaneseq
      %v2825 = vshrl.u32 %v2824, 7
      %v2826 = vsub.s32 0, %v2825
      %v2827 = vrot.slane %v2822, %v2826
      %v2828 = vlaneseq
      %v2829 = vshrl.u32 %v2828, 7
      %v2830 = vsub.s32 1, %v2829
      %v2831 = vrot.slane %v2822, %v2830
      %v2832 = vlaneseq
      %v2833 = vshrl.u32 %v2832, 7
      %v2834 = vsub.s32 2, %v2833
      %v2835 = vrot.slane %v2822, %v2834
      %v2836 = vlaneseq
      %v2837 = vshrl.u32 %v2836, 7
      %v2838 = vsub.s32 3, %v2837
      %v2839 = vrot.slane %v2822, %v2838
      %v2844 = vmul.f32 %v2184, %v2827
      %v2845 = vmul.f32 %v2183, %v2831
      %v2846 = vmul.f32 %v2182, %v2835
      %v2847 = vmul.f32 %v2185, %v2839
      %2848 = vst [vmem:[#allocation2 + $0x340] sm:$0xff] %v2844
      %2849 = vst [vmem:[#allocation2 + $0x348] sm:$0xff] %v2845
      %2850 = vst [vmem:[#allocation2 + $0x350] sm:$0xff] %v2846
      %2851 = vst [vmem:[#allocation2 + $0x358] sm:$0xff] %v2847
      %v2852 = vld [vmem:[%s4] sm:$0xff]
      %v2853 = vld [vmem:[%s4 + $0x8] sm:$0xff]
      %v2854 = vld [vmem:[#allocation2] sm:$0xff]
      %v2855 = vld [vmem:[#allocation2 + $0x8] sm:$0xff]
      %v2856 = vld [vmem:[#allocation2 + $0x10] sm:$0xff]
      %v2857 = vld [vmem:[#allocation2 + $0x18] sm:$0xff]
      %v2858 = vld [vmem:[#allocation2 + $0x20] sm:$0xff]
      %v2859 = vld [vmem:[#allocation2 + $0x28] sm:$0xff]
      %v2860 = vld [vmem:[#allocation2 + $0x30] sm:$0xff]
      %v2861 = vld [vmem:[#allocation2 + $0x38] sm:$0xff]
      %v2862 = vld [vmem:[#allocation2 + $0x40] sm:$0xff]
      %v2863 = vld [vmem:[#allocation2 + $0x48] sm:$0xff]
      %v2864 = vld [vmem:[#allocation2 + $0x50] sm:$0xff]
      %v2865 = vld [vmem:[#allocation2 + $0x58] sm:$0xff]
      %v2866 = vld [vmem:[#allocation2 + $0x60] sm:$0xff]
      %v2867 = vld [vmem:[#allocation2 + $0x68] sm:$0xff]
      %v2868 = vld [vmem:[#allocation2 + $0x70] sm:$0xff]
      %v2869 = vld [vmem:[#allocation2 + $0x78] sm:$0xff]
      %v2870 = vld [vmem:[#allocation2 + $0x80] sm:$0xff]
      %v2871 = vld [vmem:[#allocation2 + $0x88] sm:$0xff]
      %v2872 = vld [vmem:[#allocation2 + $0x90] sm:$0xff]
      %v2873 = vld [vmem:[#allocation2 + $0x98] sm:$0xff]
      %v2874 = vld [vmem:[#allocation2 + $0xa0] sm:$0xff]
      %v2875 = vld [vmem:[#allocation2 + $0xa8] sm:$0xff]
      %v2876 = vld [vmem:[#allocation2 + $0xb0] sm:$0xff]
      %v2877 = vld [vmem:[#allocation2 + $0xb8] sm:$0xff]
      %v2878 = vld [vmem:[#allocation2 + $0xc0] sm:$0xff]
      %v2879 = vld [vmem:[#allocation2 + $0xc8] sm:$0xff]
      %v2880 = vld [vmem:[#allocation2 + $0xd0] sm:$0xff]
      %v2881 = vld [vmem:[#allocation2 + $0xd8] sm:$0xff]
      %v2882 = vld [vmem:[#allocation2 + $0xe0] sm:$0xff]
      %v2883 = vld [vmem:[#allocation2 + $0xe8] sm:$0xff]
      %v2884 = vld [vmem:[#allocation2 + $0xf0] sm:$0xff]
      %v2885 = vld [vmem:[#allocation2 + $0xf8] sm:$0xff]
      %v2886 = vld [vmem:[#allocation2 + $0x100] sm:$0xff]
      %v2887 = vld [vmem:[#allocation2 + $0x108] sm:$0xff]
      %v2888 = vld [vmem:[#allocation2 + $0x110] sm:$0xff]
      %v2889 = vld [vmem:[#allocation2 + $0x118] sm:$0xff]
      %v2890 = vld [vmem:[#allocation2 + $0x120] sm:$0xff]
      %v2891 = vld [vmem:[#allocation2 + $0x128] sm:$0xff]
      %v2892 = vld [vmem:[#allocation2 + $0x130] sm:$0xff]
      %v2893 = vld [vmem:[#allocation2 + $0x138] sm:$0xff]
      %v2894 = vld [vmem:[#allocation2 + $0x140] sm:$0xff]
      %v2895 = vld [vmem:[#allocation2 + $0x148] sm:$0xff]
      %v2896 = vld [vmem:[#allocation2 + $0x150] sm:$0xff]
      %v2897 = vld [vmem:[#allocation2 + $0x158] sm:$0xff]
      %v2898 = vld [vmem:[#allocation2 + $0x160] sm:$0xff]
      %v2899 = vld [vmem:[#allocation2 + $0x168] sm:$0xff]
      %v2900 = vld [vmem:[#allocation2 + $0x170] sm:$0xff]
      %v2901 = vld [vmem:[#allocation2 + $0x178] sm:$0xff]
      %v2902 = vld [vmem:[#allocation2 + $0x180] sm:$0xff]
      %v2903 = vld [vmem:[#allocation2 + $0x188] sm:$0xff]
      %v2904 = vld [vmem:[#allocation2 + $0x190] sm:$0xff]
      %v2905 = vld [vmem:[#allocation2 + $0x198] sm:$0xff]
      %v2906 = vld [vmem:[#allocation2 + $0x1a0] sm:$0xff]
      %v2907 = vld [vmem:[#allocation2 + $0x1a8] sm:$0xff]
      %v2908 = vld [vmem:[#allocation2 + $0x1b0] sm:$0xff]
      %v2909 = vld [vmem:[#allocation2 + $0x1b8] sm:$0xff]
      %v2910 = vld [vmem:[#allocation2 + $0x1c0] sm:$0xff]
      %v2911 = vld [vmem:[#allocation2 + $0x1c8] sm:$0xff]
      %v2912 = vld [vmem:[#allocation2 + $0x1d0] sm:$0xff]
      %v2913 = vld [vmem:[#allocation2 + $0x1d8] sm:$0xff]
      %v2914 = vld [vmem:[#allocation2 + $0x1e0] sm:$0xff]
      %v2915 = vld [vmem:[#allocation2 + $0x1e8] sm:$0xff]
      %v2916 = vld [vmem:[#allocation2 + $0x1f0] sm:$0xff]
      %v2917 = vld [vmem:[#allocation2 + $0x1f8] sm:$0xff]
      %v2918 = vld [vmem:[#allocation2 + $0x200] sm:$0xff]
      %v2919 = vld [vmem:[#allocation2 + $0x208] sm:$0xff]
      %v2920 = vld [vmem:[#allocation2 + $0x210] sm:$0xff]
      %v2921 = vld [vmem:[#allocation2 + $0x218] sm:$0xff]
      %v2922 = vld [vmem:[#allocation2 + $0x220] sm:$0xff]
      %v2923 = vld [vmem:[#allocation2 + $0x228] sm:$0xff]
      %v2924 = vld [vmem:[#allocation2 + $0x230] sm:$0xff]
      %v2925 = vld [vmem:[#allocation2 + $0x238] sm:$0xff]
      %v2926 = vld [vmem:[#allocation2 + $0x240] sm:$0xff]
      %v2927 = vld [vmem:[#allocation2 + $0x248] sm:$0xff]
      %v2928 = vld [vmem:[#allocation2 + $0x250] sm:$0xff]
      %v2929 = vld [vmem:[#allocation2 + $0x258] sm:$0xff]
      %v2930 = vld [vmem:[#allocation2 + $0x260] sm:$0xff]
      %v2931 = vld [vmem:[#allocation2 + $0x268] sm:$0xff]
      %v2932 = vld [vmem:[#allocation2 + $0x270] sm:$0xff]
      %v2933 = vld [vmem:[#allocation2 + $0x278] sm:$0xff]
      %v2934 = vld [vmem:[#allocation2 + $0x280] sm:$0xff]
      %v2935 = vld [vmem:[#allocation2 + $0x288] sm:$0xff]
      %v2936 = vld [vmem:[#allocation2 + $0x290] sm:$0xff]
      %v2937 = vld [vmem:[#allocation2 + $0x298] sm:$0xff]
      %v2938 = vld [vmem:[#allocation2 + $0x2a0] sm:$0xff]
      %v2939 = vld [vmem:[#allocation2 + $0x2a8] sm:$0xff]
      %v2940 = vld [vmem:[#allocation2 + $0x2b0] sm:$0xff]
      %v2941 = vld [vmem:[#allocation2 + $0x2b8] sm:$0xff]
      %v2942 = vld [vmem:[#allocation2 + $0x2c0] sm:$0xff]
      %v2943 = vld [vmem:[#allocation2 + $0x2c8] sm:$0xff]
      %v2944 = vld [vmem:[#allocation2 + $0x2d0] sm:$0xff]
      %v2945 = vld [vmem:[#allocation2 + $0x2d8] sm:$0xff]
      %v2946 = vld [vmem:[#allocation2 + $0x2e0] sm:$0xff]
      %v2947 = vld [vmem:[#allocation2 + $0x2e8] sm:$0xff]
      %v2948 = vld [vmem:[#allocation2 + $0x2f0] sm:$0xff]
      %v2949 = vld [vmem:[#allocation2 + $0x2f8] sm:$0xff]
      %v2950 = vld [vmem:[#allocation2 + $0x300] sm:$0xff]
      %v2951 = vld [vmem:[#allocation2 + $0x308] sm:$0xff]
      %v2952 = vld [vmem:[#allocation2 + $0x310] sm:$0xff]
      %v2953 = vld [vmem:[#allocation2 + $0x318] sm:$0xff]
      %v2954 = vld [vmem:[#allocation2 + $0x320] sm:$0xff]
      %v2955 = vld [vmem:[#allocation2 + $0x328] sm:$0xff]
      %v2956 = vld [vmem:[#allocation2 + $0x330] sm:$0xff]
      %v2957 = vld [vmem:[#allocation2 + $0x338] sm:$0xff]
      %v2958 = vld [vmem:[#allocation2 + $0x340] sm:$0xff]
      %v2959 = vld [vmem:[#allocation2 + $0x348] sm:$0xff]
      %v2960 = vld [vmem:[#allocation2 + $0x350] sm:$0xff]
      %v2961 = vld [vmem:[#allocation2 + $0x358] sm:$0xff]
      %v2962 = vld [vmem:[%s5] sm:$0xff]
      %2964 = vset.pattern.permute.xlu0 0
      %2965 = vperm.xlu0 %2964, %v2962
      %v2966 = vpop.permute.xlu0 %2965
      %v2969 = vsel %vm1649, %v2853, 0
      %2971 = vmatprep.subr.mxu0 %v2855
      %2972 = vmatpush1.msra.mxu0 %v2854
      %2973 = vmatprep.subr.mxu0 %v2859
      %2974 = vmatpush1.msra.mxu0 %v2858
      %2975 = vmatprep.subr.mxu0 %v2863
      %2976 = vmatpush1.msra.mxu0 %v2862
      %2977 = vmatprep.subr.mxu0 %v2867
      %2978 = vmatpush1.msra.mxu0 %v2866
      %2979 = vmatprep.subr.mxu0 %v2871
      %2980 = vmatpush1.msra.mxu0 %v2870
      %2981 = vmatprep.subr.mxu0 %v2875
      %2982 = vmatpush1.msra.mxu0 %v2874
      %2983 = vmatprep.subr.mxu0 %v2879
      %2984 = vmatpush1.msra.mxu0 %v2878
      %2985 = vmatprep.subr.mxu0 %v2883
      %2986 = vmatpush1.msra.mxu0 %v2882
      %2987 = vmatprep.subr.mxu0 %v2887
      %2988 = vmatpush1.msra.mxu0 %v2886
      %2989 = vmatprep.subr.mxu0 %v2891
      %2990 = vmatpush1.msra.mxu0 %v2890
      %2991 = vmatprep.subr.mxu0 %v2895
      %2992 = vmatpush1.msra.mxu0 %v2894
      %2993 = vmatprep.subr.mxu0 %v2899
      %2994 = vmatpush1.msra.mxu0 %v2898
      %2995 = vmatprep.subr.mxu0 %v2903
      %2996 = vmatpush1.msra.mxu0 %v2902
      %2997 = vmatprep.subr.mxu0 %v2907
      %2998 = vmatpush1.msra.mxu0 %v2906
      %2999 = vmatprep.subr.mxu0 %v2911
      %3000 = vmatpush1.msra.mxu0 %v2910
      %3001 = vmatprep.subr.mxu0 %v2915
      %3002 = vmatpush1.msra.mxu0 %v2914
      %3003 = vmatprep.subr.mxu0 %v2919
      %3004 = vmatpush1.msra.mxu0 %v2918
      %3005 = vmatprep.subr.mxu0 %v2923
      %3006 = vmatpush1.msra.mxu0 %v2922
      %3007 = vmatprep.subr.mxu0 %v2927
      %3008 = vmatpush1.msra.mxu0 %v2926
      %3009 = vmatprep.subr.mxu0 %v2931
      %3010 = vmatpush1.msra.mxu0 %v2930
      %3011 = vmatprep.subr.mxu0 %v2935
      %3012 = vmatpush1.msra.mxu0 %v2934
      %3013 = vmatprep.subr.mxu0 %v2939
      %3014 = vmatpush1.msra.mxu0 %v2938
      %3015 = vmatprep.subr.mxu0 %v2943
      %3016 = vmatpush1.msra.mxu0 %v2942
      %3017 = vmatprep.subr.mxu0 %v2947
      %3018 = vmatpush1.msra.mxu0 %v2946
      %3019 = vmatprep.subr.mxu0 %v2951
      %3020 = vmatpush1.msra.mxu0 %v2950
      %3021 = vmatprep.subr.mxu0 %v2955
      %3022 = vmatpush1.msra.mxu0 %v2954
      %3023 = vmatprep.subr.mxu0 %v2959
      %3024 = vmatpush1.msra.mxu0 %v2958
      %3025 = vmatprep.subr.mxu0 0.0
      %3026 = vmatpush1.msra.mxu0 0.0
      %3027 = vmatprep.subr.mxu0 0.0
      %3028 = vmatpush1.msra.mxu0 0.0
      %3029 = vmatprep.subr.mxu0 0.0
      %3030 = vmatpush1.msra.mxu0 0.0
      %3031 = vmatprep.subr.mxu0 0.0
      %3032 = vmatpush1.msra.mxu0 0.0
      %3033 = vmatprep.subr.mxu0 0.0
      %3034 = vmatpush1.msra.mxu0 0.0
      %3035 = vmatprep.mubr.f32.mxu0 %v2969
      %3036 = vmatmul.mubr.f32.gmra.mrb[0].mxu0 %v2852
      %v3037 = vpop.f32.mrb[0].mxu0
      %v3038 = vadd.f32 %v2966, %v3037
      %v3039 = vpop.f32.mrb[0].mxu0
      %v3040 = vadd.f32 %v2966, %v3039
      %3041 = vdwg.mxu0
      %3042 = vmatprep.subr.mxu0 %v2857
      %3043 = vmatpush1.msra.mxu0 %v2856
      %3044 = vmatprep.subr.mxu0 %v2861
      %3045 = vmatpush1.msra.mxu0 %v2860
      %3046 = vmatprep.subr.mxu0 %v2865
      %3047 = vmatpush1.msra.mxu0 %v2864
      %3048 = vmatprep.subr.mxu0 %v2869
      %3049 = vmatpush1.msra.mxu0 %v2868
      %3050 = vmatprep.subr.mxu0 %v2873
      %3051 = vmatpush1.msra.mxu0 %v2872
      %3052 = vmatprep.subr.mxu0 %v2877
      %3053 = vmatpush1.msra.mxu0 %v2876
      %3054 = vmatprep.subr.mxu0 %v2881
      %3055 = vmatpush1.msra.mxu0 %v2880
      %3056 = vmatprep.subr.mxu0 %v2885
      %3057 = vmatpush1.msra.mxu0 %v2884
      %3058 = vmatprep.subr.mxu0 %v2889
      %3059 = vmatpush1.msra.mxu0 %v2888
      %3060 = vmatprep.subr.mxu0 %v2893
      %3061 = vmatpush1.msra.mxu0 %v2892
      %3062 = vmatprep.subr.mxu0 %v2897
      %3063 = vmatpush1.msra.mxu0 %v2896
      %3064 = vmatprep.subr.mxu0 %v2901
      %3065 = vmatpush1.msra.mxu0 %v2900
      %3066 = vmatprep.subr.mxu0 %v2905
      %3067 = vmatpush1.msra.mxu0 %v2904
      %3068 = vmatprep.subr.mxu0 %v2909
      %3069 = vmatpush1.msra.mxu0 %v2908
      %3070 = vmatprep.subr.mxu0 %v2913
      %3071 = vmatpush1.msra.mxu0 %v2912
      %3072 = vmatprep.subr.mxu0 %v2917
      %3073 = vmatpush1.msra.mxu0 %v2916
      %3074 = vmatprep.subr.mxu0 %v2921
      %3075 = vmatpush1.msra.mxu0 %v2920
      %3076 = vmatprep.subr.mxu0 %v2925
      %3077 = vmatpush1.msra.mxu0 %v2924
      %3078 = vmatprep.subr.mxu0 %v2929
      %3079 = vmatpush1.msra.mxu0 %v2928
      %3080 = vmatprep.subr.mxu0 %v2933
      %3081 = vmatpush1.msra.mxu0 %v2932
      %3082 = vmatprep.subr.mxu0 %v2937
      %3083 = vmatpush1.msra.mxu0 %v2936
      %3084 = vmatprep.subr.mxu0 %v2941
      %3085 = vmatpush1.msra.mxu0 %v2940
      %3086 = vmatprep.subr.mxu0 %v2945
      %3087 = vmatpush1.msra.mxu0 %v2944
      %3088 = vmatprep.subr.mxu0 %v2949
      %3089 = vmatpush1.msra.mxu0 %v2948
      %3090 = vmatprep.subr.mxu0 %v2953
      %3091 = vmatpush1.msra.mxu0 %v2952
      %3092 = vmatprep.subr.mxu0 %v2957
      %3093 = vmatpush1.msra.mxu0 %v2956
      %3094 = vmatprep.subr.mxu0 %v2961
      %3095 = vmatpush1.msra.mxu0 %v2960
      %3096 = vmatprep.subr.mxu0 0.0
      %3097 = vmatpush1.msra.mxu0 0.0
      %3098 = vmatprep.subr.mxu0 0.0
      %3099 = vmatpush1.msra.mxu0 0.0
      %3100 = vmatprep.subr.mxu0 0.0
      %3101 = vmatpush1.msra.mxu0 0.0
      %3102 = vmatprep.subr.mxu0 0.0
      %3103 = vmatpush1.msra.mxu0 0.0
      %3104 = vmatprep.subr.mxu0 0.0
      %3105 = vmatpush1.msra.mxu0 0.0
      %3106 = vmatprep.mubr.f32.mxu0 %v2969
      %3107 = vmatmul.mubr.f32.gmra.mrb[0].mxu0 %v2852
      %v3108 = vpop.f32.mrb[0].mxu0
      %v3109 = vadd.f32 %v2966, %v3108
      %v3110 = vpop.f32.mrb[0].mxu0
      %v3111 = vadd.f32 %v2966, %v3110
      %3112 = vdwg.mxu0
      %v3113 = vadd.f32 %v3038, %v3040
      %v3114 = vadd.f32 %v3113, %v3109
      %v3115 = vadd.f32 %v3114, %v3111
      %3116 = vadd.xlane.f32.xlu0 %v3115
      %v3117 = vpop.xlane.xlu0 %3116
      %v3118 = vmul.f32 %v3117, %v1800
      %v3119 = vsub.f32 %v3038, %v3118
      %v3120 = vsub.f32 %v3040, %v3118
      %v3121 = vsub.f32 %v3109, %v3118
      %v3122 = vsub.f32 %v3111, %v3118
      %v3123 = vmul.f32 %v3119, %v3119
      %v3124 = vmul.f32 %v3120, %v3120
      %v3125 = vmul.f32 %v3121, %v3121
      %v3126 = vmul.f32 %v3122, %v3122
      %v3127 = vadd.f32 %v3123, %v3124
      %v3128 = vadd.f32 %v3127, %v3125
      %v3129 = vadd.f32 %v3128, %v3126
      %3130 = vadd.xlane.f32.xlu0 %v3129
      %v3131 = vpop.xlane.xlu0 %3130
      %v3132 = vmul.f32 %v3131, %v1800
      %v3133 = vadd.f32 %v3132, 1e-05
      %v3134 = vrsqrt.pop %v3133
      %v3135 = vmul.f32 %v3119, %v3134
      %v3136 = vmul.f32 %v3120, %v3134
      %v3137 = vmul.f32 %v3121, %v3134
      %v3138 = vmul.f32 %v3122, %v3134
      %vm3139 = vcmp.ge.f32.partialorder %v3135, 0.0
      %vm3140 = vcmp.ge.f32.partialorder %v3136, 0.0
      %vm3141 = vcmp.ge.f32.partialorder %v3137, 0.0
      %vm3142 = vcmp.ge.f32.partialorder %v3138, 0.0
      %v3143 = vmul.f32 %v3135, 0.01
      %v3144 = vmul.f32 %v3136, 0.01
      %v3145 = vmul.f32 %v3137, 0.01
      %v3146 = vmul.f32 %v3138, 0.01
      %v3147 = vsel %vm3139, %v3135, %v3143
      %v3148 = vsel %vm3140, %v3136, %v3144
      %v3149 = vsel %vm3141, %v3137, %v3145
      %v3150 = vsel %vm3142, %v3138, %v3146
      %v3151 = vadd.f32 %v3147, %v399
      %v3152 = vadd.f32 %v3148, %v401
      %v3153 = vadd.f32 %v3149, %v470
      %v3154 = vadd.f32 %v3150, %v472
      %3155 = vrot.lane.b32.xlu0 %v3151, 73
      %v3156 = vpop.permute.xlu0 %3155
      %3157 = vrot.lane.b32.xlu0 %v3152, 73
      %v3158 = vpop.permute.xlu0 %3157
      %3159 = vrot.lane.b32.xlu0 %v3153, 73
      %v3160 = vpop.permute.xlu0 %3159
      %3161 = vrot.lane.b32.xlu0 %v3154, 73
      %v3162 = vpop.permute.xlu0 %3161
      %v3163 = vsel %vm484, %v3160, %v3162
      %v3164 = vsel %vm484, %v3158, %v3160
      %v3165 = vsel %vm484, %v3156, %v3158
      %v3166 = vsel %vm484, %v3162, %v3156
      %v3167 = vld [vmem:[%s1] ss:$8 sm:$0xf]
      %v3169 = vlaneseq
      %v3170 = vshrl.u32 %v3169, 7
      %v3171 = vsub.s32 0, %v3170
      %v3172 = vrot.slane %v3167, %v3171
      %v3173 = vlaneseq
      %v3174 = vshrl.u32 %v3173, 7
      %v3175 = vsub.s32 1, %v3174
      %v3176 = vrot.slane %v3167, %v3175
      %v3177 = vlaneseq
      %v3178 = vshrl.u32 %v3177, 7
      %v3179 = vsub.s32 2, %v3178
      %v3180 = vrot.slane %v3167, %v3179
      %v3181 = vlaneseq
      %v3182 = vshrl.u32 %v3181, 7
      %v3183 = vsub.s32 3, %v3182
      %v3184 = vrot.slane %v3167, %v3183
      %v3189 = vmul.f32 %v3166, %v3172
      %v3190 = vmul.f32 %v3165, %v3176
      %v3191 = vmul.f32 %v3164, %v3180
      %v3192 = vmul.f32 %v3163, %v3184
      %3193 = vst [vmem:[#allocation2] sm:$0xff] %v3189
      %3194 = vst [vmem:[#allocation2 + $0x8] sm:$0xff] %v3190
      %3195 = vst [vmem:[#allocation2 + $0x10] sm:$0xff] %v3191
      %3196 = vst [vmem:[#allocation2 + $0x18] sm:$0xff] %v3192
      %3197 = vrot.lane.b32.xlu0 %v3151, 72
      %v3198 = vpop.permute.xlu0 %3197
      %3199 = vrot.lane.b32.xlu0 %v3152, 72
      %v3200 = vpop.permute.xlu0 %3199
      %3201 = vrot.lane.b32.xlu0 %v3153, 72
      %v3202 = vpop.permute.xlu0 %3201
      %3203 = vrot.lane.b32.xlu0 %v3154, 72
      %v3204 = vpop.permute.xlu0 %3203
      %v3205 = vsel %vm527, %v3202, %v3204
      %v3206 = vsel %vm527, %v3200, %v3202
      %v3207 = vsel %vm527, %v3198, %v3200
      %v3208 = vsel %vm527, %v3204, %v3198
      %v3209 = vld [vmem:[%s532] ss:$8 sm:$0xf]
      %v3211 = vlaneseq
      %v3212 = vshrl.u32 %v3211, 7
      %v3213 = vsub.s32 0, %v3212
      %v3214 = vrot.slane %v3209, %v3213
      %v3215 = vlaneseq
      %v3216 = vshrl.u32 %v3215, 7
      %v3217 = vsub.s32 1, %v3216
      %v3218 = vrot.slane %v3209, %v3217
      %v3219 = vlaneseq
      %v3220 = vshrl.u32 %v3219, 7
      %v3221 = vsub.s32 2, %v3220
      %v3222 = vrot.slane %v3209, %v3221
      %v3223 = vlaneseq
      %v3224 = vshrl.u32 %v3223, 7
      %v3225 = vsub.s32 3, %v3224
      %v3226 = vrot.slane %v3209, %v3225
      %v3231 = vmul.f32 %v3208, %v3214
      %v3232 = vmul.f32 %v3207, %v3218
      %v3233 = vmul.f32 %v3206, %v3222
      %v3234 = vmul.f32 %v3205, %v3226
      %3235 = vst [vmem:[#allocation2 + $0x20] sm:$0xff] %v3231
      %3236 = vst [vmem:[#allocation2 + $0x28] sm:$0xff] %v3232
      %3237 = vst [vmem:[#allocation2 + $0x30] sm:$0xff] %v3233
      %3238 = vst [vmem:[#allocation2 + $0x38] sm:$0xff] %v3234
      %3239 = vrot.lane.b32.xlu0 %v3151, 71
      %v3240 = vpop.permute.xlu0 %3239
      %3241 = vrot.lane.b32.xlu0 %v3152, 71
      %v3242 = vpop.permute.xlu0 %3241
      %3243 = vrot.lane.b32.xlu0 %v3153, 71
      %v3244 = vpop.permute.xlu0 %3243
      %3245 = vrot.lane.b32.xlu0 %v3154, 71
      %v3246 = vpop.permute.xlu0 %3245
      %v3247 = vsel %vm571, %v3244, %v3246
      %v3248 = vsel %vm571, %v3242, %v3244
      %v3249 = vsel %vm571, %v3240, %v3242
      %v3250 = vsel %vm571, %v3246, %v3240
      %v3251 = vld [vmem:[%s576] ss:$8 sm:$0xf]
      %v3253 = vlaneseq
      %v3254 = vshrl.u32 %v3253, 7
      %v3255 = vsub.s32 0, %v3254
      %v3256 = vrot.slane %v3251, %v3255
      %v3257 = vlaneseq
      %v3258 = vshrl.u32 %v3257, 7
      %v3259 = vsub.s32 1, %v3258
      %v3260 = vrot.slane %v3251, %v3259
      %v3261 = vlaneseq
      %v3262 = vshrl.u32 %v3261, 7
      %v3263 = vsub.s32 2, %v3262
      %v3264 = vrot.slane %v3251, %v3263
      %v3265 = vlaneseq
      %v3266 = vshrl.u32 %v3265, 7
      %v3267 = vsub.s32 3, %v3266
      %v3268 = vrot.slane %v3251, %v3267
      %v3273 = vmul.f32 %v3250, %v3256
      %v3274 = vmul.f32 %v3249, %v3260
      %v3275 = vmul.f32 %v3248, %v3264
      %v3276 = vmul.f32 %v3247, %v3268
      %3277 = vst [vmem:[#allocation2 + $0x40] sm:$0xff] %v3273
      %3278 = vst [vmem:[#allocation2 + $0x48] sm:$0xff] %v3274
      %3279 = vst [vmem:[#allocation2 + $0x50] sm:$0xff] %v3275
      %3280 = vst [vmem:[#allocation2 + $0x58] sm:$0xff] %v3276
      %3281 = vrot.lane.b32.xlu0 %v3151, 65
      %v3282 = vpop.permute.xlu0 %3281
      %3283 = vrot.lane.b32.xlu0 %v3152, 65
      %v3284 = vpop.permute.xlu0 %3283
      %3285 = vrot.lane.b32.xlu0 %v3153, 65
      %v3286 = vpop.permute.xlu0 %3285
      %3287 = vrot.lane.b32.xlu0 %v3154, 65
      %v3288 = vpop.permute.xlu0 %3287
      %v3289 = vsel %vm615, %v3286, %v3288
      %v3290 = vsel %vm615, %v3284, %v3286
      %v3291 = vsel %vm615, %v3282, %v3284
      %v3292 = vsel %vm615, %v3288, %v3282
      %v3293 = vld [vmem:[%s620] ss:$8 sm:$0xf]
      %v3295 = vlaneseq
      %v3296 = vshrl.u32 %v3295, 7
      %v3297 = vsub.s32 0, %v3296
      %v3298 = vrot.slane %v3293, %v3297
      %v3299 = vlaneseq
      %v3300 = vshrl.u32 %v3299, 7
      %v3301 = vsub.s32 1, %v3300
      %v3302 = vrot.slane %v3293, %v3301
      %v3303 = vlaneseq
      %v3304 = vshrl.u32 %v3303, 7
      %v3305 = vsub.s32 2, %v3304
      %v3306 = vrot.slane %v3293, %v3305
      %v3307 = vlaneseq
      %v3308 = vshrl.u32 %v3307, 7
      %v3309 = vsub.s32 3, %v3308
      %v3310 = vrot.slane %v3293, %v3309
      %v3315 = vmul.f32 %v3292, %v3298
      %v3316 = vmul.f32 %v3291, %v3302
      %v3317 = vmul.f32 %v3290, %v3306
      %v3318 = vmul.f32 %v3289, %v3310
      %3319 = vst [vmem:[#allocation2 + $0x60] sm:$0xff] %v3315
      %3320 = vst [vmem:[#allocation2 + $0x68] sm:$0xff] %v3316
      %3321 = vst [vmem:[#allocation2 + $0x70] sm:$0xff] %v3317
      %3322 = vst [vmem:[#allocation2 + $0x78] sm:$0xff] %v3318
      %3323 = vrot.lane.b32.xlu0 %v3151, 64
      %v3324 = vpop.permute.xlu0 %3323
      %3325 = vrot.lane.b32.xlu0 %v3152, 64
      %v3326 = vpop.permute.xlu0 %3325
      %3327 = vrot.lane.b32.xlu0 %v3153, 64
      %v3328 = vpop.permute.xlu0 %3327
      %3329 = vrot.lane.b32.xlu0 %v3154, 64
      %v3330 = vpop.permute.xlu0 %3329
      %v3331 = vsel %vm659, %v3328, %v3330
      %v3332 = vsel %vm659, %v3326, %v3328
      %v3333 = vsel %vm659, %v3324, %v3326
      %v3334 = vsel %vm659, %v3330, %v3324
      %v3335 = vld [vmem:[%s664] ss:$8 sm:$0xf]
      %v3337 = vlaneseq
      %v3338 = vshrl.u32 %v3337, 7
      %v3339 = vsub.s32 0, %v3338
      %v3340 = vrot.slane %v3335, %v3339
      %v3341 = vlaneseq
      %v3342 = vshrl.u32 %v3341, 7
      %v3343 = vsub.s32 1, %v3342
      %v3344 = vrot.slane %v3335, %v3343
      %v3345 = vlaneseq
      %v3346 = vshrl.u32 %v3345, 7
      %v3347 = vsub.s32 2, %v3346
      %v3348 = vrot.slane %v3335, %v3347
      %v3349 = vlaneseq
      %v3350 = vshrl.u32 %v3349, 7
      %v3351 = vsub.s32 3, %v3350
      %v3352 = vrot.slane %v3335, %v3351
      %v3357 = vmul.f32 %v3334, %v3340
      %v3358 = vmul.f32 %v3333, %v3344
      %v3359 = vmul.f32 %v3332, %v3348
      %v3360 = vmul.f32 %v3331, %v3352
      %3361 = vst [vmem:[#allocation2 + $0x80] sm:$0xff] %v3357
      %3362 = vst [vmem:[#allocation2 + $0x88] sm:$0xff] %v3358
      %3363 = vst [vmem:[#allocation2 + $0x90] sm:$0xff] %v3359
      %3364 = vst [vmem:[#allocation2 + $0x98] sm:$0xff] %v3360
      %3365 = vrot.lane.b32.xlu0 %v3151, 63
      %v3366 = vpop.permute.xlu0 %3365
      %3367 = vrot.lane.b32.xlu0 %v3152, 63
      %v3368 = vpop.permute.xlu0 %3367
      %3369 = vrot.lane.b32.xlu0 %v3153, 63
      %v3370 = vpop.permute.xlu0 %3369
      %3371 = vrot.lane.b32.xlu0 %v3154, 63
      %v3372 = vpop.permute.xlu0 %3371
      %v3373 = vsel %vm703, %v3370, %v3372
      %v3374 = vsel %vm703, %v3368, %v3370
      %v3375 = vsel %vm703, %v3366, %v3368
      %v3376 = vsel %vm703, %v3372, %v3366
      %v3377 = vld [vmem:[%s708] ss:$8 sm:$0xf]
      %v3379 = vlaneseq
      %v3380 = vshrl.u32 %v3379, 7
      %v3381 = vsub.s32 0, %v3380
      %v3382 = vrot.slane %v3377, %v3381
      %v3383 = vlaneseq
      %v3384 = vshrl.u32 %v3383, 7
      %v3385 = vsub.s32 1, %v3384
      %v3386 = vrot.slane %v3377, %v3385
      %v3387 = vlaneseq
      %v3388 = vshrl.u32 %v3387, 7
      %v3389 = vsub.s32 2, %v3388
      %v3390 = vrot.slane %v3377, %v3389
      %v3391 = vlaneseq
      %v3392 = vshrl.u32 %v3391, 7
      %v3393 = vsub.s32 3, %v3392
      %v3394 = vrot.slane %v3377, %v3393
      %v3399 = vmul.f32 %v3376, %v3382
      %v3400 = vmul.f32 %v3375, %v3386
      %v3401 = vmul.f32 %v3374, %v3390
      %v3402 = vmul.f32 %v3373, %v3394
      %3403 = vst [vmem:[#allocation2 + $0xa0] sm:$0xff] %v3399
      %3404 = vst [vmem:[#allocation2 + $0xa8] sm:$0xff] %v3400
      %3405 = vst [vmem:[#allocation2 + $0xb0] sm:$0xff] %v3401
      %3406 = vst [vmem:[#allocation2 + $0xb8] sm:$0xff] %v3402
      %3407 = vrot.lane.b32.xlu0 %v3151, 57
      %v3408 = vpop.permute.xlu0 %3407
      %3409 = vrot.lane.b32.xlu0 %v3152, 57
      %v3410 = vpop.permute.xlu0 %3409
      %3411 = vrot.lane.b32.xlu0 %v3153, 57
      %v3412 = vpop.permute.xlu0 %3411
      %3413 = vrot.lane.b32.xlu0 %v3154, 57
      %v3414 = vpop.permute.xlu0 %3413
      %v3415 = vsel %vm747, %v3412, %v3414
      %v3416 = vsel %vm747, %v3410, %v3412
      %v3417 = vsel %vm747, %v3408, %v3410
      %v3418 = vsel %vm747, %v3414, %v3408
      %v3419 = vld [vmem:[%s752] ss:$8 sm:$0xf]
      %v3421 = vlaneseq
      %v3422 = vshrl.u32 %v3421, 7
      %v3423 = vsub.s32 0, %v3422
      %v3424 = vrot.slane %v3419, %v3423
      %v3425 = vlaneseq
      %v3426 = vshrl.u32 %v3425, 7
      %v3427 = vsub.s32 1, %v3426
      %v3428 = vrot.slane %v3419, %v3427
      %v3429 = vlaneseq
      %v3430 = vshrl.u32 %v3429, 7
      %v3431 = vsub.s32 2, %v3430
      %v3432 = vrot.slane %v3419, %v3431
      %v3433 = vlaneseq
      %v3434 = vshrl.u32 %v3433, 7
      %v3435 = vsub.s32 3, %v3434
      %v3436 = vrot.slane %v3419, %v3435
      %v3441 = vmul.f32 %v3418, %v3424
      %v3442 = vmul.f32 %v3417, %v3428
      %v3443 = vmul.f32 %v3416, %v3432
      %v3444 = vmul.f32 %v3415, %v3436
      %3445 = vst [vmem:[#allocation2 + $0xc0] sm:$0xff] %v3441
      %3446 = vst [vmem:[#allocation2 + $0xc8] sm:$0xff] %v3442
      %3447 = vst [vmem:[#allocation2 + $0xd0] sm:$0xff] %v3443
      %3448 = vst [vmem:[#allocation2 + $0xd8] sm:$0xff] %v3444
      %3449 = vrot.lane.b32.xlu0 %v3151, 56
      %v3450 = vpop.permute.xlu0 %3449
      %3451 = vrot.lane.b32.xlu0 %v3152, 56
      %v3452 = vpop.permute.xlu0 %3451
      %3453 = vrot.lane.b32.xlu0 %v3153, 56
      %v3454 = vpop.permute.xlu0 %3453
      %3455 = vrot.lane.b32.xlu0 %v3154, 56
      %v3456 = vpop.permute.xlu0 %3455
      %v3457 = vsel %vm791, %v3454, %v3456
      %v3458 = vsel %vm791, %v3452, %v3454
      %v3459 = vsel %vm791, %v3450, %v3452
      %v3460 = vsel %vm791, %v3456, %v3450
      %v3461 = vld [vmem:[%s796] ss:$8 sm:$0xf]
      %v3463 = vlaneseq
      %v3464 = vshrl.u32 %v3463, 7
      %v3465 = vsub.s32 0, %v3464
      %v3466 = vrot.slane %v3461, %v3465
      %v3467 = vlaneseq
      %v3468 = vshrl.u32 %v3467, 7
      %v3469 = vsub.s32 1, %v3468
      %v3470 = vrot.slane %v3461, %v3469
      %v3471 = vlaneseq
      %v3472 = vshrl.u32 %v3471, 7
      %v3473 = vsub.s32 2, %v3472
      %v3474 = vrot.slane %v3461, %v3473
      %v3475 = vlaneseq
      %v3476 = vshrl.u32 %v3475, 7
      %v3477 = vsub.s32 3, %v3476
      %v3478 = vrot.slane %v3461, %v3477
      %v3483 = vmul.f32 %v3460, %v3466
      %v3484 = vmul.f32 %v3459, %v3470
      %v3485 = vmul.f32 %v3458, %v3474
      %v3486 = vmul.f32 %v3457, %v3478
      %3487 = vst [vmem:[#allocation2 + $0xe0] sm:$0xff] %v3483
      %3488 = vst [vmem:[#allocation2 + $0xe8] sm:$0xff] %v3484
      %3489 = vst [vmem:[#allocation2 + $0xf0] sm:$0xff] %v3485
      %3490 = vst [vmem:[#allocation2 + $0xf8] sm:$0xff] %v3486
      %3491 = vrot.lane.b32.xlu0 %v3151, 55
      %v3492 = vpop.permute.xlu0 %3491
      %3493 = vrot.lane.b32.xlu0 %v3152, 55
      %v3494 = vpop.permute.xlu0 %3493
      %3495 = vrot.lane.b32.xlu0 %v3153, 55
      %v3496 = vpop.permute.xlu0 %3495
      %3497 = vrot.lane.b32.xlu0 %v3154, 55
      %v3498 = vpop.permute.xlu0 %3497
      %v3499 = vsel %vm835, %v3496, %v3498
      %v3500 = vsel %vm835, %v3494, %v3496
      %v3501 = vsel %vm835, %v3492, %v3494
      %v3502 = vsel %vm835, %v3498, %v3492
      %v3503 = vld [vmem:[%s840] ss:$8 sm:$0xf]
      %v3505 = vlaneseq
      %v3506 = vshrl.u32 %v3505, 7
      %v3507 = vsub.s32 0, %v3506
      %v3508 = vrot.slane %v3503, %v3507
      %v3509 = vlaneseq
      %v3510 = vshrl.u32 %v3509, 7
      %v3511 = vsub.s32 1, %v3510
      %v3512 = vrot.slane %v3503, %v3511
      %v3513 = vlaneseq
      %v3514 = vshrl.u32 %v3513, 7
      %v3515 = vsub.s32 2, %v3514
      %v3516 = vrot.slane %v3503, %v3515
      %v3517 = vlaneseq
      %v3518 = vshrl.u32 %v3517, 7
      %v3519 = vsub.s32 3, %v3518
      %v3520 = vrot.slane %v3503, %v3519
      %v3525 = vmul.f32 %v3502, %v3508
      %v3526 = vmul.f32 %v3501, %v3512
      %v3527 = vmul.f32 %v3500, %v3516
      %v3528 = vmul.f32 %v3499, %v3520
      %3529 = vst [vmem:[#allocation2 + $0x100] sm:$0xff] %v3525
      %3530 = vst [vmem:[#allocation2 + $0x108] sm:$0xff] %v3526
      %3531 = vst [vmem:[#allocation2 + $0x110] sm:$0xff] %v3527
      %3532 = vst [vmem:[#allocation2 + $0x118] sm:$0xff] %v3528
      %3533 = vrot.lane.b32.xlu0 %v3151, 9
      %v3534 = vpop.permute.xlu0 %3533
      %3535 = vrot.lane.b32.xlu0 %v3152, 9
      %v3536 = vpop.permute.xlu0 %3535
      %3537 = vrot.lane.b32.xlu0 %v3153, 9
      %v3538 = vpop.permute.xlu0 %3537
      %3539 = vrot.lane.b32.xlu0 %v3154, 9
      %v3540 = vpop.permute.xlu0 %3539
      %v3541 = vsel %vm879, %v3538, %v3540
      %v3542 = vsel %vm879, %v3536, %v3538
      %v3543 = vsel %vm879, %v3534, %v3536
      %v3544 = vsel %vm879, %v3540, %v3534
      %v3545 = vld [vmem:[%s884] ss:$8 sm:$0xf]
      %v3547 = vlaneseq
      %v3548 = vshrl.u32 %v3547, 7
      %v3549 = vsub.s32 0, %v3548
      %v3550 = vrot.slane %v3545, %v3549
      %v3551 = vlaneseq
      %v3552 = vshrl.u32 %v3551, 7
      %v3553 = vsub.s32 1, %v3552
      %v3554 = vrot.slane %v3545, %v3553
      %v3555 = vlaneseq
      %v3556 = vshrl.u32 %v3555, 7
      %v3557 = vsub.s32 2, %v3556
      %v3558 = vrot.slane %v3545, %v3557
      %v3559 = vlaneseq
      %v3560 = vshrl.u32 %v3559, 7
      %v3561 = vsub.s32 3, %v3560
      %v3562 = vrot.slane %v3545, %v3561
      %v3567 = vmul.f32 %v3544, %v3550
      %v3568 = vmul.f32 %v3543, %v3554
      %v3569 = vmul.f32 %v3542, %v3558
      %v3570 = vmul.f32 %v3541, %v3562
      %3571 = vst [vmem:[#allocation2 + $0x120] sm:$0xff] %v3567
      %3572 = vst [vmem:[#allocation2 + $0x128] sm:$0xff] %v3568
      %3573 = vst [vmem:[#allocation2 + $0x130] sm:$0xff] %v3569
      %3574 = vst [vmem:[#allocation2 + $0x138] sm:$0xff] %v3570
      %3575 = vrot.lane.b32.xlu0 %v3151, 8
      %v3576 = vpop.permute.xlu0 %3575
      %3577 = vrot.lane.b32.xlu0 %v3152, 8
      %v3578 = vpop.permute.xlu0 %3577
      %3579 = vrot.lane.b32.xlu0 %v3153, 8
      %v3580 = vpop.permute.xlu0 %3579
      %3581 = vrot.lane.b32.xlu0 %v3154, 8
      %v3582 = vpop.permute.xlu0 %3581
      %v3583 = vsel %vm923, %v3580, %v3582
      %v3584 = vsel %vm923, %v3578, %v3580
      %v3585 = vsel %vm923, %v3576, %v3578
      %v3586 = vsel %vm923, %v3582, %v3576
      %v3587 = vld [vmem:[%s928] ss:$8 sm:$0xf]
      %v3589 = vlaneseq
      %v3590 = vshrl.u32 %v3589, 7
      %v3591 = vsub.s32 0, %v3590
      %v3592 = vrot.slane %v3587, %v3591
      %v3593 = vlaneseq
      %v3594 = vshrl.u32 %v3593, 7
      %v3595 = vsub.s32 1, %v3594
      %v3596 = vrot.slane %v3587, %v3595
      %v3597 = vlaneseq
      %v3598 = vshrl.u32 %v3597, 7
      %v3599 = vsub.s32 2, %v3598
      %v3600 = vrot.slane %v3587, %v3599
      %v3601 = vlaneseq
      %v3602 = vshrl.u32 %v3601, 7
      %v3603 = vsub.s32 3, %v3602
      %v3604 = vrot.slane %v3587, %v3603
      %v3609 = vmul.f32 %v3586, %v3592
      %v3610 = vmul.f32 %v3585, %v3596
      %v3611 = vmul.f32 %v3584, %v3600
      %v3612 = vmul.f32 %v3583, %v3604
      %3613 = vst [vmem:[#allocation2 + $0x140] sm:$0xff] %v3609
      %3614 = vst [vmem:[#allocation2 + $0x148] sm:$0xff] %v3610
      %3615 = vst [vmem:[#allocation2 + $0x150] sm:$0xff] %v3611
      %3616 = vst [vmem:[#allocation2 + $0x158] sm:$0xff] %v3612
      %3617 = vrot.lane.b32.xlu0 %v3151, 7
      %v3618 = vpop.permute.xlu0 %3617
      %3619 = vrot.lane.b32.xlu0 %v3152, 7
      %v3620 = vpop.permute.xlu0 %3619
      %3621 = vrot.lane.b32.xlu0 %v3153, 7
      %v3622 = vpop.permute.xlu0 %3621
      %3623 = vrot.lane.b32.xlu0 %v3154, 7
      %v3624 = vpop.permute.xlu0 %3623
      %v3625 = vsel %vm967, %v3622, %v3624
      %v3626 = vsel %vm967, %v3620, %v3622
      %v3627 = vsel %vm967, %v3618, %v3620
      %v3628 = vsel %vm967, %v3624, %v3618
      %v3629 = vld [vmem:[%s972] ss:$8 sm:$0xf]
      %v3631 = vlaneseq
      %v3632 = vshrl.u32 %v3631, 7
      %v3633 = vsub.s32 0, %v3632
      %v3634 = vrot.slane %v3629, %v3633
      %v3635 = vlaneseq
      %v3636 = vshrl.u32 %v3635, 7
      %v3637 = vsub.s32 1, %v3636
      %v3638 = vrot.slane %v3629, %v3637
      %v3639 = vlaneseq
      %v3640 = vshrl.u32 %v3639, 7
      %v3641 = vsub.s32 2, %v3640
      %v3642 = vrot.slane %v3629, %v3641
      %v3643 = vlaneseq
      %v3644 = vshrl.u32 %v3643, 7
      %v3645 = vsub.s32 3, %v3644
      %v3646 = vrot.slane %v3629, %v3645
      %v3651 = vmul.f32 %v3628, %v3634
      %v3652 = vmul.f32 %v3627, %v3638
      %v3653 = vmul.f32 %v3626, %v3642
      %v3654 = vmul.f32 %v3625, %v3646
      %3655 = vst [vmem:[#allocation2 + $0x160] sm:$0xff] %v3651
      %3656 = vst [vmem:[#allocation2 + $0x168] sm:$0xff] %v3652
      %3657 = vst [vmem:[#allocation2 + $0x170] sm:$0xff] %v3653
      %3658 = vst [vmem:[#allocation2 + $0x178] sm:$0xff] %v3654
      %3659 = vrot.lane.b32.xlu0 %v3151, 1
      %v3660 = vpop.permute.xlu0 %3659
      %3661 = vrot.lane.b32.xlu0 %v3152, 1
      %v3662 = vpop.permute.xlu0 %3661
      %3663 = vrot.lane.b32.xlu0 %v3153, 1
      %v3664 = vpop.permute.xlu0 %3663
      %3665 = vrot.lane.b32.xlu0 %v3154, 1
      %v3666 = vpop.permute.xlu0 %3665
      %v3667 = vsel %vm1011, %v3664, %v3666
      %v3668 = vsel %vm1011, %v3662, %v3664
      %v3669 = vsel %vm1011, %v3660, %v3662
      %v3670 = vsel %vm1011, %v3666, %v3660
      %v3671 = vld [vmem:[%s1016] ss:$8 sm:$0xf]
      %v3673 = vlaneseq
      %v3674 = vshrl.u32 %v3673, 7
      %v3675 = vsub.s32 0, %v3674
      %v3676 = vrot.slane %v3671, %v3675
      %v3677 = vlaneseq
      %v3678 = vshrl.u32 %v3677, 7
      %v3679 = vsub.s32 1, %v3678
      %v3680 = vrot.slane %v3671, %v3679
      %v3681 = vlaneseq
      %v3682 = vshrl.u32 %v3681, 7
      %v3683 = vsub.s32 2, %v3682
      %v3684 = vrot.slane %v3671, %v3683
      %v3685 = vlaneseq
      %v3686 = vshrl.u32 %v3685, 7
      %v3687 = vsub.s32 3, %v3686
      %v3688 = vrot.slane %v3671, %v3687
      %v3693 = vmul.f32 %v3670, %v3676
      %v3694 = vmul.f32 %v3669, %v3680
      %v3695 = vmul.f32 %v3668, %v3684
      %v3696 = vmul.f32 %v3667, %v3688
      %3697 = vst [vmem:[#allocation2 + $0x180] sm:$0xff] %v3693
      %3698 = vst [vmem:[#allocation2 + $0x188] sm:$0xff] %v3694
      %3699 = vst [vmem:[#allocation2 + $0x190] sm:$0xff] %v3695
      %3700 = vst [vmem:[#allocation2 + $0x198] sm:$0xff] %v3696
      %v3701 = vld [vmem:[%s1047] ss:$8 sm:$0xf]
      %v3703 = vlaneseq
      %v3704 = vshrl.u32 %v3703, 7
      %v3705 = vsub.s32 0, %v3704
      %v3706 = vrot.slane %v3701, %v3705
      %v3707 = vlaneseq
      %v3708 = vshrl.u32 %v3707, 7
      %v3709 = vsub.s32 1, %v3708
      %v3710 = vrot.slane %v3701, %v3709
      %v3711 = vlaneseq
      %v3712 = vshrl.u32 %v3711, 7
      %v3713 = vsub.s32 2, %v3712
      %v3714 = vrot.slane %v3701, %v3713
      %v3715 = vlaneseq
      %v3716 = vshrl.u32 %v3715, 7
      %v3717 = vsub.s32 3, %v3716
      %v3718 = vrot.slane %v3701, %v3717
      %v3723 = vmul.f32 %v3151, %v3706
      %v3724 = vmul.f32 %v3152, %v3710
      %v3725 = vmul.f32 %v3153, %v3714
      %v3726 = vmul.f32 %v3154, %v3718
      %3727 = vst [vmem:[#allocation2 + $0x1a0] sm:$0xff] %v3723
      %3728 = vst [vmem:[#allocation2 + $0x1a8] sm:$0xff] %v3724
      %3729 = vst [vmem:[#allocation2 + $0x1b0] sm:$0xff] %v3725
      %3730 = vst [vmem:[#allocation2 + $0x1b8] sm:$0xff] %v3726
      %3731 = vrot.lane.b32.xlu0 %v3151, 127
      %v3732 = vpop.permute.xlu0 %3731
      %3733 = vrot.lane.b32.xlu0 %v3152, 127
      %v3734 = vpop.permute.xlu0 %3733
      %3735 = vrot.lane.b32.xlu0 %v3153, 127
      %v3736 = vpop.permute.xlu0 %3735
      %3737 = vrot.lane.b32.xlu0 %v3154, 127
      %v3738 = vpop.permute.xlu0 %3737
      %v3739 = vsel %vm1086, %v3736, %v3738
      %v3740 = vsel %vm1086, %v3734, %v3736
      %v3741 = vsel %vm1086, %v3732, %v3734
      %v3742 = vsel %vm1086, %v3738, %v3732
      %v3743 = vld [vmem:[%s1091] ss:$8 sm:$0xf]
      %v3745 = vlaneseq
      %v3746 = vshrl.u32 %v3745, 7
      %v3747 = vsub.s32 0, %v3746
      %v3748 = vrot.slane %v3743, %v3747
      %v3749 = vlaneseq
      %v3750 = vshrl.u32 %v3749, 7
      %v3751 = vsub.s32 1, %v3750
      %v3752 = vrot.slane %v3743, %v3751
      %v3753 = vlaneseq
      %v3754 = vshrl.u32 %v3753, 7
      %v3755 = vsub.s32 2, %v3754
      %v3756 = vrot.slane %v3743, %v3755
      %v3757 = vlaneseq
      %v3758 = vshrl.u32 %v3757, 7
      %v3759 = vsub.s32 3, %v3758
      %v3760 = vrot.slane %v3743, %v3759
      %v3765 = vmul.f32 %v3741, %v3748
      %v3766 = vmul.f32 %v3740, %v3752
      %v3767 = vmul.f32 %v3739, %v3756
      %v3768 = vmul.f32 %v3742, %v3760
      %3769 = vst [vmem:[#allocation2 + $0x1c0] sm:$0xff] %v3765
      %3770 = vst [vmem:[#allocation2 + $0x1c8] sm:$0xff] %v3766
      %3771 = vst [vmem:[#allocation2 + $0x1d0] sm:$0xff] %v3767
      %3772 = vst [vmem:[#allocation2 + $0x1d8] sm:$0xff] %v3768
      %3773 = vrot.lane.b32.xlu0 %v3151, 121
      %v3774 = vpop.permute.xlu0 %3773
      %3775 = vrot.lane.b32.xlu0 %v3152, 121
      %v3776 = vpop.permute.xlu0 %3775
      %3777 = vrot.lane.b32.xlu0 %v3153, 121
      %v3778 = vpop.permute.xlu0 %3777
      %3779 = vrot.lane.b32.xlu0 %v3154, 121
      %v3780 = vpop.permute.xlu0 %3779
      %v3781 = vsel %vm1130, %v3778, %v3780
      %v3782 = vsel %vm1130, %v3776, %v3778
      %v3783 = vsel %vm1130, %v3774, %v3776
      %v3784 = vsel %vm1130, %v3780, %v3774
      %v3785 = vld [vmem:[%s1135] ss:$8 sm:$0xf]
      %v3787 = vlaneseq
      %v3788 = vshrl.u32 %v3787, 7
      %v3789 = vsub.s32 0, %v3788
      %v3790 = vrot.slane %v3785, %v3789
      %v3791 = vlaneseq
      %v3792 = vshrl.u32 %v3791, 7
      %v3793 = vsub.s32 1, %v3792
      %v3794 = vrot.slane %v3785, %v3793
      %v3795 = vlaneseq
      %v3796 = vshrl.u32 %v3795, 7
      %v3797 = vsub.s32 2, %v3796
      %v3798 = vrot.slane %v3785, %v3797
      %v3799 = vlaneseq
      %v3800 = vshrl.u32 %v3799, 7
      %v3801 = vsub.s32 3, %v3800
      %v3802 = vrot.slane %v3785, %v3801
      %v3807 = vmul.f32 %v3783, %v3790
      %v3808 = vmul.f32 %v3782, %v3794
      %v3809 = vmul.f32 %v3781, %v3798
      %v3810 = vmul.f32 %v3784, %v3802
      %3811 = vst [vmem:[#allocation2 + $0x1e0] sm:$0xff] %v3807
      %3812 = vst [vmem:[#allocation2 + $0x1e8] sm:$0xff] %v3808
      %3813 = vst [vmem:[#allocation2 + $0x1f0] sm:$0xff] %v3809
      %3814 = vst [vmem:[#allocation2 + $0x1f8] sm:$0xff] %v3810
      %3815 = vrot.lane.b32.xlu0 %v3151, 120
      %v3816 = vpop.permute.xlu0 %3815
      %3817 = vrot.lane.b32.xlu0 %v3152, 120
      %v3818 = vpop.permute.xlu0 %3817
      %3819 = vrot.lane.b32.xlu0 %v3153, 120
      %v3820 = vpop.permute.xlu0 %3819
      %3821 = vrot.lane.b32.xlu0 %v3154, 120
      %v3822 = vpop.permute.xlu0 %3821
      %v3823 = vsel %vm1174, %v3820, %v3822
      %v3824 = vsel %vm1174, %v3818, %v3820
      %v3825 = vsel %vm1174, %v3816, %v3818
      %v3826 = vsel %vm1174, %v3822, %v3816
      %v3827 = vld [vmem:[%s1179] ss:$8 sm:$0xf]
      %v3829 = vlaneseq
      %v3830 = vshrl.u32 %v3829, 7
      %v3831 = vsub.s32 0, %v3830
      %v3832 = vrot.slane %v3827, %v3831
      %v3833 = vlaneseq
      %v3834 = vshrl.u32 %v3833, 7
      %v3835 = vsub.s32 1, %v3834
      %v3836 = vrot.slane %v3827, %v3835
      %v3837 = vlaneseq
      %v3838 = vshrl.u32 %v3837, 7
      %v3839 = vsub.s32 2, %v3838
      %v3840 = vrot.slane %v3827, %v3839
      %v3841 = vlaneseq
      %v3842 = vshrl.u32 %v3841, 7
      %v3843 = vsub.s32 3, %v3842
      %v3844 = vrot.slane %v3827, %v3843
      %v3849 = vmul.f32 %v3825, %v3832
      %v3850 = vmul.f32 %v3824, %v3836
      %v3851 = vmul.f32 %v3823, %v3840
      %v3852 = vmul.f32 %v3826, %v3844
      %3853 = vst [vmem:[#allocation2 + $0x200] sm:$0xff] %v3849
      %3854 = vst [vmem:[#allocation2 + $0x208] sm:$0xff] %v3850
      %3855 = vst [vmem:[#allocation2 + $0x210] sm:$0xff] %v3851
      %3856 = vst [vmem:[#allocation2 + $0x218] sm:$0xff] %v3852
      %3857 = vrot.lane.b32.xlu0 %v3151, 119
      %v3858 = vpop.permute.xlu0 %3857
      %3859 = vrot.lane.b32.xlu0 %v3152, 119
      %v3860 = vpop.permute.xlu0 %3859
      %3861 = vrot.lane.b32.xlu0 %v3153, 119
      %v3862 = vpop.permute.xlu0 %3861
      %3863 = vrot.lane.b32.xlu0 %v3154, 119
      %v3864 = vpop.permute.xlu0 %3863
      %v3865 = vsel %vm1218, %v3862, %v3864
      %v3866 = vsel %vm1218, %v3860, %v3862
      %v3867 = vsel %vm1218, %v3858, %v3860
      %v3868 = vsel %vm1218, %v3864, %v3858
      %v3869 = vld [vmem:[%s1223] ss:$8 sm:$0xf]
      %v3871 = vlaneseq
      %v3872 = vshrl.u32 %v3871, 7
      %v3873 = vsub.s32 0, %v3872
      %v3874 = vrot.slane %v3869, %v3873
      %v3875 = vlaneseq
      %v3876 = vshrl.u32 %v3875, 7
      %v3877 = vsub.s32 1, %v3876
      %v3878 = vrot.slane %v3869, %v3877
      %v3879 = vlaneseq
      %v3880 = vshrl.u32 %v3879, 7
      %v3881 = vsub.s32 2, %v3880
      %v3882 = vrot.slane %v3869, %v3881
      %v3883 = vlaneseq
      %v3884 = vshrl.u32 %v3883, 7
      %v3885 = vsub.s32 3, %v3884
      %v3886 = vrot.slane %v3869, %v3885
      %v3891 = vmul.f32 %v3867, %v3874
      %v3892 = vmul.f32 %v3866, %v3878
      %v3893 = vmul.f32 %v3865, %v3882
      %v3894 = vmul.f32 %v3868, %v3886
      %3895 = vst [vmem:[#allocation2 + $0x220] sm:$0xff] %v3891
      %3896 = vst [vmem:[#allocation2 + $0x228] sm:$0xff] %v3892
      %3897 = vst [vmem:[#allocation2 + $0x230] sm:$0xff] %v3893
      %3898 = vst [vmem:[#allocation2 + $0x238] sm:$0xff] %v3894
      %v3899 = vld [vmem:[%s1254] ss:$8 sm:$0xf]
      %v3901 = vlaneseq
      %v3902 = vshrl.u32 %v3901, 7
      %v3903 = vsub.s32 0, %v3902
      %v3904 = vrot.slane %v3899, %v3903
      %v3905 = vlaneseq
      %v3906 = vshrl.u32 %v3905, 7
      %v3907 = vsub.s32 1, %v3906
      %v3908 = vrot.slane %v3899, %v3907
      %v3909 = vlaneseq
      %v3910 = vshrl.u32 %v3909, 7
      %v3911 = vsub.s32 2, %v3910
      %v3912 = vrot.slane %v3899, %v3911
      %v3913 = vlaneseq
      %v3914 = vshrl.u32 %v3913, 7
      %v3915 = vsub.s32 3, %v3914
      %v3916 = vrot.slane %v3899, %v3915
      %v3921 = vmul.f32 %v3165, %v3904
      %v3922 = vmul.f32 %v3164, %v3908
      %v3923 = vmul.f32 %v3163, %v3912
      %v3924 = vmul.f32 %v3166, %v3916
      %3925 = vst [vmem:[#allocation2 + $0x240] sm:$0xff] %v3921
      %3926 = vst [vmem:[#allocation2 + $0x248] sm:$0xff] %v3922
      %3927 = vst [vmem:[#allocation2 + $0x250] sm:$0xff] %v3923
      %3928 = vst [vmem:[#allocation2 + $0x258] sm:$0xff] %v3924
      %v3929 = vld [vmem:[%s1285] ss:$8 sm:$0xf]
      %v3931 = vlaneseq
      %v3932 = vshrl.u32 %v3931, 7
      %v3933 = vsub.s32 0, %v3932
      %v3934 = vrot.slane %v3929, %v3933
      %v3935 = vlaneseq
      %v3936 = vshrl.u32 %v3935, 7
      %v3937 = vsub.s32 1, %v3936
      %v3938 = vrot.slane %v3929, %v3937
      %v3939 = vlaneseq
      %v3940 = vshrl.u32 %v3939, 7
      %v3941 = vsub.s32 2, %v3940
      %v3942 = vrot.slane %v3929, %v3941
      %v3943 = vlaneseq
      %v3944 = vshrl.u32 %v3943, 7
      %v3945 = vsub.s32 3, %v3944
      %v3946 = vrot.slane %v3929, %v3945
      %v3951 = vmul.f32 %v3207, %v3934
      %v3952 = vmul.f32 %v3206, %v3938
      %v3953 = vmul.f32 %v3205, %v3942
      %v3954 = vmul.f32 %v3208, %v3946
      %3955 = vst [vmem:[#allocation2 + $0x260] sm:$0xff] %v3951
      %3956 = vst [vmem:[#allocation2 + $0x268] sm:$0xff] %v3952
      %3957 = vst [vmem:[#allocation2 + $0x270] sm:$0xff] %v3953
      %3958 = vst [vmem:[#allocation2 + $0x278] sm:$0xff] %v3954
      %v3959 = vld [vmem:[%s1316] ss:$8 sm:$0xf]
      %v3961 = vlaneseq
      %v3962 = vshrl.u32 %v3961, 7
      %v3963 = vsub.s32 0, %v3962
      %v3964 = vrot.slane %v3959, %v3963
      %v3965 = vlaneseq
      %v3966 = vshrl.u32 %v3965, 7
      %v3967 = vsub.s32 1, %v3966
      %v3968 = vrot.slane %v3959, %v3967
      %v3969 = vlaneseq
      %v3970 = vshrl.u32 %v3969, 7
      %v3971 = vsub.s32 2, %v3970
      %v3972 = vrot.slane %v3959, %v3971
      %v3973 = vlaneseq
      %v3974 = vshrl.u32 %v3973, 7
      %v3975 = vsub.s32 3, %v3974
      %v3976 = vrot.slane %v3959, %v3975
      %v3981 = vmul.f32 %v3249, %v3964
      %v3982 = vmul.f32 %v3248, %v3968
      %v3983 = vmul.f32 %v3247, %v3972
      %v3984 = vmul.f32 %v3250, %v3976
      %3985 = vst [vmem:[#allocation2 + $0x280] sm:$0xff] %v3981
      %3986 = vst [vmem:[#allocation2 + $0x288] sm:$0xff] %v3982
      %3987 = vst [vmem:[#allocation2 + $0x290] sm:$0xff] %v3983
      %3988 = vst [vmem:[#allocation2 + $0x298] sm:$0xff] %v3984
      %v3989 = vld [vmem:[%s1347] ss:$8 sm:$0xf]
      %v3991 = vlaneseq
      %v3992 = vshrl.u32 %v3991, 7
      %v3993 = vsub.s32 0, %v3992
      %v3994 = vrot.slane %v3989, %v3993
      %v3995 = vlaneseq
      %v3996 = vshrl.u32 %v3995, 7
      %v3997 = vsub.s32 1, %v3996
      %v3998 = vrot.slane %v3989, %v3997
      %v3999 = vlaneseq
      %v4000 = vshrl.u32 %v3999, 7
      %v4001 = vsub.s32 2, %v4000
      %v4002 = vrot.slane %v3989, %v4001
      %v4003 = vlaneseq
      %v4004 = vshrl.u32 %v4003, 7
      %v4005 = vsub.s32 3, %v4004
      %v4006 = vrot.slane %v3989, %v4005
      %v4011 = vmul.f32 %v3291, %v3994
      %v4012 = vmul.f32 %v3290, %v3998
      %v4013 = vmul.f32 %v3289, %v4002
      %v4014 = vmul.f32 %v3292, %v4006
      %4015 = vst [vmem:[#allocation2 + $0x2a0] sm:$0xff] %v4011
      %4016 = vst [vmem:[#allocation2 + $0x2a8] sm:$0xff] %v4012
      %4017 = vst [vmem:[#allocation2 + $0x2b0] sm:$0xff] %v4013
      %4018 = vst [vmem:[#allocation2 + $0x2b8] sm:$0xff] %v4014
      %v4019 = vld [vmem:[%s1378] ss:$8 sm:$0xf]
      %v4021 = vlaneseq
      %v4022 = vshrl.u32 %v4021, 7
      %v4023 = vsub.s32 0, %v4022
      %v4024 = vrot.slane %v4019, %v4023
      %v4025 = vlaneseq
      %v4026 = vshrl.u32 %v4025, 7
      %v4027 = vsub.s32 1, %v4026
      %v4028 = vrot.slane %v4019, %v4027
      %v4029 = vlaneseq
      %v4030 = vshrl.u32 %v4029, 7
      %v4031 = vsub.s32 2, %v4030
      %v4032 = vrot.slane %v4019, %v4031
      %v4033 = vlaneseq
      %v4034 = vshrl.u32 %v4033, 7
      %v4035 = vsub.s32 3, %v4034
      %v4036 = vrot.slane %v4019, %v4035
      %v4041 = vmul.f32 %v3333, %v4024
      %v4042 = vmul.f32 %v3332, %v4028
      %v4043 = vmul.f32 %v3331, %v4032
      %v4044 = vmul.f32 %v3334, %v4036
      %4045 = vst [vmem:[#allocation2 + $0x2c0] sm:$0xff] %v4041
      %4046 = vst [vmem:[#allocation2 + $0x2c8] sm:$0xff] %v4042
      %4047 = vst [vmem:[#allocation2 + $0x2d0] sm:$0xff] %v4043
      %4048 = vst [vmem:[#allocation2 + $0x2d8] sm:$0xff] %v4044
      %v4049 = vld [vmem:[%s1409] ss:$8 sm:$0xf]
      %v4051 = vlaneseq
      %v4052 = vshrl.u32 %v4051, 7
      %v4053 = vsub.s32 0, %v4052
      %v4054 = vrot.slane %v4049, %v4053
      %v4055 = vlaneseq
      %v4056 = vshrl.u32 %v4055, 7
      %v4057 = vsub.s32 1, %v4056
      %v4058 = vrot.slane %v4049, %v4057
      %v4059 = vlaneseq
      %v4060 = vshrl.u32 %v4059, 7
      %v4061 = vsub.s32 2, %v4060
      %v4062 = vrot.slane %v4049, %v4061
      %v4063 = vlaneseq
      %v4064 = vshrl.u32 %v4063, 7
      %v4065 = vsub.s32 3, %v4064
      %v4066 = vrot.slane %v4049, %v4065
      %v4071 = vmul.f32 %v3375, %v4054
      %v4072 = vmul.f32 %v3374, %v4058
      %v4073 = vmul.f32 %v3373, %v4062
      %v4074 = vmul.f32 %v3376, %v4066
      %4075 = vst [vmem:[#allocation2 + $0x2e0] sm:$0xff] %v4071
      %4076 = vst [vmem:[#allocation2 + $0x2e8] sm:$0xff] %v4072
      %4077 = vst [vmem:[#allocation2 + $0x2f0] sm:$0xff] %v4073
      %4078 = vst [vmem:[#allocation2 + $0x2f8] sm:$0xff] %v4074
      %v4079 = vld [vmem:[%s1440] ss:$8 sm:$0xf]
      %v4081 = vlaneseq
      %v4082 = vshrl.u32 %v4081, 7
      %v4083 = vsub.s32 0, %v4082
      %v4084 = vrot.slane %v4079, %v4083
      %v4085 = vlaneseq
      %v4086 = vshrl.u32 %v4085, 7
      %v4087 = vsub.s32 1, %v4086
      %v4088 = vrot.slane %v4079, %v4087
      %v4089 = vlaneseq
      %v4090 = vshrl.u32 %v4089, 7
      %v4091 = vsub.s32 2, %v4090
      %v4092 = vrot.slane %v4079, %v4091
      %v4093 = vlaneseq
      %v4094 = vshrl.u32 %v4093, 7
      %v4095 = vsub.s32 3, %v4094
      %v4096 = vrot.slane %v4079, %v4095
      %v4101 = vmul.f32 %v3417, %v4084
      %v4102 = vmul.f32 %v3416, %v4088
      %v4103 = vmul.f32 %v3415, %v4092
      %v4104 = vmul.f32 %v3418, %v4096
      %4105 = vst [vmem:[#allocation2 + $0x300] sm:$0xff] %v4101
      %4106 = vst [vmem:[#allocation2 + $0x308] sm:$0xff] %v4102
      %4107 = vst [vmem:[#allocation2 + $0x310] sm:$0xff] %v4103
      %4108 = vst [vmem:[#allocation2 + $0x318] sm:$0xff] %v4104
      %v4109 = vld [vmem:[%s1471] ss:$8 sm:$0xf]
      %v4111 = vlaneseq
      %v4112 = vshrl.u32 %v4111, 7
      %v4113 = vsub.s32 0, %v4112
      %v4114 = vrot.slane %v4109, %v4113
      %v4115 = vlaneseq
      %v4116 = vshrl.u32 %v4115, 7
      %v4117 = vsub.s32 1, %v4116
      %v4118 = vrot.slane %v4109, %v4117
      %v4119 = vlaneseq
      %v4120 = vshrl.u32 %v4119, 7
      %v4121 = vsub.s32 2, %v4120
      %v4122 = vrot.slane %v4109, %v4121
      %v4123 = vlaneseq
      %v4124 = vshrl.u32 %v4123, 7
      %v4125 = vsub.s32 3, %v4124
      %v4126 = vrot.slane %v4109, %v4125
      %v4131 = vmul.f32 %v3459, %v4114
      %v4132 = vmul.f32 %v3458, %v4118
      %v4133 = vmul.f32 %v3457, %v4122
      %v4134 = vmul.f32 %v3460, %v4126
      %4135 = vst [vmem:[#allocation2 + $0x320] sm:$0xff] %v4131
      %4136 = vst [vmem:[#allocation2 + $0x328] sm:$0xff] %v4132
      %4137 = vst [vmem:[#allocation2 + $0x330] sm:$0xff] %v4133
      %4138 = vst [vmem:[#allocation2 + $0x338] sm:$0xff] %v4134
      %v4139 = vld [vmem:[%s1502] ss:$8 sm:$0xf]
      %v4141 = vlaneseq
      %v4142 = vshrl.u32 %v4141, 7
      %v4143 = vsub.s32 0, %v4142
      %v4144 = vrot.slane %v4139, %v4143
      %v4145 = vlaneseq
      %v4146 = vshrl.u32 %v4145, 7
      %v4147 = vsub.s32 1, %v4146
      %v4148 = vrot.slane %v4139, %v4147
      %v4149 = vlaneseq
      %v4150 = vshrl.u32 %v4149, 7
      %v4151 = vsub.s32 2, %v4150
      %v4152 = vrot.slane %v4139, %v4151
      %v4153 = vlaneseq
      %v4154 = vshrl.u32 %v4153, 7
      %v4155 = vsub.s32 3, %v4154
      %v4156 = vrot.slane %v4139, %v4155
      %v4161 = vmul.f32 %v3501, %v4144
      %v4162 = vmul.f32 %v3500, %v4148
      %v4163 = vmul.f32 %v3499, %v4152
      %v4164 = vmul.f32 %v3502, %v4156
      %4165 = vst [vmem:[#allocation2 + $0x340] sm:$0xff] %v4161
      %4166 = vst [vmem:[#allocation2 + $0x348] sm:$0xff] %v4162
      %4167 = vst [vmem:[#allocation2 + $0x350] sm:$0xff] %v4163
      %4168 = vst [vmem:[#allocation2 + $0x358] sm:$0xff] %v4164
      %v4169 = vld [vmem:[%s4] sm:$0xff]
      %v4170 = vld [vmem:[%s4 + $0x8] sm:$0xff]
      %v4171 = vld [vmem:[#allocation2] sm:$0xff]
      %v4172 = vld [vmem:[#allocation2 + $0x8] sm:$0xff]
      %v4173 = vld [vmem:[#allocation2 + $0x10] sm:$0xff]
      %v4174 = vld [vmem:[#allocation2 + $0x18] sm:$0xff]
      %v4175 = vld [vmem:[#allocation2 + $0x20] sm:$0xff]
      %v4176 = vld [vmem:[#allocation2 + $0x28] sm:$0xff]
      %v4177 = vld [vmem:[#allocation2 + $0x30] sm:$0xff]
      %v4178 = vld [vmem:[#allocation2 + $0x38] sm:$0xff]
      %v4179 = vld [vmem:[#allocation2 + $0x40] sm:$0xff]
      %v4180 = vld [vmem:[#allocation2 + $0x48] sm:$0xff]
      %v4181 = vld [vmem:[#allocation2 + $0x50] sm:$0xff]
      %v4182 = vld [vmem:[#allocation2 + $0x58] sm:$0xff]
      %v4183 = vld [vmem:[#allocation2 + $0x60] sm:$0xff]
      %v4184 = vld [vmem:[#allocation2 + $0x68] sm:$0xff]
      %v4185 = vld [vmem:[#allocation2 + $0x70] sm:$0xff]
      %v4186 = vld [vmem:[#allocation2 + $0x78] sm:$0xff]
      %v4187 = vld [vmem:[#allocation2 + $0x80] sm:$0xff]
      %v4188 = vld [vmem:[#allocation2 + $0x88] sm:$0xff]
      %v4189 = vld [vmem:[#allocation2 + $0x90] sm:$0xff]
      %v4190 = vld [vmem:[#allocation2 + $0x98] sm:$0xff]
      %v4191 = vld [vmem:[#allocation2 + $0xa0] sm:$0xff]
      %v4192 = vld [vmem:[#allocation2 + $0xa8] sm:$0xff]
      %v4193 = vld [vmem:[#allocation2 + $0xb0] sm:$0xff]
      %v4194 = vld [vmem:[#allocation2 + $0xb8] sm:$0xff]
      %v4195 = vld [vmem:[#allocation2 + $0xc0] sm:$0xff]
      %v4196 = vld [vmem:[#allocation2 + $0xc8] sm:$0xff]
      %v4197 = vld [vmem:[#allocation2 + $0xd0] sm:$0xff]
      %v4198 = vld [vmem:[#allocation2 + $0xd8] sm:$0xff]
      %v4199 = vld [vmem:[#allocation2 + $0xe0] sm:$0xff]
      %v4200 = vld [vmem:[#allocation2 + $0xe8] sm:$0xff]
      %v4201 = vld [vmem:[#allocation2 + $0xf0] sm:$0xff]
      %v4202 = vld [vmem:[#allocation2 + $0xf8] sm:$0xff]
      %v4203 = vld [vmem:[#allocation2 + $0x100] sm:$0xff]
      %v4204 = vld [vmem:[#allocation2 + $0x108] sm:$0xff]
      %v4205 = vld [vmem:[#allocation2 + $0x110] sm:$0xff]
      %v4206 = vld [vmem:[#allocation2 + $0x118] sm:$0xff]
      %v4207 = vld [vmem:[#allocation2 + $0x120] sm:$0xff]
      %v4208 = vld [vmem:[#allocation2 + $0x128] sm:$0xff]
      %v4209 = vld [vmem:[#allocation2 + $0x130] sm:$0xff]
      %v4210 = vld [vmem:[#allocation2 + $0x138] sm:$0xff]
      %v4211 = vld [vmem:[#allocation2 + $0x140] sm:$0xff]
      %v4212 = vld [vmem:[#allocation2 + $0x148] sm:$0xff]
      %v4213 = vld [vmem:[#allocation2 + $0x150] sm:$0xff]
      %v4214 = vld [vmem:[#allocation2 + $0x158] sm:$0xff]
      %v4215 = vld [vmem:[#allocation2 + $0x160] sm:$0xff]
      %v4216 = vld [vmem:[#allocation2 + $0x168] sm:$0xff]
      %v4217 = vld [vmem:[#allocation2 + $0x170] sm:$0xff]
      %v4218 = vld [vmem:[#allocation2 + $0x178] sm:$0xff]
      %v4219 = vld [vmem:[#allocation2 + $0x180] sm:$0xff]
      %v4220 = vld [vmem:[#allocation2 + $0x188] sm:$0xff]
      %v4221 = vld [vmem:[#allocation2 + $0x190] sm:$0xff]
      %v4222 = vld [vmem:[#allocation2 + $0x198] sm:$0xff]
      %v4223 = vld [vmem:[#allocation2 + $0x1a0] sm:$0xff]
      %v4224 = vld [vmem:[#allocation2 + $0x1a8] sm:$0xff]
      %v4225 = vld [vmem:[#allocation2 + $0x1b0] sm:$0xff]
      %v4226 = vld [vmem:[#allocation2 + $0x1b8] sm:$0xff]
      %v4227 = vld [vmem:[#allocation2 + $0x1c0] sm:$0xff]
      %v4228 = vld [vmem:[#allocation2 + $0x1c8] sm:$0xff]
      %v4229 = vld [vmem:[#allocation2 + $0x1d0] sm:$0xff]
      %v4230 = vld [vmem:[#allocation2 + $0x1d8] sm:$0xff]
      %v4231 = vld [vmem:[#allocation2 + $0x1e0] sm:$0xff]
      %v4232 = vld [vmem:[#allocation2 + $0x1e8] sm:$0xff]
      %v4233 = vld [vmem:[#allocation2 + $0x1f0] sm:$0xff]
      %v4234 = vld [vmem:[#allocation2 + $0x1f8] sm:$0xff]
      %v4235 = vld [vmem:[#allocation2 + $0x200] sm:$0xff]
      %v4236 = vld [vmem:[#allocation2 + $0x208] sm:$0xff]
      %v4237 = vld [vmem:[#allocation2 + $0x210] sm:$0xff]
      %v4238 = vld [vmem:[#allocation2 + $0x218] sm:$0xff]
      %v4239 = vld [vmem:[#allocation2 + $0x220] sm:$0xff]
      %v4240 = vld [vmem:[#allocation2 + $0x228] sm:$0xff]
      %v4241 = vld [vmem:[#allocation2 + $0x230] sm:$0xff]
      %v4242 = vld [vmem:[#allocation2 + $0x238] sm:$0xff]
      %v4243 = vld [vmem:[#allocation2 + $0x240] sm:$0xff]
      %v4244 = vld [vmem:[#allocation2 + $0x248] sm:$0xff]
      %v4245 = vld [vmem:[#allocation2 + $0x250] sm:$0xff]
      %v4246 = vld [vmem:[#allocation2 + $0x258] sm:$0xff]
      %v4247 = vld [vmem:[#allocation2 + $0x260] sm:$0xff]
      %v4248 = vld [vmem:[#allocation2 + $0x268] sm:$0xff]
      %v4249 = vld [vmem:[#allocation2 + $0x270] sm:$0xff]
      %v4250 = vld [vmem:[#allocation2 + $0x278] sm:$0xff]
      %v4251 = vld [vmem:[#allocation2 + $0x280] sm:$0xff]
      %v4252 = vld [vmem:[#allocation2 + $0x288] sm:$0xff]
      %v4253 = vld [vmem:[#allocation2 + $0x290] sm:$0xff]
      %v4254 = vld [vmem:[#allocation2 + $0x298] sm:$0xff]
      %v4255 = vld [vmem:[#allocation2 + $0x2a0] sm:$0xff]
      %v4256 = vld [vmem:[#allocation2 + $0x2a8] sm:$0xff]
      %v4257 = vld [vmem:[#allocation2 + $0x2b0] sm:$0xff]
      %v4258 = vld [vmem:[#allocation2 + $0x2b8] sm:$0xff]
      %v4259 = vld [vmem:[#allocation2 + $0x2c0] sm:$0xff]
      %v4260 = vld [vmem:[#allocation2 + $0x2c8] sm:$0xff]
      %v4261 = vld [vmem:[#allocation2 + $0x2d0] sm:$0xff]
      %v4262 = vld [vmem:[#allocation2 + $0x2d8] sm:$0xff]
      %v4263 = vld [vmem:[#allocation2 + $0x2e0] sm:$0xff]
      %v4264 = vld [vmem:[#allocation2 + $0x2e8] sm:$0xff]
      %v4265 = vld [vmem:[#allocation2 + $0x2f0] sm:$0xff]
      %v4266 = vld [vmem:[#allocation2 + $0x2f8] sm:$0xff]
      %v4267 = vld [vmem:[#allocation2 + $0x300] sm:$0xff]
      %v4268 = vld [vmem:[#allocation2 + $0x308] sm:$0xff]
      %v4269 = vld [vmem:[#allocation2 + $0x310] sm:$0xff]
      %v4270 = vld [vmem:[#allocation2 + $0x318] sm:$0xff]
      %v4271 = vld [vmem:[#allocation2 + $0x320] sm:$0xff]
      %v4272 = vld [vmem:[#allocation2 + $0x328] sm:$0xff]
      %v4273 = vld [vmem:[#allocation2 + $0x330] sm:$0xff]
      %v4274 = vld [vmem:[#allocation2 + $0x338] sm:$0xff]
      %v4275 = vld [vmem:[#allocation2 + $0x340] sm:$0xff]
      %v4276 = vld [vmem:[#allocation2 + $0x348] sm:$0xff]
      %v4277 = vld [vmem:[#allocation2 + $0x350] sm:$0xff]
      %v4278 = vld [vmem:[#allocation2 + $0x358] sm:$0xff]
      %v4279 = vld [vmem:[%s5] sm:$0xff]
      %4281 = vset.pattern.permute.xlu0 0
      %4282 = vperm.xlu0 %4281, %v4279
      %v4283 = vpop.permute.xlu0 %4282
      %v4286 = vsel %vm1649, %v4170, 0
      %4288 = vmatprep.subr.mxu0 %v4172
      %4289 = vmatpush1.msra.mxu0 %v4171
      %4290 = vmatprep.subr.mxu0 %v4176
      %4291 = vmatpush1.msra.mxu0 %v4175
      %4292 = vmatprep.subr.mxu0 %v4180
      %4293 = vmatpush1.msra.mxu0 %v4179
      %4294 = vmatprep.subr.mxu0 %v4184
      %4295 = vmatpush1.msra.mxu0 %v4183
      %4296 = vmatprep.subr.mxu0 %v4188
      %4297 = vmatpush1.msra.mxu0 %v4187
      %4298 = vmatprep.subr.mxu0 %v4192
      %4299 = vmatpush1.msra.mxu0 %v4191
      %4300 = vmatprep.subr.mxu0 %v4196
      %4301 = vmatpush1.msra.mxu0 %v4195
      %4302 = vmatprep.subr.mxu0 %v4200
      %4303 = vmatpush1.msra.mxu0 %v4199
      %4304 = vmatprep.subr.mxu0 %v4204
      %4305 = vmatpush1.msra.mxu0 %v4203
      %4306 = vmatprep.subr.mxu0 %v4208
      %4307 = vmatpush1.msra.mxu0 %v4207
      %4308 = vmatprep.subr.mxu0 %v4212
      %4309 = vmatpush1.msra.mxu0 %v4211
      %4310 = vmatprep.subr.mxu0 %v4216
      %4311 = vmatpush1.msra.mxu0 %v4215
      %4312 = vmatprep.subr.mxu0 %v4220
      %4313 = vmatpush1.msra.mxu0 %v4219
      %4314 = vmatprep.subr.mxu0 %v4224
      %4315 = vmatpush1.msra.mxu0 %v4223
      %4316 = vmatprep.subr.mxu0 %v4228
      %4317 = vmatpush1.msra.mxu0 %v4227
      %4318 = vmatprep.subr.mxu0 %v4232
      %4319 = vmatpush1.msra.mxu0 %v4231
      %4320 = vmatprep.subr.mxu0 %v4236
      %4321 = vmatpush1.msra.mxu0 %v4235
      %4322 = vmatprep.subr.mxu0 %v4240
      %4323 = vmatpush1.msra.mxu0 %v4239
      %4324 = vmatprep.subr.mxu0 %v4244
      %4325 = vmatpush1.msra.mxu0 %v4243
      %4326 = vmatprep.subr.mxu0 %v4248
      %4327 = vmatpush1.msra.mxu0 %v4247
      %4328 = vmatprep.subr.mxu0 %v4252
      %4329 = vmatpush1.msra.mxu0 %v4251
      %4330 = vmatprep.subr.mxu0 %v4256
      %4331 = vmatpush1.msra.mxu0 %v4255
      %4332 = vmatprep.subr.mxu0 %v4260
      %4333 = vmatpush1.msra.mxu0 %v4259
      %4334 = vmatprep.subr.mxu0 %v4264
      %4335 = vmatpush1.msra.mxu0 %v4263
      %4336 = vmatprep.subr.mxu0 %v4268
      %4337 = vmatpush1.msra.mxu0 %v4267
      %4338 = vmatprep.subr.mxu0 %v4272
      %4339 = vmatpush1.msra.mxu0 %v4271
      %4340 = vmatprep.subr.mxu0 %v4276
      %4341 = vmatpush1.msra.mxu0 %v4275
      %4342 = vmatprep.subr.mxu0 0.0
      %4343 = vmatpush1.msra.mxu0 0.0
      %4344 = vmatprep.subr.mxu0 0.0
      %4345 = vmatpush1.msra.mxu0 0.0
      %4346 = vmatprep.subr.mxu0 0.0
      %4347 = vmatpush1.msra.mxu0 0.0
      %4348 = vmatprep.subr.mxu0 0.0
      %4349 = vmatpush1.msra.mxu0 0.0
      %4350 = vmatprep.subr.mxu0 0.0
      %4351 = vmatpush1.msra.mxu0 0.0
      %4352 = vmatprep.mubr.f32.mxu0 %v4286
      %4353 = vmatmul.mubr.f32.gmra.mrb[0].mxu0 %v4169
      %v4354 = vpop.f32.mrb[0].mxu0
      %v4355 = vadd.f32 %v4283, %v4354
      %v4356 = vpop.f32.mrb[0].mxu0
      %v4357 = vadd.f32 %v4283, %v4356
      %4358 = vdwg.mxu0
      %4359 = vmatprep.subr.mxu0 %v4174
      %4360 = vmatpush1.msra.mxu0 %v4173
      %4361 = vmatprep.subr.mxu0 %v4178
      %4362 = vmatpush1.msra.mxu0 %v4177
      %4363 = vmatprep.subr.mxu0 %v4182
      %4364 = vmatpush1.msra.mxu0 %v4181
      %4365 = vmatprep.subr.mxu0 %v4186
      %4366 = vmatpush1.msra.mxu0 %v4185
      %4367 = vmatprep.subr.mxu0 %v4190
      %4368 = vmatpush1.msra.mxu0 %v4189
      %4369 = vmatprep.subr.mxu0 %v4194
      %4370 = vmatpush1.msra.mxu0 %v4193
      %4371 = vmatprep.subr.mxu0 %v4198
      %4372 = vmatpush1.msra.mxu0 %v4197
      %4373 = vmatprep.subr.mxu0 %v4202
      %4374 = vmatpush1.msra.mxu0 %v4201
      %4375 = vmatprep.subr.mxu0 %v4206
      %4376 = vmatpush1.msra.mxu0 %v4205
      %4377 = vmatprep.subr.mxu0 %v4210
      %4378 = vmatpush1.msra.mxu0 %v4209
      %4379 = vmatprep.subr.mxu0 %v4214
      %4380 = vmatpush1.msra.mxu0 %v4213
      %4381 = vmatprep.subr.mxu0 %v4218
      %4382 = vmatpush1.msra.mxu0 %v4217
      %4383 = vmatprep.subr.mxu0 %v4222
      %4384 = vmatpush1.msra.mxu0 %v4221
      %4385 = vmatprep.subr.mxu0 %v4226
      %4386 = vmatpush1.msra.mxu0 %v4225
      %4387 = vmatprep.subr.mxu0 %v4230
      %4388 = vmatpush1.msra.mxu0 %v4229
      %4389 = vmatprep.subr.mxu0 %v4234
      %4390 = vmatpush1.msra.mxu0 %v4233
      %4391 = vmatprep.subr.mxu0 %v4238
      %4392 = vmatpush1.msra.mxu0 %v4237
      %4393 = vmatprep.subr.mxu0 %v4242
      %4394 = vmatpush1.msra.mxu0 %v4241
      %4395 = vmatprep.subr.mxu0 %v4246
      %4396 = vmatpush1.msra.mxu0 %v4245
      %4397 = vmatprep.subr.mxu0 %v4250
      %4398 = vmatpush1.msra.mxu0 %v4249
      %4399 = vmatprep.subr.mxu0 %v4254
      %4400 = vmatpush1.msra.mxu0 %v4253
      %4401 = vmatprep.subr.mxu0 %v4258
      %4402 = vmatpush1.msra.mxu0 %v4257
      %4403 = vmatprep.subr.mxu0 %v4262
      %4404 = vmatpush1.msra.mxu0 %v4261
      %4405 = vmatprep.subr.mxu0 %v4266
      %4406 = vmatpush1.msra.mxu0 %v4265
      %4407 = vmatprep.subr.mxu0 %v4270
      %4408 = vmatpush1.msra.mxu0 %v4269
      %4409 = vmatprep.subr.mxu0 %v4274
      %4410 = vmatpush1.msra.mxu0 %v4273
      %4411 = vmatprep.subr.mxu0 %v4278
      %4412 = vmatpush1.msra.mxu0 %v4277
      %4413 = vmatprep.subr.mxu0 0.0
      %4414 = vmatpush1.msra.mxu0 0.0
      %4415 = vmatprep.subr.mxu0 0.0
      %4416 = vmatpush1.msra.mxu0 0.0
      %4417 = vmatprep.subr.mxu0 0.0
      %4418 = vmatpush1.msra.mxu0 0.0
      %4419 = vmatprep.subr.mxu0 0.0
      %4420 = vmatpush1.msra.mxu0 0.0
      %4421 = vmatprep.subr.mxu0 0.0
      %4422 = vmatpush1.msra.mxu0 0.0
      %4423 = vmatprep.mubr.f32.mxu0 %v4286
      %4424 = vmatmul.mubr.f32.gmra.mrb[0].mxu0 %v4169
      %v4425 = vpop.f32.mrb[0].mxu0
      %v4426 = vadd.f32 %v4283, %v4425
      %v4427 = vpop.f32.mrb[0].mxu0
      %v4428 = vadd.f32 %v4283, %v4427
      %4429 = vdwg.mxu0
      %v4430 = vadd.f32 %v4355, %v4357
      %v4431 = vadd.f32 %v4430, %v4426
      %v4432 = vadd.f32 %v4431, %v4428
      %4433 = vadd.xlane.f32.xlu0 %v4432
      %v4434 = vpop.xlane.xlu0 %4433
      %v4435 = vmul.f32 %v4434, %v1800
      %v4436 = vsub.f32 %v4355, %v4435
      %v4437 = vsub.f32 %v4357, %v4435
      %v4438 = vsub.f32 %v4426, %v4435
      %v4439 = vsub.f32 %v4428, %v4435
      %v4440 = vmul.f32 %v4436, %v4436
      %v4441 = vmul.f32 %v4437, %v4437
      %v4442 = vmul.f32 %v4438, %v4438
      %v4443 = vmul.f32 %v4439, %v4439
      %v4444 = vadd.f32 %v4440, %v4441
      %v4445 = vadd.f32 %v4444, %v4442
      %v4446 = vadd.f32 %v4445, %v4443
      %4447 = vadd.xlane.f32.xlu0 %v4446
      %v4448 = vpop.xlane.xlu0 %4447
      %v4449 = vmul.f32 %v4448, %v1800
      %v4450 = vadd.f32 %v4449, 1e-05
      %v4451 = vrsqrt.pop %v4450
      %v4452 = vmul.f32 %v4436, %v4451
      %v4453 = vmul.f32 %v4437, %v4451
      %v4454 = vmul.f32 %v4438, %v4451
      %v4455 = vmul.f32 %v4439, %v4451
      %vm4456 = vcmp.ge.f32.partialorder %v4452, 0.0
      %vm4457 = vcmp.ge.f32.partialorder %v4453, 0.0
      %vm4458 = vcmp.ge.f32.partialorder %v4454, 0.0
      %vm4459 = vcmp.ge.f32.partialorder %v4455, 0.0
      %v4460 = vmul.f32 %v4452, 0.01
      %v4461 = vmul.f32 %v4453, 0.01
      %v4462 = vmul.f32 %v4454, 0.01
      %v4463 = vmul.f32 %v4455, 0.01
      %v4464 = vsel %vm4456, %v4452, %v4460
      %v4465 = vsel %vm4457, %v4453, %v4461
      %v4466 = vsel %vm4458, %v4454, %v4462
      %v4467 = vsel %vm4459, %v4455, %v4463
      %4468 = vrot.lane.b32.xlu0 %v4464, 73
      %v4469 = vpop.permute.xlu0 %4468
      %4470 = vrot.lane.b32.xlu0 %v4465, 73
      %v4471 = vpop.permute.xlu0 %4470
      %4472 = vrot.lane.b32.xlu0 %v4466, 73
      %v4473 = vpop.permute.xlu0 %4472
      %4474 = vrot.lane.b32.xlu0 %v4467, 73
      %v4475 = vpop.permute.xlu0 %4474
      %v4476 = vsel %vm484, %v4473, %v4475
      %v4477 = vsel %vm484, %v4471, %v4473
      %v4478 = vsel %vm484, %v4469, %v4471
      %v4479 = vsel %vm484, %v4475, %v4469
      %v4480 = vld [vmem:[%s1] ss:$8 sm:$0xf]
      %v4482 = vlaneseq
      %v4483 = vshrl.u32 %v4482, 7
      %v4484 = vsub.s32 0, %v4483
      %v4485 = vrot.slane %v4480, %v4484
      %v4486 = vlaneseq
      %v4487 = vshrl.u32 %v4486, 7
      %v4488 = vsub.s32 1, %v4487
      %v4489 = vrot.slane %v4480, %v4488
      %v4490 = vlaneseq
      %v4491 = vshrl.u32 %v4490, 7
      %v4492 = vsub.s32 2, %v4491
      %v4493 = vrot.slane %v4480, %v4492
      %v4494 = vlaneseq
      %v4495 = vshrl.u32 %v4494, 7
      %v4496 = vsub.s32 3, %v4495
      %v4497 = vrot.slane %v4480, %v4496
      %v4502 = vmul.f32 %v4479, %v4485
      %v4503 = vmul.f32 %v4478, %v4489
      %v4504 = vmul.f32 %v4477, %v4493
      %v4505 = vmul.f32 %v4476, %v4497
      %4506 = vst [vmem:[#allocation2] sm:$0xff] %v4502
      %4507 = vst [vmem:[#allocation2 + $0x8] sm:$0xff] %v4503
      %4508 = vst [vmem:[#allocation2 + $0x10] sm:$0xff] %v4504
      %4509 = vst [vmem:[#allocation2 + $0x18] sm:$0xff] %v4505
      %4510 = vrot.lane.b32.xlu0 %v4464, 72
      %v4511 = vpop.permute.xlu0 %4510
      %4512 = vrot.lane.b32.xlu0 %v4465, 72
      %v4513 = vpop.permute.xlu0 %4512
      %4514 = vrot.lane.b32.xlu0 %v4466, 72
      %v4515 = vpop.permute.xlu0 %4514
      %4516 = vrot.lane.b32.xlu0 %v4467, 72
      %v4517 = vpop.permute.xlu0 %4516
      %v4518 = vsel %vm527, %v4515, %v4517
      %v4519 = vsel %vm527, %v4513, %v4515
      %v4520 = vsel %vm527, %v4511, %v4513
      %v4521 = vsel %vm527, %v4517, %v4511
      %v4522 = vld [vmem:[%s532] ss:$8 sm:$0xf]
      %v4524 = vlaneseq
      %v4525 = vshrl.u32 %v4524, 7
      %v4526 = vsub.s32 0, %v4525
      %v4527 = vrot.slane %v4522, %v4526
      %v4528 = vlaneseq
      %v4529 = vshrl.u32 %v4528, 7
      %v4530 = vsub.s32 1, %v4529
      %v4531 = vrot.slane %v4522, %v4530
      %v4532 = vlaneseq
      %v4533 = vshrl.u32 %v4532, 7
      %v4534 = vsub.s32 2, %v4533
      %v4535 = vrot.slane %v4522, %v4534
      %v4536 = vlaneseq
      %v4537 = vshrl.u32 %v4536, 7
      %v4538 = vsub.s32 3, %v4537
      %v4539 = vrot.slane %v4522, %v4538
      %v4544 = vmul.f32 %v4521, %v4527
      %v4545 = vmul.f32 %v4520, %v4531
      %v4546 = vmul.f32 %v4519, %v4535
      %v4547 = vmul.f32 %v4518, %v4539
      %4548 = vst [vmem:[#allocation2 + $0x20] sm:$0xff] %v4544
      %4549 = vst [vmem:[#allocation2 + $0x28] sm:$0xff] %v4545
      %4550 = vst [vmem:[#allocation2 + $0x30] sm:$0xff] %v4546
      %4551 = vst [vmem:[#allocation2 + $0x38] sm:$0xff] %v4547
      %4552 = vrot.lane.b32.xlu0 %v4464, 71
      %v4553 = vpop.permute.xlu0 %4552
      %4554 = vrot.lane.b32.xlu0 %v4465, 71
      %v4555 = vpop.permute.xlu0 %4554
      %4556 = vrot.lane.b32.xlu0 %v4466, 71
      %v4557 = vpop.permute.xlu0 %4556
      %4558 = vrot.lane.b32.xlu0 %v4467, 71
      %v4559 = vpop.permute.xlu0 %4558
      %v4560 = vsel %vm571, %v4557, %v4559
      %v4561 = vsel %vm571, %v4555, %v4557
      %v4562 = vsel %vm571, %v4553, %v4555
      %v4563 = vsel %vm571, %v4559, %v4553
      %v4564 = vld [vmem:[%s576] ss:$8 sm:$0xf]
      %v4566 = vlaneseq
      %v4567 = vshrl.u32 %v4566, 7
      %v4568 = vsub.s32 0, %v4567
      %v4569 = vrot.slane %v4564, %v4568
      %v4570 = vlaneseq
      %v4571 = vshrl.u32 %v4570, 7
      %v4572 = vsub.s32 1, %v4571
      %v4573 = vrot.slane %v4564, %v4572
      %v4574 = vlaneseq
      %v4575 = vshrl.u32 %v4574, 7
      %v4576 = vsub.s32 2, %v4575
      %v4577 = vrot.slane %v4564, %v4576
      %v4578 = vlaneseq
      %v4579 = vshrl.u32 %v4578, 7
      %v4580 = vsub.s32 3, %v4579
      %v4581 = vrot.slane %v4564, %v4580
      %v4586 = vmul.f32 %v4563, %v4569
      %v4587 = vmul.f32 %v4562, %v4573
      %v4588 = vmul.f32 %v4561, %v4577
      %v4589 = vmul.f32 %v4560, %v4581
      %4590 = vst [vmem:[#allocation2 + $0x40] sm:$0xff] %v4586
      %4591 = vst [vmem:[#allocation2 + $0x48] sm:$0xff] %v4587
      %4592 = vst [vmem:[#allocation2 + $0x50] sm:$0xff] %v4588
      %4593 = vst [vmem:[#allocation2 + $0x58] sm:$0xff] %v4589
      %4594 = vrot.lane.b32.xlu0 %v4464, 65
      %v4595 = vpop.permute.xlu0 %4594
      %4596 = vrot.lane.b32.xlu0 %v4465, 65
      %v4597 = vpop.permute.xlu0 %4596
      %4598 = vrot.lane.b32.xlu0 %v4466, 65
      %v4599 = vpop.permute.xlu0 %4598
      %4600 = vrot.lane.b32.xlu0 %v4467, 65
      %v4601 = vpop.permute.xlu0 %4600
      %v4602 = vsel %vm615, %v4599, %v4601
      %v4603 = vsel %vm615, %v4597, %v4599
      %v4604 = vsel %vm615, %v4595, %v4597
      %v4605 = vsel %vm615, %v4601, %v4595
      %v4606 = vld [vmem:[%s620] ss:$8 sm:$0xf]
      %v4608 = vlaneseq
      %v4609 = vshrl.u32 %v4608, 7
      %v4610 = vsub.s32 0, %v4609
      %v4611 = vrot.slane %v4606, %v4610
      %v4612 = vlaneseq
      %v4613 = vshrl.u32 %v4612, 7
      %v4614 = vsub.s32 1, %v4613
      %v4615 = vrot.slane %v4606, %v4614
      %v4616 = vlaneseq
      %v4617 = vshrl.u32 %v4616, 7
      %v4618 = vsub.s32 2, %v4617
      %v4619 = vrot.slane %v4606, %v4618
      %v4620 = vlaneseq
      %v4621 = vshrl.u32 %v4620, 7
      %v4622 = vsub.s32 3, %v4621
      %v4623 = vrot.slane %v4606, %v4622
      %v4628 = vmul.f32 %v4605, %v4611
      %v4629 = vmul.f32 %v4604, %v4615
      %v4630 = vmul.f32 %v4603, %v4619
      %v4631 = vmul.f32 %v4602, %v4623
      %4632 = vst [vmem:[#allocation2 + $0x60] sm:$0xff] %v4628
      %4633 = vst [vmem:[#allocation2 + $0x68] sm:$0xff] %v4629
      %4634 = vst [vmem:[#allocation2 + $0x70] sm:$0xff] %v4630
      %4635 = vst [vmem:[#allocation2 + $0x78] sm:$0xff] %v4631
      %4636 = vrot.lane.b32.xlu0 %v4464, 64
      %v4637 = vpop.permute.xlu0 %4636
      %4638 = vrot.lane.b32.xlu0 %v4465, 64
      %v4639 = vpop.permute.xlu0 %4638
      %4640 = vrot.lane.b32.xlu0 %v4466, 64
      %v4641 = vpop.permute.xlu0 %4640
      %4642 = vrot.lane.b32.xlu0 %v4467, 64
      %v4643 = vpop.permute.xlu0 %4642
      %v4644 = vsel %vm659, %v4641, %v4643
      %v4645 = vsel %vm659, %v4639, %v4641
      %v4646 = vsel %vm659, %v4637, %v4639
      %v4647 = vsel %vm659, %v4643, %v4637
      %v4648 = vld [vmem:[%s664] ss:$8 sm:$0xf]
      %v4650 = vlaneseq
      %v4651 = vshrl.u32 %v4650, 7
      %v4652 = vsub.s32 0, %v4651
      %v4653 = vrot.slane %v4648, %v4652
      %v4654 = vlaneseq
      %v4655 = vshrl.u32 %v4654, 7
      %v4656 = vsub.s32 1, %v4655
      %v4657 = vrot.slane %v4648, %v4656
      %v4658 = vlaneseq
      %v4659 = vshrl.u32 %v4658, 7
      %v4660 = vsub.s32 2, %v4659
      %v4661 = vrot.slane %v4648, %v4660
      %v4662 = vlaneseq
      %v4663 = vshrl.u32 %v4662, 7
      %v4664 = vsub.s32 3, %v4663
      %v4665 = vrot.slane %v4648, %v4664
      %v4670 = vmul.f32 %v4647, %v4653
      %v4671 = vmul.f32 %v4646, %v4657
      %v4672 = vmul.f32 %v4645, %v4661
      %v4673 = vmul.f32 %v4644, %v4665
      %4674 = vst [vmem:[#allocation2 + $0x80] sm:$0xff] %v4670
      %4675 = vst [vmem:[#allocation2 + $0x88] sm:$0xff] %v4671
      %4676 = vst [vmem:[#allocation2 + $0x90] sm:$0xff] %v4672
      %4677 = vst [vmem:[#allocation2 + $0x98] sm:$0xff] %v4673
      %4678 = vrot.lane.b32.xlu0 %v4464, 63
      %v4679 = vpop.permute.xlu0 %4678
      %4680 = vrot.lane.b32.xlu0 %v4465, 63
      %v4681 = vpop.permute.xlu0 %4680
      %4682 = vrot.lane.b32.xlu0 %v4466, 63
      %v4683 = vpop.permute.xlu0 %4682
      %4684 = vrot.lane.b32.xlu0 %v4467, 63
      %v4685 = vpop.permute.xlu0 %4684
      %v4686 = vsel %vm703, %v4683, %v4685
      %v4687 = vsel %vm703, %v4681, %v4683
      %v4688 = vsel %vm703, %v4679, %v4681
      %v4689 = vsel %vm703, %v4685, %v4679
      %v4690 = vld [vmem:[%s708] ss:$8 sm:$0xf]
      %v4692 = vlaneseq
      %v4693 = vshrl.u32 %v4692, 7
      %v4694 = vsub.s32 0, %v4693
      %v4695 = vrot.slane %v4690, %v4694
      %v4696 = vlaneseq
      %v4697 = vshrl.u32 %v4696, 7
      %v4698 = vsub.s32 1, %v4697
      %v4699 = vrot.slane %v4690, %v4698
      %v4700 = vlaneseq
      %v4701 = vshrl.u32 %v4700, 7
      %v4702 = vsub.s32 2, %v4701
      %v4703 = vrot.slane %v4690, %v4702
      %v4704 = vlaneseq
      %v4705 = vshrl.u32 %v4704, 7
      %v4706 = vsub.s32 3, %v4705
      %v4707 = vrot.slane %v4690, %v4706
      %v4712 = vmul.f32 %v4689, %v4695
      %v4713 = vmul.f32 %v4688, %v4699
      %v4714 = vmul.f32 %v4687, %v4703
      %v4715 = vmul.f32 %v4686, %v4707
      %4716 = vst [vmem:[#allocation2 + $0xa0] sm:$0xff] %v4712
      %4717 = vst [vmem:[#allocation2 + $0xa8] sm:$0xff] %v4713
      %4718 = vst [vmem:[#allocation2 + $0xb0] sm:$0xff] %v4714
      %4719 = vst [vmem:[#allocation2 + $0xb8] sm:$0xff] %v4715
      %4720 = vrot.lane.b32.xlu0 %v4464, 57
      %v4721 = vpop.permute.xlu0 %4720
      %4722 = vrot.lane.b32.xlu0 %v4465, 57
      %v4723 = vpop.permute.xlu0 %4722
      %4724 = vrot.lane.b32.xlu0 %v4466, 57
      %v4725 = vpop.permute.xlu0 %4724
      %4726 = vrot.lane.b32.xlu0 %v4467, 57
      %v4727 = vpop.permute.xlu0 %4726
      %v4728 = vsel %vm747, %v4725, %v4727
      %v4729 = vsel %vm747, %v4723, %v4725
      %v4730 = vsel %vm747, %v4721, %v4723
      %v4731 = vsel %vm747, %v4727, %v4721
      %v4732 = vld [vmem:[%s752] ss:$8 sm:$0xf]
      %v4734 = vlaneseq
      %v4735 = vshrl.u32 %v4734, 7
      %v4736 = vsub.s32 0, %v4735
      %v4737 = vrot.slane %v4732, %v4736
      %v4738 = vlaneseq
      %v4739 = vshrl.u32 %v4738, 7
      %v4740 = vsub.s32 1, %v4739
      %v4741 = vrot.slane %v4732, %v4740
      %v4742 = vlaneseq
      %v4743 = vshrl.u32 %v4742, 7
      %v4744 = vsub.s32 2, %v4743
      %v4745 = vrot.slane %v4732, %v4744
      %v4746 = vlaneseq
      %v4747 = vshrl.u32 %v4746, 7
      %v4748 = vsub.s32 3, %v4747
      %v4749 = vrot.slane %v4732, %v4748
      %v4754 = vmul.f32 %v4731, %v4737
      %v4755 = vmul.f32 %v4730, %v4741
      %v4756 = vmul.f32 %v4729, %v4745
      %v4757 = vmul.f32 %v4728, %v4749
      %4758 = vst [vmem:[#allocation2 + $0xc0] sm:$0xff] %v4754
      %4759 = vst [vmem:[#allocation2 + $0xc8] sm:$0xff] %v4755
      %4760 = vst [vmem:[#allocation2 + $0xd0] sm:$0xff] %v4756
      %4761 = vst [vmem:[#allocation2 + $0xd8] sm:$0xff] %v4757
      %4762 = vrot.lane.b32.xlu0 %v4464, 56
      %v4763 = vpop.permute.xlu0 %4762
      %4764 = vrot.lane.b32.xlu0 %v4465, 56
      %v4765 = vpop.permute.xlu0 %4764
      %4766 = vrot.lane.b32.xlu0 %v4466, 56
      %v4767 = vpop.permute.xlu0 %4766
      %4768 = vrot.lane.b32.xlu0 %v4467, 56
      %v4769 = vpop.permute.xlu0 %4768
      %v4770 = vsel %vm791, %v4767, %v4769
      %v4771 = vsel %vm791, %v4765, %v4767
      %v4772 = vsel %vm791, %v4763, %v4765
      %v4773 = vsel %vm791, %v4769, %v4763
      %v4774 = vld [vmem:[%s796] ss:$8 sm:$0xf]
      %v4776 = vlaneseq
      %v4777 = vshrl.u32 %v4776, 7
      %v4778 = vsub.s32 0, %v4777
      %v4779 = vrot.slane %v4774, %v4778
      %v4780 = vlaneseq
      %v4781 = vshrl.u32 %v4780, 7
      %v4782 = vsub.s32 1, %v4781
      %v4783 = vrot.slane %v4774, %v4782
      %v4784 = vlaneseq
      %v4785 = vshrl.u32 %v4784, 7
      %v4786 = vsub.s32 2, %v4785
      %v4787 = vrot.slane %v4774, %v4786
      %v4788 = vlaneseq
      %v4789 = vshrl.u32 %v4788, 7
      %v4790 = vsub.s32 3, %v4789
      %v4791 = vrot.slane %v4774, %v4790
      %v4796 = vmul.f32 %v4773, %v4779
      %v4797 = vmul.f32 %v4772, %v4783
      %v4798 = vmul.f32 %v4771, %v4787
      %v4799 = vmul.f32 %v4770, %v4791
      %4800 = vst [vmem:[#allocation2 + $0xe0] sm:$0xff] %v4796
      %4801 = vst [vmem:[#allocation2 + $0xe8] sm:$0xff] %v4797
      %4802 = vst [vmem:[#allocation2 + $0xf0] sm:$0xff] %v4798
      %4803 = vst [vmem:[#allocation2 + $0xf8] sm:$0xff] %v4799
      %4804 = vrot.lane.b32.xlu0 %v4464, 55
      %v4805 = vpop.permute.xlu0 %4804
      %4806 = vrot.lane.b32.xlu0 %v4465, 55
      %v4807 = vpop.permute.xlu0 %4806
      %4808 = vrot.lane.b32.xlu0 %v4466, 55
      %v4809 = vpop.permute.xlu0 %4808
      %4810 = vrot.lane.b32.xlu0 %v4467, 55
      %v4811 = vpop.permute.xlu0 %4810
      %v4812 = vsel %vm835, %v4809, %v4811
      %v4813 = vsel %vm835, %v4807, %v4809
      %v4814 = vsel %vm835, %v4805, %v4807
      %v4815 = vsel %vm835, %v4811, %v4805
      %v4816 = vld [vmem:[%s840] ss:$8 sm:$0xf]
      %v4818 = vlaneseq
      %v4819 = vshrl.u32 %v4818, 7
      %v4820 = vsub.s32 0, %v4819
      %v4821 = vrot.slane %v4816, %v4820
      %v4822 = vlaneseq
      %v4823 = vshrl.u32 %v4822, 7
      %v4824 = vsub.s32 1, %v4823
      %v4825 = vrot.slane %v4816, %v4824
      %v4826 = vlaneseq
      %v4827 = vshrl.u32 %v4826, 7
      %v4828 = vsub.s32 2, %v4827
      %v4829 = vrot.slane %v4816, %v4828
      %v4830 = vlaneseq
      %v4831 = vshrl.u32 %v4830, 7
      %v4832 = vsub.s32 3, %v4831
      %v4833 = vrot.slane %v4816, %v4832
      %v4838 = vmul.f32 %v4815, %v4821
      %v4839 = vmul.f32 %v4814, %v4825
      %v4840 = vmul.f32 %v4813, %v4829
      %v4841 = vmul.f32 %v4812, %v4833
      %4842 = vst [vmem:[#allocation2 + $0x100] sm:$0xff] %v4838
      %4843 = vst [vmem:[#allocation2 + $0x108] sm:$0xff] %v4839
      %4844 = vst [vmem:[#allocation2 + $0x110] sm:$0xff] %v4840
      %4845 = vst [vmem:[#allocation2 + $0x118] sm:$0xff] %v4841
      %4846 = vrot.lane.b32.xlu0 %v4464, 9
      %v4847 = vpop.permute.xlu0 %4846
      %4848 = vrot.lane.b32.xlu0 %v4465, 9
      %v4849 = vpop.permute.xlu0 %4848
      %4850 = vrot.lane.b32.xlu0 %v4466, 9
      %v4851 = vpop.permute.xlu0 %4850
      %4852 = vrot.lane.b32.xlu0 %v4467, 9
      %v4853 = vpop.permute.xlu0 %4852
      %v4854 = vsel %vm879, %v4851, %v4853
      %v4855 = vsel %vm879, %v4849, %v4851
      %v4856 = vsel %vm879, %v4847, %v4849
      %v4857 = vsel %vm879, %v4853, %v4847
      %v4858 = vld [vmem:[%s884] ss:$8 sm:$0xf]
      %v4860 = vlaneseq
      %v4861 = vshrl.u32 %v4860, 7
      %v4862 = vsub.s32 0, %v4861
      %v4863 = vrot.slane %v4858, %v4862
      %v4864 = vlaneseq
      %v4865 = vshrl.u32 %v4864, 7
      %v4866 = vsub.s32 1, %v4865
      %v4867 = vrot.slane %v4858, %v4866
      %v4868 = vlaneseq
      %v4869 = vshrl.u32 %v4868, 7
      %v4870 = vsub.s32 2, %v4869
      %v4871 = vrot.slane %v4858, %v4870
      %v4872 = vlaneseq
      %v4873 = vshrl.u32 %v4872, 7
      %v4874 = vsub.s32 3, %v4873
      %v4875 = vrot.slane %v4858, %v4874
      %v4880 = vmul.f32 %v4857, %v4863
      %v4881 = vmul.f32 %v4856, %v4867
      %v4882 = vmul.f32 %v4855, %v4871
      %v4883 = vmul.f32 %v4854, %v4875
      %4884 = vst [vmem:[#allocation2 + $0x120] sm:$0xff] %v4880
      %4885 = vst [vmem:[#allocation2 + $0x128] sm:$0xff] %v4881
      %4886 = vst [vmem:[#allocation2 + $0x130] sm:$0xff] %v4882
      %4887 = vst [vmem:[#allocation2 + $0x138] sm:$0xff] %v4883
      %4888 = vrot.lane.b32.xlu0 %v4464, 8
      %v4889 = vpop.permute.xlu0 %4888
      %4890 = vrot.lane.b32.xlu0 %v4465, 8
      %v4891 = vpop.permute.xlu0 %4890
      %4892 = vrot.lane.b32.xlu0 %v4466, 8
      %v4893 = vpop.permute.xlu0 %4892
      %4894 = vrot.lane.b32.xlu0 %v4467, 8
      %v4895 = vpop.permute.xlu0 %4894
      %v4896 = vsel %vm923, %v4893, %v4895
      %v4897 = vsel %vm923, %v4891, %v4893
      %v4898 = vsel %vm923, %v4889, %v4891
      %v4899 = vsel %vm923, %v4895, %v4889
      %v4900 = vld [vmem:[%s928] ss:$8 sm:$0xf]
      %v4902 = vlaneseq
      %v4903 = vshrl.u32 %v4902, 7
      %v4904 = vsub.s32 0, %v4903
      %v4905 = vrot.slane %v4900, %v4904
      %v4906 = vlaneseq
      %v4907 = vshrl.u32 %v4906, 7
      %v4908 = vsub.s32 1, %v4907
      %v4909 = vrot.slane %v4900, %v4908
      %v4910 = vlaneseq
      %v4911 = vshrl.u32 %v4910, 7
      %v4912 = vsub.s32 2, %v4911
      %v4913 = vrot.slane %v4900, %v4912
      %v4914 = vlaneseq
      %v4915 = vshrl.u32 %v4914, 7
      %v4916 = vsub.s32 3, %v4915
      %v4917 = vrot.slane %v4900, %v4916
      %v4922 = vmul.f32 %v4899, %v4905
      %v4923 = vmul.f32 %v4898, %v4909
      %v4924 = vmul.f32 %v4897, %v4913
      %v4925 = vmul.f32 %v4896, %v4917
      %4926 = vst [vmem:[#allocation2 + $0x140] sm:$0xff] %v4922
      %4927 = vst [vmem:[#allocation2 + $0x148] sm:$0xff] %v4923
      %4928 = vst [vmem:[#allocation2 + $0x150] sm:$0xff] %v4924
      %4929 = vst [vmem:[#allocation2 + $0x158] sm:$0xff] %v4925
      %4930 = vrot.lane.b32.xlu0 %v4464, 7
      %v4931 = vpop.permute.xlu0 %4930
      %4932 = vrot.lane.b32.xlu0 %v4465, 7
      %v4933 = vpop.permute.xlu0 %4932
      %4934 = vrot.lane.b32.xlu0 %v4466, 7
      %v4935 = vpop.permute.xlu0 %4934
      %4936 = vrot.lane.b32.xlu0 %v4467, 7
      %v4937 = vpop.permute.xlu0 %4936
      %v4938 = vsel %vm967, %v4935, %v4937
      %v4939 = vsel %vm967, %v4933, %v4935
      %v4940 = vsel %vm967, %v4931, %v4933
      %v4941 = vsel %vm967, %v4937, %v4931
      %v4942 = vld [vmem:[%s972] ss:$8 sm:$0xf]
      %v4944 = vlaneseq
      %v4945 = vshrl.u32 %v4944, 7
      %v4946 = vsub.s32 0, %v4945
      %v4947 = vrot.slane %v4942, %v4946
      %v4948 = vlaneseq
      %v4949 = vshrl.u32 %v4948, 7
      %v4950 = vsub.s32 1, %v4949
      %v4951 = vrot.slane %v4942, %v4950
      %v4952 = vlaneseq
      %v4953 = vshrl.u32 %v4952, 7
      %v4954 = vsub.s32 2, %v4953
      %v4955 = vrot.slane %v4942, %v4954
      %v4956 = vlaneseq
      %v4957 = vshrl.u32 %v4956, 7
      %v4958 = vsub.s32 3, %v4957
      %v4959 = vrot.slane %v4942, %v4958
      %v4964 = vmul.f32 %v4941, %v4947
      %v4965 = vmul.f32 %v4940, %v4951
      %v4966 = vmul.f32 %v4939, %v4955
      %v4967 = vmul.f32 %v4938, %v4959
      %4968 = vst [vmem:[#allocation2 + $0x160] sm:$0xff] %v4964
      %4969 = vst [vmem:[#allocation2 + $0x168] sm:$0xff] %v4965
      %4970 = vst [vmem:[#allocation2 + $0x170] sm:$0xff] %v4966
      %4971 = vst [vmem:[#allocation2 + $0x178] sm:$0xff] %v4967
      %4972 = vrot.lane.b32.xlu0 %v4464, 1
      %v4973 = vpop.permute.xlu0 %4972
      %4974 = vrot.lane.b32.xlu0 %v4465, 1
      %v4975 = vpop.permute.xlu0 %4974
      %4976 = vrot.lane.b32.xlu0 %v4466, 1
      %v4977 = vpop.permute.xlu0 %4976
      %4978 = vrot.lane.b32.xlu0 %v4467, 1
      %v4979 = vpop.permute.xlu0 %4978
      %v4980 = vsel %vm1011, %v4977, %v4979
      %v4981 = vsel %vm1011, %v4975, %v4977
      %v4982 = vsel %vm1011, %v4973, %v4975
      %v4983 = vsel %vm1011, %v4979, %v4973
      %v4984 = vld [vmem:[%s1016] ss:$8 sm:$0xf]
      %v4986 = vlaneseq
      %v4987 = vshrl.u32 %v4986, 7
      %v4988 = vsub.s32 0, %v4987
      %v4989 = vrot.slane %v4984, %v4988
      %v4990 = vlaneseq
      %v4991 = vshrl.u32 %v4990, 7
      %v4992 = vsub.s32 1, %v4991
      %v4993 = vrot.slane %v4984, %v4992
      %v4994 = vlaneseq
      %v4995 = vshrl.u32 %v4994, 7
      %v4996 = vsub.s32 2, %v4995
      %v4997 = vrot.slane %v4984, %v4996
      %v4998 = vlaneseq
      %v4999 = vshrl.u32 %v4998, 7
      %v5000 = vsub.s32 3, %v4999
      %v5001 = vrot.slane %v4984, %v5000
      %v5006 = vmul.f32 %v4983, %v4989
      %v5007 = vmul.f32 %v4982, %v4993
      %v5008 = vmul.f32 %v4981, %v4997
      %v5009 = vmul.f32 %v4980, %v5001
      %5010 = vst [vmem:[#allocation2 + $0x180] sm:$0xff] %v5006
      %5011 = vst [vmem:[#allocation2 + $0x188] sm:$0xff] %v5007
      %5012 = vst [vmem:[#allocation2 + $0x190] sm:$0xff] %v5008
      %5013 = vst [vmem:[#allocation2 + $0x198] sm:$0xff] %v5009
      %v5014 = vld [vmem:[%s1047] ss:$8 sm:$0xf]
      %v5016 = vlaneseq
      %v5017 = vshrl.u32 %v5016, 7
      %v5018 = vsub.s32 0, %v5017
      %v5019 = vrot.slane %v5014, %v5018
      %v5020 = vlaneseq
      %v5021 = vshrl.u32 %v5020, 7
      %v5022 = vsub.s32 1, %v5021
      %v5023 = vrot.slane %v5014, %v5022
      %v5024 = vlaneseq
      %v5025 = vshrl.u32 %v5024, 7
      %v5026 = vsub.s32 2, %v5025
      %v5027 = vrot.slane %v5014, %v5026
      %v5028 = vlaneseq
      %v5029 = vshrl.u32 %v5028, 7
      %v5030 = vsub.s32 3, %v5029
      %v5031 = vrot.slane %v5014, %v5030
      %v5036 = vmul.f32 %v4464, %v5019
      %v5037 = vmul.f32 %v4465, %v5023
      %v5038 = vmul.f32 %v4466, %v5027
      %v5039 = vmul.f32 %v4467, %v5031
      %5040 = vst [vmem:[#allocation2 + $0x1a0] sm:$0xff] %v5036
      %5041 = vst [vmem:[#allocation2 + $0x1a8] sm:$0xff] %v5037
      %5042 = vst [vmem:[#allocation2 + $0x1b0] sm:$0xff] %v5038
      %5043 = vst [vmem:[#allocation2 + $0x1b8] sm:$0xff] %v5039
      %5044 = vrot.lane.b32.xlu0 %v4464, 127
      %v5045 = vpop.permute.xlu0 %5044
      %5046 = vrot.lane.b32.xlu0 %v4465, 127
      %v5047 = vpop.permute.xlu0 %5046
      %5048 = vrot.lane.b32.xlu0 %v4466, 127
      %v5049 = vpop.permute.xlu0 %5048
      %5050 = vrot.lane.b32.xlu0 %v4467, 127
      %v5051 = vpop.permute.xlu0 %5050
      %v5052 = vsel %vm1086, %v5049, %v5051
      %v5053 = vsel %vm1086, %v5047, %v5049
      %v5054 = vsel %vm1086, %v5045, %v5047
      %v5055 = vsel %vm1086, %v5051, %v5045
      %v5056 = vld [vmem:[%s1091] ss:$8 sm:$0xf]
      %v5058 = vlaneseq
      %v5059 = vshrl.u32 %v5058, 7
      %v5060 = vsub.s32 0, %v5059
      %v5061 = vrot.slane %v5056, %v5060
      %v5062 = vlaneseq
      %v5063 = vshrl.u32 %v5062, 7
      %v5064 = vsub.s32 1, %v5063
      %v5065 = vrot.slane %v5056, %v5064
      %v5066 = vlaneseq
      %v5067 = vshrl.u32 %v5066, 7
      %v5068 = vsub.s32 2, %v5067
      %v5069 = vrot.slane %v5056, %v5068
      %v5070 = vlaneseq
      %v5071 = vshrl.u32 %v5070, 7
      %v5072 = vsub.s32 3, %v5071
      %v5073 = vrot.slane %v5056, %v5072
      %v5078 = vmul.f32 %v5054, %v5061
      %v5079 = vmul.f32 %v5053, %v5065
      %v5080 = vmul.f32 %v5052, %v5069
      %v5081 = vmul.f32 %v5055, %v5073
      %5082 = vst [vmem:[#allocation2 + $0x1c0] sm:$0xff] %v5078
      %5083 = vst [vmem:[#allocation2 + $0x1c8] sm:$0xff] %v5079
      %5084 = vst [vmem:[#allocation2 + $0x1d0] sm:$0xff] %v5080
      %5085 = vst [vmem:[#allocation2 + $0x1d8] sm:$0xff] %v5081
      %5086 = vrot.lane.b32.xlu0 %v4464, 121
      %v5087 = vpop.permute.xlu0 %5086
      %5088 = vrot.lane.b32.xlu0 %v4465, 121
      %v5089 = vpop.permute.xlu0 %5088
      %5090 = vrot.lane.b32.xlu0 %v4466, 121
      %v5091 = vpop.permute.xlu0 %5090
      %5092 = vrot.lane.b32.xlu0 %v4467, 121
      %v5093 = vpop.permute.xlu0 %5092
      %v5094 = vsel %vm1130, %v5091, %v5093
      %v5095 = vsel %vm1130, %v5089, %v5091
      %v5096 = vsel %vm1130, %v5087, %v5089
      %v5097 = vsel %vm1130, %v5093, %v5087
      %v5098 = vld [vmem:[%s1135] ss:$8 sm:$0xf]
      %v5100 = vlaneseq
      %v5101 = vshrl.u32 %v5100, 7
      %v5102 = vsub.s32 0, %v5101
      %v5103 = vrot.slane %v5098, %v5102
      %v5104 = vlaneseq
      %v5105 = vshrl.u32 %v5104, 7
      %v5106 = vsub.s32 1, %v5105
      %v5107 = vrot.slane %v5098, %v5106
      %v5108 = vlaneseq
      %v5109 = vshrl.u32 %v5108, 7
      %v5110 = vsub.s32 2, %v5109
      %v5111 = vrot.slane %v5098, %v5110
      %v5112 = vlaneseq
      %v5113 = vshrl.u32 %v5112, 7
      %v5114 = vsub.s32 3, %v5113
      %v5115 = vrot.slane %v5098, %v5114
      %v5120 = vmul.f32 %v5096, %v5103
      %v5121 = vmul.f32 %v5095, %v5107
      %v5122 = vmul.f32 %v5094, %v5111
      %v5123 = vmul.f32 %v5097, %v5115
      %5124 = vst [vmem:[#allocation2 + $0x1e0] sm:$0xff] %v5120
      %5125 = vst [vmem:[#allocation2 + $0x1e8] sm:$0xff] %v5121
      %5126 = vst [vmem:[#allocation2 + $0x1f0] sm:$0xff] %v5122
      %5127 = vst [vmem:[#allocation2 + $0x1f8] sm:$0xff] %v5123
      %5128 = vrot.lane.b32.xlu0 %v4464, 120
      %v5129 = vpop.permute.xlu0 %5128
      %5130 = vrot.lane.b32.xlu0 %v4465, 120
      %v5131 = vpop.permute.xlu0 %5130
      %5132 = vrot.lane.b32.xlu0 %v4466, 120
      %v5133 = vpop.permute.xlu0 %5132
      %5134 = vrot.lane.b32.xlu0 %v4467, 120
      %v5135 = vpop.permute.xlu0 %5134
      %v5136 = vsel %vm1174, %v5133, %v5135
      %v5137 = vsel %vm1174, %v5131, %v5133
      %v5138 = vsel %vm1174, %v5129, %v5131
      %v5139 = vsel %vm1174, %v5135, %v5129
      %v5140 = vld [vmem:[%s1179] ss:$8 sm:$0xf]
      %v5142 = vlaneseq
      %v5143 = vshrl.u32 %v5142, 7
      %v5144 = vsub.s32 0, %v5143
      %v5145 = vrot.slane %v5140, %v5144
      %v5146 = vlaneseq
      %v5147 = vshrl.u32 %v5146, 7
      %v5148 = vsub.s32 1, %v5147
      %v5149 = vrot.slane %v5140, %v5148
      %v5150 = vlaneseq
      %v5151 = vshrl.u32 %v5150, 7
      %v5152 = vsub.s32 2, %v5151
      %v5153 = vrot.slane %v5140, %v5152
      %v5154 = vlaneseq
      %v5155 = vshrl.u32 %v5154, 7
      %v5156 = vsub.s32 3, %v5155
      %v5157 = vrot.slane %v5140, %v5156
      %v5162 = vmul.f32 %v5138, %v5145
      %v5163 = vmul.f32 %v5137, %v5149
      %v5164 = vmul.f32 %v5136, %v5153
      %v5165 = vmul.f32 %v5139, %v5157
      %5166 = vst [vmem:[#allocation2 + $0x200] sm:$0xff] %v5162
      %5167 = vst [vmem:[#allocation2 + $0x208] sm:$0xff] %v5163
      %5168 = vst [vmem:[#allocation2 + $0x210] sm:$0xff] %v5164
      %5169 = vst [vmem:[#allocation2 + $0x218] sm:$0xff] %v5165
      %5170 = vrot.lane.b32.xlu0 %v4464, 119
      %v5171 = vpop.permute.xlu0 %5170
      %5172 = vrot.lane.b32.xlu0 %v4465, 119
      %v5173 = vpop.permute.xlu0 %5172
      %5174 = vrot.lane.b32.xlu0 %v4466, 119
      %v5175 = vpop.permute.xlu0 %5174
      %5176 = vrot.lane.b32.xlu0 %v4467, 119
      %v5177 = vpop.permute.xlu0 %5176
      %v5178 = vsel %vm1218, %v5175, %v5177
      %v5179 = vsel %vm1218, %v5173, %v5175
      %v5180 = vsel %vm1218, %v5171, %v5173
      %v5181 = vsel %vm1218, %v5177, %v5171
      %v5182 = vld [vmem:[%s1223] ss:$8 sm:$0xf]
      %v5184 = vlaneseq
      %v5185 = vshrl.u32 %v5184, 7
      %v5186 = vsub.s32 0, %v5185
      %v5187 = vrot.slane %v5182, %v5186
      %v5188 = vlaneseq
      %v5189 = vshrl.u32 %v5188, 7
      %v5190 = vsub.s32 1, %v5189
      %v5191 = vrot.slane %v5182, %v5190
      %v5192 = vlaneseq
      %v5193 = vshrl.u32 %v5192, 7
      %v5194 = vsub.s32 2, %v5193
      %v5195 = vrot.slane %v5182, %v5194
      %v5196 = vlaneseq
      %v5197 = vshrl.u32 %v5196, 7
      %v5198 = vsub.s32 3, %v5197
      %v5199 = vrot.slane %v5182, %v5198
      %v5204 = vmul.f32 %v5180, %v5187
      %v5205 = vmul.f32 %v5179, %v5191
      %v5206 = vmul.f32 %v5178, %v5195
      %v5207 = vmul.f32 %v5181, %v5199
      %5208 = vst [vmem:[#allocation2 + $0x220] sm:$0xff] %v5204
      %5209 = vst [vmem:[#allocation2 + $0x228] sm:$0xff] %v5205
      %5210 = vst [vmem:[#allocation2 + $0x230] sm:$0xff] %v5206
      %5211 = vst [vmem:[#allocation2 + $0x238] sm:$0xff] %v5207
      %v5212 = vld [vmem:[%s1254] ss:$8 sm:$0xf]
      %v5214 = vlaneseq
      %v5215 = vshrl.u32 %v5214, 7
      %v5216 = vsub.s32 0, %v5215
      %v5217 = vrot.slane %v5212, %v5216
      %v5218 = vlaneseq
      %v5219 = vshrl.u32 %v5218, 7
      %v5220 = vsub.s32 1, %v5219
      %v5221 = vrot.slane %v5212, %v5220
      %v5222 = vlaneseq
      %v5223 = vshrl.u32 %v5222, 7
      %v5224 = vsub.s32 2, %v5223
      %v5225 = vrot.slane %v5212, %v5224
      %v5226 = vlaneseq
      %v5227 = vshrl.u32 %v5226, 7
      %v5228 = vsub.s32 3, %v5227
      %v5229 = vrot.slane %v5212, %v5228
      %v5234 = vmul.f32 %v4478, %v5217
      %v5235 = vmul.f32 %v4477, %v5221
      %v5236 = vmul.f32 %v4476, %v5225
      %v5237 = vmul.f32 %v4479, %v5229
      %5238 = vst [vmem:[#allocation2 + $0x240] sm:$0xff] %v5234
      %5239 = vst [vmem:[#allocation2 + $0x248] sm:$0xff] %v5235
      %5240 = vst [vmem:[#allocation2 + $0x250] sm:$0xff] %v5236
      %5241 = vst [vmem:[#allocation2 + $0x258] sm:$0xff] %v5237
      %v5242 = vld [vmem:[%s1285] ss:$8 sm:$0xf]
      %v5244 = vlaneseq
      %v5245 = vshrl.u32 %v5244, 7
      %v5246 = vsub.s32 0, %v5245
      %v5247 = vrot.slane %v5242, %v5246
      %v5248 = vlaneseq
      %v5249 = vshrl.u32 %v5248, 7
      %v5250 = vsub.s32 1, %v5249
      %v5251 = vrot.slane %v5242, %v5250
      %v5252 = vlaneseq
      %v5253 = vshrl.u32 %v5252, 7
      %v5254 = vsub.s32 2, %v5253
      %v5255 = vrot.slane %v5242, %v5254
      %v5256 = vlaneseq
      %v5257 = vshrl.u32 %v5256, 7
      %v5258 = vsub.s32 3, %v5257
      %v5259 = vrot.slane %v5242, %v5258
      %v5264 = vmul.f32 %v4520, %v5247
      %v5265 = vmul.f32 %v4519, %v5251
      %v5266 = vmul.f32 %v4518, %v5255
      %v5267 = vmul.f32 %v4521, %v5259
      %5268 = vst [vmem:[#allocation2 + $0x260] sm:$0xff] %v5264
      %5269 = vst [vmem:[#allocation2 + $0x268] sm:$0xff] %v5265
      %5270 = vst [vmem:[#allocation2 + $0x270] sm:$0xff] %v5266
      %5271 = vst [vmem:[#allocation2 + $0x278] sm:$0xff] %v5267
      %v5272 = vld [vmem:[%s1316] ss:$8 sm:$0xf]
      %v5274 = vlaneseq
      %v5275 = vshrl.u32 %v5274, 7
      %v5276 = vsub.s32 0, %v5275
      %v5277 = vrot.slane %v5272, %v5276
      %v5278 = vlaneseq
      %v5279 = vshrl.u32 %v5278, 7
      %v5280 = vsub.s32 1, %v5279
      %v5281 = vrot.slane %v5272, %v5280
      %v5282 = vlaneseq
      %v5283 = vshrl.u32 %v5282, 7
      %v5284 = vsub.s32 2, %v5283
      %v5285 = vrot.slane %v5272, %v5284
      %v5286 = vlaneseq
      %v5287 = vshrl.u32 %v5286, 7
      %v5288 = vsub.s32 3, %v5287
      %v5289 = vrot.slane %v5272, %v5288
      %v5294 = vmul.f32 %v4562, %v5277
      %v5295 = vmul.f32 %v4561, %v5281
      %v5296 = vmul.f32 %v4560, %v5285
      %v5297 = vmul.f32 %v4563, %v5289
      %5298 = vst [vmem:[#allocation2 + $0x280] sm:$0xff] %v5294
      %5299 = vst [vmem:[#allocation2 + $0x288] sm:$0xff] %v5295
      %5300 = vst [vmem:[#allocation2 + $0x290] sm:$0xff] %v5296
      %5301 = vst [vmem:[#allocation2 + $0x298] sm:$0xff] %v5297
      %v5302 = vld [vmem:[%s1347] ss:$8 sm:$0xf]
      %v5304 = vlaneseq
      %v5305 = vshrl.u32 %v5304, 7
      %v5306 = vsub.s32 0, %v5305
      %v5307 = vrot.slane %v5302, %v5306
      %v5308 = vlaneseq
      %v5309 = vshrl.u32 %v5308, 7
      %v5310 = vsub.s32 1, %v5309
      %v5311 = vrot.slane %v5302, %v5310
      %v5312 = vlaneseq
      %v5313 = vshrl.u32 %v5312, 7
      %v5314 = vsub.s32 2, %v5313
      %v5315 = vrot.slane %v5302, %v5314
      %v5316 = vlaneseq
      %v5317 = vshrl.u32 %v5316, 7
      %v5318 = vsub.s32 3, %v5317
      %v5319 = vrot.slane %v5302, %v5318
      %v5324 = vmul.f32 %v4604, %v5307
      %v5325 = vmul.f32 %v4603, %v5311
      %v5326 = vmul.f32 %v4602, %v5315
      %v5327 = vmul.f32 %v4605, %v5319
      %5328 = vst [vmem:[#allocation2 + $0x2a0] sm:$0xff] %v5324
      %5329 = vst [vmem:[#allocation2 + $0x2a8] sm:$0xff] %v5325
      %5330 = vst [vmem:[#allocation2 + $0x2b0] sm:$0xff] %v5326
      %5331 = vst [vmem:[#allocation2 + $0x2b8] sm:$0xff] %v5327
      %v5332 = vld [vmem:[%s1378] ss:$8 sm:$0xf]
      %v5334 = vlaneseq
      %v5335 = vshrl.u32 %v5334, 7
      %v5336 = vsub.s32 0, %v5335
      %v5337 = vrot.slane %v5332, %v5336
      %v5338 = vlaneseq
      %v5339 = vshrl.u32 %v5338, 7
      %v5340 = vsub.s32 1, %v5339
      %v5341 = vrot.slane %v5332, %v5340
      %v5342 = vlaneseq
      %v5343 = vshrl.u32 %v5342, 7
      %v5344 = vsub.s32 2, %v5343
      %v5345 = vrot.slane %v5332, %v5344
      %v5346 = vlaneseq
      %v5347 = vshrl.u32 %v5346, 7
      %v5348 = vsub.s32 3, %v5347
      %v5349 = vrot.slane %v5332, %v5348
      %v5354 = vmul.f32 %v4646, %v5337
      %v5355 = vmul.f32 %v4645, %v5341
      %v5356 = vmul.f32 %v4644, %v5345
      %v5357 = vmul.f32 %v4647, %v5349
      %5358 = vst [vmem:[#allocation2 + $0x2c0] sm:$0xff] %v5354
      %5359 = vst [vmem:[#allocation2 + $0x2c8] sm:$0xff] %v5355
      %5360 = vst [vmem:[#allocation2 + $0x2d0] sm:$0xff] %v5356
      %5361 = vst [vmem:[#allocation2 + $0x2d8] sm:$0xff] %v5357
      %v5362 = vld [vmem:[%s1409] ss:$8 sm:$0xf]
      %v5364 = vlaneseq
      %v5365 = vshrl.u32 %v5364, 7
      %v5366 = vsub.s32 0, %v5365
      %v5367 = vrot.slane %v5362, %v5366
      %v5368 = vlaneseq
      %v5369 = vshrl.u32 %v5368, 7
      %v5370 = vsub.s32 1, %v5369
      %v5371 = vrot.slane %v5362, %v5370
      %v5372 = vlaneseq
      %v5373 = vshrl.u32 %v5372, 7
      %v5374 = vsub.s32 2, %v5373
      %v5375 = vrot.slane %v5362, %v5374
      %v5376 = vlaneseq
      %v5377 = vshrl.u32 %v5376, 7
      %v5378 = vsub.s32 3, %v5377
      %v5379 = vrot.slane %v5362, %v5378
      %v5384 = vmul.f32 %v4688, %v5367
      %v5385 = vmul.f32 %v4687, %v5371
      %v5386 = vmul.f32 %v4686, %v5375
      %v5387 = vmul.f32 %v4689, %v5379
      %5388 = vst [vmem:[#allocation2 + $0x2e0] sm:$0xff] %v5384
      %5389 = vst [vmem:[#allocation2 + $0x2e8] sm:$0xff] %v5385
      %5390 = vst [vmem:[#allocation2 + $0x2f0] sm:$0xff] %v5386
      %5391 = vst [vmem:[#allocation2 + $0x2f8] sm:$0xff] %v5387
      %v5392 = vld [vmem:[%s1440] ss:$8 sm:$0xf]
      %v5394 = vlaneseq
      %v5395 = vshrl.u32 %v5394, 7
      %v5396 = vsub.s32 0, %v5395
      %v5397 = vrot.slane %v5392, %v5396
      %v5398 = vlaneseq
      %v5399 = vshrl.u32 %v5398, 7
      %v5400 = vsub.s32 1, %v5399
      %v5401 = vrot.slane %v5392, %v5400
      %v5402 = vlaneseq
      %v5403 = vshrl.u32 %v5402, 7
      %v5404 = vsub.s32 2, %v5403
      %v5405 = vrot.slane %v5392, %v5404
      %v5406 = vlaneseq
      %v5407 = vshrl.u32 %v5406, 7
      %v5408 = vsub.s32 3, %v5407
      %v5409 = vrot.slane %v5392, %v5408
      %v5414 = vmul.f32 %v4730, %v5397
      %v5415 = vmul.f32 %v4729, %v5401
      %v5416 = vmul.f32 %v4728, %v5405
      %v5417 = vmul.f32 %v4731, %v5409
      %5418 = vst [vmem:[#allocation2 + $0x300] sm:$0xff] %v5414
      %5419 = vst [vmem:[#allocation2 + $0x308] sm:$0xff] %v5415
      %5420 = vst [vmem:[#allocation2 + $0x310] sm:$0xff] %v5416
      %5421 = vst [vmem:[#allocation2 + $0x318] sm:$0xff] %v5417
      %v5422 = vld [vmem:[%s1471] ss:$8 sm:$0xf]
      %v5424 = vlaneseq
      %v5425 = vshrl.u32 %v5424, 7
      %v5426 = vsub.s32 0, %v5425
      %v5427 = vrot.slane %v5422, %v5426
      %v5428 = vlaneseq
      %v5429 = vshrl.u32 %v5428, 7
      %v5430 = vsub.s32 1, %v5429
      %v5431 = vrot.slane %v5422, %v5430
      %v5432 = vlaneseq
      %v5433 = vshrl.u32 %v5432, 7
      %v5434 = vsub.s32 2, %v5433
      %v5435 = vrot.slane %v5422, %v5434
      %v5436 = vlaneseq
      %v5437 = vshrl.u32 %v5436, 7
      %v5438 = vsub.s32 3, %v5437
      %v5439 = vrot.slane %v5422, %v5438
      %v5444 = vmul.f32 %v4772, %v5427
      %v5445 = vmul.f32 %v4771, %v5431
      %v5446 = vmul.f32 %v4770, %v5435
      %v5447 = vmul.f32 %v4773, %v5439
      %5448 = vst [vmem:[#allocation2 + $0x320] sm:$0xff] %v5444
      %5449 = vst [vmem:[#allocation2 + $0x328] sm:$0xff] %v5445
      %5450 = vst [vmem:[#allocation2 + $0x330] sm:$0xff] %v5446
      %5451 = vst [vmem:[#allocation2 + $0x338] sm:$0xff] %v5447
      %v5452 = vld [vmem:[%s1502] ss:$8 sm:$0xf]
      %v5454 = vlaneseq
      %v5455 = vshrl.u32 %v5454, 7
      %v5456 = vsub.s32 0, %v5455
      %v5457 = vrot.slane %v5452, %v5456
      %v5458 = vlaneseq
      %v5459 = vshrl.u32 %v5458, 7
      %v5460 = vsub.s32 1, %v5459
      %v5461 = vrot.slane %v5452, %v5460
      %v5462 = vlaneseq
      %v5463 = vshrl.u32 %v5462, 7
      %v5464 = vsub.s32 2, %v5463
      %v5465 = vrot.slane %v5452, %v5464
      %v5466 = vlaneseq
      %v5467 = vshrl.u32 %v5466, 7
      %v5468 = vsub.s32 3, %v5467
      %v5469 = vrot.slane %v5452, %v5468
      %v5474 = vmul.f32 %v4814, %v5457
      %v5475 = vmul.f32 %v4813, %v5461
      %v5476 = vmul.f32 %v4812, %v5465
      %v5477 = vmul.f32 %v4815, %v5469
      %5478 = vst [vmem:[#allocation2 + $0x340] sm:$0xff] %v5474
      %5479 = vst [vmem:[#allocation2 + $0x348] sm:$0xff] %v5475
      %5480 = vst [vmem:[#allocation2 + $0x350] sm:$0xff] %v5476
      %5481 = vst [vmem:[#allocation2 + $0x358] sm:$0xff] %v5477
      %v5482 = vld [vmem:[%s6] sm:$0xff]
      %v5483 = vld [vmem:[%s6 + $0x8] sm:$0xff]
      %v5484 = vld [vmem:[#allocation2] sm:$0xff]
      %v5485 = vld [vmem:[#allocation2 + $0x8] sm:$0xff]
      %v5486 = vld [vmem:[#allocation2 + $0x10] sm:$0xff]
      %v5487 = vld [vmem:[#allocation2 + $0x18] sm:$0xff]
      %v5488 = vld [vmem:[#allocation2 + $0x20] sm:$0xff]
      %v5489 = vld [vmem:[#allocation2 + $0x28] sm:$0xff]
      %v5490 = vld [vmem:[#allocation2 + $0x30] sm:$0xff]
      %v5491 = vld [vmem:[#allocation2 + $0x38] sm:$0xff]
      %v5492 = vld [vmem:[#allocation2 + $0x40] sm:$0xff]
      %v5493 = vld [vmem:[#allocation2 + $0x48] sm:$0xff]
      %v5494 = vld [vmem:[#allocation2 + $0x50] sm:$0xff]
      %v5495 = vld [vmem:[#allocation2 + $0x58] sm:$0xff]
      %v5496 = vld [vmem:[#allocation2 + $0x60] sm:$0xff]
      %v5497 = vld [vmem:[#allocation2 + $0x68] sm:$0xff]
      %v5498 = vld [vmem:[#allocation2 + $0x70] sm:$0xff]
      %v5499 = vld [vmem:[#allocation2 + $0x78] sm:$0xff]
      %v5500 = vld [vmem:[#allocation2 + $0x80] sm:$0xff]
      %v5501 = vld [vmem:[#allocation2 + $0x88] sm:$0xff]
      %v5502 = vld [vmem:[#allocation2 + $0x90] sm:$0xff]
      %v5503 = vld [vmem:[#allocation2 + $0x98] sm:$0xff]
      %v5504 = vld [vmem:[#allocation2 + $0xa0] sm:$0xff]
      %v5505 = vld [vmem:[#allocation2 + $0xa8] sm:$0xff]
      %v5506 = vld [vmem:[#allocation2 + $0xb0] sm:$0xff]
      %v5507 = vld [vmem:[#allocation2 + $0xb8] sm:$0xff]
      %v5508 = vld [vmem:[#allocation2 + $0xc0] sm:$0xff]
      %v5509 = vld [vmem:[#allocation2 + $0xc8] sm:$0xff]
      %v5510 = vld [vmem:[#allocation2 + $0xd0] sm:$0xff]
      %v5511 = vld [vmem:[#allocation2 + $0xd8] sm:$0xff]
      %v5512 = vld [vmem:[#allocation2 + $0xe0] sm:$0xff]
      %v5513 = vld [vmem:[#allocation2 + $0xe8] sm:$0xff]
      %v5514 = vld [vmem:[#allocation2 + $0xf0] sm:$0xff]
      %v5515 = vld [vmem:[#allocation2 + $0xf8] sm:$0xff]
      %v5516 = vld [vmem:[#allocation2 + $0x100] sm:$0xff]
      %v5517 = vld [vmem:[#allocation2 + $0x108] sm:$0xff]
      %v5518 = vld [vmem:[#allocation2 + $0x110] sm:$0xff]
      %v5519 = vld [vmem:[#allocation2 + $0x118] sm:$0xff]
      %v5520 = vld [vmem:[#allocation2 + $0x120] sm:$0xff]
      %v5521 = vld [vmem:[#allocation2 + $0x128] sm:$0xff]
      %v5522 = vld [vmem:[#allocation2 + $0x130] sm:$0xff]
      %v5523 = vld [vmem:[#allocation2 + $0x138] sm:$0xff]
      %v5524 = vld [vmem:[#allocation2 + $0x140] sm:$0xff]
      %v5525 = vld [vmem:[#allocation2 + $0x148] sm:$0xff]
      %v5526 = vld [vmem:[#allocation2 + $0x150] sm:$0xff]
      %v5527 = vld [vmem:[#allocation2 + $0x158] sm:$0xff]
      %v5528 = vld [vmem:[#allocation2 + $0x160] sm:$0xff]
      %v5529 = vld [vmem:[#allocation2 + $0x168] sm:$0xff]
      %v5530 = vld [vmem:[#allocation2 + $0x170] sm:$0xff]
      %v5531 = vld [vmem:[#allocation2 + $0x178] sm:$0xff]
      %v5532 = vld [vmem:[#allocation2 + $0x180] sm:$0xff]
      %v5533 = vld [vmem:[#allocation2 + $0x188] sm:$0xff]
      %v5534 = vld [vmem:[#allocation2 + $0x190] sm:$0xff]
      %v5535 = vld [vmem:[#allocation2 + $0x198] sm:$0xff]
      %v5536 = vld [vmem:[#allocation2 + $0x1a0] sm:$0xff]
      %v5537 = vld [vmem:[#allocation2 + $0x1a8] sm:$0xff]
      %v5538 = vld [vmem:[#allocation2 + $0x1b0] sm:$0xff]
      %v5539 = vld [vmem:[#allocation2 + $0x1b8] sm:$0xff]
      %v5540 = vld [vmem:[#allocation2 + $0x1c0] sm:$0xff]
      %v5541 = vld [vmem:[#allocation2 + $0x1c8] sm:$0xff]
      %v5542 = vld [vmem:[#allocation2 + $0x1d0] sm:$0xff]
      %v5543 = vld [vmem:[#allocation2 + $0x1d8] sm:$0xff]
      %v5544 = vld [vmem:[#allocation2 + $0x1e0] sm:$0xff]
      %v5545 = vld [vmem:[#allocation2 + $0x1e8] sm:$0xff]
      %v5546 = vld [vmem:[#allocation2 + $0x1f0] sm:$0xff]
      %v5547 = vld [vmem:[#allocation2 + $0x1f8] sm:$0xff]
      %v5548 = vld [vmem:[#allocation2 + $0x200] sm:$0xff]
      %v5549 = vld [vmem:[#allocation2 + $0x208] sm:$0xff]
      %v5550 = vld [vmem:[#allocation2 + $0x210] sm:$0xff]
      %v5551 = vld [vmem:[#allocation2 + $0x218] sm:$0xff]
      %v5552 = vld [vmem:[#allocation2 + $0x220] sm:$0xff]
      %v5553 = vld [vmem:[#allocation2 + $0x228] sm:$0xff]
      %v5554 = vld [vmem:[#allocation2 + $0x230] sm:$0xff]
      %v5555 = vld [vmem:[#allocation2 + $0x238] sm:$0xff]
      %v5556 = vld [vmem:[#allocation2 + $0x240] sm:$0xff]
      %v5557 = vld [vmem:[#allocation2 + $0x248] sm:$0xff]
      %v5558 = vld [vmem:[#allocation2 + $0x250] sm:$0xff]
      %v5559 = vld [vmem:[#allocation2 + $0x258] sm:$0xff]
      %v5560 = vld [vmem:[#allocation2 + $0x260] sm:$0xff]
      %v5561 = vld [vmem:[#allocation2 + $0x268] sm:$0xff]
      %v5562 = vld [vmem:[#allocation2 + $0x270] sm:$0xff]
      %v5563 = vld [vmem:[#allocation2 + $0x278] sm:$0xff]
      %v5564 = vld [vmem:[#allocation2 + $0x280] sm:$0xff]
      %v5565 = vld [vmem:[#allocation2 + $0x288] sm:$0xff]
      %v5566 = vld [vmem:[#allocation2 + $0x290] sm:$0xff]
      %v5567 = vld [vmem:[#allocation2 + $0x298] sm:$0xff]
      %v5568 = vld [vmem:[#allocation2 + $0x2a0] sm:$0xff]
      %v5569 = vld [vmem:[#allocation2 + $0x2a8] sm:$0xff]
      %v5570 = vld [vmem:[#allocation2 + $0x2b0] sm:$0xff]
      %v5571 = vld [vmem:[#allocation2 + $0x2b8] sm:$0xff]
      %v5572 = vld [vmem:[#allocation2 + $0x2c0] sm:$0xff]
      %v5573 = vld [vmem:[#allocation2 + $0x2c8] sm:$0xff]
      %v5574 = vld [vmem:[#allocation2 + $0x2d0] sm:$0xff]
      %v5575 = vld [vmem:[#allocation2 + $0x2d8] sm:$0xff]
      %v5576 = vld [vmem:[#allocation2 + $0x2e0] sm:$0xff]
      %v5577 = vld [vmem:[#allocation2 + $0x2e8] sm:$0xff]
      %v5578 = vld [vmem:[#allocation2 + $0x2f0] sm:$0xff]
      %v5579 = vld [vmem:[#allocation2 + $0x2f8] sm:$0xff]
      %v5580 = vld [vmem:[#allocation2 + $0x300] sm:$0xff]
      %v5581 = vld [vmem:[#allocation2 + $0x308] sm:$0xff]
      %v5582 = vld [vmem:[#allocation2 + $0x310] sm:$0xff]
      %v5583 = vld [vmem:[#allocation2 + $0x318] sm:$0xff]
      %v5584 = vld [vmem:[#allocation2 + $0x320] sm:$0xff]
      %v5585 = vld [vmem:[#allocation2 + $0x328] sm:$0xff]
      %v5586 = vld [vmem:[#allocation2 + $0x330] sm:$0xff]
      %v5587 = vld [vmem:[#allocation2 + $0x338] sm:$0xff]
      %v5588 = vld [vmem:[#allocation2 + $0x340] sm:$0xff]
      %v5589 = vld [vmem:[#allocation2 + $0x348] sm:$0xff]
      %v5590 = vld [vmem:[#allocation2 + $0x350] sm:$0xff]
      %v5591 = vld [vmem:[#allocation2 + $0x358] sm:$0xff]
      %v5592 = vld [vmem:[%s7] sm:$0xff]
      %5594 = vset.pattern.permute.xlu0 0
      %5595 = vperm.xlu0 %5594, %v5592
      %v5596 = vpop.permute.xlu0 %5595
      %v5599 = vsel %vm1649, %v5483, 0
      %5601 = vmatprep.subr.mxu0 %v5485
      %5602 = vmatpush1.msra.mxu0 %v5484
      %5603 = vmatprep.subr.mxu0 %v5489
      %5604 = vmatpush1.msra.mxu0 %v5488
      %5605 = vmatprep.subr.mxu0 %v5493
      %5606 = vmatpush1.msra.mxu0 %v5492
      %5607 = vmatprep.subr.mxu0 %v5497
      %5608 = vmatpush1.msra.mxu0 %v5496
      %5609 = vmatprep.subr.mxu0 %v5501
      %5610 = vmatpush1.msra.mxu0 %v5500
      %5611 = vmatprep.subr.mxu0 %v5505
      %5612 = vmatpush1.msra.mxu0 %v5504
      %5613 = vmatprep.subr.mxu0 %v5509
      %5614 = vmatpush1.msra.mxu0 %v5508
      %5615 = vmatprep.subr.mxu0 %v5513
      %5616 = vmatpush1.msra.mxu0 %v5512
      %5617 = vmatprep.subr.mxu0 %v5517
      %5618 = vmatpush1.msra.mxu0 %v5516
      %5619 = vmatprep.subr.mxu0 %v5521
      %5620 = vmatpush1.msra.mxu0 %v5520
      %5621 = vmatprep.subr.mxu0 %v5525
      %5622 = vmatpush1.msra.mxu0 %v5524
      %5623 = vmatprep.subr.mxu0 %v5529
      %5624 = vmatpush1.msra.mxu0 %v5528
      %5625 = vmatprep.subr.mxu0 %v5533
      %5626 = vmatpush1.msra.mxu0 %v5532
      %5627 = vmatprep.subr.mxu0 %v5537
      %5628 = vmatpush1.msra.mxu0 %v5536
      %5629 = vmatprep.subr.mxu0 %v5541
      %5630 = vmatpush1.msra.mxu0 %v5540
      %5631 = vmatprep.subr.mxu0 %v5545
      %5632 = vmatpush1.msra.mxu0 %v5544
      %5633 = vmatprep.subr.mxu0 %v5549
      %5634 = vmatpush1.msra.mxu0 %v5548
      %5635 = vmatprep.subr.mxu0 %v5553
      %5636 = vmatpush1.msra.mxu0 %v5552
      %5637 = vmatprep.subr.mxu0 %v5557
      %5638 = vmatpush1.msra.mxu0 %v5556
      %5639 = vmatprep.subr.mxu0 %v5561
      %5640 = vmatpush1.msra.mxu0 %v5560
      %5641 = vmatprep.subr.mxu0 %v5565
      %5642 = vmatpush1.msra.mxu0 %v5564
      %5643 = vmatprep.subr.mxu0 %v5569
      %5644 = vmatpush1.msra.mxu0 %v5568
      %5645 = vmatprep.subr.mxu0 %v5573
      %5646 = vmatpush1.msra.mxu0 %v5572
      %5647 = vmatprep.subr.mxu0 %v5577
      %5648 = vmatpush1.msra.mxu0 %v5576
      %5649 = vmatprep.subr.mxu0 %v5581
      %5650 = vmatpush1.msra.mxu0 %v5580
      %5651 = vmatprep.subr.mxu0 %v5585
      %5652 = vmatpush1.msra.mxu0 %v5584
      %5653 = vmatprep.subr.mxu0 %v5589
      %5654 = vmatpush1.msra.mxu0 %v5588
      %5655 = vmatprep.subr.mxu0 0.0
      %5656 = vmatpush1.msra.mxu0 0.0
      %5657 = vmatprep.subr.mxu0 0.0
      %5658 = vmatpush1.msra.mxu0 0.0
      %5659 = vmatprep.subr.mxu0 0.0
      %5660 = vmatpush1.msra.mxu0 0.0
      %5661 = vmatprep.subr.mxu0 0.0
      %5662 = vmatpush1.msra.mxu0 0.0
      %5663 = vmatprep.subr.mxu0 0.0
      %5664 = vmatpush1.msra.mxu0 0.0
      %5665 = vmatprep.mubr.f32.mxu0 %v5599
      %5666 = vmatmul.mubr.f32.gmra.mrb[0].mxu0 %v5482
      %v5667 = vpop.f32.mrb[0].mxu0
      %v5668 = vadd.f32 %v5596, %v5667
      %v5669 = vpop.f32.mrb[0].mxu0
      %v5670 = vadd.f32 %v5596, %v5669
      %5671 = vdwg.mxu0
      %5672 = vmatprep.subr.mxu0 %v5487
      %5673 = vmatpush1.msra.mxu0 %v5486
      %5674 = vmatprep.subr.mxu0 %v5491
      %5675 = vmatpush1.msra.mxu0 %v5490
      %5676 = vmatprep.subr.mxu0 %v5495
      %5677 = vmatpush1.msra.mxu0 %v5494
      %5678 = vmatprep.subr.mxu0 %v5499
      %5679 = vmatpush1.msra.mxu0 %v5498
      %5680 = vmatprep.subr.mxu0 %v5503
      %5681 = vmatpush1.msra.mxu0 %v5502
      %5682 = vmatprep.subr.mxu0 %v5507
      %5683 = vmatpush1.msra.mxu0 %v5506
      %5684 = vmatprep.subr.mxu0 %v5511
      %5685 = vmatpush1.msra.mxu0 %v5510
      %5686 = vmatprep.subr.mxu0 %v5515
      %5687 = vmatpush1.msra.mxu0 %v5514
      %5688 = vmatprep.subr.mxu0 %v5519
      %5689 = vmatpush1.msra.mxu0 %v5518
      %5690 = vmatprep.subr.mxu0 %v5523
      %5691 = vmatpush1.msra.mxu0 %v5522
      %5692 = vmatprep.subr.mxu0 %v5527
      %5693 = vmatpush1.msra.mxu0 %v5526
      %5694 = vmatprep.subr.mxu0 %v5531
      %5695 = vmatpush1.msra.mxu0 %v5530
      %5696 = vmatprep.subr.mxu0 %v5535
      %5697 = vmatpush1.msra.mxu0 %v5534
      %5698 = vmatprep.subr.mxu0 %v5539
      %5699 = vmatpush1.msra.mxu0 %v5538
      %5700 = vmatprep.subr.mxu0 %v5543
      %5701 = vmatpush1.msra.mxu0 %v5542
      %5702 = vmatprep.subr.mxu0 %v5547
      %5703 = vmatpush1.msra.mxu0 %v5546
      %5704 = vmatprep.subr.mxu0 %v5551
      %5705 = vmatpush1.msra.mxu0 %v5550
      %5706 = vmatprep.subr.mxu0 %v5555
      %5707 = vmatpush1.msra.mxu0 %v5554
      %5708 = vmatprep.subr.mxu0 %v5559
      %5709 = vmatpush1.msra.mxu0 %v5558
      %5710 = vmatprep.subr.mxu0 %v5563
      %5711 = vmatpush1.msra.mxu0 %v5562
      %5712 = vmatprep.subr.mxu0 %v5567
      %5713 = vmatpush1.msra.mxu0 %v5566
      %5714 = vmatprep.subr.mxu0 %v5571
      %5715 = vmatpush1.msra.mxu0 %v5570
      %5716 = vmatprep.subr.mxu0 %v5575
      %5717 = vmatpush1.msra.mxu0 %v5574
      %5718 = vmatprep.subr.mxu0 %v5579
      %5719 = vmatpush1.msra.mxu0 %v5578
      %5720 = vmatprep.subr.mxu0 %v5583
      %5721 = vmatpush1.msra.mxu0 %v5582
      %5722 = vmatprep.subr.mxu0 %v5587
      %5723 = vmatpush1.msra.mxu0 %v5586
      %5724 = vmatprep.subr.mxu0 %v5591
      %5725 = vmatpush1.msra.mxu0 %v5590
      %5726 = vmatprep.subr.mxu0 0.0
      %5727 = vmatpush1.msra.mxu0 0.0
      %5728 = vmatprep.subr.mxu0 0.0
      %5729 = vmatpush1.msra.mxu0 0.0
      %5730 = vmatprep.subr.mxu0 0.0
      %5731 = vmatpush1.msra.mxu0 0.0
      %5732 = vmatprep.subr.mxu0 0.0
      %5733 = vmatpush1.msra.mxu0 0.0
      %5734 = vmatprep.subr.mxu0 0.0
      %5735 = vmatpush1.msra.mxu0 0.0
      %5736 = vmatprep.mubr.f32.mxu0 %v5599
      %5737 = vmatmul.mubr.f32.gmra.mrb[0].mxu0 %v5482
      %v5738 = vpop.f32.mrb[0].mxu0
      %v5739 = vadd.f32 %v5596, %v5738
      %v5740 = vpop.f32.mrb[0].mxu0
      %v5741 = vadd.f32 %v5596, %v5740
      %5742 = vdwg.mxu0
      %v5743 = vadd.f32 %v5668, %v5670
      %v5744 = vadd.f32 %v5743, %v5739
      %v5745 = vadd.f32 %v5744, %v5741
      %5746 = vadd.xlane.f32.xlu0 %v5745
      %v5747 = vpop.xlane.xlu0 %5746
      %v5748 = vmul.f32 %v5747, %v1800
      %v5749 = vsub.f32 %v5668, %v5748
      %v5750 = vsub.f32 %v5670, %v5748
      %v5751 = vsub.f32 %v5739, %v5748
      %v5752 = vsub.f32 %v5741, %v5748
      %v5753 = vmul.f32 %v5749, %v5749
      %v5754 = vmul.f32 %v5750, %v5750
      %v5755 = vmul.f32 %v5751, %v5751
      %v5756 = vmul.f32 %v5752, %v5752
      %v5757 = vadd.f32 %v5753, %v5754
      %v5758 = vadd.f32 %v5757, %v5755
      %v5759 = vadd.f32 %v5758, %v5756
      %5760 = vadd.xlane.f32.xlu0 %v5759
      %v5761 = vpop.xlane.xlu0 %5760
      %v5762 = vmul.f32 %v5761, %v1800
      %v5763 = vadd.f32 %v5762, 1e-05
      %v5764 = vrsqrt.pop %v5763
      %v5765 = vmul.f32 %v5749, %v5764
      %v5766 = vmul.f32 %v5750, %v5764
      %v5767 = vmul.f32 %v5751, %v5764
      %v5768 = vmul.f32 %v5752, %v5764
      %vm5769 = vcmp.ge.f32.partialorder %v5765, 0.0
      %vm5770 = vcmp.ge.f32.partialorder %v5766, 0.0
      %vm5771 = vcmp.ge.f32.partialorder %v5767, 0.0
      %vm5772 = vcmp.ge.f32.partialorder %v5768, 0.0
      %v5773 = vmul.f32 %v5765, 0.01
      %v5774 = vmul.f32 %v5766, 0.01
      %v5775 = vmul.f32 %v5767, 0.01
      %v5776 = vmul.f32 %v5768, 0.01
      %v5777 = vsel %vm5769, %v5765, %v5773
      %v5778 = vsel %vm5770, %v5766, %v5774
      %v5779 = vsel %vm5771, %v5767, %v5775
      %v5780 = vsel %vm5772, %v5768, %v5776
      %v5781 = vadd.f32 %v5777, %v4464
      %v5782 = vadd.f32 %v5778, %v4465
      %v5783 = vadd.f32 %v5779, %v4466
      %v5784 = vadd.f32 %v5780, %v4467
      %5785 = vrot.lane.b32.xlu0 %v5781, 73
      %v5786 = vpop.permute.xlu0 %5785
      %5787 = vrot.lane.b32.xlu0 %v5782, 73
      %v5788 = vpop.permute.xlu0 %5787
      %5789 = vrot.lane.b32.xlu0 %v5783, 73
      %v5790 = vpop.permute.xlu0 %5789
      %5791 = vrot.lane.b32.xlu0 %v5784, 73
      %v5792 = vpop.permute.xlu0 %5791
      %v5793 = vsel %vm484, %v5790, %v5792
      %v5794 = vsel %vm484, %v5788, %v5790
      %v5795 = vsel %vm484, %v5786, %v5788
      %v5796 = vsel %vm484, %v5792, %v5786
      %v5797 = vld [vmem:[%s1] ss:$8 sm:$0xf]
      %v5799 = vlaneseq
      %v5800 = vshrl.u32 %v5799, 7
      %v5801 = vsub.s32 0, %v5800
      %v5802 = vrot.slane %v5797, %v5801
      %v5803 = vlaneseq
      %v5804 = vshrl.u32 %v5803, 7
      %v5805 = vsub.s32 1, %v5804
      %v5806 = vrot.slane %v5797, %v5805
      %v5807 = vlaneseq
      %v5808 = vshrl.u32 %v5807, 7
      %v5809 = vsub.s32 2, %v5808
      %v5810 = vrot.slane %v5797, %v5809
      %v5811 = vlaneseq
      %v5812 = vshrl.u32 %v5811, 7
      %v5813 = vsub.s32 3, %v5812
      %v5814 = vrot.slane %v5797, %v5813
      %v5819 = vmul.f32 %v5796, %v5802
      %v5820 = vmul.f32 %v5795, %v5806
      %v5821 = vmul.f32 %v5794, %v5810
      %v5822 = vmul.f32 %v5793, %v5814
      %5823 = vst [vmem:[#allocation2] sm:$0xff] %v5819
      %5824 = vst [vmem:[#allocation2 + $0x8] sm:$0xff] %v5820
      %5825 = vst [vmem:[#allocation2 + $0x10] sm:$0xff] %v5821
      %5826 = vst [vmem:[#allocation2 + $0x18] sm:$0xff] %v5822
      %5827 = vrot.lane.b32.xlu0 %v5781, 72
      %v5828 = vpop.permute.xlu0 %5827
      %5829 = vrot.lane.b32.xlu0 %v5782, 72
      %v5830 = vpop.permute.xlu0 %5829
      %5831 = vrot.lane.b32.xlu0 %v5783, 72
      %v5832 = vpop.permute.xlu0 %5831
      %5833 = vrot.lane.b32.xlu0 %v5784, 72
      %v5834 = vpop.permute.xlu0 %5833
      %v5835 = vsel %vm527, %v5832, %v5834
      %v5836 = vsel %vm527, %v5830, %v5832
      %v5837 = vsel %vm527, %v5828, %v5830
      %v5838 = vsel %vm527, %v5834, %v5828
      %v5839 = vld [vmem:[%s532] ss:$8 sm:$0xf]
      %v5841 = vlaneseq
      %v5842 = vshrl.u32 %v5841, 7
      %v5843 = vsub.s32 0, %v5842
      %v5844 = vrot.slane %v5839, %v5843
      %v5845 = vlaneseq
      %v5846 = vshrl.u32 %v5845, 7
      %v5847 = vsub.s32 1, %v5846
      %v5848 = vrot.slane %v5839, %v5847
      %v5849 = vlaneseq
      %v5850 = vshrl.u32 %v5849, 7
      %v5851 = vsub.s32 2, %v5850
      %v5852 = vrot.slane %v5839, %v5851
      %v5853 = vlaneseq
      %v5854 = vshrl.u32 %v5853, 7
      %v5855 = vsub.s32 3, %v5854
      %v5856 = vrot.slane %v5839, %v5855
      %v5861 = vmul.f32 %v5838, %v5844
      %v5862 = vmul.f32 %v5837, %v5848
      %v5863 = vmul.f32 %v5836, %v5852
      %v5864 = vmul.f32 %v5835, %v5856
      %5865 = vst [vmem:[#allocation2 + $0x20] sm:$0xff] %v5861
      %5866 = vst [vmem:[#allocation2 + $0x28] sm:$0xff] %v5862
      %5867 = vst [vmem:[#allocation2 + $0x30] sm:$0xff] %v5863
      %5868 = vst [vmem:[#allocation2 + $0x38] sm:$0xff] %v5864
      %5869 = vrot.lane.b32.xlu0 %v5781, 71
      %v5870 = vpop.permute.xlu0 %5869
      %5871 = vrot.lane.b32.xlu0 %v5782, 71
      %v5872 = vpop.permute.xlu0 %5871
      %5873 = vrot.lane.b32.xlu0 %v5783, 71
      %v5874 = vpop.permute.xlu0 %5873
      %5875 = vrot.lane.b32.xlu0 %v5784, 71
      %v5876 = vpop.permute.xlu0 %5875
      %v5877 = vsel %vm571, %v5874, %v5876
      %v5878 = vsel %vm571, %v5872, %v5874
      %v5879 = vsel %vm571, %v5870, %v5872
      %v5880 = vsel %vm571, %v5876, %v5870
      %v5881 = vld [vmem:[%s576] ss:$8 sm:$0xf]
      %v5883 = vlaneseq
      %v5884 = vshrl.u32 %v5883, 7
      %v5885 = vsub.s32 0, %v5884
      %v5886 = vrot.slane %v5881, %v5885
      %v5887 = vlaneseq
      %v5888 = vshrl.u32 %v5887, 7
      %v5889 = vsub.s32 1, %v5888
      %v5890 = vrot.slane %v5881, %v5889
      %v5891 = vlaneseq
      %v5892 = vshrl.u32 %v5891, 7
      %v5893 = vsub.s32 2, %v5892
      %v5894 = vrot.slane %v5881, %v5893
      %v5895 = vlaneseq
      %v5896 = vshrl.u32 %v5895, 7
      %v5897 = vsub.s32 3, %v5896
      %v5898 = vrot.slane %v5881, %v5897
      %v5903 = vmul.f32 %v5880, %v5886
      %v5904 = vmul.f32 %v5879, %v5890
      %v5905 = vmul.f32 %v5878, %v5894
      %v5906 = vmul.f32 %v5877, %v5898
      %5907 = vst [vmem:[#allocation2 + $0x40] sm:$0xff] %v5903
      %5908 = vst [vmem:[#allocation2 + $0x48] sm:$0xff] %v5904
      %5909 = vst [vmem:[#allocation2 + $0x50] sm:$0xff] %v5905
      %5910 = vst [vmem:[#allocation2 + $0x58] sm:$0xff] %v5906
      %5911 = vrot.lane.b32.xlu0 %v5781, 65
      %v5912 = vpop.permute.xlu0 %5911
      %5913 = vrot.lane.b32.xlu0 %v5782, 65
      %v5914 = vpop.permute.xlu0 %5913
      %5915 = vrot.lane.b32.xlu0 %v5783, 65
      %v5916 = vpop.permute.xlu0 %5915
      %5917 = vrot.lane.b32.xlu0 %v5784, 65
      %v5918 = vpop.permute.xlu0 %5917
      %v5919 = vsel %vm615, %v5916, %v5918
      %v5920 = vsel %vm615, %v5914, %v5916
      %v5921 = vsel %vm615, %v5912, %v5914
      %v5922 = vsel %vm615, %v5918, %v5912
      %v5923 = vld [vmem:[%s620] ss:$8 sm:$0xf]
      %v5925 = vlaneseq
      %v5926 = vshrl.u32 %v5925, 7
      %v5927 = vsub.s32 0, %v5926
      %v5928 = vrot.slane %v5923, %v5927
      %v5929 = vlaneseq
      %v5930 = vshrl.u32 %v5929, 7
      %v5931 = vsub.s32 1, %v5930
      %v5932 = vrot.slane %v5923, %v5931
      %v5933 = vlaneseq
      %v5934 = vshrl.u32 %v5933, 7
      %v5935 = vsub.s32 2, %v5934
      %v5936 = vrot.slane %v5923, %v5935
      %v5937 = vlaneseq
      %v5938 = vshrl.u32 %v5937, 7
      %v5939 = vsub.s32 3, %v5938
      %v5940 = vrot.slane %v5923, %v5939
      %v5945 = vmul.f32 %v5922, %v5928
      %v5946 = vmul.f32 %v5921, %v5932
      %v5947 = vmul.f32 %v5920, %v5936
      %v5948 = vmul.f32 %v5919, %v5940
      %5949 = vst [vmem:[#allocation2 + $0x60] sm:$0xff] %v5945
      %5950 = vst [vmem:[#allocation2 + $0x68] sm:$0xff] %v5946
      %5951 = vst [vmem:[#allocation2 + $0x70] sm:$0xff] %v5947
      %5952 = vst [vmem:[#allocation2 + $0x78] sm:$0xff] %v5948
      %5953 = vrot.lane.b32.xlu0 %v5781, 64
      %v5954 = vpop.permute.xlu0 %5953
      %5955 = vrot.lane.b32.xlu0 %v5782, 64
      %v5956 = vpop.permute.xlu0 %5955
      %5957 = vrot.lane.b32.xlu0 %v5783, 64
      %v5958 = vpop.permute.xlu0 %5957
      %5959 = vrot.lane.b32.xlu0 %v5784, 64
      %v5960 = vpop.permute.xlu0 %5959
      %v5961 = vsel %vm659, %v5958, %v5960
      %v5962 = vsel %vm659, %v5956, %v5958
      %v5963 = vsel %vm659, %v5954, %v5956
      %v5964 = vsel %vm659, %v5960, %v5954
      %v5965 = vld [vmem:[%s664] ss:$8 sm:$0xf]
      %v5967 = vlaneseq
      %v5968 = vshrl.u32 %v5967, 7
      %v5969 = vsub.s32 0, %v5968
      %v5970 = vrot.slane %v5965, %v5969
      %v5971 = vlaneseq
      %v5972 = vshrl.u32 %v5971, 7
      %v5973 = vsub.s32 1, %v5972
      %v5974 = vrot.slane %v5965, %v5973
      %v5975 = vlaneseq
      %v5976 = vshrl.u32 %v5975, 7
      %v5977 = vsub.s32 2, %v5976
      %v5978 = vrot.slane %v5965, %v5977
      %v5979 = vlaneseq
      %v5980 = vshrl.u32 %v5979, 7
      %v5981 = vsub.s32 3, %v5980
      %v5982 = vrot.slane %v5965, %v5981
      %v5987 = vmul.f32 %v5964, %v5970
      %v5988 = vmul.f32 %v5963, %v5974
      %v5989 = vmul.f32 %v5962, %v5978
      %v5990 = vmul.f32 %v5961, %v5982
      %5991 = vst [vmem:[#allocation2 + $0x80] sm:$0xff] %v5987
      %5992 = vst [vmem:[#allocation2 + $0x88] sm:$0xff] %v5988
      %5993 = vst [vmem:[#allocation2 + $0x90] sm:$0xff] %v5989
      %5994 = vst [vmem:[#allocation2 + $0x98] sm:$0xff] %v5990
      %5995 = vrot.lane.b32.xlu0 %v5781, 63
      %v5996 = vpop.permute.xlu0 %5995
      %5997 = vrot.lane.b32.xlu0 %v5782, 63
      %v5998 = vpop.permute.xlu0 %5997
      %5999 = vrot.lane.b32.xlu0 %v5783, 63
      %v6000 = vpop.permute.xlu0 %5999
      %6001 = vrot.lane.b32.xlu0 %v5784, 63
      %v6002 = vpop.permute.xlu0 %6001
      %v6003 = vsel %vm703, %v6000, %v6002
      %v6004 = vsel %vm703, %v5998, %v6000
      %v6005 = vsel %vm703, %v5996, %v5998
      %v6006 = vsel %vm703, %v6002, %v5996
      %v6007 = vld [vmem:[%s708] ss:$8 sm:$0xf]
      %v6009 = vlaneseq
      %v6010 = vshrl.u32 %v6009, 7
      %v6011 = vsub.s32 0, %v6010
      %v6012 = vrot.slane %v6007, %v6011
      %v6013 = vlaneseq
      %v6014 = vshrl.u32 %v6013, 7
      %v6015 = vsub.s32 1, %v6014
      %v6016 = vrot.slane %v6007, %v6015
      %v6017 = vlaneseq
      %v6018 = vshrl.u32 %v6017, 7
      %v6019 = vsub.s32 2, %v6018
      %v6020 = vrot.slane %v6007, %v6019
      %v6021 = vlaneseq
      %v6022 = vshrl.u32 %v6021, 7
      %v6023 = vsub.s32 3, %v6022
      %v6024 = vrot.slane %v6007, %v6023
      %v6029 = vmul.f32 %v6006, %v6012
      %v6030 = vmul.f32 %v6005, %v6016
      %v6031 = vmul.f32 %v6004, %v6020
      %v6032 = vmul.f32 %v6003, %v6024
      %6033 = vst [vmem:[#allocation2 + $0xa0] sm:$0xff] %v6029
      %6034 = vst [vmem:[#allocation2 + $0xa8] sm:$0xff] %v6030
      %6035 = vst [vmem:[#allocation2 + $0xb0] sm:$0xff] %v6031
      %6036 = vst [vmem:[#allocation2 + $0xb8] sm:$0xff] %v6032
      %6037 = vrot.lane.b32.xlu0 %v5781, 57
      %v6038 = vpop.permute.xlu0 %6037
      %6039 = vrot.lane.b32.xlu0 %v5782, 57
      %v6040 = vpop.permute.xlu0 %6039
      %6041 = vrot.lane.b32.xlu0 %v5783, 57
      %v6042 = vpop.permute.xlu0 %6041
      %6043 = vrot.lane.b32.xlu0 %v5784, 57
      %v6044 = vpop.permute.xlu0 %6043
      %v6045 = vsel %vm747, %v6042, %v6044
      %v6046 = vsel %vm747, %v6040, %v6042
      %v6047 = vsel %vm747, %v6038, %v6040
      %v6048 = vsel %vm747, %v6044, %v6038
      %v6049 = vld [vmem:[%s752] ss:$8 sm:$0xf]
      %v6051 = vlaneseq
      %v6052 = vshrl.u32 %v6051, 7
      %v6053 = vsub.s32 0, %v6052
      %v6054 = vrot.slane %v6049, %v6053
      %v6055 = vlaneseq
      %v6056 = vshrl.u32 %v6055, 7
      %v6057 = vsub.s32 1, %v6056
      %v6058 = vrot.slane %v6049, %v6057
      %v6059 = vlaneseq
      %v6060 = vshrl.u32 %v6059, 7
      %v6061 = vsub.s32 2, %v6060
      %v6062 = vrot.slane %v6049, %v6061
      %v6063 = vlaneseq
      %v6064 = vshrl.u32 %v6063, 7
      %v6065 = vsub.s32 3, %v6064
      %v6066 = vrot.slane %v6049, %v6065
      %v6071 = vmul.f32 %v6048, %v6054
      %v6072 = vmul.f32 %v6047, %v6058
      %v6073 = vmul.f32 %v6046, %v6062
      %v6074 = vmul.f32 %v6045, %v6066
      %6075 = vst [vmem:[#allocation2 + $0xc0] sm:$0xff] %v6071
      %6076 = vst [vmem:[#allocation2 + $0xc8] sm:$0xff] %v6072
      %6077 = vst [vmem:[#allocation2 + $0xd0] sm:$0xff] %v6073
      %6078 = vst [vmem:[#allocation2 + $0xd8] sm:$0xff] %v6074
      %6079 = vrot.lane.b32.xlu0 %v5781, 56
      %v6080 = vpop.permute.xlu0 %6079
      %6081 = vrot.lane.b32.xlu0 %v5782, 56
      %v6082 = vpop.permute.xlu0 %6081
      %6083 = vrot.lane.b32.xlu0 %v5783, 56
      %v6084 = vpop.permute.xlu0 %6083
      %6085 = vrot.lane.b32.xlu0 %v5784, 56
      %v6086 = vpop.permute.xlu0 %6085
      %v6087 = vsel %vm791, %v6084, %v6086
      %v6088 = vsel %vm791, %v6082, %v6084
      %v6089 = vsel %vm791, %v6080, %v6082
      %v6090 = vsel %vm791, %v6086, %v6080
      %v6091 = vld [vmem:[%s796] ss:$8 sm:$0xf]
      %v6093 = vlaneseq
      %v6094 = vshrl.u32 %v6093, 7
      %v6095 = vsub.s32 0, %v6094
      %v6096 = vrot.slane %v6091, %v6095
      %v6097 = vlaneseq
      %v6098 = vshrl.u32 %v6097, 7
      %v6099 = vsub.s32 1, %v6098
      %v6100 = vrot.slane %v6091, %v6099
      %v6101 = vlaneseq
      %v6102 = vshrl.u32 %v6101, 7
      %v6103 = vsub.s32 2, %v6102
      %v6104 = vrot.slane %v6091, %v6103
      %v6105 = vlaneseq
      %v6106 = vshrl.u32 %v6105, 7
      %v6107 = vsub.s32 3, %v6106
      %v6108 = vrot.slane %v6091, %v6107
      %v6113 = vmul.f32 %v6090, %v6096
      %v6114 = vmul.f32 %v6089, %v6100
      %v6115 = vmul.f32 %v6088, %v6104
      %v6116 = vmul.f32 %v6087, %v6108
      %6117 = vst [vmem:[#allocation2 + $0xe0] sm:$0xff] %v6113
      %6118 = vst [vmem:[#allocation2 + $0xe8] sm:$0xff] %v6114
      %6119 = vst [vmem:[#allocation2 + $0xf0] sm:$0xff] %v6115
      %6120 = vst [vmem:[#allocation2 + $0xf8] sm:$0xff] %v6116
      %6121 = vrot.lane.b32.xlu0 %v5781, 55
      %v6122 = vpop.permute.xlu0 %6121
      %6123 = vrot.lane.b32.xlu0 %v5782, 55
      %v6124 = vpop.permute.xlu0 %6123
      %6125 = vrot.lane.b32.xlu0 %v5783, 55
      %v6126 = vpop.permute.xlu0 %6125
      %6127 = vrot.lane.b32.xlu0 %v5784, 55
      %v6128 = vpop.permute.xlu0 %6127
      %v6129 = vsel %vm835, %v6126, %v6128
      %v6130 = vsel %vm835, %v6124, %v6126
      %v6131 = vsel %vm835, %v6122, %v6124
      %v6132 = vsel %vm835, %v6128, %v6122
      %v6133 = vld [vmem:[%s840] ss:$8 sm:$0xf]
      %v6135 = vlaneseq
      %v6136 = vshrl.u32 %v6135, 7
      %v6137 = vsub.s32 0, %v6136
      %v6138 = vrot.slane %v6133, %v6137
      %v6139 = vlaneseq
      %v6140 = vshrl.u32 %v6139, 7
      %v6141 = vsub.s32 1, %v6140
      %v6142 = vrot.slane %v6133, %v6141
      %v6143 = vlaneseq
      %v6144 = vshrl.u32 %v6143, 7
      %v6145 = vsub.s32 2, %v6144
      %v6146 = vrot.slane %v6133, %v6145
      %v6147 = vlaneseq
      %v6148 = vshrl.u32 %v6147, 7
      %v6149 = vsub.s32 3, %v6148
      %v6150 = vrot.slane %v6133, %v6149
      %v6155 = vmul.f32 %v6132, %v6138
      %v6156 = vmul.f32 %v6131, %v6142
      %v6157 = vmul.f32 %v6130, %v6146
      %v6158 = vmul.f32 %v6129, %v6150
      %6159 = vst [vmem:[#allocation2 + $0x100] sm:$0xff] %v6155
      %6160 = vst [vmem:[#allocation2 + $0x108] sm:$0xff] %v6156
      %6161 = vst [vmem:[#allocation2 + $0x110] sm:$0xff] %v6157
      %6162 = vst [vmem:[#allocation2 + $0x118] sm:$0xff] %v6158
      %6163 = vrot.lane.b32.xlu0 %v5781, 9
      %v6164 = vpop.permute.xlu0 %6163
      %6165 = vrot.lane.b32.xlu0 %v5782, 9
      %v6166 = vpop.permute.xlu0 %6165
      %6167 = vrot.lane.b32.xlu0 %v5783, 9
      %v6168 = vpop.permute.xlu0 %6167
      %6169 = vrot.lane.b32.xlu0 %v5784, 9
      %v6170 = vpop.permute.xlu0 %6169
      %v6171 = vsel %vm879, %v6168, %v6170
      %v6172 = vsel %vm879, %v6166, %v6168
      %v6173 = vsel %vm879, %v6164, %v6166
      %v6174 = vsel %vm879, %v6170, %v6164
      %v6175 = vld [vmem:[%s884] ss:$8 sm:$0xf]
      %v6177 = vlaneseq
      %v6178 = vshrl.u32 %v6177, 7
      %v6179 = vsub.s32 0, %v6178
      %v6180 = vrot.slane %v6175, %v6179
      %v6181 = vlaneseq
      %v6182 = vshrl.u32 %v6181, 7
      %v6183 = vsub.s32 1, %v6182
      %v6184 = vrot.slane %v6175, %v6183
      %v6185 = vlaneseq
      %v6186 = vshrl.u32 %v6185, 7
      %v6187 = vsub.s32 2, %v6186
      %v6188 = vrot.slane %v6175, %v6187
      %v6189 = vlaneseq
      %v6190 = vshrl.u32 %v6189, 7
      %v6191 = vsub.s32 3, %v6190
      %v6192 = vrot.slane %v6175, %v6191
      %v6197 = vmul.f32 %v6174, %v6180
      %v6198 = vmul.f32 %v6173, %v6184
      %v6199 = vmul.f32 %v6172, %v6188
      %v6200 = vmul.f32 %v6171, %v6192
      %6201 = vst [vmem:[#allocation2 + $0x120] sm:$0xff] %v6197
      %6202 = vst [vmem:[#allocation2 + $0x128] sm:$0xff] %v6198
      %6203 = vst [vmem:[#allocation2 + $0x130] sm:$0xff] %v6199
      %6204 = vst [vmem:[#allocation2 + $0x138] sm:$0xff] %v6200
      %6205 = vrot.lane.b32.xlu0 %v5781, 8
      %v6206 = vpop.permute.xlu0 %6205
      %6207 = vrot.lane.b32.xlu0 %v5782, 8
      %v6208 = vpop.permute.xlu0 %6207
      %6209 = vrot.lane.b32.xlu0 %v5783, 8
      %v6210 = vpop.permute.xlu0 %6209
      %6211 = vrot.lane.b32.xlu0 %v5784, 8
      %v6212 = vpop.permute.xlu0 %6211
      %v6213 = vsel %vm923, %v6210, %v6212
      %v6214 = vsel %vm923, %v6208, %v6210
      %v6215 = vsel %vm923, %v6206, %v6208
      %v6216 = vsel %vm923, %v6212, %v6206
      %v6217 = vld [vmem:[%s928] ss:$8 sm:$0xf]
      %v6219 = vlaneseq
      %v6220 = vshrl.u32 %v6219, 7
      %v6221 = vsub.s32 0, %v6220
      %v6222 = vrot.slane %v6217, %v6221
      %v6223 = vlaneseq
      %v6224 = vshrl.u32 %v6223, 7
      %v6225 = vsub.s32 1, %v6224
      %v6226 = vrot.slane %v6217, %v6225
      %v6227 = vlaneseq
      %v6228 = vshrl.u32 %v6227, 7
      %v6229 = vsub.s32 2, %v6228
      %v6230 = vrot.slane %v6217, %v6229
      %v6231 = vlaneseq
      %v6232 = vshrl.u32 %v6231, 7
      %v6233 = vsub.s32 3, %v6232
      %v6234 = vrot.slane %v6217, %v6233
      %v6239 = vmul.f32 %v6216, %v6222
      %v6240 = vmul.f32 %v6215, %v6226
      %v6241 = vmul.f32 %v6214, %v6230
      %v6242 = vmul.f32 %v6213, %v6234
      %6243 = vst [vmem:[#allocation2 + $0x140] sm:$0xff] %v6239
      %6244 = vst [vmem:[#allocation2 + $0x148] sm:$0xff] %v6240
      %6245 = vst [vmem:[#allocation2 + $0x150] sm:$0xff] %v6241
      %6246 = vst [vmem:[#allocation2 + $0x158] sm:$0xff] %v6242
      %6247 = vrot.lane.b32.xlu0 %v5781, 7
      %v6248 = vpop.permute.xlu0 %6247
      %6249 = vrot.lane.b32.xlu0 %v5782, 7
      %v6250 = vpop.permute.xlu0 %6249
      %6251 = vrot.lane.b32.xlu0 %v5783, 7
      %v6252 = vpop.permute.xlu0 %6251
      %6253 = vrot.lane.b32.xlu0 %v5784, 7
      %v6254 = vpop.permute.xlu0 %6253
      %v6255 = vsel %vm967, %v6252, %v6254
      %v6256 = vsel %vm967, %v6250, %v6252
      %v6257 = vsel %vm967, %v6248, %v6250
      %v6258 = vsel %vm967, %v6254, %v6248
      %v6259 = vld [vmem:[%s972] ss:$8 sm:$0xf]
      %v6261 = vlaneseq
      %v6262 = vshrl.u32 %v6261, 7
      %v6263 = vsub.s32 0, %v6262
      %v6264 = vrot.slane %v6259, %v6263
      %v6265 = vlaneseq
      %v6266 = vshrl.u32 %v6265, 7
      %v6267 = vsub.s32 1, %v6266
      %v6268 = vrot.slane %v6259, %v6267
      %v6269 = vlaneseq
      %v6270 = vshrl.u32 %v6269, 7
      %v6271 = vsub.s32 2, %v6270
      %v6272 = vrot.slane %v6259, %v6271
      %v6273 = vlaneseq
      %v6274 = vshrl.u32 %v6273, 7
      %v6275 = vsub.s32 3, %v6274
      %v6276 = vrot.slane %v6259, %v6275
      %v6281 = vmul.f32 %v6258, %v6264
      %v6282 = vmul.f32 %v6257, %v6268
      %v6283 = vmul.f32 %v6256, %v6272
      %v6284 = vmul.f32 %v6255, %v6276
      %6285 = vst [vmem:[#allocation2 + $0x160] sm:$0xff] %v6281
      %6286 = vst [vmem:[#allocation2 + $0x168] sm:$0xff] %v6282
      %6287 = vst [vmem:[#allocation2 + $0x170] sm:$0xff] %v6283
      %6288 = vst [vmem:[#allocation2 + $0x178] sm:$0xff] %v6284
      %6289 = vrot.lane.b32.xlu0 %v5781, 1
      %v6290 = vpop.permute.xlu0 %6289
      %6291 = vrot.lane.b32.xlu0 %v5782, 1
      %v6292 = vpop.permute.xlu0 %6291
      %6293 = vrot.lane.b32.xlu0 %v5783, 1
      %v6294 = vpop.permute.xlu0 %6293
      %6295 = vrot.lane.b32.xlu0 %v5784, 1
      %v6296 = vpop.permute.xlu0 %6295
      %v6297 = vsel %vm1011, %v6294, %v6296
      %v6298 = vsel %vm1011, %v6292, %v6294
      %v6299 = vsel %vm1011, %v6290, %v6292
      %v6300 = vsel %vm1011, %v6296, %v6290
      %v6301 = vld [vmem:[%s1016] ss:$8 sm:$0xf]
      %v6303 = vlaneseq
      %v6304 = vshrl.u32 %v6303, 7
      %v6305 = vsub.s32 0, %v6304
      %v6306 = vrot.slane %v6301, %v6305
      %v6307 = vlaneseq
      %v6308 = vshrl.u32 %v6307, 7
      %v6309 = vsub.s32 1, %v6308
      %v6310 = vrot.slane %v6301, %v6309
      %v6311 = vlaneseq
      %v6312 = vshrl.u32 %v6311, 7
      %v6313 = vsub.s32 2, %v6312
      %v6314 = vrot.slane %v6301, %v6313
      %v6315 = vlaneseq
      %v6316 = vshrl.u32 %v6315, 7
      %v6317 = vsub.s32 3, %v6316
      %v6318 = vrot.slane %v6301, %v6317
      %v6323 = vmul.f32 %v6300, %v6306
      %v6324 = vmul.f32 %v6299, %v6310
      %v6325 = vmul.f32 %v6298, %v6314
      %v6326 = vmul.f32 %v6297, %v6318
      %6327 = vst [vmem:[#allocation2 + $0x180] sm:$0xff] %v6323
      %6328 = vst [vmem:[#allocation2 + $0x188] sm:$0xff] %v6324
      %6329 = vst [vmem:[#allocation2 + $0x190] sm:$0xff] %v6325
      %6330 = vst [vmem:[#allocation2 + $0x198] sm:$0xff] %v6326
      %v6331 = vld [vmem:[%s1047] ss:$8 sm:$0xf]
      %v6333 = vlaneseq
      %v6334 = vshrl.u32 %v6333, 7
      %v6335 = vsub.s32 0, %v6334
      %v6336 = vrot.slane %v6331, %v6335
      %v6337 = vlaneseq
      %v6338 = vshrl.u32 %v6337, 7
      %v6339 = vsub.s32 1, %v6338
      %v6340 = vrot.slane %v6331, %v6339
      %v6341 = vlaneseq
      %v6342 = vshrl.u32 %v6341, 7
      %v6343 = vsub.s32 2, %v6342
      %v6344 = vrot.slane %v6331, %v6343
      %v6345 = vlaneseq
      %v6346 = vshrl.u32 %v6345, 7
      %v6347 = vsub.s32 3, %v6346
      %v6348 = vrot.slane %v6331, %v6347
      %v6353 = vmul.f32 %v5781, %v6336
      %v6354 = vmul.f32 %v5782, %v6340
      %v6355 = vmul.f32 %v5783, %v6344
      %v6356 = vmul.f32 %v5784, %v6348
      %6357 = vst [vmem:[#allocation2 + $0x1a0] sm:$0xff] %v6353
      %6358 = vst [vmem:[#allocation2 + $0x1a8] sm:$0xff] %v6354
      %6359 = vst [vmem:[#allocation2 + $0x1b0] sm:$0xff] %v6355
      %6360 = vst [vmem:[#allocation2 + $0x1b8] sm:$0xff] %v6356
      %6361 = vrot.lane.b32.xlu0 %v5781, 127
      %v6362 = vpop.permute.xlu0 %6361
      %6363 = vrot.lane.b32.xlu0 %v5782, 127
      %v6364 = vpop.permute.xlu0 %6363
      %6365 = vrot.lane.b32.xlu0 %v5783, 127
      %v6366 = vpop.permute.xlu0 %6365
      %6367 = vrot.lane.b32.xlu0 %v5784, 127
      %v6368 = vpop.permute.xlu0 %6367
      %v6369 = vsel %vm1086, %v6366, %v6368
      %v6370 = vsel %vm1086, %v6364, %v6366
      %v6371 = vsel %vm1086, %v6362, %v6364
      %v6372 = vsel %vm1086, %v6368, %v6362
      %v6373 = vld [vmem:[%s1091] ss:$8 sm:$0xf]
      %v6375 = vlaneseq
      %v6376 = vshrl.u32 %v6375, 7
      %v6377 = vsub.s32 0, %v6376
      %v6378 = vrot.slane %v6373, %v6377
      %v6379 = vlaneseq
      %v6380 = vshrl.u32 %v6379, 7
      %v6381 = vsub.s32 1, %v6380
      %v6382 = vrot.slane %v6373, %v6381
      %v6383 = vlaneseq
      %v6384 = vshrl.u32 %v6383, 7
      %v6385 = vsub.s32 2, %v6384
      %v6386 = vrot.slane %v6373, %v6385
      %v6387 = vlaneseq
      %v6388 = vshrl.u32 %v6387, 7
      %v6389 = vsub.s32 3, %v6388
      %v6390 = vrot.slane %v6373, %v6389
      %v6395 = vmul.f32 %v6371, %v6378
      %v6396 = vmul.f32 %v6370, %v6382
      %v6397 = vmul.f32 %v6369, %v6386
      %v6398 = vmul.f32 %v6372, %v6390
      %6399 = vst [vmem:[#allocation2 + $0x1c0] sm:$0xff] %v6395
      %6400 = vst [vmem:[#allocation2 + $0x1c8] sm:$0xff] %v6396
      %6401 = vst [vmem:[#allocation2 + $0x1d0] sm:$0xff] %v6397
      %6402 = vst [vmem:[#allocation2 + $0x1d8] sm:$0xff] %v6398
      %6403 = vrot.lane.b32.xlu0 %v5781, 121
      %v6404 = vpop.permute.xlu0 %6403
      %6405 = vrot.lane.b32.xlu0 %v5782, 121
      %v6406 = vpop.permute.xlu0 %6405
      %6407 = vrot.lane.b32.xlu0 %v5783, 121
      %v6408 = vpop.permute.xlu0 %6407
      %6409 = vrot.lane.b32.xlu0 %v5784, 121
      %v6410 = vpop.permute.xlu0 %6409
      %v6411 = vsel %vm1130, %v6408, %v6410
      %v6412 = vsel %vm1130, %v6406, %v6408
      %v6413 = vsel %vm1130, %v6404, %v6406
      %v6414 = vsel %vm1130, %v6410, %v6404
      %v6415 = vld [vmem:[%s1135] ss:$8 sm:$0xf]
      %v6417 = vlaneseq
      %v6418 = vshrl.u32 %v6417, 7
      %v6419 = vsub.s32 0, %v6418
      %v6420 = vrot.slane %v6415, %v6419
      %v6421 = vlaneseq
      %v6422 = vshrl.u32 %v6421, 7
      %v6423 = vsub.s32 1, %v6422
      %v6424 = vrot.slane %v6415, %v6423
      %v6425 = vlaneseq
      %v6426 = vshrl.u32 %v6425, 7
      %v6427 = vsub.s32 2, %v6426
      %v6428 = vrot.slane %v6415, %v6427
      %v6429 = vlaneseq
      %v6430 = vshrl.u32 %v6429, 7
      %v6431 = vsub.s32 3, %v6430
      %v6432 = vrot.slane %v6415, %v6431
      %v6437 = vmul.f32 %v6413, %v6420
      %v6438 = vmul.f32 %v6412, %v6424
      %v6439 = vmul.f32 %v6411, %v6428
      %v6440 = vmul.f32 %v6414, %v6432
      %6441 = vst [vmem:[#allocation2 + $0x1e0] sm:$0xff] %v6437
      %6442 = vst [vmem:[#allocation2 + $0x1e8] sm:$0xff] %v6438
      %6443 = vst [vmem:[#allocation2 + $0x1f0] sm:$0xff] %v6439
      %6444 = vst [vmem:[#allocation2 + $0x1f8] sm:$0xff] %v6440
      %6445 = vrot.lane.b32.xlu0 %v5781, 120
      %v6446 = vpop.permute.xlu0 %6445
      %6447 = vrot.lane.b32.xlu0 %v5782, 120
      %v6448 = vpop.permute.xlu0 %6447
      %6449 = vrot.lane.b32.xlu0 %v5783, 120
      %v6450 = vpop.permute.xlu0 %6449
      %6451 = vrot.lane.b32.xlu0 %v5784, 120
      %v6452 = vpop.permute.xlu0 %6451
      %v6453 = vsel %vm1174, %v6450, %v6452
      %v6454 = vsel %vm1174, %v6448, %v6450
      %v6455 = vsel %vm1174, %v6446, %v6448
      %v6456 = vsel %vm1174, %v6452, %v6446
      %v6457 = vld [vmem:[%s1179] ss:$8 sm:$0xf]
      %v6459 = vlaneseq
      %v6460 = vshrl.u32 %v6459, 7
      %v6461 = vsub.s32 0, %v6460
      %v6462 = vrot.slane %v6457, %v6461
      %v6463 = vlaneseq
      %v6464 = vshrl.u32 %v6463, 7
      %v6465 = vsub.s32 1, %v6464
      %v6466 = vrot.slane %v6457, %v6465
      %v6467 = vlaneseq
      %v6468 = vshrl.u32 %v6467, 7
      %v6469 = vsub.s32 2, %v6468
      %v6470 = vrot.slane %v6457, %v6469
      %v6471 = vlaneseq
      %v6472 = vshrl.u32 %v6471, 7
      %v6473 = vsub.s32 3, %v6472
      %v6474 = vrot.slane %v6457, %v6473
      %v6479 = vmul.f32 %v6455, %v6462
      %v6480 = vmul.f32 %v6454, %v6466
      %v6481 = vmul.f32 %v6453, %v6470
      %v6482 = vmul.f32 %v6456, %v6474
      %6483 = vst [vmem:[#allocation2 + $0x200] sm:$0xff] %v6479
      %6484 = vst [vmem:[#allocation2 + $0x208] sm:$0xff] %v6480
      %6485 = vst [vmem:[#allocation2 + $0x210] sm:$0xff] %v6481
      %6486 = vst [vmem:[#allocation2 + $0x218] sm:$0xff] %v6482
      %6487 = vrot.lane.b32.xlu0 %v5781, 119
      %v6488 = vpop.permute.xlu0 %6487
      %6489 = vrot.lane.b32.xlu0 %v5782, 119
      %v6490 = vpop.permute.xlu0 %6489
      %6491 = vrot.lane.b32.xlu0 %v5783, 119
      %v6492 = vpop.permute.xlu0 %6491
      %6493 = vrot.lane.b32.xlu0 %v5784, 119
      %v6494 = vpop.permute.xlu0 %6493
      %v6495 = vsel %vm1218, %v6492, %v6494
      %v6496 = vsel %vm1218, %v6490, %v6492
      %v6497 = vsel %vm1218, %v6488, %v6490
      %v6498 = vsel %vm1218, %v6494, %v6488
      %v6499 = vld [vmem:[%s1223] ss:$8 sm:$0xf]
      %v6501 = vlaneseq
      %v6502 = vshrl.u32 %v6501, 7
      %v6503 = vsub.s32 0, %v6502
      %v6504 = vrot.slane %v6499, %v6503
      %v6505 = vlaneseq
      %v6506 = vshrl.u32 %v6505, 7
      %v6507 = vsub.s32 1, %v6506
      %v6508 = vrot.slane %v6499, %v6507
      %v6509 = vlaneseq
      %v6510 = vshrl.u32 %v6509, 7
      %v6511 = vsub.s32 2, %v6510
      %v6512 = vrot.slane %v6499, %v6511
      %v6513 = vlaneseq
      %v6514 = vshrl.u32 %v6513, 7
      %v6515 = vsub.s32 3, %v6514
      %v6516 = vrot.slane %v6499, %v6515
      %v6521 = vmul.f32 %v6497, %v6504
      %v6522 = vmul.f32 %v6496, %v6508
      %v6523 = vmul.f32 %v6495, %v6512
      %v6524 = vmul.f32 %v6498, %v6516
      %6525 = vst [vmem:[#allocation2 + $0x220] sm:$0xff] %v6521
      %6526 = vst [vmem:[#allocation2 + $0x228] sm:$0xff] %v6522
      %6527 = vst [vmem:[#allocation2 + $0x230] sm:$0xff] %v6523
      %6528 = vst [vmem:[#allocation2 + $0x238] sm:$0xff] %v6524
      %v6529 = vld [vmem:[%s1254] ss:$8 sm:$0xf]
      %v6531 = vlaneseq
      %v6532 = vshrl.u32 %v6531, 7
      %v6533 = vsub.s32 0, %v6532
      %v6534 = vrot.slane %v6529, %v6533
      %v6535 = vlaneseq
      %v6536 = vshrl.u32 %v6535, 7
      %v6537 = vsub.s32 1, %v6536
      %v6538 = vrot.slane %v6529, %v6537
      %v6539 = vlaneseq
      %v6540 = vshrl.u32 %v6539, 7
      %v6541 = vsub.s32 2, %v6540
      %v6542 = vrot.slane %v6529, %v6541
      %v6543 = vlaneseq
      %v6544 = vshrl.u32 %v6543, 7
      %v6545 = vsub.s32 3, %v6544
      %v6546 = vrot.slane %v6529, %v6545
      %v6551 = vmul.f32 %v5795, %v6534
      %v6552 = vmul.f32 %v5794, %v6538
      %v6553 = vmul.f32 %v5793, %v6542
      %v6554 = vmul.f32 %v5796, %v6546
      %6555 = vst [vmem:[#allocation2 + $0x240] sm:$0xff] %v6551
      %6556 = vst [vmem:[#allocation2 + $0x248] sm:$0xff] %v6552
      %6557 = vst [vmem:[#allocation2 + $0x250] sm:$0xff] %v6553
      %6558 = vst [vmem:[#allocation2 + $0x258] sm:$0xff] %v6554
      %v6559 = vld [vmem:[%s1285] ss:$8 sm:$0xf]
      %v6561 = vlaneseq
      %v6562 = vshrl.u32 %v6561, 7
      %v6563 = vsub.s32 0, %v6562
      %v6564 = vrot.slane %v6559, %v6563
      %v6565 = vlaneseq
      %v6566 = vshrl.u32 %v6565, 7
      %v6567 = vsub.s32 1, %v6566
      %v6568 = vrot.slane %v6559, %v6567
      %v6569 = vlaneseq
      %v6570 = vshrl.u32 %v6569, 7
      %v6571 = vsub.s32 2, %v6570
      %v6572 = vrot.slane %v6559, %v6571
      %v6573 = vlaneseq
      %v6574 = vshrl.u32 %v6573, 7
      %v6575 = vsub.s32 3, %v6574
      %v6576 = vrot.slane %v6559, %v6575
      %v6581 = vmul.f32 %v5837, %v6564
      %v6582 = vmul.f32 %v5836, %v6568
      %v6583 = vmul.f32 %v5835, %v6572
      %v6584 = vmul.f32 %v5838, %v6576
      %6585 = vst [vmem:[#allocation2 + $0x260] sm:$0xff] %v6581
      %6586 = vst [vmem:[#allocation2 + $0x268] sm:$0xff] %v6582
      %6587 = vst [vmem:[#allocation2 + $0x270] sm:$0xff] %v6583
      %6588 = vst [vmem:[#allocation2 + $0x278] sm:$0xff] %v6584
      %v6589 = vld [vmem:[%s1316] ss:$8 sm:$0xf]
      %v6591 = vlaneseq
      %v6592 = vshrl.u32 %v6591, 7
      %v6593 = vsub.s32 0, %v6592
      %v6594 = vrot.slane %v6589, %v6593
      %v6595 = vlaneseq
      %v6596 = vshrl.u32 %v6595, 7
      %v6597 = vsub.s32 1, %v6596
      %v6598 = vrot.slane %v6589, %v6597
      %v6599 = vlaneseq
      %v6600 = vshrl.u32 %v6599, 7
      %v6601 = vsub.s32 2, %v6600
      %v6602 = vrot.slane %v6589, %v6601
      %v6603 = vlaneseq
      %v6604 = vshrl.u32 %v6603, 7
      %v6605 = vsub.s32 3, %v6604
      %v6606 = vrot.slane %v6589, %v6605
      %v6611 = vmul.f32 %v5879, %v6594
      %v6612 = vmul.f32 %v5878, %v6598
      %v6613 = vmul.f32 %v5877, %v6602
      %v6614 = vmul.f32 %v5880, %v6606
      %6615 = vst [vmem:[#allocation2 + $0x280] sm:$0xff] %v6611
      %6616 = vst [vmem:[#allocation2 + $0x288] sm:$0xff] %v6612
      %6617 = vst [vmem:[#allocation2 + $0x290] sm:$0xff] %v6613
      %6618 = vst [vmem:[#allocation2 + $0x298] sm:$0xff] %v6614
      %v6619 = vld [vmem:[%s1347] ss:$8 sm:$0xf]
      %v6621 = vlaneseq
      %v6622 = vshrl.u32 %v6621, 7
      %v6623 = vsub.s32 0, %v6622
      %v6624 = vrot.slane %v6619, %v6623
      %v6625 = vlaneseq
      %v6626 = vshrl.u32 %v6625, 7
      %v6627 = vsub.s32 1, %v6626
      %v6628 = vrot.slane %v6619, %v6627
      %v6629 = vlaneseq
      %v6630 = vshrl.u32 %v6629, 7
      %v6631 = vsub.s32 2, %v6630
      %v6632 = vrot.slane %v6619, %v6631
      %v6633 = vlaneseq
      %v6634 = vshrl.u32 %v6633, 7
      %v6635 = vsub.s32 3, %v6634
      %v6636 = vrot.slane %v6619, %v6635
      %v6641 = vmul.f32 %v5921, %v6624
      %v6642 = vmul.f32 %v5920, %v6628
      %v6643 = vmul.f32 %v5919, %v6632
      %v6644 = vmul.f32 %v5922, %v6636
      %6645 = vst [vmem:[#allocation2 + $0x2a0] sm:$0xff] %v6641
      %6646 = vst [vmem:[#allocation2 + $0x2a8] sm:$0xff] %v6642
      %6647 = vst [vmem:[#allocation2 + $0x2b0] sm:$0xff] %v6643
      %6648 = vst [vmem:[#allocation2 + $0x2b8] sm:$0xff] %v6644
      %v6649 = vld [vmem:[%s1378] ss:$8 sm:$0xf]
      %v6651 = vlaneseq
      %v6652 = vshrl.u32 %v6651, 7
      %v6653 = vsub.s32 0, %v6652
      %v6654 = vrot.slane %v6649, %v6653
      %v6655 = vlaneseq
      %v6656 = vshrl.u32 %v6655, 7
      %v6657 = vsub.s32 1, %v6656
      %v6658 = vrot.slane %v6649, %v6657
      %v6659 = vlaneseq
      %v6660 = vshrl.u32 %v6659, 7
      %v6661 = vsub.s32 2, %v6660
      %v6662 = vrot.slane %v6649, %v6661
      %v6663 = vlaneseq
      %v6664 = vshrl.u32 %v6663, 7
      %v6665 = vsub.s32 3, %v6664
      %v6666 = vrot.slane %v6649, %v6665
      %v6671 = vmul.f32 %v5963, %v6654
      %v6672 = vmul.f32 %v5962, %v6658
      %v6673 = vmul.f32 %v5961, %v6662
      %v6674 = vmul.f32 %v5964, %v6666
      %6675 = vst [vmem:[#allocation2 + $0x2c0] sm:$0xff] %v6671
      %6676 = vst [vmem:[#allocation2 + $0x2c8] sm:$0xff] %v6672
      %6677 = vst [vmem:[#allocation2 + $0x2d0] sm:$0xff] %v6673
      %6678 = vst [vmem:[#allocation2 + $0x2d8] sm:$0xff] %v6674
      %v6679 = vld [vmem:[%s1409] ss:$8 sm:$0xf]
      %v6681 = vlaneseq
      %v6682 = vshrl.u32 %v6681, 7
      %v6683 = vsub.s32 0, %v6682
      %v6684 = vrot.slane %v6679, %v6683
      %v6685 = vlaneseq
      %v6686 = vshrl.u32 %v6685, 7
      %v6687 = vsub.s32 1, %v6686
      %v6688 = vrot.slane %v6679, %v6687
      %v6689 = vlaneseq
      %v6690 = vshrl.u32 %v6689, 7
      %v6691 = vsub.s32 2, %v6690
      %v6692 = vrot.slane %v6679, %v6691
      %v6693 = vlaneseq
      %v6694 = vshrl.u32 %v6693, 7
      %v6695 = vsub.s32 3, %v6694
      %v6696 = vrot.slane %v6679, %v6695
      %v6701 = vmul.f32 %v6005, %v6684
      %v6702 = vmul.f32 %v6004, %v6688
      %v6703 = vmul.f32 %v6003, %v6692
      %v6704 = vmul.f32 %v6006, %v6696
      %6705 = vst [vmem:[#allocation2 + $0x2e0] sm:$0xff] %v6701
      %6706 = vst [vmem:[#allocation2 + $0x2e8] sm:$0xff] %v6702
      %6707 = vst [vmem:[#allocation2 + $0x2f0] sm:$0xff] %v6703
      %6708 = vst [vmem:[#allocation2 + $0x2f8] sm:$0xff] %v6704
      %v6709 = vld [vmem:[%s1440] ss:$8 sm:$0xf]
      %v6711 = vlaneseq
      %v6712 = vshrl.u32 %v6711, 7
      %v6713 = vsub.s32 0, %v6712
      %v6714 = vrot.slane %v6709, %v6713
      %v6715 = vlaneseq
      %v6716 = vshrl.u32 %v6715, 7
      %v6717 = vsub.s32 1, %v6716
      %v6718 = vrot.slane %v6709, %v6717
      %v6719 = vlaneseq
      %v6720 = vshrl.u32 %v6719, 7
      %v6721 = vsub.s32 2, %v6720
      %v6722 = vrot.slane %v6709, %v6721
      %v6723 = vlaneseq
      %v6724 = vshrl.u32 %v6723, 7
      %v6725 = vsub.s32 3, %v6724
      %v6726 = vrot.slane %v6709, %v6725
      %v6731 = vmul.f32 %v6047, %v6714
      %v6732 = vmul.f32 %v6046, %v6718
      %v6733 = vmul.f32 %v6045, %v6722
      %v6734 = vmul.f32 %v6048, %v6726
      %6735 = vst [vmem:[#allocation2 + $0x300] sm:$0xff] %v6731
      %6736 = vst [vmem:[#allocation2 + $0x308] sm:$0xff] %v6732
      %6737 = vst [vmem:[#allocation2 + $0x310] sm:$0xff] %v6733
      %6738 = vst [vmem:[#allocation2 + $0x318] sm:$0xff] %v6734
      %v6739 = vld [vmem:[%s1471] ss:$8 sm:$0xf]
      %v6741 = vlaneseq
      %v6742 = vshrl.u32 %v6741, 7
      %v6743 = vsub.s32 0, %v6742
      %v6744 = vrot.slane %v6739, %v6743
      %v6745 = vlaneseq
      %v6746 = vshrl.u32 %v6745, 7
      %v6747 = vsub.s32 1, %v6746
      %v6748 = vrot.slane %v6739, %v6747
      %v6749 = vlaneseq
      %v6750 = vshrl.u32 %v6749, 7
      %v6751 = vsub.s32 2, %v6750
      %v6752 = vrot.slane %v6739, %v6751
      %v6753 = vlaneseq
      %v6754 = vshrl.u32 %v6753, 7
      %v6755 = vsub.s32 3, %v6754
      %v6756 = vrot.slane %v6739, %v6755
      %v6761 = vmul.f32 %v6089, %v6744
      %v6762 = vmul.f32 %v6088, %v6748
      %v6763 = vmul.f32 %v6087, %v6752
      %v6764 = vmul.f32 %v6090, %v6756
      %6765 = vst [vmem:[#allocation2 + $0x320] sm:$0xff] %v6761
      %6766 = vst [vmem:[#allocation2 + $0x328] sm:$0xff] %v6762
      %6767 = vst [vmem:[#allocation2 + $0x330] sm:$0xff] %v6763
      %6768 = vst [vmem:[#allocation2 + $0x338] sm:$0xff] %v6764
      %v6769 = vld [vmem:[%s1502] ss:$8 sm:$0xf]
      %v6771 = vlaneseq
      %v6772 = vshrl.u32 %v6771, 7
      %v6773 = vsub.s32 0, %v6772
      %v6774 = vrot.slane %v6769, %v6773
      %v6775 = vlaneseq
      %v6776 = vshrl.u32 %v6775, 7
      %v6777 = vsub.s32 1, %v6776
      %v6778 = vrot.slane %v6769, %v6777
      %v6779 = vlaneseq
      %v6780 = vshrl.u32 %v6779, 7
      %v6781 = vsub.s32 2, %v6780
      %v6782 = vrot.slane %v6769, %v6781
      %v6783 = vlaneseq
      %v6784 = vshrl.u32 %v6783, 7
      %v6785 = vsub.s32 3, %v6784
      %v6786 = vrot.slane %v6769, %v6785
      %v6791 = vmul.f32 %v6131, %v6774
      %v6792 = vmul.f32 %v6130, %v6778
      %v6793 = vmul.f32 %v6129, %v6782
      %v6794 = vmul.f32 %v6132, %v6786
      %6795 = vst [vmem:[#allocation2 + $0x340] sm:$0xff] %v6791
      %6796 = vst [vmem:[#allocation2 + $0x348] sm:$0xff] %v6792
      %6797 = vst [vmem:[#allocation2 + $0x350] sm:$0xff] %v6793
      %6798 = vst [vmem:[#allocation2 + $0x358] sm:$0xff] %v6794
      %v6799 = vld [vmem:[%s6] sm:$0xff]
      %v6800 = vld [vmem:[%s6 + $0x8] sm:$0xff]
      %v6801 = vld [vmem:[#allocation2] sm:$0xff]
      %v6802 = vld [vmem:[#allocation2 + $0x8] sm:$0xff]
      %v6803 = vld [vmem:[#allocation2 + $0x10] sm:$0xff]
      %v6804 = vld [vmem:[#allocation2 + $0x18] sm:$0xff]
      %v6805 = vld [vmem:[#allocation2 + $0x20] sm:$0xff]
      %v6806 = vld [vmem:[#allocation2 + $0x28] sm:$0xff]
      %v6807 = vld [vmem:[#allocation2 + $0x30] sm:$0xff]
      %v6808 = vld [vmem:[#allocation2 + $0x38] sm:$0xff]
      %v6809 = vld [vmem:[#allocation2 + $0x40] sm:$0xff]
      %v6810 = vld [vmem:[#allocation2 + $0x48] sm:$0xff]
      %v6811 = vld [vmem:[#allocation2 + $0x50] sm:$0xff]
      %v6812 = vld [vmem:[#allocation2 + $0x58] sm:$0xff]
      %v6813 = vld [vmem:[#allocation2 + $0x60] sm:$0xff]
      %v6814 = vld [vmem:[#allocation2 + $0x68] sm:$0xff]
      %v6815 = vld [vmem:[#allocation2 + $0x70] sm:$0xff]
      %v6816 = vld [vmem:[#allocation2 + $0x78] sm:$0xff]
      %v6817 = vld [vmem:[#allocation2 + $0x80] sm:$0xff]
      %v6818 = vld [vmem:[#allocation2 + $0x88] sm:$0xff]
      %v6819 = vld [vmem:[#allocation2 + $0x90] sm:$0xff]
      %v6820 = vld [vmem:[#allocation2 + $0x98] sm:$0xff]
      %v6821 = vld [vmem:[#allocation2 + $0xa0] sm:$0xff]
      %v6822 = vld [vmem:[#allocation2 + $0xa8] sm:$0xff]
      %v6823 = vld [vmem:[#allocation2 + $0xb0] sm:$0xff]
      %v6824 = vld [vmem:[#allocation2 + $0xb8] sm:$0xff]
      %v6825 = vld [vmem:[#allocation2 + $0xc0] sm:$0xff]
      %v6826 = vld [vmem:[#allocation2 + $0xc8] sm:$0xff]
      %v6827 = vld [vmem:[#allocation2 + $0xd0] sm:$0xff]
      %v6828 = vld [vmem:[#allocation2 + $0xd8] sm:$0xff]
      %v6829 = vld [vmem:[#allocation2 + $0xe0] sm:$0xff]
      %v6830 = vld [vmem:[#allocation2 + $0xe8] sm:$0xff]
      %v6831 = vld [vmem:[#allocation2 + $0xf0] sm:$0xff]
      %v6832 = vld [vmem:[#allocation2 + $0xf8] sm:$0xff]
      %v6833 = vld [vmem:[#allocation2 + $0x100] sm:$0xff]
      %v6834 = vld [vmem:[#allocation2 + $0x108] sm:$0xff]
      %v6835 = vld [vmem:[#allocation2 + $0x110] sm:$0xff]
      %v6836 = vld [vmem:[#allocation2 + $0x118] sm:$0xff]
      %v6837 = vld [vmem:[#allocation2 + $0x120] sm:$0xff]
      %v6838 = vld [vmem:[#allocation2 + $0x128] sm:$0xff]
      %v6839 = vld [vmem:[#allocation2 + $0x130] sm:$0xff]
      %v6840 = vld [vmem:[#allocation2 + $0x138] sm:$0xff]
      %v6841 = vld [vmem:[#allocation2 + $0x140] sm:$0xff]
      %v6842 = vld [vmem:[#allocation2 + $0x148] sm:$0xff]
      %v6843 = vld [vmem:[#allocation2 + $0x150] sm:$0xff]
      %v6844 = vld [vmem:[#allocation2 + $0x158] sm:$0xff]
      %v6845 = vld [vmem:[#allocation2 + $0x160] sm:$0xff]
      %v6846 = vld [vmem:[#allocation2 + $0x168] sm:$0xff]
      %v6847 = vld [vmem:[#allocation2 + $0x170] sm:$0xff]
      %v6848 = vld [vmem:[#allocation2 + $0x178] sm:$0xff]
      %v6849 = vld [vmem:[#allocation2 + $0x180] sm:$0xff]
      %v6850 = vld [vmem:[#allocation2 + $0x188] sm:$0xff]
      %v6851 = vld [vmem:[#allocation2 + $0x190] sm:$0xff]
      %v6852 = vld [vmem:[#allocation2 + $0x198] sm:$0xff]
      %v6853 = vld [vmem:[#allocation2 + $0x1a0] sm:$0xff]
      %v6854 = vld [vmem:[#allocation2 + $0x1a8] sm:$0xff]
      %v6855 = vld [vmem:[#allocation2 + $0x1b0] sm:$0xff]
      %v6856 = vld [vmem:[#allocation2 + $0x1b8] sm:$0xff]
      %v6857 = vld [vmem:[#allocation2 + $0x1c0] sm:$0xff]
      %v6858 = vld [vmem:[#allocation2 + $0x1c8] sm:$0xff]
      %v6859 = vld [vmem:[#allocation2 + $0x1d0] sm:$0xff]
      %v6860 = vld [vmem:[#allocation2 + $0x1d8] sm:$0xff]
      %v6861 = vld [vmem:[#allocation2 + $0x1e0] sm:$0xff]
      %v6862 = vld [vmem:[#allocation2 + $0x1e8] sm:$0xff]
      %v6863 = vld [vmem:[#allocation2 + $0x1f0] sm:$0xff]
      %v6864 = vld [vmem:[#allocation2 + $0x1f8] sm:$0xff]
      %v6865 = vld [vmem:[#allocation2 + $0x200] sm:$0xff]
      %v6866 = vld [vmem:[#allocation2 + $0x208] sm:$0xff]
      %v6867 = vld [vmem:[#allocation2 + $0x210] sm:$0xff]
      %v6868 = vld [vmem:[#allocation2 + $0x218] sm:$0xff]
      %v6869 = vld [vmem:[#allocation2 + $0x220] sm:$0xff]
      %v6870 = vld [vmem:[#allocation2 + $0x228] sm:$0xff]
      %v6871 = vld [vmem:[#allocation2 + $0x230] sm:$0xff]
      %v6872 = vld [vmem:[#allocation2 + $0x238] sm:$0xff]
      %v6873 = vld [vmem:[#allocation2 + $0x240] sm:$0xff]
      %v6874 = vld [vmem:[#allocation2 + $0x248] sm:$0xff]
      %v6875 = vld [vmem:[#allocation2 + $0x250] sm:$0xff]
      %v6876 = vld [vmem:[#allocation2 + $0x258] sm:$0xff]
      %v6877 = vld [vmem:[#allocation2 + $0x260] sm:$0xff]
      %v6878 = vld [vmem:[#allocation2 + $0x268] sm:$0xff]
      %v6879 = vld [vmem:[#allocation2 + $0x270] sm:$0xff]
      %v6880 = vld [vmem:[#allocation2 + $0x278] sm:$0xff]
      %v6881 = vld [vmem:[#allocation2 + $0x280] sm:$0xff]
      %v6882 = vld [vmem:[#allocation2 + $0x288] sm:$0xff]
      %v6883 = vld [vmem:[#allocation2 + $0x290] sm:$0xff]
      %v6884 = vld [vmem:[#allocation2 + $0x298] sm:$0xff]
      %v6885 = vld [vmem:[#allocation2 + $0x2a0] sm:$0xff]
      %v6886 = vld [vmem:[#allocation2 + $0x2a8] sm:$0xff]
      %v6887 = vld [vmem:[#allocation2 + $0x2b0] sm:$0xff]
      %v6888 = vld [vmem:[#allocation2 + $0x2b8] sm:$0xff]
      %v6889 = vld [vmem:[#allocation2 + $0x2c0] sm:$0xff]
      %v6890 = vld [vmem:[#allocation2 + $0x2c8] sm:$0xff]
      %v6891 = vld [vmem:[#allocation2 + $0x2d0] sm:$0xff]
      %v6892 = vld [vmem:[#allocation2 + $0x2d8] sm:$0xff]
      %v6893 = vld [vmem:[#allocation2 + $0x2e0] sm:$0xff]
      %v6894 = vld [vmem:[#allocation2 + $0x2e8] sm:$0xff]
      %v6895 = vld [vmem:[#allocation2 + $0x2f0] sm:$0xff]
      %v6896 = vld [vmem:[#allocation2 + $0x2f8] sm:$0xff]
      %v6897 = vld [vmem:[#allocation2 + $0x300] sm:$0xff]
      %v6898 = vld [vmem:[#allocation2 + $0x308] sm:$0xff]
      %v6899 = vld [vmem:[#allocation2 + $0x310] sm:$0xff]
      %v6900 = vld [vmem:[#allocation2 + $0x318] sm:$0xff]
      %v6901 = vld [vmem:[#allocation2 + $0x320] sm:$0xff]
      %v6902 = vld [vmem:[#allocation2 + $0x328] sm:$0xff]
      %v6903 = vld [vmem:[#allocation2 + $0x330] sm:$0xff]
      %v6904 = vld [vmem:[#allocation2 + $0x338] sm:$0xff]
      %v6905 = vld [vmem:[#allocation2 + $0x340] sm:$0xff]
      %v6906 = vld [vmem:[#allocation2 + $0x348] sm:$0xff]
      %v6907 = vld [vmem:[#allocation2 + $0x350] sm:$0xff]
      %v6908 = vld [vmem:[#allocation2 + $0x358] sm:$0xff]
      %v6909 = vld [vmem:[%s7] sm:$0xff]
      %6911 = vset.pattern.permute.xlu0 0
      %6912 = vperm.xlu0 %6911, %v6909
      %v6913 = vpop.permute.xlu0 %6912
      %v6916 = vsel %vm1649, %v6800, 0
      %6918 = vmatprep.subr.mxu0 %v6802
      %6919 = vmatpush1.msra.mxu0 %v6801
      %6920 = vmatprep.subr.mxu0 %v6806
      %6921 = vmatpush1.msra.mxu0 %v6805
      %6922 = vmatprep.subr.mxu0 %v6810
      %6923 = vmatpush1.msra.mxu0 %v6809
      %6924 = vmatprep.subr.mxu0 %v6814
      %6925 = vmatpush1.msra.mxu0 %v6813
      %6926 = vmatprep.subr.mxu0 %v6818
      %6927 = vmatpush1.msra.mxu0 %v6817
      %6928 = vmatprep.subr.mxu0 %v6822
      %6929 = vmatpush1.msra.mxu0 %v6821
      %6930 = vmatprep.subr.mxu0 %v6826
      %6931 = vmatpush1.msra.mxu0 %v6825
      %6932 = vmatprep.subr.mxu0 %v6830
      %6933 = vmatpush1.msra.mxu0 %v6829
      %6934 = vmatprep.subr.mxu0 %v6834
      %6935 = vmatpush1.msra.mxu0 %v6833
      %6936 = vmatprep.subr.mxu0 %v6838
      %6937 = vmatpush1.msra.mxu0 %v6837
      %6938 = vmatprep.subr.mxu0 %v6842
      %6939 = vmatpush1.msra.mxu0 %v6841
      %6940 = vmatprep.subr.mxu0 %v6846
      %6941 = vmatpush1.msra.mxu0 %v6845
      %6942 = vmatprep.subr.mxu0 %v6850
      %6943 = vmatpush1.msra.mxu0 %v6849
      %6944 = vmatprep.subr.mxu0 %v6854
      %6945 = vmatpush1.msra.mxu0 %v6853
      %6946 = vmatprep.subr.mxu0 %v6858
      %6947 = vmatpush1.msra.mxu0 %v6857
      %6948 = vmatprep.subr.mxu0 %v6862
      %6949 = vmatpush1.msra.mxu0 %v6861
      %6950 = vmatprep.subr.mxu0 %v6866
      %6951 = vmatpush1.msra.mxu0 %v6865
      %6952 = vmatprep.subr.mxu0 %v6870
      %6953 = vmatpush1.msra.mxu0 %v6869
      %6954 = vmatprep.subr.mxu0 %v6874
      %6955 = vmatpush1.msra.mxu0 %v6873
      %6956 = vmatprep.subr.mxu0 %v6878
      %6957 = vmatpush1.msra.mxu0 %v6877
      %6958 = vmatprep.subr.mxu0 %v6882
      %6959 = vmatpush1.msra.mxu0 %v6881
      %6960 = vmatprep.subr.mxu0 %v6886
      %6961 = vmatpush1.msra.mxu0 %v6885
      %6962 = vmatprep.subr.mxu0 %v6890
      %6963 = vmatpush1.msra.mxu0 %v6889
      %6964 = vmatprep.subr.mxu0 %v6894
      %6965 = vmatpush1.msra.mxu0 %v6893
      %6966 = vmatprep.subr.mxu0 %v6898
      %6967 = vmatpush1.msra.mxu0 %v6897
      %6968 = vmatprep.subr.mxu0 %v6902
      %6969 = vmatpush1.msra.mxu0 %v6901
      %6970 = vmatprep.subr.mxu0 %v6906
      %6971 = vmatpush1.msra.mxu0 %v6905
      %6972 = vmatprep.subr.mxu0 0.0
      %6973 = vmatpush1.msra.mxu0 0.0
      %6974 = vmatprep.subr.mxu0 0.0
      %6975 = vmatpush1.msra.mxu0 0.0
      %6976 = vmatprep.subr.mxu0 0.0
      %6977 = vmatpush1.msra.mxu0 0.0
      %6978 = vmatprep.subr.mxu0 0.0
      %6979 = vmatpush1.msra.mxu0 0.0
      %6980 = vmatprep.subr.mxu0 0.0
      %6981 = vmatpush1.msra.mxu0 0.0
      %6982 = vmatprep.mubr.f32.mxu0 %v6916
      %6983 = vmatmul.mubr.f32.gmra.mrb[0].mxu0 %v6799
      %v6984 = vpop.f32.mrb[0].mxu0
      %v6985 = vadd.f32 %v6913, %v6984
      %v6986 = vpop.f32.mrb[0].mxu0
      %v6987 = vadd.f32 %v6913, %v6986
      %6988 = vdwg.mxu0
      %6989 = vmatprep.subr.mxu0 %v6804
      %6990 = vmatpush1.msra.mxu0 %v6803
      %6991 = vmatprep.subr.mxu0 %v6808
      %6992 = vmatpush1.msra.mxu0 %v6807
      %6993 = vmatprep.subr.mxu0 %v6812
      %6994 = vmatpush1.msra.mxu0 %v6811
      %6995 = vmatprep.subr.mxu0 %v6816
      %6996 = vmatpush1.msra.mxu0 %v6815
      %6997 = vmatprep.subr.mxu0 %v6820
      %6998 = vmatpush1.msra.mxu0 %v6819
      %6999 = vmatprep.subr.mxu0 %v6824
      %7000 = vmatpush1.msra.mxu0 %v6823
      %7001 = vmatprep.subr.mxu0 %v6828
      %7002 = vmatpush1.msra.mxu0 %v6827
      %7003 = vmatprep.subr.mxu0 %v6832
      %7004 = vmatpush1.msra.mxu0 %v6831
      %7005 = vmatprep.subr.mxu0 %v6836
      %7006 = vmatpush1.msra.mxu0 %v6835
      %7007 = vmatprep.subr.mxu0 %v6840
      %7008 = vmatpush1.msra.mxu0 %v6839
      %7009 = vmatprep.subr.mxu0 %v6844
      %7010 = vmatpush1.msra.mxu0 %v6843
      %7011 = vmatprep.subr.mxu0 %v6848
      %7012 = vmatpush1.msra.mxu0 %v6847
      %7013 = vmatprep.subr.mxu0 %v6852
      %7014 = vmatpush1.msra.mxu0 %v6851
      %7015 = vmatprep.subr.mxu0 %v6856
      %7016 = vmatpush1.msra.mxu0 %v6855
      %7017 = vmatprep.subr.mxu0 %v6860
      %7018 = vmatpush1.msra.mxu0 %v6859
      %7019 = vmatprep.subr.mxu0 %v6864
      %7020 = vmatpush1.msra.mxu0 %v6863
      %7021 = vmatprep.subr.mxu0 %v6868
      %7022 = vmatpush1.msra.mxu0 %v6867
      %7023 = vmatprep.subr.mxu0 %v6872
      %7024 = vmatpush1.msra.mxu0 %v6871
      %7025 = vmatprep.subr.mxu0 %v6876
      %7026 = vmatpush1.msra.mxu0 %v6875
      %7027 = vmatprep.subr.mxu0 %v6880
      %7028 = vmatpush1.msra.mxu0 %v6879
      %7029 = vmatprep.subr.mxu0 %v6884
      %7030 = vmatpush1.msra.mxu0 %v6883
      %7031 = vmatprep.subr.mxu0 %v6888
      %7032 = vmatpush1.msra.mxu0 %v6887
      %7033 = vmatprep.subr.mxu0 %v6892
      %7034 = vmatpush1.msra.mxu0 %v6891
      %7035 = vmatprep.subr.mxu0 %v6896
      %7036 = vmatpush1.msra.mxu0 %v6895
      %7037 = vmatprep.subr.mxu0 %v6900
      %7038 = vmatpush1.msra.mxu0 %v6899
      %7039 = vmatprep.subr.mxu0 %v6904
      %7040 = vmatpush1.msra.mxu0 %v6903
      %7041 = vmatprep.subr.mxu0 %v6908
      %7042 = vmatpush1.msra.mxu0 %v6907
      %7043 = vmatprep.subr.mxu0 0.0
      %7044 = vmatpush1.msra.mxu0 0.0
      %7045 = vmatprep.subr.mxu0 0.0
      %7046 = vmatpush1.msra.mxu0 0.0
      %7047 = vmatprep.subr.mxu0 0.0
      %7048 = vmatpush1.msra.mxu0 0.0
      %7049 = vmatprep.subr.mxu0 0.0
      %7050 = vmatpush1.msra.mxu0 0.0
      %7051 = vmatprep.subr.mxu0 0.0
      %7052 = vmatpush1.msra.mxu0 0.0
      %7053 = vmatprep.mubr.f32.mxu0 %v6916
      %7054 = vmatmul.mubr.f32.gmra.mrb[0].mxu0 %v6799
      %v7055 = vpop.f32.mrb[0].mxu0
      %v7056 = vadd.f32 %v6913, %v7055
      %v7057 = vpop.f32.mrb[0].mxu0
      %v7058 = vadd.f32 %v6913, %v7057
      %7059 = vdwg.mxu0
      %v7060 = vadd.f32 %v6985, %v6987
      %v7061 = vadd.f32 %v7060, %v7056
      %v7062 = vadd.f32 %v7061, %v7058
      %7063 = vadd.xlane.f32.xlu0 %v7062
      %v7064 = vpop.xlane.xlu0 %7063
      %v7065 = vmul.f32 %v7064, %v1800
      %v7066 = vsub.f32 %v6985, %v7065
      %v7067 = vsub.f32 %v6987, %v7065
      %v7068 = vsub.f32 %v7056, %v7065
      %v7069 = vsub.f32 %v7058, %v7065
      %v7070 = vmul.f32 %v7066, %v7066
      %v7071 = vmul.f32 %v7067, %v7067
      %v7072 = vmul.f32 %v7068, %v7068
      %v7073 = vmul.f32 %v7069, %v7069
      %v7074 = vadd.f32 %v7070, %v7071
      %v7075 = vadd.f32 %v7074, %v7072
      %v7076 = vadd.f32 %v7075, %v7073
      %7077 = vadd.xlane.f32.xlu0 %v7076
      %v7078 = vpop.xlane.xlu0 %7077
      %v7079 = vmul.f32 %v7078, %v1800
      %v7080 = vadd.f32 %v7079, 1e-05
      %v7081 = vrsqrt.pop %v7080
      %v7082 = vmul.f32 %v7066, %v7081
      %v7083 = vmul.f32 %v7067, %v7081
      %v7084 = vmul.f32 %v7068, %v7081
      %v7085 = vmul.f32 %v7069, %v7081
      %vm7086 = vcmp.ge.f32.partialorder %v7082, 0.0
      %vm7087 = vcmp.ge.f32.partialorder %v7083, 0.0
      %vm7088 = vcmp.ge.f32.partialorder %v7084, 0.0
      %vm7089 = vcmp.ge.f32.partialorder %v7085, 0.0
      %v7090 = vmul.f32 %v7082, 0.01
      %v7091 = vmul.f32 %v7083, 0.01
      %v7092 = vmul.f32 %v7084, 0.01
      %v7093 = vmul.f32 %v7085, 0.01
      %v7094 = vsel %vm7086, %v7082, %v7090
      %v7095 = vsel %vm7087, %v7083, %v7091
      %v7096 = vsel %vm7088, %v7084, %v7092
      %v7097 = vsel %vm7089, %v7085, %v7093
      %v7098 = vadd.f32 %v7094, %v4464
      %v7099 = vadd.f32 %v7095, %v4465
      %v7100 = vadd.f32 %v7096, %v4466
      %v7101 = vadd.f32 %v7097, %v4467
      %7102 = vrot.lane.b32.xlu0 %v7098, 73
      %v7103 = vpop.permute.xlu0 %7102
      %7104 = vrot.lane.b32.xlu0 %v7099, 73
      %v7105 = vpop.permute.xlu0 %7104
      %7106 = vrot.lane.b32.xlu0 %v7100, 73
      %v7107 = vpop.permute.xlu0 %7106
      %7108 = vrot.lane.b32.xlu0 %v7101, 73
      %v7109 = vpop.permute.xlu0 %7108
      %v7110 = vsel %vm484, %v7107, %v7109
      %v7111 = vsel %vm484, %v7105, %v7107
      %v7112 = vsel %vm484, %v7103, %v7105
      %v7113 = vsel %vm484, %v7109, %v7103
      %v7114 = vld [vmem:[%s1] ss:$8 sm:$0xf]
      %v7116 = vlaneseq
      %v7117 = vshrl.u32 %v7116, 7
      %v7118 = vsub.s32 0, %v7117
      %v7119 = vrot.slane %v7114, %v7118
      %v7120 = vlaneseq
      %v7121 = vshrl.u32 %v7120, 7
      %v7122 = vsub.s32 1, %v7121
      %v7123 = vrot.slane %v7114, %v7122
      %v7124 = vlaneseq
      %v7125 = vshrl.u32 %v7124, 7
      %v7126 = vsub.s32 2, %v7125
      %v7127 = vrot.slane %v7114, %v7126
      %v7128 = vlaneseq
      %v7129 = vshrl.u32 %v7128, 7
      %v7130 = vsub.s32 3, %v7129
      %v7131 = vrot.slane %v7114, %v7130
      %v7136 = vmul.f32 %v7113, %v7119
      %v7137 = vmul.f32 %v7112, %v7123
      %v7138 = vmul.f32 %v7111, %v7127
      %v7139 = vmul.f32 %v7110, %v7131
      %7140 = vst [vmem:[#allocation2] sm:$0xff] %v7136
      %7141 = vst [vmem:[#allocation2 + $0x8] sm:$0xff] %v7137
      %7142 = vst [vmem:[#allocation2 + $0x10] sm:$0xff] %v7138
      %7143 = vst [vmem:[#allocation2 + $0x18] sm:$0xff] %v7139
      %7144 = vrot.lane.b32.xlu0 %v7098, 72
      %v7145 = vpop.permute.xlu0 %7144
      %7146 = vrot.lane.b32.xlu0 %v7099, 72
      %v7147 = vpop.permute.xlu0 %7146
      %7148 = vrot.lane.b32.xlu0 %v7100, 72
      %v7149 = vpop.permute.xlu0 %7148
      %7150 = vrot.lane.b32.xlu0 %v7101, 72
      %v7151 = vpop.permute.xlu0 %7150
      %v7152 = vsel %vm527, %v7149, %v7151
      %v7153 = vsel %vm527, %v7147, %v7149
      %v7154 = vsel %vm527, %v7145, %v7147
      %v7155 = vsel %vm527, %v7151, %v7145
      %v7156 = vld [vmem:[%s532] ss:$8 sm:$0xf]
      %v7158 = vlaneseq
      %v7159 = vshrl.u32 %v7158, 7
      %v7160 = vsub.s32 0, %v7159
      %v7161 = vrot.slane %v7156, %v7160
      %v7162 = vlaneseq
      %v7163 = vshrl.u32 %v7162, 7
      %v7164 = vsub.s32 1, %v7163
      %v7165 = vrot.slane %v7156, %v7164
      %v7166 = vlaneseq
      %v7167 = vshrl.u32 %v7166, 7
      %v7168 = vsub.s32 2, %v7167
      %v7169 = vrot.slane %v7156, %v7168
      %v7170 = vlaneseq
      %v7171 = vshrl.u32 %v7170, 7
      %v7172 = vsub.s32 3, %v7171
      %v7173 = vrot.slane %v7156, %v7172
      %v7178 = vmul.f32 %v7155, %v7161
      %v7179 = vmul.f32 %v7154, %v7165
      %v7180 = vmul.f32 %v7153, %v7169
      %v7181 = vmul.f32 %v7152, %v7173
      %7182 = vst [vmem:[#allocation2 + $0x20] sm:$0xff] %v7178
      %7183 = vst [vmem:[#allocation2 + $0x28] sm:$0xff] %v7179
      %7184 = vst [vmem:[#allocation2 + $0x30] sm:$0xff] %v7180
      %7185 = vst [vmem:[#allocation2 + $0x38] sm:$0xff] %v7181
      %7186 = vrot.lane.b32.xlu0 %v7098, 71
      %v7187 = vpop.permute.xlu0 %7186
      %7188 = vrot.lane.b32.xlu0 %v7099, 71
      %v7189 = vpop.permute.xlu0 %7188
      %7190 = vrot.lane.b32.xlu0 %v7100, 71
      %v7191 = vpop.permute.xlu0 %7190
      %7192 = vrot.lane.b32.xlu0 %v7101, 71
      %v7193 = vpop.permute.xlu0 %7192
      %v7194 = vsel %vm571, %v7191, %v7193
      %v7195 = vsel %vm571, %v7189, %v7191
      %v7196 = vsel %vm571, %v7187, %v7189
      %v7197 = vsel %vm571, %v7193, %v7187
      %v7198 = vld [vmem:[%s576] ss:$8 sm:$0xf]
      %v7200 = vlaneseq
      %v7201 = vshrl.u32 %v7200, 7
      %v7202 = vsub.s32 0, %v7201
      %v7203 = vrot.slane %v7198, %v7202
      %v7204 = vlaneseq
      %v7205 = vshrl.u32 %v7204, 7
      %v7206 = vsub.s32 1, %v7205
      %v7207 = vrot.slane %v7198, %v7206
      %v7208 = vlaneseq
      %v7209 = vshrl.u32 %v7208, 7
      %v7210 = vsub.s32 2, %v7209
      %v7211 = vrot.slane %v7198, %v7210
      %v7212 = vlaneseq
      %v7213 = vshrl.u32 %v7212, 7
      %v7214 = vsub.s32 3, %v7213
      %v7215 = vrot.slane %v7198, %v7214
      %v7220 = vmul.f32 %v7197, %v7203
      %v7221 = vmul.f32 %v7196, %v7207
      %v7222 = vmul.f32 %v7195, %v7211
      %v7223 = vmul.f32 %v7194, %v7215
      %7224 = vst [vmem:[#allocation2 + $0x40] sm:$0xff] %v7220
      %7225 = vst [vmem:[#allocation2 + $0x48] sm:$0xff] %v7221
      %7226 = vst [vmem:[#allocation2 + $0x50] sm:$0xff] %v7222
      %7227 = vst [vmem:[#allocation2 + $0x58] sm:$0xff] %v7223
      %7228 = vrot.lane.b32.xlu0 %v7098, 65
      %v7229 = vpop.permute.xlu0 %7228
      %7230 = vrot.lane.b32.xlu0 %v7099, 65
      %v7231 = vpop.permute.xlu0 %7230
      %7232 = vrot.lane.b32.xlu0 %v7100, 65
      %v7233 = vpop.permute.xlu0 %7232
      %7234 = vrot.lane.b32.xlu0 %v7101, 65
      %v7235 = vpop.permute.xlu0 %7234
      %v7236 = vsel %vm615, %v7233, %v7235
      %v7237 = vsel %vm615, %v7231, %v7233
      %v7238 = vsel %vm615, %v7229, %v7231
      %v7239 = vsel %vm615, %v7235, %v7229
      %v7240 = vld [vmem:[%s620] ss:$8 sm:$0xf]
      %v7242 = vlaneseq
      %v7243 = vshrl.u32 %v7242, 7
      %v7244 = vsub.s32 0, %v7243
      %v7245 = vrot.slane %v7240, %v7244
      %v7246 = vlaneseq
      %v7247 = vshrl.u32 %v7246, 7
      %v7248 = vsub.s32 1, %v7247
      %v7249 = vrot.slane %v7240, %v7248
      %v7250 = vlaneseq
      %v7251 = vshrl.u32 %v7250, 7
      %v7252 = vsub.s32 2, %v7251
      %v7253 = vrot.slane %v7240, %v7252
      %v7254 = vlaneseq
      %v7255 = vshrl.u32 %v7254, 7
      %v7256 = vsub.s32 3, %v7255
      %v7257 = vrot.slane %v7240, %v7256
      %v7262 = vmul.f32 %v7239, %v7245
      %v7263 = vmul.f32 %v7238, %v7249
      %v7264 = vmul.f32 %v7237, %v7253
      %v7265 = vmul.f32 %v7236, %v7257
      %7266 = vst [vmem:[#allocation2 + $0x60] sm:$0xff] %v7262
      %7267 = vst [vmem:[#allocation2 + $0x68] sm:$0xff] %v7263
      %7268 = vst [vmem:[#allocation2 + $0x70] sm:$0xff] %v7264
      %7269 = vst [vmem:[#allocation2 + $0x78] sm:$0xff] %v7265
      %7270 = vrot.lane.b32.xlu0 %v7098, 64
      %v7271 = vpop.permute.xlu0 %7270
      %7272 = vrot.lane.b32.xlu0 %v7099, 64
      %v7273 = vpop.permute.xlu0 %7272
      %7274 = vrot.lane.b32.xlu0 %v7100, 64
      %v7275 = vpop.permute.xlu0 %7274
      %7276 = vrot.lane.b32.xlu0 %v7101, 64
      %v7277 = vpop.permute.xlu0 %7276
      %v7278 = vsel %vm659, %v7275, %v7277
      %v7279 = vsel %vm659, %v7273, %v7275
      %v7280 = vsel %vm659, %v7271, %v7273
      %v7281 = vsel %vm659, %v7277, %v7271
      %v7282 = vld [vmem:[%s664] ss:$8 sm:$0xf]
      %v7284 = vlaneseq
      %v7285 = vshrl.u32 %v7284, 7
      %v7286 = vsub.s32 0, %v7285
      %v7287 = vrot.slane %v7282, %v7286
      %v7288 = vlaneseq
      %v7289 = vshrl.u32 %v7288, 7
      %v7290 = vsub.s32 1, %v7289
      %v7291 = vrot.slane %v7282, %v7290
      %v7292 = vlaneseq
      %v7293 = vshrl.u32 %v7292, 7
      %v7294 = vsub.s32 2, %v7293
      %v7295 = vrot.slane %v7282, %v7294
      %v7296 = vlaneseq
      %v7297 = vshrl.u32 %v7296, 7
      %v7298 = vsub.s32 3, %v7297
      %v7299 = vrot.slane %v7282, %v7298
      %v7304 = vmul.f32 %v7281, %v7287
      %v7305 = vmul.f32 %v7280, %v7291
      %v7306 = vmul.f32 %v7279, %v7295
      %v7307 = vmul.f32 %v7278, %v7299
      %7308 = vst [vmem:[#allocation2 + $0x80] sm:$0xff] %v7304
      %7309 = vst [vmem:[#allocation2 + $0x88] sm:$0xff] %v7305
      %7310 = vst [vmem:[#allocation2 + $0x90] sm:$0xff] %v7306
      %7311 = vst [vmem:[#allocation2 + $0x98] sm:$0xff] %v7307
      %7312 = vrot.lane.b32.xlu0 %v7098, 63
      %v7313 = vpop.permute.xlu0 %7312
      %7314 = vrot.lane.b32.xlu0 %v7099, 63
      %v7315 = vpop.permute.xlu0 %7314
      %7316 = vrot.lane.b32.xlu0 %v7100, 63
      %v7317 = vpop.permute.xlu0 %7316
      %7318 = vrot.lane.b32.xlu0 %v7101, 63
      %v7319 = vpop.permute.xlu0 %7318
      %v7320 = vsel %vm703, %v7317, %v7319
      %v7321 = vsel %vm703, %v7315, %v7317
      %v7322 = vsel %vm703, %v7313, %v7315
      %v7323 = vsel %vm703, %v7319, %v7313
      %v7324 = vld [vmem:[%s708] ss:$8 sm:$0xf]
      %v7326 = vlaneseq
      %v7327 = vshrl.u32 %v7326, 7
      %v7328 = vsub.s32 0, %v7327
      %v7329 = vrot.slane %v7324, %v7328
      %v7330 = vlaneseq
      %v7331 = vshrl.u32 %v7330, 7
      %v7332 = vsub.s32 1, %v7331
      %v7333 = vrot.slane %v7324, %v7332
      %v7334 = vlaneseq
      %v7335 = vshrl.u32 %v7334, 7
      %v7336 = vsub.s32 2, %v7335
      %v7337 = vrot.slane %v7324, %v7336
      %v7338 = vlaneseq
      %v7339 = vshrl.u32 %v7338, 7
      %v7340 = vsub.s32 3, %v7339
      %v7341 = vrot.slane %v7324, %v7340
      %v7346 = vmul.f32 %v7323, %v7329
      %v7347 = vmul.f32 %v7322, %v7333
      %v7348 = vmul.f32 %v7321, %v7337
      %v7349 = vmul.f32 %v7320, %v7341
      %7350 = vst [vmem:[#allocation2 + $0xa0] sm:$0xff] %v7346
      %7351 = vst [vmem:[#allocation2 + $0xa8] sm:$0xff] %v7347
      %7352 = vst [vmem:[#allocation2 + $0xb0] sm:$0xff] %v7348
      %7353 = vst [vmem:[#allocation2 + $0xb8] sm:$0xff] %v7349
      %7354 = vrot.lane.b32.xlu0 %v7098, 57
      %v7355 = vpop.permute.xlu0 %7354
      %7356 = vrot.lane.b32.xlu0 %v7099, 57
      %v7357 = vpop.permute.xlu0 %7356
      %7358 = vrot.lane.b32.xlu0 %v7100, 57
      %v7359 = vpop.permute.xlu0 %7358
      %7360 = vrot.lane.b32.xlu0 %v7101, 57
      %v7361 = vpop.permute.xlu0 %7360
      %v7362 = vsel %vm747, %v7359, %v7361
      %v7363 = vsel %vm747, %v7357, %v7359
      %v7364 = vsel %vm747, %v7355, %v7357
      %v7365 = vsel %vm747, %v7361, %v7355
      %v7366 = vld [vmem:[%s752] ss:$8 sm:$0xf]
      %v7368 = vlaneseq
      %v7369 = vshrl.u32 %v7368, 7
      %v7370 = vsub.s32 0, %v7369
      %v7371 = vrot.slane %v7366, %v7370
      %v7372 = vlaneseq
      %v7373 = vshrl.u32 %v7372, 7
      %v7374 = vsub.s32 1, %v7373
      %v7375 = vrot.slane %v7366, %v7374
      %v7376 = vlaneseq
      %v7377 = vshrl.u32 %v7376, 7
      %v7378 = vsub.s32 2, %v7377
      %v7379 = vrot.slane %v7366, %v7378
      %v7380 = vlaneseq
      %v7381 = vshrl.u32 %v7380, 7
      %v7382 = vsub.s32 3, %v7381
      %v7383 = vrot.slane %v7366, %v7382
      %v7388 = vmul.f32 %v7365, %v7371
      %v7389 = vmul.f32 %v7364, %v7375
      %v7390 = vmul.f32 %v7363, %v7379
      %v7391 = vmul.f32 %v7362, %v7383
      %7392 = vst [vmem:[#allocation2 + $0xc0] sm:$0xff] %v7388
      %7393 = vst [vmem:[#allocation2 + $0xc8] sm:$0xff] %v7389
      %7394 = vst [vmem:[#allocation2 + $0xd0] sm:$0xff] %v7390
      %7395 = vst [vmem:[#allocation2 + $0xd8] sm:$0xff] %v7391
      %7396 = vrot.lane.b32.xlu0 %v7098, 56
      %v7397 = vpop.permute.xlu0 %7396
      %7398 = vrot.lane.b32.xlu0 %v7099, 56
      %v7399 = vpop.permute.xlu0 %7398
      %7400 = vrot.lane.b32.xlu0 %v7100, 56
      %v7401 = vpop.permute.xlu0 %7400
      %7402 = vrot.lane.b32.xlu0 %v7101, 56
      %v7403 = vpop.permute.xlu0 %7402
      %v7404 = vsel %vm791, %v7401, %v7403
      %v7405 = vsel %vm791, %v7399, %v7401
      %v7406 = vsel %vm791, %v7397, %v7399
      %v7407 = vsel %vm791, %v7403, %v7397
      %v7408 = vld [vmem:[%s796] ss:$8 sm:$0xf]
      %v7410 = vlaneseq
      %v7411 = vshrl.u32 %v7410, 7
      %v7412 = vsub.s32 0, %v7411
      %v7413 = vrot.slane %v7408, %v7412
      %v7414 = vlaneseq
      %v7415 = vshrl.u32 %v7414, 7
      %v7416 = vsub.s32 1, %v7415
      %v7417 = vrot.slane %v7408, %v7416
      %v7418 = vlaneseq
      %v7419 = vshrl.u32 %v7418, 7
      %v7420 = vsub.s32 2, %v7419
      %v7421 = vrot.slane %v7408, %v7420
      %v7422 = vlaneseq
      %v7423 = vshrl.u32 %v7422, 7
      %v7424 = vsub.s32 3, %v7423
      %v7425 = vrot.slane %v7408, %v7424
      %v7430 = vmul.f32 %v7407, %v7413
      %v7431 = vmul.f32 %v7406, %v7417
      %v7432 = vmul.f32 %v7405, %v7421
      %v7433 = vmul.f32 %v7404, %v7425
      %7434 = vst [vmem:[#allocation2 + $0xe0] sm:$0xff] %v7430
      %7435 = vst [vmem:[#allocation2 + $0xe8] sm:$0xff] %v7431
      %7436 = vst [vmem:[#allocation2 + $0xf0] sm:$0xff] %v7432
      %7437 = vst [vmem:[#allocation2 + $0xf8] sm:$0xff] %v7433
      %7438 = vrot.lane.b32.xlu0 %v7098, 55
      %v7439 = vpop.permute.xlu0 %7438
      %7440 = vrot.lane.b32.xlu0 %v7099, 55
      %v7441 = vpop.permute.xlu0 %7440
      %7442 = vrot.lane.b32.xlu0 %v7100, 55
      %v7443 = vpop.permute.xlu0 %7442
      %7444 = vrot.lane.b32.xlu0 %v7101, 55
      %v7445 = vpop.permute.xlu0 %7444
      %v7446 = vsel %vm835, %v7443, %v7445
      %v7447 = vsel %vm835, %v7441, %v7443
      %v7448 = vsel %vm835, %v7439, %v7441
      %v7449 = vsel %vm835, %v7445, %v7439
      %v7450 = vld [vmem:[%s840] ss:$8 sm:$0xf]
      %v7452 = vlaneseq
      %v7453 = vshrl.u32 %v7452, 7
      %v7454 = vsub.s32 0, %v7453
      %v7455 = vrot.slane %v7450, %v7454
      %v7456 = vlaneseq
      %v7457 = vshrl.u32 %v7456, 7
      %v7458 = vsub.s32 1, %v7457
      %v7459 = vrot.slane %v7450, %v7458
      %v7460 = vlaneseq
      %v7461 = vshrl.u32 %v7460, 7
      %v7462 = vsub.s32 2, %v7461
      %v7463 = vrot.slane %v7450, %v7462
      %v7464 = vlaneseq
      %v7465 = vshrl.u32 %v7464, 7
      %v7466 = vsub.s32 3, %v7465
      %v7467 = vrot.slane %v7450, %v7466
      %v7472 = vmul.f32 %v7449, %v7455
      %v7473 = vmul.f32 %v7448, %v7459
      %v7474 = vmul.f32 %v7447, %v7463
      %v7475 = vmul.f32 %v7446, %v7467
      %7476 = vst [vmem:[#allocation2 + $0x100] sm:$0xff] %v7472
      %7477 = vst [vmem:[#allocation2 + $0x108] sm:$0xff] %v7473
      %7478 = vst [vmem:[#allocation2 + $0x110] sm:$0xff] %v7474
      %7479 = vst [vmem:[#allocation2 + $0x118] sm:$0xff] %v7475
      %7480 = vrot.lane.b32.xlu0 %v7098, 9
      %v7481 = vpop.permute.xlu0 %7480
      %7482 = vrot.lane.b32.xlu0 %v7099, 9
      %v7483 = vpop.permute.xlu0 %7482
      %7484 = vrot.lane.b32.xlu0 %v7100, 9
      %v7485 = vpop.permute.xlu0 %7484
      %7486 = vrot.lane.b32.xlu0 %v7101, 9
      %v7487 = vpop.permute.xlu0 %7486
      %v7488 = vsel %vm879, %v7485, %v7487
      %v7489 = vsel %vm879, %v7483, %v7485
      %v7490 = vsel %vm879, %v7481, %v7483
      %v7491 = vsel %vm879, %v7487, %v7481
      %v7492 = vld [vmem:[%s884] ss:$8 sm:$0xf]
      %v7494 = vlaneseq
      %v7495 = vshrl.u32 %v7494, 7
      %v7496 = vsub.s32 0, %v7495
      %v7497 = vrot.slane %v7492, %v7496
      %v7498 = vlaneseq
      %v7499 = vshrl.u32 %v7498, 7
      %v7500 = vsub.s32 1, %v7499
      %v7501 = vrot.slane %v7492, %v7500
      %v7502 = vlaneseq
      %v7503 = vshrl.u32 %v7502, 7
      %v7504 = vsub.s32 2, %v7503
      %v7505 = vrot.slane %v7492, %v7504
      %v7506 = vlaneseq
      %v7507 = vshrl.u32 %v7506, 7
      %v7508 = vsub.s32 3, %v7507
      %v7509 = vrot.slane %v7492, %v7508
      %v7514 = vmul.f32 %v7491, %v7497
      %v7515 = vmul.f32 %v7490, %v7501
      %v7516 = vmul.f32 %v7489, %v7505
      %v7517 = vmul.f32 %v7488, %v7509
      %7518 = vst [vmem:[#allocation2 + $0x120] sm:$0xff] %v7514
      %7519 = vst [vmem:[#allocation2 + $0x128] sm:$0xff] %v7515
      %7520 = vst [vmem:[#allocation2 + $0x130] sm:$0xff] %v7516
      %7521 = vst [vmem:[#allocation2 + $0x138] sm:$0xff] %v7517
      %7522 = vrot.lane.b32.xlu0 %v7098, 8
      %v7523 = vpop.permute.xlu0 %7522
      %7524 = vrot.lane.b32.xlu0 %v7099, 8
      %v7525 = vpop.permute.xlu0 %7524
      %7526 = vrot.lane.b32.xlu0 %v7100, 8
      %v7527 = vpop.permute.xlu0 %7526
      %7528 = vrot.lane.b32.xlu0 %v7101, 8
      %v7529 = vpop.permute.xlu0 %7528
      %v7530 = vsel %vm923, %v7527, %v7529
      %v7531 = vsel %vm923, %v7525, %v7527
      %v7532 = vsel %vm923, %v7523, %v7525
      %v7533 = vsel %vm923, %v7529, %v7523
      %v7534 = vld [vmem:[%s928] ss:$8 sm:$0xf]
      %v7536 = vlaneseq
      %v7537 = vshrl.u32 %v7536, 7
      %v7538 = vsub.s32 0, %v7537
      %v7539 = vrot.slane %v7534, %v7538
      %v7540 = vlaneseq
      %v7541 = vshrl.u32 %v7540, 7
      %v7542 = vsub.s32 1, %v7541
      %v7543 = vrot.slane %v7534, %v7542
      %v7544 = vlaneseq
      %v7545 = vshrl.u32 %v7544, 7
      %v7546 = vsub.s32 2, %v7545
      %v7547 = vrot.slane %v7534, %v7546
      %v7548 = vlaneseq
      %v7549 = vshrl.u32 %v7548, 7
      %v7550 = vsub.s32 3, %v7549
      %v7551 = vrot.slane %v7534, %v7550
      %v7556 = vmul.f32 %v7533, %v7539
      %v7557 = vmul.f32 %v7532, %v7543
      %v7558 = vmul.f32 %v7531, %v7547
      %v7559 = vmul.f32 %v7530, %v7551
      %7560 = vst [vmem:[#allocation2 + $0x140] sm:$0xff] %v7556
      %7561 = vst [vmem:[#allocation2 + $0x148] sm:$0xff] %v7557
      %7562 = vst [vmem:[#allocation2 + $0x150] sm:$0xff] %v7558
      %7563 = vst [vmem:[#allocation2 + $0x158] sm:$0xff] %v7559
      %7564 = vrot.lane.b32.xlu0 %v7098, 7
      %v7565 = vpop.permute.xlu0 %7564
      %7566 = vrot.lane.b32.xlu0 %v7099, 7
      %v7567 = vpop.permute.xlu0 %7566
      %7568 = vrot.lane.b32.xlu0 %v7100, 7
      %v7569 = vpop.permute.xlu0 %7568
      %7570 = vrot.lane.b32.xlu0 %v7101, 7
      %v7571 = vpop.permute.xlu0 %7570
      %v7572 = vsel %vm967, %v7569, %v7571
      %v7573 = vsel %vm967, %v7567, %v7569
      %v7574 = vsel %vm967, %v7565, %v7567
      %v7575 = vsel %vm967, %v7571, %v7565
      %v7576 = vld [vmem:[%s972] ss:$8 sm:$0xf]
      %v7578 = vlaneseq
      %v7579 = vshrl.u32 %v7578, 7
      %v7580 = vsub.s32 0, %v7579
      %v7581 = vrot.slane %v7576, %v7580
      %v7582 = vlaneseq
      %v7583 = vshrl.u32 %v7582, 7
      %v7584 = vsub.s32 1, %v7583
      %v7585 = vrot.slane %v7576, %v7584
      %v7586 = vlaneseq
      %v7587 = vshrl.u32 %v7586, 7
      %v7588 = vsub.s32 2, %v7587
      %v7589 = vrot.slane %v7576, %v7588
      %v7590 = vlaneseq
      %v7591 = vshrl.u32 %v7590, 7
      %v7592 = vsub.s32 3, %v7591
      %v7593 = vrot.slane %v7576, %v7592
      %v7598 = vmul.f32 %v7575, %v7581
      %v7599 = vmul.f32 %v7574, %v7585
      %v7600 = vmul.f32 %v7573, %v7589
      %v7601 = vmul.f32 %v7572, %v7593
      %7602 = vst [vmem:[#allocation2 + $0x160] sm:$0xff] %v7598
      %7603 = vst [vmem:[#allocation2 + $0x168] sm:$0xff] %v7599
      %7604 = vst [vmem:[#allocation2 + $0x170] sm:$0xff] %v7600
      %7605 = vst [vmem:[#allocation2 + $0x178] sm:$0xff] %v7601
      %7606 = vrot.lane.b32.xlu0 %v7098, 1
      %v7607 = vpop.permute.xlu0 %7606
      %7608 = vrot.lane.b32.xlu0 %v7099, 1
      %v7609 = vpop.permute.xlu0 %7608
      %7610 = vrot.lane.b32.xlu0 %v7100, 1
      %v7611 = vpop.permute.xlu0 %7610
      %7612 = vrot.lane.b32.xlu0 %v7101, 1
      %v7613 = vpop.permute.xlu0 %7612
      %v7614 = vsel %vm1011, %v7611, %v7613
      %v7615 = vsel %vm1011, %v7609, %v7611
      %v7616 = vsel %vm1011, %v7607, %v7609
      %v7617 = vsel %vm1011, %v7613, %v7607
      %v7618 = vld [vmem:[%s1016] ss:$8 sm:$0xf]
      %v7620 = vlaneseq
      %v7621 = vshrl.u32 %v7620, 7
      %v7622 = vsub.s32 0, %v7621
      %v7623 = vrot.slane %v7618, %v7622
      %v7624 = vlaneseq
      %v7625 = vshrl.u32 %v7624, 7
      %v7626 = vsub.s32 1, %v7625
      %v7627 = vrot.slane %v7618, %v7626
      %v7628 = vlaneseq
      %v7629 = vshrl.u32 %v7628, 7
      %v7630 = vsub.s32 2, %v7629
      %v7631 = vrot.slane %v7618, %v7630
      %v7632 = vlaneseq
      %v7633 = vshrl.u32 %v7632, 7
      %v7634 = vsub.s32 3, %v7633
      %v7635 = vrot.slane %v7618, %v7634
      %v7640 = vmul.f32 %v7617, %v7623
      %v7641 = vmul.f32 %v7616, %v7627
      %v7642 = vmul.f32 %v7615, %v7631
      %v7643 = vmul.f32 %v7614, %v7635
      %7644 = vst [vmem:[#allocation2 + $0x180] sm:$0xff] %v7640
      %7645 = vst [vmem:[#allocation2 + $0x188] sm:$0xff] %v7641
      %7646 = vst [vmem:[#allocation2 + $0x190] sm:$0xff] %v7642
      %7647 = vst [vmem:[#allocation2 + $0x198] sm:$0xff] %v7643
      %v7648 = vld [vmem:[%s1047] ss:$8 sm:$0xf]
      %v7650 = vlaneseq
      %v7651 = vshrl.u32 %v7650, 7
      %v7652 = vsub.s32 0, %v7651
      %v7653 = vrot.slane %v7648, %v7652
      %v7654 = vlaneseq
      %v7655 = vshrl.u32 %v7654, 7
      %v7656 = vsub.s32 1, %v7655
      %v7657 = vrot.slane %v7648, %v7656
      %v7658 = vlaneseq
      %v7659 = vshrl.u32 %v7658, 7
      %v7660 = vsub.s32 2, %v7659
      %v7661 = vrot.slane %v7648, %v7660
      %v7662 = vlaneseq
      %v7663 = vshrl.u32 %v7662, 7
      %v7664 = vsub.s32 3, %v7663
      %v7665 = vrot.slane %v7648, %v7664
      %v7670 = vmul.f32 %v7098, %v7653
      %v7671 = vmul.f32 %v7099, %v7657
      %v7672 = vmul.f32 %v7100, %v7661
      %v7673 = vmul.f32 %v7101, %v7665
      %7674 = vst [vmem:[#allocation2 + $0x1a0] sm:$0xff] %v7670
      %7675 = vst [vmem:[#allocation2 + $0x1a8] sm:$0xff] %v7671
      %7676 = vst [vmem:[#allocation2 + $0x1b0] sm:$0xff] %v7672
      %7677 = vst [vmem:[#allocation2 + $0x1b8] sm:$0xff] %v7673
      %7678 = vrot.lane.b32.xlu0 %v7098, 127
      %v7679 = vpop.permute.xlu0 %7678
      %7680 = vrot.lane.b32.xlu0 %v7099, 127
      %v7681 = vpop.permute.xlu0 %7680
      %7682 = vrot.lane.b32.xlu0 %v7100, 127
      %v7683 = vpop.permute.xlu0 %7682
      %7684 = vrot.lane.b32.xlu0 %v7101, 127
      %v7685 = vpop.permute.xlu0 %7684
      %v7686 = vsel %vm1086, %v7683, %v7685
      %v7687 = vsel %vm1086, %v7681, %v7683
      %v7688 = vsel %vm1086, %v7679, %v7681
      %v7689 = vsel %vm1086, %v7685, %v7679
      %v7690 = vld [vmem:[%s1091] ss:$8 sm:$0xf]
      %v7692 = vlaneseq
      %v7693 = vshrl.u32 %v7692, 7
      %v7694 = vsub.s32 0, %v7693
      %v7695 = vrot.slane %v7690, %v7694
      %v7696 = vlaneseq
      %v7697 = vshrl.u32 %v7696, 7
      %v7698 = vsub.s32 1, %v7697
      %v7699 = vrot.slane %v7690, %v7698
      %v7700 = vlaneseq
      %v7701 = vshrl.u32 %v7700, 7
      %v7702 = vsub.s32 2, %v7701
      %v7703 = vrot.slane %v7690, %v7702
      %v7704 = vlaneseq
      %v7705 = vshrl.u32 %v7704, 7
      %v7706 = vsub.s32 3, %v7705
      %v7707 = vrot.slane %v7690, %v7706
      %v7712 = vmul.f32 %v7688, %v7695
      %v7713 = vmul.f32 %v7687, %v7699
      %v7714 = vmul.f32 %v7686, %v7703
      %v7715 = vmul.f32 %v7689, %v7707
      %7716 = vst [vmem:[#allocation2 + $0x1c0] sm:$0xff] %v7712
      %7717 = vst [vmem:[#allocation2 + $0x1c8] sm:$0xff] %v7713
      %7718 = vst [vmem:[#allocation2 + $0x1d0] sm:$0xff] %v7714
      %7719 = vst [vmem:[#allocation2 + $0x1d8] sm:$0xff] %v7715
      %7720 = vrot.lane.b32.xlu0 %v7098, 121
      %v7721 = vpop.permute.xlu0 %7720
      %7722 = vrot.lane.b32.xlu0 %v7099, 121
      %v7723 = vpop.permute.xlu0 %7722
      %7724 = vrot.lane.b32.xlu0 %v7100, 121
      %v7725 = vpop.permute.xlu0 %7724
      %7726 = vrot.lane.b32.xlu0 %v7101, 121
      %v7727 = vpop.permute.xlu0 %7726
      %v7728 = vsel %vm1130, %v7725, %v7727
      %v7729 = vsel %vm1130, %v7723, %v7725
      %v7730 = vsel %vm1130, %v7721, %v7723
      %v7731 = vsel %vm1130, %v7727, %v7721
      %v7732 = vld [vmem:[%s1135] ss:$8 sm:$0xf]
      %v7734 = vlaneseq
      %v7735 = vshrl.u32 %v7734, 7
      %v7736 = vsub.s32 0, %v7735
      %v7737 = vrot.slane %v7732, %v7736
      %v7738 = vlaneseq
      %v7739 = vshrl.u32 %v7738, 7
      %v7740 = vsub.s32 1, %v7739
      %v7741 = vrot.slane %v7732, %v7740
      %v7742 = vlaneseq
      %v7743 = vshrl.u32 %v7742, 7
      %v7744 = vsub.s32 2, %v7743
      %v7745 = vrot.slane %v7732, %v7744
      %v7746 = vlaneseq
      %v7747 = vshrl.u32 %v7746, 7
      %v7748 = vsub.s32 3, %v7747
      %v7749 = vrot.slane %v7732, %v7748
      %v7754 = vmul.f32 %v7730, %v7737
      %v7755 = vmul.f32 %v7729, %v7741
      %v7756 = vmul.f32 %v7728, %v7745
      %v7757 = vmul.f32 %v7731, %v7749
      %7758 = vst [vmem:[#allocation2 + $0x1e0] sm:$0xff] %v7754
      %7759 = vst [vmem:[#allocation2 + $0x1e8] sm:$0xff] %v7755
      %7760 = vst [vmem:[#allocation2 + $0x1f0] sm:$0xff] %v7756
      %7761 = vst [vmem:[#allocation2 + $0x1f8] sm:$0xff] %v7757
      %7762 = vrot.lane.b32.xlu0 %v7098, 120
      %v7763 = vpop.permute.xlu0 %7762
      %7764 = vrot.lane.b32.xlu0 %v7099, 120
      %v7765 = vpop.permute.xlu0 %7764
      %7766 = vrot.lane.b32.xlu0 %v7100, 120
      %v7767 = vpop.permute.xlu0 %7766
      %7768 = vrot.lane.b32.xlu0 %v7101, 120
      %v7769 = vpop.permute.xlu0 %7768
      %v7770 = vsel %vm1174, %v7767, %v7769
      %v7771 = vsel %vm1174, %v7765, %v7767
      %v7772 = vsel %vm1174, %v7763, %v7765
      %v7773 = vsel %vm1174, %v7769, %v7763
      %v7774 = vld [vmem:[%s1179] ss:$8 sm:$0xf]
      %v7776 = vlaneseq
      %v7777 = vshrl.u32 %v7776, 7
      %v7778 = vsub.s32 0, %v7777
      %v7779 = vrot.slane %v7774, %v7778
      %v7780 = vlaneseq
      %v7781 = vshrl.u32 %v7780, 7
      %v7782 = vsub.s32 1, %v7781
      %v7783 = vrot.slane %v7774, %v7782
      %v7784 = vlaneseq
      %v7785 = vshrl.u32 %v7784, 7
      %v7786 = vsub.s32 2, %v7785
      %v7787 = vrot.slane %v7774, %v7786
      %v7788 = vlaneseq
      %v7789 = vshrl.u32 %v7788, 7
      %v7790 = vsub.s32 3, %v7789
      %v7791 = vrot.slane %v7774, %v7790
      %v7796 = vmul.f32 %v7772, %v7779
      %v7797 = vmul.f32 %v7771, %v7783
      %v7798 = vmul.f32 %v7770, %v7787
      %v7799 = vmul.f32 %v7773, %v7791
      %7800 = vst [vmem:[#allocation2 + $0x200] sm:$0xff] %v7796
      %7801 = vst [vmem:[#allocation2 + $0x208] sm:$0xff] %v7797
      %7802 = vst [vmem:[#allocation2 + $0x210] sm:$0xff] %v7798
      %7803 = vst [vmem:[#allocation2 + $0x218] sm:$0xff] %v7799
      %7804 = vrot.lane.b32.xlu0 %v7098, 119
      %v7805 = vpop.permute.xlu0 %7804
      %7806 = vrot.lane.b32.xlu0 %v7099, 119
      %v7807 = vpop.permute.xlu0 %7806
      %7808 = vrot.lane.b32.xlu0 %v7100, 119
      %v7809 = vpop.permute.xlu0 %7808
      %7810 = vrot.lane.b32.xlu0 %v7101, 119
      %v7811 = vpop.permute.xlu0 %7810
      %v7812 = vsel %vm1218, %v7809, %v7811
      %v7813 = vsel %vm1218, %v7807, %v7809
      %v7814 = vsel %vm1218, %v7805, %v7807
      %v7815 = vsel %vm1218, %v7811, %v7805
      %v7816 = vld [vmem:[%s1223] ss:$8 sm:$0xf]
      %v7818 = vlaneseq
      %v7819 = vshrl.u32 %v7818, 7
      %v7820 = vsub.s32 0, %v7819
      %v7821 = vrot.slane %v7816, %v7820
      %v7822 = vlaneseq
      %v7823 = vshrl.u32 %v7822, 7
      %v7824 = vsub.s32 1, %v7823
      %v7825 = vrot.slane %v7816, %v7824
      %v7826 = vlaneseq
      %v7827 = vshrl.u32 %v7826, 7
      %v7828 = vsub.s32 2, %v7827
      %v7829 = vrot.slane %v7816, %v7828
      %v7830 = vlaneseq
      %v7831 = vshrl.u32 %v7830, 7
      %v7832 = vsub.s32 3, %v7831
      %v7833 = vrot.slane %v7816, %v7832
      %v7838 = vmul.f32 %v7814, %v7821
      %v7839 = vmul.f32 %v7813, %v7825
      %v7840 = vmul.f32 %v7812, %v7829
      %v7841 = vmul.f32 %v7815, %v7833
      %7842 = vst [vmem:[#allocation2 + $0x220] sm:$0xff] %v7838
      %7843 = vst [vmem:[#allocation2 + $0x228] sm:$0xff] %v7839
      %7844 = vst [vmem:[#allocation2 + $0x230] sm:$0xff] %v7840
      %7845 = vst [vmem:[#allocation2 + $0x238] sm:$0xff] %v7841
      %v7846 = vld [vmem:[%s1254] ss:$8 sm:$0xf]
      %v7848 = vlaneseq
      %v7849 = vshrl.u32 %v7848, 7
      %v7850 = vsub.s32 0, %v7849
      %v7851 = vrot.slane %v7846, %v7850
      %v7852 = vlaneseq
      %v7853 = vshrl.u32 %v7852, 7
      %v7854 = vsub.s32 1, %v7853
      %v7855 = vrot.slane %v7846, %v7854
      %v7856 = vlaneseq
      %v7857 = vshrl.u32 %v7856, 7
      %v7858 = vsub.s32 2, %v7857
      %v7859 = vrot.slane %v7846, %v7858
      %v7860 = vlaneseq
      %v7861 = vshrl.u32 %v7860, 7
      %v7862 = vsub.s32 3, %v7861
      %v7863 = vrot.slane %v7846, %v7862
      %v7868 = vmul.f32 %v7112, %v7851
      %v7869 = vmul.f32 %v7111, %v7855
      %v7870 = vmul.f32 %v7110, %v7859
      %v7871 = vmul.f32 %v7113, %v7863
      %7872 = vst [vmem:[#allocation2 + $0x240] sm:$0xff] %v7868
      %7873 = vst [vmem:[#allocation2 + $0x248] sm:$0xff] %v7869
      %7874 = vst [vmem:[#allocation2 + $0x250] sm:$0xff] %v7870
      %7875 = vst [vmem:[#allocation2 + $0x258] sm:$0xff] %v7871
      %v7876 = vld [vmem:[%s1285] ss:$8 sm:$0xf]
      %v7878 = vlaneseq
      %v7879 = vshrl.u32 %v7878, 7
      %v7880 = vsub.s32 0, %v7879
      %v7881 = vrot.slane %v7876, %v7880
      %v7882 = vlaneseq
      %v7883 = vshrl.u32 %v7882, 7
      %v7884 = vsub.s32 1, %v7883
      %v7885 = vrot.slane %v7876, %v7884
      %v7886 = vlaneseq
      %v7887 = vshrl.u32 %v7886, 7
      %v7888 = vsub.s32 2, %v7887
      %v7889 = vrot.slane %v7876, %v7888
      %v7890 = vlaneseq
      %v7891 = vshrl.u32 %v7890, 7
      %v7892 = vsub.s32 3, %v7891
      %v7893 = vrot.slane %v7876, %v7892
      %v7898 = vmul.f32 %v7154, %v7881
      %v7899 = vmul.f32 %v7153, %v7885
      %v7900 = vmul.f32 %v7152, %v7889
      %v7901 = vmul.f32 %v7155, %v7893
      %7902 = vst [vmem:[#allocation2 + $0x260] sm:$0xff] %v7898
      %7903 = vst [vmem:[#allocation2 + $0x268] sm:$0xff] %v7899
      %7904 = vst [vmem:[#allocation2 + $0x270] sm:$0xff] %v7900
      %7905 = vst [vmem:[#allocation2 + $0x278] sm:$0xff] %v7901
      %v7906 = vld [vmem:[%s1316] ss:$8 sm:$0xf]
      %v7908 = vlaneseq
      %v7909 = vshrl.u32 %v7908, 7
      %v7910 = vsub.s32 0, %v7909
      %v7911 = vrot.slane %v7906, %v7910
      %v7912 = vlaneseq
      %v7913 = vshrl.u32 %v7912, 7
      %v7914 = vsub.s32 1, %v7913
      %v7915 = vrot.slane %v7906, %v7914
      %v7916 = vlaneseq
      %v7917 = vshrl.u32 %v7916, 7
      %v7918 = vsub.s32 2, %v7917
      %v7919 = vrot.slane %v7906, %v7918
      %v7920 = vlaneseq
      %v7921 = vshrl.u32 %v7920, 7
      %v7922 = vsub.s32 3, %v7921
      %v7923 = vrot.slane %v7906, %v7922
      %v7928 = vmul.f32 %v7196, %v7911
      %v7929 = vmul.f32 %v7195, %v7915
      %v7930 = vmul.f32 %v7194, %v7919
      %v7931 = vmul.f32 %v7197, %v7923
      %7932 = vst [vmem:[#allocation2 + $0x280] sm:$0xff] %v7928
      %7933 = vst [vmem:[#allocation2 + $0x288] sm:$0xff] %v7929
      %7934 = vst [vmem:[#allocation2 + $0x290] sm:$0xff] %v7930
      %7935 = vst [vmem:[#allocation2 + $0x298] sm:$0xff] %v7931
      %v7936 = vld [vmem:[%s1347] ss:$8 sm:$0xf]
      %v7938 = vlaneseq
      %v7939 = vshrl.u32 %v7938, 7
      %v7940 = vsub.s32 0, %v7939
      %v7941 = vrot.slane %v7936, %v7940
      %v7942 = vlaneseq
      %v7943 = vshrl.u32 %v7942, 7
      %v7944 = vsub.s32 1, %v7943
      %v7945 = vrot.slane %v7936, %v7944
      %v7946 = vlaneseq
      %v7947 = vshrl.u32 %v7946, 7
      %v7948 = vsub.s32 2, %v7947
      %v7949 = vrot.slane %v7936, %v7948
      %v7950 = vlaneseq
      %v7951 = vshrl.u32 %v7950, 7
      %v7952 = vsub.s32 3, %v7951
      %v7953 = vrot.slane %v7936, %v7952
      %v7958 = vmul.f32 %v7238, %v7941
      %v7959 = vmul.f32 %v7237, %v7945
      %v7960 = vmul.f32 %v7236, %v7949
      %v7961 = vmul.f32 %v7239, %v7953
      %7962 = vst [vmem:[#allocation2 + $0x2a0] sm:$0xff] %v7958
      %7963 = vst [vmem:[#allocation2 + $0x2a8] sm:$0xff] %v7959
      %7964 = vst [vmem:[#allocation2 + $0x2b0] sm:$0xff] %v7960
      %7965 = vst [vmem:[#allocation2 + $0x2b8] sm:$0xff] %v7961
      %v7966 = vld [vmem:[%s1378] ss:$8 sm:$0xf]
      %v7968 = vlaneseq
      %v7969 = vshrl.u32 %v7968, 7
      %v7970 = vsub.s32 0, %v7969
      %v7971 = vrot.slane %v7966, %v7970
      %v7972 = vlaneseq
      %v7973 = vshrl.u32 %v7972, 7
      %v7974 = vsub.s32 1, %v7973
      %v7975 = vrot.slane %v7966, %v7974
      %v7976 = vlaneseq
      %v7977 = vshrl.u32 %v7976, 7
      %v7978 = vsub.s32 2, %v7977
      %v7979 = vrot.slane %v7966, %v7978
      %v7980 = vlaneseq
      %v7981 = vshrl.u32 %v7980, 7
      %v7982 = vsub.s32 3, %v7981
      %v7983 = vrot.slane %v7966, %v7982
      %v7988 = vmul.f32 %v7280, %v7971
      %v7989 = vmul.f32 %v7279, %v7975
      %v7990 = vmul.f32 %v7278, %v7979
      %v7991 = vmul.f32 %v7281, %v7983
      %7992 = vst [vmem:[#allocation2 + $0x2c0] sm:$0xff] %v7988
      %7993 = vst [vmem:[#allocation2 + $0x2c8] sm:$0xff] %v7989
      %7994 = vst [vmem:[#allocation2 + $0x2d0] sm:$0xff] %v7990
      %7995 = vst [vmem:[#allocation2 + $0x2d8] sm:$0xff] %v7991
      %v7996 = vld [vmem:[%s1409] ss:$8 sm:$0xf]
      %v7998 = vlaneseq
      %v7999 = vshrl.u32 %v7998, 7
      %v8000 = vsub.s32 0, %v7999
      %v8001 = vrot.slane %v7996, %v8000
      %v8002 = vlaneseq
      %v8003 = vshrl.u32 %v8002, 7
      %v8004 = vsub.s32 1, %v8003
      %v8005 = vrot.slane %v7996, %v8004
      %v8006 = vlaneseq
      %v8007 = vshrl.u32 %v8006, 7
      %v8008 = vsub.s32 2, %v8007
      %v8009 = vrot.slane %v7996, %v8008
      %v8010 = vlaneseq
      %v8011 = vshrl.u32 %v8010, 7
      %v8012 = vsub.s32 3, %v8011
      %v8013 = vrot.slane %v7996, %v8012
      %v8018 = vmul.f32 %v7322, %v8001
      %v8019 = vmul.f32 %v7321, %v8005
      %v8020 = vmul.f32 %v7320, %v8009
      %v8021 = vmul.f32 %v7323, %v8013
      %8022 = vst [vmem:[#allocation2 + $0x2e0] sm:$0xff] %v8018
      %8023 = vst [vmem:[#allocation2 + $0x2e8] sm:$0xff] %v8019
      %8024 = vst [vmem:[#allocation2 + $0x2f0] sm:$0xff] %v8020
      %8025 = vst [vmem:[#allocation2 + $0x2f8] sm:$0xff] %v8021
      %v8026 = vld [vmem:[%s1440] ss:$8 sm:$0xf]
      %v8028 = vlaneseq
      %v8029 = vshrl.u32 %v8028, 7
      %v8030 = vsub.s32 0, %v8029
      %v8031 = vrot.slane %v8026, %v8030
      %v8032 = vlaneseq
      %v8033 = vshrl.u32 %v8032, 7
      %v8034 = vsub.s32 1, %v8033
      %v8035 = vrot.slane %v8026, %v8034
      %v8036 = vlaneseq
      %v8037 = vshrl.u32 %v8036, 7
      %v8038 = vsub.s32 2, %v8037
      %v8039 = vrot.slane %v8026, %v8038
      %v8040 = vlaneseq
      %v8041 = vshrl.u32 %v8040, 7
      %v8042 = vsub.s32 3, %v8041
      %v8043 = vrot.slane %v8026, %v8042
      %v8048 = vmul.f32 %v7364, %v8031
      %v8049 = vmul.f32 %v7363, %v8035
      %v8050 = vmul.f32 %v7362, %v8039
      %v8051 = vmul.f32 %v7365, %v8043
      %8052 = vst [vmem:[#allocation2 + $0x300] sm:$0xff] %v8048
      %8053 = vst [vmem:[#allocation2 + $0x308] sm:$0xff] %v8049
      %8054 = vst [vmem:[#allocation2 + $0x310] sm:$0xff] %v8050
      %8055 = vst [vmem:[#allocation2 + $0x318] sm:$0xff] %v8051
      %v8056 = vld [vmem:[%s1471] ss:$8 sm:$0xf]
      %v8058 = vlaneseq
      %v8059 = vshrl.u32 %v8058, 7
      %v8060 = vsub.s32 0, %v8059
      %v8061 = vrot.slane %v8056, %v8060
      %v8062 = vlaneseq
      %v8063 = vshrl.u32 %v8062, 7
      %v8064 = vsub.s32 1, %v8063
      %v8065 = vrot.slane %v8056, %v8064
      %v8066 = vlaneseq
      %v8067 = vshrl.u32 %v8066, 7
      %v8068 = vsub.s32 2, %v8067
      %v8069 = vrot.slane %v8056, %v8068
      %v8070 = vlaneseq
      %v8071 = vshrl.u32 %v8070, 7
      %v8072 = vsub.s32 3, %v8071
      %v8073 = vrot.slane %v8056, %v8072
      %v8078 = vmul.f32 %v7406, %v8061
      %v8079 = vmul.f32 %v7405, %v8065
      %v8080 = vmul.f32 %v7404, %v8069
      %v8081 = vmul.f32 %v7407, %v8073
      %8082 = vst [vmem:[#allocation2 + $0x320] sm:$0xff] %v8078
      %8083 = vst [vmem:[#allocation2 + $0x328] sm:$0xff] %v8079
      %8084 = vst [vmem:[#allocation2 + $0x330] sm:$0xff] %v8080
      %8085 = vst [vmem:[#allocation2 + $0x338] sm:$0xff] %v8081
      %v8086 = vld [vmem:[%s1502] ss:$8 sm:$0xf]
      %v8088 = vlaneseq
      %v8089 = vshrl.u32 %v8088, 7
      %v8090 = vsub.s32 0, %v8089
      %v8091 = vrot.slane %v8086, %v8090
      %v8092 = vlaneseq
      %v8093 = vshrl.u32 %v8092, 7
      %v8094 = vsub.s32 1, %v8093
      %v8095 = vrot.slane %v8086, %v8094
      %v8096 = vlaneseq
      %v8097 = vshrl.u32 %v8096, 7
      %v8098 = vsub.s32 2, %v8097
      %v8099 = vrot.slane %v8086, %v8098
      %v8100 = vlaneseq
      %v8101 = vshrl.u32 %v8100, 7
      %v8102 = vsub.s32 3, %v8101
      %v8103 = vrot.slane %v8086, %v8102
      %v8108 = vmul.f32 %v7448, %v8091
      %v8109 = vmul.f32 %v7447, %v8095
      %v8110 = vmul.f32 %v7446, %v8099
      %v8111 = vmul.f32 %v7449, %v8103
      %8112 = vst [vmem:[#allocation2 + $0x340] sm:$0xff] %v8108
      %8113 = vst [vmem:[#allocation2 + $0x348] sm:$0xff] %v8109
      %8114 = vst [vmem:[#allocation2 + $0x350] sm:$0xff] %v8110
      %8115 = vst [vmem:[#allocation2 + $0x358] sm:$0xff] %v8111
      %v8116 = vld [vmem:[%s6] sm:$0xff]
      %v8117 = vld [vmem:[%s6 + $0x8] sm:$0xff]
      %v8118 = vld [vmem:[#allocation2] sm:$0xff]
      %v8119 = vld [vmem:[#allocation2 + $0x8] sm:$0xff]
      %v8120 = vld [vmem:[#allocation2 + $0x10] sm:$0xff]
      %v8121 = vld [vmem:[#allocation2 + $0x18] sm:$0xff]
      %v8122 = vld [vmem:[#allocation2 + $0x20] sm:$0xff]
      %v8123 = vld [vmem:[#allocation2 + $0x28] sm:$0xff]
      %v8124 = vld [vmem:[#allocation2 + $0x30] sm:$0xff]
      %v8125 = vld [vmem:[#allocation2 + $0x38] sm:$0xff]
      %v8126 = vld [vmem:[#allocation2 + $0x40] sm:$0xff]
      %v8127 = vld [vmem:[#allocation2 + $0x48] sm:$0xff]
      %v8128 = vld [vmem:[#allocation2 + $0x50] sm:$0xff]
      %v8129 = vld [vmem:[#allocation2 + $0x58] sm:$0xff]
      %v8130 = vld [vmem:[#allocation2 + $0x60] sm:$0xff]
      %v8131 = vld [vmem:[#allocation2 + $0x68] sm:$0xff]
      %v8132 = vld [vmem:[#allocation2 + $0x70] sm:$0xff]
      %v8133 = vld [vmem:[#allocation2 + $0x78] sm:$0xff]
      %v8134 = vld [vmem:[#allocation2 + $0x80] sm:$0xff]
      %v8135 = vld [vmem:[#allocation2 + $0x88] sm:$0xff]
      %v8136 = vld [vmem:[#allocation2 + $0x90] sm:$0xff]
      %v8137 = vld [vmem:[#allocation2 + $0x98] sm:$0xff]
      %v8138 = vld [vmem:[#allocation2 + $0xa0] sm:$0xff]
      %v8139 = vld [vmem:[#allocation2 + $0xa8] sm:$0xff]
      %v8140 = vld [vmem:[#allocation2 + $0xb0] sm:$0xff]
      %v8141 = vld [vmem:[#allocation2 + $0xb8] sm:$0xff]
      %v8142 = vld [vmem:[#allocation2 + $0xc0] sm:$0xff]
      %v8143 = vld [vmem:[#allocation2 + $0xc8] sm:$0xff]
      %v8144 = vld [vmem:[#allocation2 + $0xd0] sm:$0xff]
      %v8145 = vld [vmem:[#allocation2 + $0xd8] sm:$0xff]
      %v8146 = vld [vmem:[#allocation2 + $0xe0] sm:$0xff]
      %v8147 = vld [vmem:[#allocation2 + $0xe8] sm:$0xff]
      %v8148 = vld [vmem:[#allocation2 + $0xf0] sm:$0xff]
      %v8149 = vld [vmem:[#allocation2 + $0xf8] sm:$0xff]
      %v8150 = vld [vmem:[#allocation2 + $0x100] sm:$0xff]
      %v8151 = vld [vmem:[#allocation2 + $0x108] sm:$0xff]
      %v8152 = vld [vmem:[#allocation2 + $0x110] sm:$0xff]
      %v8153 = vld [vmem:[#allocation2 + $0x118] sm:$0xff]
      %v8154 = vld [vmem:[#allocation2 + $0x120] sm:$0xff]
      %v8155 = vld [vmem:[#allocation2 + $0x128] sm:$0xff]
      %v8156 = vld [vmem:[#allocation2 + $0x130] sm:$0xff]
      %v8157 = vld [vmem:[#allocation2 + $0x138] sm:$0xff]
      %v8158 = vld [vmem:[#allocation2 + $0x140] sm:$0xff]
      %v8159 = vld [vmem:[#allocation2 + $0x148] sm:$0xff]
      %v8160 = vld [vmem:[#allocation2 + $0x150] sm:$0xff]
      %v8161 = vld [vmem:[#allocation2 + $0x158] sm:$0xff]
      %v8162 = vld [vmem:[#allocation2 + $0x160] sm:$0xff]
      %v8163 = vld [vmem:[#allocation2 + $0x168] sm:$0xff]
      %v8164 = vld [vmem:[#allocation2 + $0x170] sm:$0xff]
      %v8165 = vld [vmem:[#allocation2 + $0x178] sm:$0xff]
      %v8166 = vld [vmem:[#allocation2 + $0x180] sm:$0xff]
      %v8167 = vld [vmem:[#allocation2 + $0x188] sm:$0xff]
      %v8168 = vld [vmem:[#allocation2 + $0x190] sm:$0xff]
      %v8169 = vld [vmem:[#allocation2 + $0x198] sm:$0xff]
      %v8170 = vld [vmem:[#allocation2 + $0x1a0] sm:$0xff]
      %v8171 = vld [vmem:[#allocation2 + $0x1a8] sm:$0xff]
      %v8172 = vld [vmem:[#allocation2 + $0x1b0] sm:$0xff]
      %v8173 = vld [vmem:[#allocation2 + $0x1b8] sm:$0xff]
      %v8174 = vld [vmem:[#allocation2 + $0x1c0] sm:$0xff]
      %v8175 = vld [vmem:[#allocation2 + $0x1c8] sm:$0xff]
      %v8176 = vld [vmem:[#allocation2 + $0x1d0] sm:$0xff]
      %v8177 = vld [vmem:[#allocation2 + $0x1d8] sm:$0xff]
      %v8178 = vld [vmem:[#allocation2 + $0x1e0] sm:$0xff]
      %v8179 = vld [vmem:[#allocation2 + $0x1e8] sm:$0xff]
      %v8180 = vld [vmem:[#allocation2 + $0x1f0] sm:$0xff]
      %v8181 = vld [vmem:[#allocation2 + $0x1f8] sm:$0xff]
      %v8182 = vld [vmem:[#allocation2 + $0x200] sm:$0xff]
      %v8183 = vld [vmem:[#allocation2 + $0x208] sm:$0xff]
      %v8184 = vld [vmem:[#allocation2 + $0x210] sm:$0xff]
      %v8185 = vld [vmem:[#allocation2 + $0x218] sm:$0xff]
      %v8186 = vld [vmem:[#allocation2 + $0x220] sm:$0xff]
      %v8187 = vld [vmem:[#allocation2 + $0x228] sm:$0xff]
      %v8188 = vld [vmem:[#allocation2 + $0x230] sm:$0xff]
      %v8189 = vld [vmem:[#allocation2 + $0x238] sm:$0xff]
      %v8190 = vld [vmem:[#allocation2 + $0x240] sm:$0xff]
      %v8191 = vld [vmem:[#allocation2 + $0x248] sm:$0xff]
      %v8192 = vld [vmem:[#allocation2 + $0x250] sm:$0xff]
      %v8193 = vld [vmem:[#allocation2 + $0x258] sm:$0xff]
      %v8194 = vld [vmem:[#allocation2 + $0x260] sm:$0xff]
      %v8195 = vld [vmem:[#allocation2 + $0x268] sm:$0xff]
      %v8196 = vld [vmem:[#allocation2 + $0x270] sm:$0xff]
      %v8197 = vld [vmem:[#allocation2 + $0x278] sm:$0xff]
      %v8198 = vld [vmem:[#allocation2 + $0x280] sm:$0xff]
      %v8199 = vld [vmem:[#allocation2 + $0x288] sm:$0xff]
      %v8200 = vld [vmem:[#allocation2 + $0x290] sm:$0xff]
      %v8201 = vld [vmem:[#allocation2 + $0x298] sm:$0xff]
      %v8202 = vld [vmem:[#allocation2 + $0x2a0] sm:$0xff]
      %v8203 = vld [vmem:[#allocation2 + $0x2a8] sm:$0xff]
      %v8204 = vld [vmem:[#allocation2 + $0x2b0] sm:$0xff]
      %v8205 = vld [vmem:[#allocation2 + $0x2b8] sm:$0xff]
      %v8206 = vld [vmem:[#allocation2 + $0x2c0] sm:$0xff]
      %v8207 = vld [vmem:[#allocation2 + $0x2c8] sm:$0xff]
      %v8208 = vld [vmem:[#allocation2 + $0x2d0] sm:$0xff]
      %v8209 = vld [vmem:[#allocation2 + $0x2d8] sm:$0xff]
      %v8210 = vld [vmem:[#allocation2 + $0x2e0] sm:$0xff]
      %v8211 = vld [vmem:[#allocation2 + $0x2e8] sm:$0xff]
      %v8212 = vld [vmem:[#allocation2 + $0x2f0] sm:$0xff]
      %v8213 = vld [vmem:[#allocation2 + $0x2f8] sm:$0xff]
      %v8214 = vld [vmem:[#allocation2 + $0x300] sm:$0xff]
      %v8215 = vld [vmem:[#allocation2 + $0x308] sm:$0xff]
      %v8216 = vld [vmem:[#allocation2 + $0x310] sm:$0xff]
      %v8217 = vld [vmem:[#allocation2 + $0x318] sm:$0xff]
      %v8218 = vld [vmem:[#allocation2 + $0x320] sm:$0xff]
      %v8219 = vld [vmem:[#allocation2 + $0x328] sm:$0xff]
      %v8220 = vld [vmem:[#allocation2 + $0x330] sm:$0xff]
      %v8221 = vld [vmem:[#allocation2 + $0x338] sm:$0xff]
      %v8222 = vld [vmem:[#allocation2 + $0x340] sm:$0xff]
      %v8223 = vld [vmem:[#allocation2 + $0x348] sm:$0xff]
      %v8224 = vld [vmem:[#allocation2 + $0x350] sm:$0xff]
      %v8225 = vld [vmem:[#allocation2 + $0x358] sm:$0xff]
      %v8226 = vld [vmem:[%s7] sm:$0xff]
      %8228 = vset.pattern.permute.xlu0 0
      %8229 = vperm.xlu0 %8228, %v8226
      %v8230 = vpop.permute.xlu0 %8229
      %v8233 = vsel %vm1649, %v8117, 0
      %8235 = vmatprep.subr.mxu0 %v8119
      %8236 = vmatpush1.msra.mxu0 %v8118
      %8237 = vmatprep.subr.mxu0 %v8123
      %8238 = vmatpush1.msra.mxu0 %v8122
      %8239 = vmatprep.subr.mxu0 %v8127
      %8240 = vmatpush1.msra.mxu0 %v8126
      %8241 = vmatprep.subr.mxu0 %v8131
      %8242 = vmatpush1.msra.mxu0 %v8130
      %8243 = vmatprep.subr.mxu0 %v8135
      %8244 = vmatpush1.msra.mxu0 %v8134
      %8245 = vmatprep.subr.mxu0 %v8139
      %8246 = vmatpush1.msra.mxu0 %v8138
      %8247 = vmatprep.subr.mxu0 %v8143
      %8248 = vmatpush1.msra.mxu0 %v8142
      %8249 = vmatprep.subr.mxu0 %v8147
      %8250 = vmatpush1.msra.mxu0 %v8146
      %8251 = vmatprep.subr.mxu0 %v8151
      %8252 = vmatpush1.msra.mxu0 %v8150
      %8253 = vmatprep.subr.mxu0 %v8155
      %8254 = vmatpush1.msra.mxu0 %v8154
      %8255 = vmatprep.subr.mxu0 %v8159
      %8256 = vmatpush1.msra.mxu0 %v8158
      %8257 = vmatprep.subr.mxu0 %v8163
      %8258 = vmatpush1.msra.mxu0 %v8162
      %8259 = vmatprep.subr.mxu0 %v8167
      %8260 = vmatpush1.msra.mxu0 %v8166
      %8261 = vmatprep.subr.mxu0 %v8171
      %8262 = vmatpush1.msra.mxu0 %v8170
      %8263 = vmatprep.subr.mxu0 %v8175
      %8264 = vmatpush1.msra.mxu0 %v8174
      %8265 = vmatprep.subr.mxu0 %v8179
      %8266 = vmatpush1.msra.mxu0 %v8178
      %8267 = vmatprep.subr.mxu0 %v8183
      %8268 = vmatpush1.msra.mxu0 %v8182
      %8269 = vmatprep.subr.mxu0 %v8187
      %8270 = vmatpush1.msra.mxu0 %v8186
      %8271 = vmatprep.subr.mxu0 %v8191
      %8272 = vmatpush1.msra.mxu0 %v8190
      %8273 = vmatprep.subr.mxu0 %v8195
      %8274 = vmatpush1.msra.mxu0 %v8194
      %8275 = vmatprep.subr.mxu0 %v8199
      %8276 = vmatpush1.msra.mxu0 %v8198
      %8277 = vmatprep.subr.mxu0 %v8203
      %8278 = vmatpush1.msra.mxu0 %v8202
      %8279 = vmatprep.subr.mxu0 %v8207
      %8280 = vmatpush1.msra.mxu0 %v8206
      %8281 = vmatprep.subr.mxu0 %v8211
      %8282 = vmatpush1.msra.mxu0 %v8210
      %8283 = vmatprep.subr.mxu0 %v8215
      %8284 = vmatpush1.msra.mxu0 %v8214
      %8285 = vmatprep.subr.mxu0 %v8219
      %8286 = vmatpush1.msra.mxu0 %v8218
      %8287 = vmatprep.subr.mxu0 %v8223
      %8288 = vmatpush1.msra.mxu0 %v8222
      %8289 = vmatprep.subr.mxu0 0.0
      %8290 = vmatpush1.msra.mxu0 0.0
      %8291 = vmatprep.subr.mxu0 0.0
      %8292 = vmatpush1.msra.mxu0 0.0
      %8293 = vmatprep.subr.mxu0 0.0
      %8294 = vmatpush1.msra.mxu0 0.0
      %8295 = vmatprep.subr.mxu0 0.0
      %8296 = vmatpush1.msra.mxu0 0.0
      %8297 = vmatprep.subr.mxu0 0.0
      %8298 = vmatpush1.msra.mxu0 0.0
      %8299 = vmatprep.mubr.f32.mxu0 %v8233
      %8300 = vmatmul.mubr.f32.gmra.mrb[0].mxu0 %v8116
      %v8301 = vpop.f32.mrb[0].mxu0
      %v8302 = vadd.f32 %v8230, %v8301
      %v8303 = vpop.f32.mrb[0].mxu0
      %v8304 = vadd.f32 %v8230, %v8303
      %8305 = vdwg.mxu0
      %8306 = vmatprep.subr.mxu0 %v8121
      %8307 = vmatpush1.msra.mxu0 %v8120
      %8308 = vmatprep.subr.mxu0 %v8125
      %8309 = vmatpush1.msra.mxu0 %v8124
      %8310 = vmatprep.subr.mxu0 %v8129
      %8311 = vmatpush1.msra.mxu0 %v8128
      %8312 = vmatprep.subr.mxu0 %v8133
      %8313 = vmatpush1.msra.mxu0 %v8132
      %8314 = vmatprep.subr.mxu0 %v8137
      %8315 = vmatpush1.msra.mxu0 %v8136
      %8316 = vmatprep.subr.mxu0 %v8141
      %8317 = vmatpush1.msra.mxu0 %v8140
      %8318 = vmatprep.subr.mxu0 %v8145
      %8319 = vmatpush1.msra.mxu0 %v8144
      %8320 = vmatprep.subr.mxu0 %v8149
      %8321 = vmatpush1.msra.mxu0 %v8148
      %8322 = vmatprep.subr.mxu0 %v8153
      %8323 = vmatpush1.msra.mxu0 %v8152
      %8324 = vmatprep.subr.mxu0 %v8157
      %8325 = vmatpush1.msra.mxu0 %v8156
      %8326 = vmatprep.subr.mxu0 %v8161
      %8327 = vmatpush1.msra.mxu0 %v8160
      %8328 = vmatprep.subr.mxu0 %v8165
      %8329 = vmatpush1.msra.mxu0 %v8164
      %8330 = vmatprep.subr.mxu0 %v8169
      %8331 = vmatpush1.msra.mxu0 %v8168
      %8332 = vmatprep.subr.mxu0 %v8173
      %8333 = vmatpush1.msra.mxu0 %v8172
      %8334 = vmatprep.subr.mxu0 %v8177
      %8335 = vmatpush1.msra.mxu0 %v8176
      %8336 = vmatprep.subr.mxu0 %v8181
      %8337 = vmatpush1.msra.mxu0 %v8180
      %8338 = vmatprep.subr.mxu0 %v8185
      %8339 = vmatpush1.msra.mxu0 %v8184
      %8340 = vmatprep.subr.mxu0 %v8189
      %8341 = vmatpush1.msra.mxu0 %v8188
      %8342 = vmatprep.subr.mxu0 %v8193
      %8343 = vmatpush1.msra.mxu0 %v8192
      %8344 = vmatprep.subr.mxu0 %v8197
      %8345 = vmatpush1.msra.mxu0 %v8196
      %8346 = vmatprep.subr.mxu0 %v8201
      %8347 = vmatpush1.msra.mxu0 %v8200
      %8348 = vmatprep.subr.mxu0 %v8205
      %8349 = vmatpush1.msra.mxu0 %v8204
      %8350 = vmatprep.subr.mxu0 %v8209
      %8351 = vmatpush1.msra.mxu0 %v8208
      %8352 = vmatprep.subr.mxu0 %v8213
      %8353 = vmatpush1.msra.mxu0 %v8212
      %8354 = vmatprep.subr.mxu0 %v8217
      %8355 = vmatpush1.msra.mxu0 %v8216
      %8356 = vmatprep.subr.mxu0 %v8221
      %8357 = vmatpush1.msra.mxu0 %v8220
      %8358 = vmatprep.subr.mxu0 %v8225
      %8359 = vmatpush1.msra.mxu0 %v8224
      %8360 = vmatprep.subr.mxu0 0.0
      %8361 = vmatpush1.msra.mxu0 0.0
      %8362 = vmatprep.subr.mxu0 0.0
      %8363 = vmatpush1.msra.mxu0 0.0
      %8364 = vmatprep.subr.mxu0 0.0
      %8365 = vmatpush1.msra.mxu0 0.0
      %8366 = vmatprep.subr.mxu0 0.0
      %8367 = vmatpush1.msra.mxu0 0.0
      %8368 = vmatprep.subr.mxu0 0.0
      %8369 = vmatpush1.msra.mxu0 0.0
      %8370 = vmatprep.mubr.f32.mxu0 %v8233
      %8371 = vmatmul.mubr.f32.gmra.mrb[0].mxu0 %v8116
      %v8372 = vpop.f32.mrb[0].mxu0
      %v8373 = vadd.f32 %v8230, %v8372
      %v8374 = vpop.f32.mrb[0].mxu0
      %v8375 = vadd.f32 %v8230, %v8374
      %8376 = vdwg.mxu0
      %v8377 = vadd.f32 %v8302, %v8304
      %v8378 = vadd.f32 %v8377, %v8373
      %v8379 = vadd.f32 %v8378, %v8375
      %8380 = vadd.xlane.f32.xlu0 %v8379
      %v8381 = vpop.xlane.xlu0 %8380
      %v8382 = vmul.f32 %v8381, %v1800
      %v8383 = vsub.f32 %v8302, %v8382
      %v8384 = vsub.f32 %v8304, %v8382
      %v8385 = vsub.f32 %v8373, %v8382
      %v8386 = vsub.f32 %v8375, %v8382
      %v8387 = vmul.f32 %v8383, %v8383
      %v8388 = vmul.f32 %v8384, %v8384
      %v8389 = vmul.f32 %v8385, %v8385
      %v8390 = vmul.f32 %v8386, %v8386
      %v8391 = vadd.f32 %v8387, %v8388
      %v8392 = vadd.f32 %v8391, %v8389
      %v8393 = vadd.f32 %v8392, %v8390
      %8394 = vadd.xlane.f32.xlu0 %v8393
      %v8395 = vpop.xlane.xlu0 %8394
      %v8396 = vmul.f32 %v8395, %v1800
      %v8397 = vadd.f32 %v8396, 1e-05
      %v8398 = vrsqrt.pop %v8397
      %v8399 = vmul.f32 %v8383, %v8398
      %v8400 = vmul.f32 %v8384, %v8398
      %v8401 = vmul.f32 %v8385, %v8398
      %v8402 = vmul.f32 %v8386, %v8398
      %vm8403 = vcmp.ge.f32.partialorder %v8399, 0.0
      %vm8404 = vcmp.ge.f32.partialorder %v8400, 0.0
      %vm8405 = vcmp.ge.f32.partialorder %v8401, 0.0
      %vm8406 = vcmp.ge.f32.partialorder %v8402, 0.0
      %v8407 = vmul.f32 %v8399, 0.01
      %v8408 = vmul.f32 %v8400, 0.01
      %v8409 = vmul.f32 %v8401, 0.01
      %v8410 = vmul.f32 %v8402, 0.01
      %v8411 = vsel %vm8403, %v8399, %v8407
      %v8412 = vsel %vm8404, %v8400, %v8408
      %v8413 = vsel %vm8405, %v8401, %v8409
      %v8414 = vsel %vm8406, %v8402, %v8410
      %v8415 = vadd.f32 %v8411, %v399
      %v8416 = vadd.f32 %v8412, %v401
      %v8417 = vadd.f32 %v8413, %v470
      %v8418 = vadd.f32 %v8414, %v472
      %8419 = vst [vmem:[%s305] sm:$0xff] %v8415
      %8420 = vst [vmem:[%s305 + $0x8] sm:$0xff] %v8416
      %8421 = vst [vmem:[%s305 + $0x10] sm:$0xff] %v8417
      %8422 = vst [vmem:[%s305 + $0x18] sm:$0xff] %v8418
      %p8423 = scmp.lt.s32.totalorder %s19, 1
      %s8424 = scalar_select %p8423, %s19, 1
      %s8425 = smul.addr %s8424, 4
      %s8426 = smul.addr %s8425, 8
      %s8427 = scalar_lea.vmem %s8, %s8426
      // Predicated region
      $region53: #{res_rec_block_forward.1} parent=51 // pred_check
        %p8428 = pneg %p210
      $region54: #{res_rec_block_forward.1} parent=51 // pred_check_branch
        %8430 = sbr.rel (%p8428) target = $region56
      $region55: #{res_rec_block_forward.1} parent=51 // pred_region
        _
      $region56: #{res_rec_block_forward.1} parent=51 // pred_fallthru
        _
    $region52: #{res_rec_block_forward.1} parent=5 // pred_fallthru
      _
    %p8431 = scmp.le.s32.totalorder 2, %s14
    // Predicated region
    $region57: #{res_rec_block_forward.1} parent=5 // pred_check
      %p8432 = pneg %p8431
    $region58: #{res_rec_block_forward.1} parent=5 // pred_check_branch
      %8434 = sbr.rel (%p8432) target = $region60
    $region59: #{res_rec_block_forward.1} parent=5 // pred_region
      %s8435 = ssub.s32 %s14, 2
      // Predicated region
      $region61: #{res_rec_block_forward.1} parent=59 // pred_check
        %p8436 = pneg %p216
      $region62: #{res_rec_block_forward.1} parent=59 // pred_check_branch
        %8438 = sbr.rel (%p8436) target = $region64
      $region63: #{res_rec_block_forward.1} parent=59 // pred_region
        %p8439 = scmp.lt.s32.totalorder %s20, 1
        %s8440 = scalar_select %p8439, %s20, 1
        %s8441 = smul.addr %s8440, 4
        %s8442 = smul.addr %s8441, 8
        %s8443 = scalar_lea.vmem %s8, %s8442
      $region64: #{res_rec_block_forward.1} parent=59 // pred_fallthru
        _
    $region60: #{res_rec_block_forward.1} parent=5 // pred_fallthru
      _
  $region6: #{res_rec_block_forward.1} parent=0 // loop_footer
    %s18 = sadd.s32 1, %s14
  $region7: #{res_rec_block_forward.1} parent=0 // loop_footer_branch
    %13 = sbr.rel target = $region3
  $region8: #{res_rec_block_forward.1} parent=0 // loop_exit
    _

</llo_original>
